<compile_context>
chip_gen: v7x
topology: tpu7x:2x2x1
jax: 0.10.0
libtpu: 0.0.40
codegen_flags: <defaults>
</compile_context>

<pallas_src>
import math

import jax
import jax.numpy as jnp
from jax.experimental import pallas as pl
from jax.experimental.pallas import tpu as pltpu


def _lrelu(v):
    return jnp.where(v > 0, v, 0.2 * v)


def _rdb_kernel(x_ref, w1, b1, w2, b2, w3, b3, w4, b4, w5, b5,
                w6, b6, gamma, beta, o_ref, cat_ref, x5p_ref):
    H = 8                                    # zero-halo rows on each side
    Nb, L, nf = x_ref.shape
    gc = b1.shape[-1]
    Lo = o_ref.shape[1]
    no = o_ref.shape[2]
    cw = cat_ref.shape[-1]                   # nf + 4*gc
    M = Nb * L                               # batch-stacked matmul rows

    # Re-zero only the halos every grid step (4 tiny stores); the interiors are
    # fully overwritten before being read.
    zc = jnp.zeros((Nb, H, cw), jnp.float32)
    cat_ref[:, pl.ds(0, H), :] = zc
    cat_ref[:, pl.ds(H + L, H), :] = zc
    zx = jnp.zeros((Nb, H, nf), jnp.float32)
    x5p_ref[:, pl.ds(0, H), :] = zx
    x5p_ref[:, pl.ds(H + L, H), :] = zx

    # Stage the whole input block into the dense-concat buffer.
    cat_ref[:, pl.ds(H, L), pl.ds(0, nf)] = x_ref[...]

    def tap(cin, off):
        # Shifted (Nb, L, cin) view -> (Nb*L, cin) batch-stacked matmul LHS.
        return cat_ref[:, pl.ds(H + off, L), pl.ds(0, cin)].reshape(M, cin)

    def dilated_conv3(cin, w_ref, b_ref, d):
        # 'same' conv, kernel=3, dilation=d, padding=d over the first cin
        # channels of the dense concat, batch-stacked to M = Nb*L.
        # Three accumulating dots (one per tap) on lane-aligned slices — no
        # (M, 3*cin) concat materialisation; out-of-range rows come from the
        # zero halos.  Weight rows: [0:cin)=tap(l-d), [cin:2cin)=tap(l),
        # [2cin:3cin)=tap(l+d).
        y = jnp.dot(tap(cin, -d), w_ref[pl.ds(0, cin), :],
                    preferred_element_type=jnp.float32)
        y = y + jnp.dot(tap(cin, 0), w_ref[pl.ds(cin, cin), :],
                        preferred_element_type=jnp.float32)
        y = y + jnp.dot(tap(cin, d), w_ref[pl.ds(2 * cin, cin), :],
                        preferred_element_type=jnp.float32)
        return y + b_ref[...]

    x1 = _lrelu(dilated_conv3(nf, w1, b1, 1))
    cat_ref[:, pl.ds(H, L), pl.ds(nf, gc)] = x1.reshape(Nb, L, gc)
    x2 = _lrelu(dilated_conv3(nf + gc, w2, b2, 2))
    cat_ref[:, pl.ds(H, L), pl.ds(nf + gc, gc)] = x2.reshape(Nb, L, gc)
    x3 = _lrelu(dilated_conv3(nf + 2 * gc, w3, b3, 4))
    cat_ref[:, pl.ds(H, L), pl.ds(nf + 2 * gc, gc)] = x3.reshape(Nb, L, gc)
    x4 = _lrelu(dilated_conv3(nf + 3 * gc, w4, b4, 8))
    cat_ref[:, pl.ds(H, L), pl.ds(nf + 3 * gc, gc)] = x4.reshape(Nb, L, gc)

    # conv5 (1x1) on the full dense concat; the 1x1 shortcut on x is already
    # folded into w5/b5 on the host (cat[..., :nf] == x exactly).  M = Nb*L.
    x5 = jnp.dot(cat_ref[:, pl.ds(H, L), :].reshape(M, cw), w5[...],
                 preferred_element_type=jnp.float32) + b5[...]
    x5p_ref[:, pl.ds(H, L), :] = x5.reshape(Nb, L, nf)

    # conv6: kernel=16, stride=8, pad=4 as ONE batch-stacked im2col matmul.
    # Reference padded index p maps to x5p row p + 4; the 8-row halos provide
    # the 4 pad rows on each side.  Phase t gathers rows 4 + t + 8*o.
    phases = [x5p_ref[:, pl.ds(4 + t, Lo, stride=8), :] for t in range(16)]
    blocks = jnp.concatenate(phases, axis=-1).reshape(Nb * Lo, 16 * nf)
    y6 = (jnp.dot(blocks, w6[...], preferred_element_type=jnp.float32)
          + b6[...]).reshape(Nb, Lo, no)

    # LayerNorm over the length axis (PyTorch last dim): unbiased std (Lo-1),
    # eps added to the std.  EUP approximate reciprocal + one Newton step.
    mean = jnp.mean(y6, axis=1, keepdims=True)                    # (Nb, 1, no)
    var = jnp.sum((y6 - mean) ** 2, axis=1, keepdims=True) / (Lo - 1)
    denom = jnp.sqrt(var) + 1e-8
    r = pl.reciprocal(denom, approx=True)
    r = r * (2.0 - denom * r)
    g = gamma[...].reshape(1, 1, no)
    be = beta[...].reshape(1, 1, no)
    yn = g * (y6 - mean) * r + be
    o_ref[...] = _lrelu(yn)


def _zero_map(nd):
    return lambda n: (0,) * nd


def _full_spec(a):
    return pl.BlockSpec(a.shape, _zero_map(a.ndim))


def _prep_args(x, params, nf, gc, no):
    xt = jnp.transpose(x, (0, 2, 1)).astype(jnp.float32)                    # (N, L, nf)

    def stack_k3(w):                                                        # (gc,cin,3) -> (3*cin,gc)
        return jnp.concatenate(
            [jnp.transpose(w[:, :, k], (1, 0)) for k in range(3)], axis=0
        ).astype(jnp.float32)

    row = lambda b: b.reshape(1, -1).astype(jnp.float32)

    # Fold the 1x1 shortcut into conv5: sc = cat[:, :nf] @ wsc^T.
    w5 = jnp.transpose(params['w5'][:, :, 0], (1, 0)).astype(jnp.float32)   # (nf+4gc, nf)
    wsc = jnp.transpose(params['wsc'][:, :, 0], (1, 0)).astype(jnp.float32) # (nf, nf)
    w5f = w5.at[:nf, :].add(wsc)
    b5f = row(params['b5'] + params['bsc'])

    # conv6 im2col weight: tap t, channel c -> row t*nf + c.
    w6i = jnp.transpose(params['w6'], (2, 1, 0)).astype(jnp.float32).reshape(16 * nf, no)

    return (
        xt,
        stack_k3(params['w1']), row(params['b1']),
        stack_k3(params['w2']), row(params['b2']),
        stack_k3(params['w3']), row(params['b3']),
        stack_k3(params['w4']), row(params['b4']),
        w5f, b5f,
        w6i, row(params['b6']),
        row(params['gamma']), row(params['beta']),
    )


def _vmem_capacity_bytes():
    # Generation-aware VMEM cap (v5e/v6e: 128 MiB, v7x: 64 MiB per TensorCore).
    try:
        info = pltpu.get_tpu_info()
        cap = getattr(info, "vmem_capacity_bytes", None)
        if cap:
            return int(cap)
    except Exception:
        pass
    return 64 * 1024 * 1024          # conservative fallback (v7x per-core VMEM)


def residual_dense_block(x, params, *, nf=64, gc=32, no=64, batch_block=None):
    """x: (N, nf, L) float32  ->  (N, no, Lo) float32, matching the PyTorch module."""
    N, C, L = x.shape
    assert C == nf
    assert L >= 16 and L % 8 == 0            # L sits on the sublane axis
    Lo = (L + 2 * 4 - 16) // 8 + 1           # conv6: k=16, stride=8, pad=4
    assert Lo >= 2                           # LayerNorm uses unbiased std over Lo

    args = _prep_args(x, params, nf, gc, no)
    weight_elems = sum(int(a.size) for a in args[1:])

    f32 = 4
    cw = nf + 4 * gc
    vmem_cap = min(_vmem_capacity_bytes(), 128 * 1024 * 1024)
    usable = max(32 * 1024 * 1024, vmem_cap - (8 << 20))

    def estimate(bb):
        scratch = bb * (L + 16) * (cw + nf) * f32                 # single-buffered scratch
        io_blocks = 2 * bb * (L * nf + Lo * no) * f32             # double-buffered in/out
        weights = 2 * weight_elems * f32                          # double-buffered constants
        temps = bb * (3 * L * cw + Lo * 16 * nf + 4 * L * gc) * f32
        return scratch + io_blocks + weights + temps + (4 << 20)

    if batch_block is None:
        # Largest divisor of N (<= 32) whose VMEM estimate fits; prefer a
        # parallel grid >= 2 (and even) so both v7x TensorCores get balanced
        # work, while maximising M = batch_block*L of every matmul.
        best_key = (-1, -1, 0)
        batch_block = 1
        for bb in range(1, min(N, 32) + 1):
            if N % bb or estimate(bb) > usable:
                continue
            g = N // bb
            key = (1 if g >= 2 else 0, 1 if (g >= 2 and g % 2 == 0) else 0, bb)
            if key > best_key:
                best_key, batch_block = key, bb
    assert N % batch_block == 0
    grid_n = N // batch_block

    in_specs = [pl.BlockSpec((batch_block, L, nf), lambda n: (n, 0, 0))] + \
               [_full_spec(a) for a in args[1:]]

    out = pl.pallas_call(
        _rdb_kernel,
        out_shape=jax.ShapeDtypeStruct((N, Lo, no), jnp.float32),
        grid_spec=pltpu.PrefetchScalarGridSpec(
            num_scalar_prefetch=0,
            grid=(grid_n,),
            in_specs=in_specs,
            out_specs=pl.BlockSpec((batch_block, Lo, no), lambda n: (n, 0, 0)),
            scratch_shapes=[
                pltpu.VMEM((batch_block, L + 16, cw), jnp.float32),  # dense concat + halos
                pltpu.VMEM((batch_block, L + 16, nf), jnp.float32),  # padded x5 for conv6
            ],
        ),
        compiler_params=pltpu.CompilerParams(
            dimension_semantics=("parallel",),
            vmem_limit_bytes=int(usable),
        ),
    )(*args)

    return jnp.transpose(out, (0, 2, 1))                          # (N, no, Lo)


# ----------------------------- parameter init -----------------------------

def init_params(key, nf=64, gc=32, no=64):
    ks = jax.random.split(key, 8)

    def kaiming(k, cout, cin, ksz, scale):
        std = math.sqrt(2.0 / (cin * ksz))
        return jax.random.normal(k, (cout, cin, ksz), jnp.float32) * std * scale

    p = {}
    p['w1'] = kaiming(ks[0], gc, nf, 3, 0.1);            p['b1'] = jnp.zeros((gc,), jnp.float32)
    p['w2'] = kaiming(ks[1], gc, nf + gc, 3, 0.1);       p['b2'] = jnp.zeros((gc,), jnp.float32)
    p['w3'] = kaiming(ks[2], gc, nf + 2 * gc, 3, 0.1);   p['b3'] = jnp.zeros((gc,), jnp.float32)
    p['w4'] = kaiming(ks[3], gc, nf + 3 * gc, 3, 0.1);   p['b4'] = jnp.zeros((gc,), jnp.float32)
    p['w5'] = kaiming(ks[4], nf, nf + 4 * gc, 1, 0.1);   p['b5'] = jnp.zeros((nf,), jnp.float32)
    p['wsc'] = kaiming(ks[5], nf, nf, 1, 0.1);           p['bsc'] = jnp.zeros((nf,), jnp.float32)
    p['w6'] = kaiming(ks[6], no, nf, 16, 1.0)            # conv6 keeps (non-scaled) init
    p['b6'] = jax.random.normal(ks[7], (no,), jnp.float32) * 0.01
    p['gamma'] = jnp.ones((no,), jnp.float32)            # LayerNorm((no, 1)) params
    p['beta'] = jnp.zeros((no,), jnp.float32)
    return p


# ----------------------------- pure-JAX reference -----------------------------

def _conv1d_ref(x, w, b, stride=1, dilation=1, padding=0):
    y = jax.lax.conv_general_dilated(
        x, w, window_strides=(stride,), padding=[(padding, padding)],
        rhs_dilation=(dilation,), dimension_numbers=('NCH', 'OIH', 'NCH'))
    return y + b[None, :, None]


def reference_forward(x, p):
    lrelu = lambda v: jnp.where(v > 0, v, 0.2 * v)
    x1 = lrelu(_conv1d_ref(x, p['w1'], p['b1'], dilation=1, padding=1))
    x2 = lrelu(_conv1d_ref(jnp.concatenate([x, x1], 1), p['w2'], p['b2'], dilation=2, padding=2))
    x3 = lrelu(_conv1d_ref(jnp.concatenate([x, x1, x2], 1), p['w3'], p['b3'], dilation=4, padding=4))
    x4 = lrelu(_conv1d_ref(jnp.concatenate([x, x1, x2, x3], 1), p['w4'], p['b4'], dilation=8, padding=8))
    x5 = _conv1d_ref(jnp.concatenate([x, x1, x2, x3, x4], 1), p['w5'], p['b5']) \
        + _conv1d_ref(x, p['wsc'], p['bsc'])
    y6 = _conv1d_ref(x5, p['w6'], p['b6'], stride=8, padding=4)
    mean = jnp.mean(y6, axis=-1, keepdims=True)
    std = jnp.std(y6, axis=-1, keepdims=True, ddof=1)
    yn = p['gamma'][None, :, None] * (y6 - mean) / (std + 1e-8) + p['beta'][None, :, None]
    return lrelu(yn)


if __name__ == "__main__":
    nf, gc, no = 64, 32, 64
    N, L = 8, 64                         # -> batch_block=4, grid=(2,), M=256 per conv matmul

    key = jax.random.PRNGKey(0)
    kx, kp = jax.random.split(key)
    x = jax.random.normal(kx, (N, nf, L), jnp.float32)
    params = init_params(kp, nf, gc, no)

    out = residual_dense_block(x, params, nf=nf, gc=gc, no=no)
    out = jax.block_until_ready(out)

    ref = reference_forward(x, params)
    assert out.shape == ref.shape, (out.shape, ref.shape)
    err = float(jnp.max(jnp.abs(out - ref)))
    assert err < 5e-3, f"max abs error {err}"
    print("KERNEL_OK")
</pallas_src>

<mosaic_0001>
module attributes {stable_mosaic.version = 11 : i64} {
  func.func @_rdb_kernel(%arg0: i32, %arg1: memref<4x64x64xf32, #tpu.memory_space<vmem>>, %arg2: memref<192x32xf32, #tpu.memory_space<vmem>>, %arg3: memref<1x32xf32, #tpu.memory_space<vmem>>, %arg4: memref<288x32xf32, #tpu.memory_space<vmem>>, %arg5: memref<1x32xf32, #tpu.memory_space<vmem>>, %arg6: memref<384x32xf32, #tpu.memory_space<vmem>>, %arg7: memref<1x32xf32, #tpu.memory_space<vmem>>, %arg8: memref<480x32xf32, #tpu.memory_space<vmem>>, %arg9: memref<1x32xf32, #tpu.memory_space<vmem>>, %arg10: memref<192x64xf32, #tpu.memory_space<vmem>>, %arg11: memref<1x64xf32, #tpu.memory_space<vmem>>, %arg12: memref<1024x64xf32, #tpu.memory_space<vmem>>, %arg13: memref<1x64xf32, #tpu.memory_space<vmem>>, %arg14: memref<1x64xf32, #tpu.memory_space<vmem>>, %arg15: memref<1x64xf32, #tpu.memory_space<vmem>>, %arg16: memref<4x8x64xf32, #tpu.memory_space<vmem>>, %arg17: memref<4x80x192xf32, #tpu.memory_space<vmem>>, %arg18: memref<4x80x64xf32, #tpu.memory_space<vmem>>) attributes {dimension_semantics = [#tpu.dimension_semantics<parallel>], iteration_bounds = array<i64: 2>, scalar_prefetch = 0 : i64, scratch_operands = 2 : i64, tpu.core_type = #tpu.core_type<tc>, window_params = [{transform_indices = @transform_0, window_bounds = array<i64: 4, 64, 64>}, {pipeline_mode = #tpu.pipeline_mode<synchronous>, transform_indices = @transform_1, window_bounds = array<i64: 192, 32>}, {pipeline_mode = #tpu.pipeline_mode<synchronous>, transform_indices = @transform_2, window_bounds = array<i64: 1, 32>}, {pipeline_mode = #tpu.pipeline_mode<synchronous>, transform_indices = @transform_3, window_bounds = array<i64: 288, 32>}, {pipeline_mode = #tpu.pipeline_mode<synchronous>, transform_indices = @transform_4, window_bounds = array<i64: 1, 32>}, {pipeline_mode = #tpu.pipeline_mode<synchronous>, transform_indices = @transform_5, window_bounds = array<i64: 384, 32>}, {pipeline_mode = #tpu.pipeline_mode<synchronous>, transform_indices = @transform_6, window_bounds = array<i64: 1, 32>}, {pipeline_mode = #tpu.pipeline_mode<synchronous>, transform_indices = @transform_7, window_bounds = array<i64: 480, 32>}, {pipeline_mode = #tpu.pipeline_mode<synchronous>, transform_indices = @transform_8, window_bounds = array<i64: 1, 32>}, {pipeline_mode = #tpu.pipeline_mode<synchronous>, transform_indices = @transform_9, window_bounds = array<i64: 192, 64>}, {pipeline_mode = #tpu.pipeline_mode<synchronous>, transform_indices = @transform_10, window_bounds = array<i64: 1, 64>}, {pipeline_mode = #tpu.pipeline_mode<synchronous>, transform_indices = @transform_11, window_bounds = array<i64: 1024, 64>}, {pipeline_mode = #tpu.pipeline_mode<synchronous>, transform_indices = @transform_12, window_bounds = array<i64: 1, 64>}, {pipeline_mode = #tpu.pipeline_mode<synchronous>, transform_indices = @transform_13, window_bounds = array<i64: 1, 64>}, {pipeline_mode = #tpu.pipeline_mode<synchronous>, transform_indices = @transform_14, window_bounds = array<i64: 1, 64>}, {transform_indices = @transform_15, window_bounds = array<i64: 4, 8, 64>}]} {
    %cst = arith.constant 0.000000e+00 : f32
    %0 = vector.broadcast %cst : f32 to vector<4x8x192xf32>
    %c0 = arith.constant 0 : index
    %c0_0 = arith.constant 0 : index
    %c0_1 = arith.constant 0 : index
    %1 = vector.load %arg17[%c0, %c0_0, %c0_1] : memref<4x80x192xf32, #tpu.memory_space<vmem>>, vector<4x8x192xf32>
    tpu.vector_store %arg17[%c0, %c0_0, %c0_1], %0 {strides = array<i32>} : memref<4x80x192xf32, #tpu.memory_space<vmem>>, vector<4x8x192xf32>,
    %c0_2 = arith.constant 0 : index
    %c72 = arith.constant 72 : index
    %c0_3 = arith.constant 0 : index
    %2 = vector.load %arg17[%c0_2, %c72, %c0_3] : memref<4x80x192xf32, #tpu.memory_space<vmem>>, vector<4x8x192xf32>
    tpu.vector_store %arg17[%c0_2, %c72, %c0_3], %0 {strides = array<i32>} : memref<4x80x192xf32, #tpu.memory_space<vmem>>, vector<4x8x192xf32>,
    %cst_4 = arith.constant 0.000000e+00 : f32
    %3 = vector.broadcast %cst_4 : f32 to vector<4x8x64xf32>
    %c0_5 = arith.constant 0 : index
    %c0_6 = arith.constant 0 : index
    %c0_7 = arith.constant 0 : index
    %4 = vector.load %arg18[%c0_5, %c0_6, %c0_7] : memref<4x80x64xf32, #tpu.memory_space<vmem>>, vector<4x8x64xf32>
    tpu.vector_store %arg18[%c0_5, %c0_6, %c0_7], %3 {strides = array<i32>} : memref<4x80x64xf32, #tpu.memory_space<vmem>>, vector<4x8x64xf32>,
    %c0_8 = arith.constant 0 : index
    %c72_9 = arith.constant 72 : index
    %c0_10 = arith.constant 0 : index
    %5 = vector.load %arg18[%c0_8, %c72_9, %c0_10] : memref<4x80x64xf32, #tpu.memory_space<vmem>>, vector<4x8x64xf32>
    tpu.vector_store %arg18[%c0_8, %c72_9, %c0_10], %3 {strides = array<i32>} : memref<4x80x64xf32, #tpu.memory_space<vmem>>, vector<4x8x64xf32>,
    %c0_11 = arith.constant 0 : index
    %c0_12 = arith.constant 0 : index
    %c0_13 = arith.constant 0 : index
    %6 = vector.load %arg1[%c0_11, %c0_12, %c0_13] : memref<4x64x64xf32, #tpu.memory_space<vmem>>, vector<4x64x64xf32>
    %c0_14 = arith.constant 0 : index
    %c8 = arith.constant 8 : index
    %c0_15 = arith.constant 0 : index
    %7 = vector.load %arg17[%c0_14, %c8, %c0_15] : memref<4x80x192xf32, #tpu.memory_space<vmem>>, vector<4x64x64xf32>
    tpu.vector_store %arg17[%c0_14, %c8, %c0_15], %6 {strides = array<i32>} : memref<4x80x192xf32, #tpu.memory_space<vmem>>, vector<4x64x64xf32>,
    %c0_16 = arith.constant 0 : index
    %c7 = arith.constant 7 : index
    %c0_17 = arith.constant 0 : index
    %8 = vector.load %arg17[%c0_16, %c7, %c0_17] : memref<4x80x192xf32, #tpu.memory_space<vmem>>, vector<4x64x64xf32>
    %9 = vector.shape_cast %8 : vector<4x64x64xf32> to vector<256x64xf32>
    %c0_18 = arith.constant 0 : index
    %c0_19 = arith.constant 0 : index
    %10 = vector.load %arg2[%c0_18, %c0_19] : memref<192x32xf32, #tpu.memory_space<vmem>>, vector<64x32xf32>
    %cst_20 = arith.constant dense<0.000000e+00> : vector<256x32xf32>
    %11 = tpu.matmul %9, %10, %cst_20 {dimension_numbers = #tpu.dot_dimension_numbers<[1], [0], [0], [1], [0, 0, 1, 1], [], []>} : vector<256x64xf32>, vector<64x32xf32>, vector<256x32xf32> -> vector<256x32xf32>
    %c0_21 = arith.constant 0 : index
    %c8_22 = arith.constant 8 : index
    %c0_23 = arith.constant 0 : index
    %12 = vector.load %arg17[%c0_21, %c8_22, %c0_23] : memref<4x80x192xf32, #tpu.memory_space<vmem>>, vector<4x64x64xf32>
    %13 = vector.shape_cast %12 : vector<4x64x64xf32> to vector<256x64xf32>
    %c64 = arith.constant 64 : index
    %c0_24 = arith.constant 0 : index
    %14 = vector.load %arg2[%c64, %c0_24] : memref<192x32xf32, #tpu.memory_space<vmem>>, vector<64x32xf32>
    %cst_25 = arith.constant dense<0.000000e+00> : vector<256x32xf32>
    %15 = tpu.matmul %13, %14, %cst_25 {dimension_numbers = #tpu.dot_dimension_numbers<[1], [0], [0], [1], [0, 0, 1, 1], [], []>} : vector<256x64xf32>, vector<64x32xf32>, vector<256x32xf32> -> vector<256x32xf32>
    %16 = arith.addf %11, %15 : vector<256x32xf32>
    %c0_26 = arith.constant 0 : index
    %c9 = arith.constant 9 : index
    %c0_27 = arith.constant 0 : index
    %17 = vector.load %arg17[%c0_26, %c9, %c0_27] : memref<4x80x192xf32, #tpu.memory_space<vmem>>, vector<4x64x64xf32>
    %18 = vector.shape_cast %17 : vector<4x64x64xf32> to vector<256x64xf32>
    %c128 = arith.constant 128 : index
    %c0_28 = arith.constant 0 : index
    %19 = vector.load %arg2[%c128, %c0_28] : memref<192x32xf32, #tpu.memory_space<vmem>>, vector<64x32xf32>
    %cst_29 = arith.constant dense<0.000000e+00> : vector<256x32xf32>
    %20 = tpu.matmul %18, %19, %cst_29 {dimension_numbers = #tpu.dot_dimension_numbers<[1], [0], [0], [1], [0, 0, 1, 1], [], []>} : vector<256x64xf32>, vector<64x32xf32>, vector<256x32xf32> -> vector<256x32xf32>
    %21 = arith.addf %16, %20 : vector<256x32xf32>
    %c0_30 = arith.constant 0 : index
    %c0_31 = arith.constant 0 : index
    %22 = vector.load %arg3[%c0_30, %c0_31] : memref<1x32xf32, #tpu.memory_space<vmem>>, vector<1x32xf32>
    %23 = vector.broadcast %22 : vector<1x32xf32> to vector<256x32xf32>
    %24 = arith.addf %21, %23 : vector<256x32xf32>
    %cst_32 = arith.constant 0.000000e+00 : f32
    %25 = vector.broadcast %cst_32 : f32 to vector<256x32xf32>
    %26 = arith.cmpf ogt, %24, %25 : vector<256x32xf32>
    %cst_33 = arith.constant 2.000000e-01 : f32
    %27 = vector.broadcast %cst_33 : f32 to vector<256x32xf32>
    %28 = arith.mulf %27, %24 : vector<256x32xf32>
    %29 = arith.select %26, %24, %28 : vector<256x32xi1>, vector<256x32xf32>
    %30 = vector.shape_cast %29 : vector<256x32xf32> to vector<4x64x32xf32>
    %c0_34 = arith.constant 0 : index
    %c8_35 = arith.constant 8 : index
    %c64_36 = arith.constant 64 : index
    %31 = vector.load %arg17[%c0_34, %c8_35, %c64_36] : memref<4x80x192xf32, #tpu.memory_space<vmem>>, vector<4x64x32xf32>
    tpu.vector_store %arg17[%c0_34, %c8_35, %c64_36], %30 {strides = array<i32>} : memref<4x80x192xf32, #tpu.memory_space<vmem>>, vector<4x64x32xf32>,
    %c0_37 = arith.constant 0 : index
    %c6 = arith.constant 6 : index
    %c0_38 = arith.constant 0 : index
    %32 = vector.load %arg17[%c0_37, %c6, %c0_38] : memref<4x80x192xf32, #tpu.memory_space<vmem>>, vector<4x64x96xf32>
    %33 = vector.shape_cast %32 : vector<4x64x96xf32> to vector<256x96xf32>
    %c0_39 = arith.constant 0 : index
    %c0_40 = arith.constant 0 : index
    %34 = vector.load %arg4[%c0_39, %c0_40] : memref<288x32xf32, #tpu.memory_space<vmem>>, vector<96x32xf32>
    %cst_41 = arith.constant dense<0.000000e+00> : vector<256x32xf32>
    %35 = tpu.matmul %33, %34, %cst_41 {dimension_numbers = #tpu.dot_dimension_numbers<[1], [0], [0], [1], [0, 0, 1, 1], [], []>} : vector<256x96xf32>, vector<96x32xf32>, vector<256x32xf32> -> vector<256x32xf32>
    %c0_42 = arith.constant 0 : index
    %c8_43 = arith.constant 8 : index
    %c0_44 = arith.constant 0 : index
    %36 = vector.load %arg17[%c0_42, %c8_43, %c0_44] : memref<4x80x192xf32, #tpu.memory_space<vmem>>, vector<4x64x96xf32>
    %37 = vector.shape_cast %36 : vector<4x64x96xf32> to vector<256x96xf32>
    %c96 = arith.constant 96 : index
    %c0_45 = arith.constant 0 : index
    %38 = vector.load %arg4[%c96, %c0_45] : memref<288x32xf32, #tpu.memory_space<vmem>>, vector<96x32xf32>
    %cst_46 = arith.constant dense<0.000000e+00> : vector<256x32xf32>
    %39 = tpu.matmul %37, %38, %cst_46 {dimension_numbers = #tpu.dot_dimension_numbers<[1], [0], [0], [1], [0, 0, 1, 1], [], []>} : vector<256x96xf32>, vector<96x32xf32>, vector<256x32xf32> -> vector<256x32xf32>
    %40 = arith.addf %35, %39 : vector<256x32xf32>
    %c0_47 = arith.constant 0 : index
    %c10 = arith.constant 10 : index
    %c0_48 = arith.constant 0 : index
    %41 = vector.load %arg17[%c0_47, %c10, %c0_48] : memref<4x80x192xf32, #tpu.memory_space<vmem>>, vector<4x64x96xf32>
    %42 = vector.shape_cast %41 : vector<4x64x96xf32> to vector<256x96xf32>
    %c192 = arith.constant 192 : index
    %c0_49 = arith.constant 0 : index
    %43 = vector.load %arg4[%c192, %c0_49] : memref<288x32xf32, #tpu.memory_space<vmem>>, vector<96x32xf32>
    %cst_50 = arith.constant dense<0.000000e+00> : vector<256x32xf32>
    %44 = tpu.matmul %42, %43, %cst_50 {dimension_numbers = #tpu.dot_dimension_numbers<[1], [0], [0], [1], [0, 0, 1, 1], [], []>} : vector<256x96xf32>, vector<96x32xf32>, vector<256x32xf32> -> vector<256x32xf32>
    %45 = arith.addf %40, %44 : vector<256x32xf32>
    %c0_51 = arith.constant 0 : index
    %c0_52 = arith.constant 0 : index
    %46 = vector.load %arg5[%c0_51, %c0_52] : memref<1x32xf32, #tpu.memory_space<vmem>>, vector<1x32xf32>
    %47 = vector.broadcast %46 : vector<1x32xf32> to vector<256x32xf32>
    %48 = arith.addf %45, %47 : vector<256x32xf32>
    %cst_53 = arith.constant 0.000000e+00 : f32
    %49 = vector.broadcast %cst_53 : f32 to vector<256x32xf32>
    %50 = arith.cmpf ogt, %48, %49 : vector<256x32xf32>
    %cst_54 = arith.constant 2.000000e-01 : f32
    %51 = vector.broadcast %cst_54 : f32 to vector<256x32xf32>
    %52 = arith.mulf %51, %48 : vector<256x32xf32>
    %53 = arith.select %50, %48, %52 : vector<256x32xi1>, vector<256x32xf32>
    %54 = vector.shape_cast %53 : vector<256x32xf32> to vector<4x64x32xf32>
    %c0_55 = arith.constant 0 : index
    %c8_56 = arith.constant 8 : index
    %c96_57 = arith.constant 96 : index
    %55 = vector.load %arg17[%c0_55, %c8_56, %c96_57] : memref<4x80x192xf32, #tpu.memory_space<vmem>>, vector<4x64x32xf32>
    tpu.vector_store %arg17[%c0_55, %c8_56, %c96_57], %54 {strides = array<i32>} : memref<4x80x192xf32, #tpu.memory_space<vmem>>, vector<4x64x32xf32>,
    %c0_58 = arith.constant 0 : index
    %c4 = arith.constant 4 : index
    %c0_59 = arith.constant 0 : index
    %56 = vector.load %arg17[%c0_58, %c4, %c0_59] : memref<4x80x192xf32, #tpu.memory_space<vmem>>, vector<4x64x128xf32>
    %57 = vector.shape_cast %56 : vector<4x64x128xf32> to vector<256x128xf32>
    %c0_60 = arith.constant 0 : index
    %c0_61 = arith.constant 0 : index
    %58 = vector.load %arg6[%c0_60, %c0_61] : memref<384x32xf32, #tpu.memory_space<vmem>>, vector<128x32xf32>
    %cst_62 = arith.constant dense<0.000000e+00> : vector<256x32xf32>
    %59 = tpu.matmul %57, %58, %cst_62 {dimension_numbers = #tpu.dot_dimension_numbers<[1], [0], [0], [1], [0, 0, 1, 1], [], []>} : vector<256x128xf32>, vector<128x32xf32>, vector<256x32xf32> -> vector<256x32xf32>
    %c0_63 = arith.constant 0 : index
    %c8_64 = arith.constant 8 : index
    %c0_65 = arith.constant 0 : index
    %60 = vector.load %arg17[%c0_63, %c8_64, %c0_65] : memref<4x80x192xf32, #tpu.memory_space<vmem>>, vector<4x64x128xf32>
    %61 = vector.shape_cast %60 : vector<4x64x128xf32> to vector<256x128xf32>
    %c128_66 = arith.constant 128 : index
    %c0_67 = arith.constant 0 : index
    %62 = vector.load %arg6[%c128_66, %c0_67] : memref<384x32xf32, #tpu.memory_space<vmem>>, vector<128x32xf32>
    %cst_68 = arith.constant dense<0.000000e+00> : vector<256x32xf32>
    %63 = tpu.matmul %61, %62, %cst_68 {dimension_numbers = #tpu.dot_dimension_numbers<[1], [0], [0], [1], [0, 0, 1, 1], [], []>} : vector<256x128xf32>, vector<128x32xf32>, vector<256x32xf32> -> vector<256x32xf32>
    %64 = arith.addf %59, %63 : vector<256x32xf32>
    %c0_69 = arith.constant 0 : index
    %c12 = arith.constant 12 : index
    %c0_70 = arith.constant 0 : index
    %65 = vector.load %arg17[%c0_69, %c12, %c0_70] : memref<4x80x192xf32, #tpu.memory_space<vmem>>, vector<4x64x128xf32>
    %66 = vector.shape_cast %65 : vector<4x64x128xf32> to vector<256x128xf32>
    %c256 = arith.constant 256 : index
    %c0_71 = arith.constant 0 : index
    %67 = vector.load %arg6[%c256, %c0_71] : memref<384x32xf32, #tpu.memory_space<vmem>>, vector<128x32xf32>
    %cst_72 = arith.constant dense<0.000000e+00> : vector<256x32xf32>
    %68 = tpu.matmul %66, %67, %cst_72 {dimension_numbers = #tpu.dot_dimension_numbers<[1], [0], [0], [1], [0, 0, 1, 1], [], []>} : vector<256x128xf32>, vector<128x32xf32>, vector<256x32xf32> -> vector<256x32xf32>
    %69 = arith.addf %64, %68 : vector<256x32xf32>
    %c0_73 = arith.constant 0 : index
    %c0_74 = arith.constant 0 : index
    %70 = vector.load %arg7[%c0_73, %c0_74] : memref<1x32xf32, #tpu.memory_space<vmem>>, vector<1x32xf32>
    %71 = vector.broadcast %70 : vector<1x32xf32> to vector<256x32xf32>
    %72 = arith.addf %69, %71 : vector<256x32xf32>
    %cst_75 = arith.constant 0.000000e+00 : f32
    %73 = vector.broadcast %cst_75 : f32 to vector<256x32xf32>
    %74 = arith.cmpf ogt, %72, %73 : vector<256x32xf32>
    %cst_76 = arith.constant 2.000000e-01 : f32
    %75 = vector.broadcast %cst_76 : f32 to vector<256x32xf32>
    %76 = arith.mulf %75, %72 : vector<256x32xf32>
    %77 = arith.select %74, %72, %76 : vector<256x32xi1>, vector<256x32xf32>
    %78 = vector.shape_cast %77 : vector<256x32xf32> to vector<4x64x32xf32>
    %c0_77 = arith.constant 0 : index
    %c8_78 = arith.constant 8 : index
    %c128_79 = arith.constant 128 : index
    %79 = vector.load %arg17[%c0_77, %c8_78, %c128_79] : memref<4x80x192xf32, #tpu.memory_space<vmem>>, vector<4x64x32xf32>
    tpu.vector_store %arg17[%c0_77, %c8_78, %c128_79], %78 {strides = array<i32>} : memref<4x80x192xf32, #tpu.memory_space<vmem>>, vector<4x64x32xf32>,
    %c0_80 = arith.constant 0 : index
    %c0_81 = arith.constant 0 : index
    %c0_82 = arith.constant 0 : index
    %80 = vector.load %arg17[%c0_80, %c0_81, %c0_82] : memref<4x80x192xf32, #tpu.memory_space<vmem>>, vector<4x64x160xf32>
    %81 = vector.shape_cast %80 : vector<4x64x160xf32> to vector<256x160xf32>
    %c0_83 = arith.constant 0 : index
    %c0_84 = arith.constant 0 : index
    %82 = vector.load %arg8[%c0_83, %c0_84] : memref<480x32xf32, #tpu.memory_space<vmem>>, vector<160x32xf32>
    %cst_85 = arith.constant dense<0.000000e+00> : vector<256x32xf32>
    %83 = tpu.matmul %81, %82, %cst_85 {dimension_numbers = #tpu.dot_dimension_numbers<[1], [0], [0], [1], [0, 0, 1, 1], [], []>} : vector<256x160xf32>, vector<160x32xf32>, vector<256x32xf32> -> vector<256x32xf32>
    %c0_86 = arith.constant 0 : index
    %c8_87 = arith.constant 8 : index
    %c0_88 = arith.constant 0 : index
    %84 = vector.load %arg17[%c0_86, %c8_87, %c0_88] : memref<4x80x192xf32, #tpu.memory_space<vmem>>, vector<4x64x160xf32>
    %85 = vector.shape_cast %84 : vector<4x64x160xf32> to vector<256x160xf32>
    %c160 = arith.constant 160 : index
    %c0_89 = arith.constant 0 : index
    %86 = vector.load %arg8[%c160, %c0_89] : memref<480x32xf32, #tpu.memory_space<vmem>>, vector<160x32xf32>
    %cst_90 = arith.constant dense<0.000000e+00> : vector<256x32xf32>
    %87 = tpu.matmul %85, %86, %cst_90 {dimension_numbers = #tpu.dot_dimension_numbers<[1], [0], [0], [1], [0, 0, 1, 1], [], []>} : vector<256x160xf32>, vector<160x32xf32>, vector<256x32xf32> -> vector<256x32xf32>
    %88 = arith.addf %83, %87 : vector<256x32xf32>
    %c0_91 = arith.constant 0 : index
    %c16 = arith.constant 16 : index
    %c0_92 = arith.constant 0 : index
    %89 = vector.load %arg17[%c0_91, %c16, %c0_92] : memref<4x80x192xf32, #tpu.memory_space<vmem>>, vector<4x64x160xf32>
    %90 = vector.shape_cast %89 : vector<4x64x160xf32> to vector<256x160xf32>
    %c320 = arith.constant 320 : index
    %c0_93 = arith.constant 0 : index
    %91 = vector.load %arg8[%c320, %c0_93] : memref<480x32xf32, #tpu.memory_space<vmem>>, vector<160x32xf32>
    %cst_94 = arith.constant dense<0.000000e+00> : vector<256x32xf32>
    %92 = tpu.matmul %90, %91, %cst_94 {dimension_numbers = #tpu.dot_dimension_numbers<[1], [0], [0], [1], [0, 0, 1, 1], [], []>} : vector<256x160xf32>, vector<160x32xf32>, vector<256x32xf32> -> vector<256x32xf32>
    %93 = arith.addf %88, %92 : vector<256x32xf32>
    %c0_95 = arith.constant 0 : index
    %c0_96 = arith.constant 0 : index
    %94 = vector.load %arg9[%c0_95, %c0_96] : memref<1x32xf32, #tpu.memory_space<vmem>>, vector<1x32xf32>
    %95 = vector.broadcast %94 : vector<1x32xf32> to vector<256x32xf32>
    %96 = arith.addf %93, %95 : vector<256x32xf32>
    %cst_97 = arith.constant 0.000000e+00 : f32
    %97 = vector.broadcast %cst_97 : f32 to vector<256x32xf32>
    %98 = arith.cmpf ogt, %96, %97 : vector<256x32xf32>
    %cst_98 = arith.constant 2.000000e-01 : f32
    %99 = vector.broadcast %cst_98 : f32 to vector<256x32xf32>
    %100 = arith.mulf %99, %96 : vector<256x32xf32>
    %101 = arith.select %98, %96, %100 : vector<256x32xi1>, vector<256x32xf32>
    %102 = vector.shape_cast %101 : vector<256x32xf32> to vector<4x64x32xf32>
    %c0_99 = arith.constant 0 : index
    %c8_100 = arith.constant 8 : index
    %c160_101 = arith.constant 160 : index
    %103 = vector.load %arg17[%c0_99, %c8_100, %c160_101] : memref<4x80x192xf32, #tpu.memory_space<vmem>>, vector<4x64x32xf32>
    tpu.vector_store %arg17[%c0_99, %c8_100, %c160_101], %102 {strides = array<i32>} : memref<4x80x192xf32, #tpu.memory_space<vmem>>, vector<4x64x32xf32>,
    %c0_102 = arith.constant 0 : index
    %c8_103 = arith.constant 8 : index
    %c0_104 = arith.constant 0 : index
    %104 = vector.load %arg17[%c0_102, %c8_103, %c0_104] : memref<4x80x192xf32, #tpu.memory_space<vmem>>, vector<4x64x192xf32>
    %105 = vector.shape_cast %104 : vector<4x64x192xf32> to vector<256x192xf32>
    %c0_105 = arith.constant 0 : index
    %c0_106 = arith.constant 0 : index
    %106 = vector.load %arg10[%c0_105, %c0_106] : memref<192x64xf32, #tpu.memory_space<vmem>>, vector<192x64xf32>
    %cst_107 = arith.constant dense<0.000000e+00> : vector<256x64xf32>
    %107 = tpu.matmul %105, %106, %cst_107 {dimension_numbers = #tpu.dot_dimension_numbers<[1], [0], [0], [1], [0, 0, 1, 1], [], []>} : vector<256x192xf32>, vector<192x64xf32>, vector<256x64xf32> -> vector<256x64xf32>
    %c0_108 = arith.constant 0 : index
    %c0_109 = arith.constant 0 : index
    %108 = vector.load %arg11[%c0_108, %c0_109] : memref<1x64xf32, #tpu.memory_space<vmem>>, vector<1x64xf32>
    %109 = vector.broadcast %108 : vector<1x64xf32> to vector<256x64xf32>
    %110 = arith.addf %107, %109 : vector<256x64xf32>
    %111 = vector.shape_cast %110 : vector<256x64xf32> to vector<4x64x64xf32>
    %c0_110 = arith.constant 0 : index
    %c8_111 = arith.constant 8 : index
    %c0_112 = arith.constant 0 : index
    %112 = vector.load %arg18[%c0_110, %c8_111, %c0_112] : memref<4x80x64xf32, #tpu.memory_space<vmem>>, vector<4x64x64xf32>
    tpu.vector_store %arg18[%c0_110, %c8_111, %c0_112], %111 {strides = array<i32>} : memref<4x80x64xf32, #tpu.memory_space<vmem>>, vector<4x64x64xf32>,
    %c0_113 = arith.constant 0 : index
    %c4_114 = arith.constant 4 : index
    %c0_115 = arith.constant 0 : index
    %113 = tpu.strided_load %arg18[%c0_113, %c4_114, %c0_115] {strides = array<i32: 1, 8, 1>} : memref<4x80x64xf32, #tpu.memory_space<vmem>>, vector<4x8x64xf32>
    %c0_116 = arith.constant 0 : index
    %c5 = arith.constant 5 : index
    %c0_117 = arith.constant 0 : index
    %114 = tpu.strided_load %arg18[%c0_116, %c5, %c0_117] {strides = array<i32: 1, 8, 1>} : memref<4x80x64xf32, #tpu.memory_space<vmem>>, vector<4x8x64xf32>
    %c0_118 = arith.constant 0 : index
    %c6_119 = arith.constant 6 : index
    %c0_120 = arith.constant 0 : index
    %115 = tpu.strided_load %arg18[%c0_118, %c6_119, %c0_120] {strides = array<i32: 1, 8, 1>} : memref<4x80x64xf32, #tpu.memory_space<vmem>>, vector<4x8x64xf32>
    %c0_121 = arith.constant 0 : index
    %c7_122 = arith.constant 7 : index
    %c0_123 = arith.constant 0 : index
    %116 = tpu.strided_load %arg18[%c0_121, %c7_122, %c0_123] {strides = array<i32: 1, 8, 1>} : memref<4x80x64xf32, #tpu.memory_space<vmem>>, vector<4x8x64xf32>
    %c0_124 = arith.constant 0 : index
    %c8_125 = arith.constant 8 : index
    %c0_126 = arith.constant 0 : index
    %117 = tpu.strided_load %arg18[%c0_124, %c8_125, %c0_126] {strides = array<i32: 1, 8, 1>} : memref<4x80x64xf32, #tpu.memory_space<vmem>>, vector<4x8x64xf32>
    %c0_127 = arith.constant 0 : index
    %c9_128 = arith.constant 9 : index
    %c0_129 = arith.constant 0 : index
    %118 = tpu.strided_load %arg18[%c0_127, %c9_128, %c0_129] {strides = array<i32: 1, 8, 1>} : memref<4x80x64xf32, #tpu.memory_space<vmem>>, vector<4x8x64xf32>
    %c0_130 = arith.constant 0 : index
    %c10_131 = arith.constant 10 : index
    %c0_132 = arith.constant 0 : index
    %119 = tpu.strided_load %arg18[%c0_130, %c10_131, %c0_132] {strides = array<i32: 1, 8, 1>} : memref<4x80x64xf32, #tpu.memory_space<vmem>>, vector<4x8x64xf32>
    %c0_133 = arith.constant 0 : index
    %c11 = arith.constant 11 : index
    %c0_134 = arith.constant 0 : index
    %120 = tpu.strided_load %arg18[%c0_133, %c11, %c0_134] {strides = array<i32: 1, 8, 1>} : memref<4x80x64xf32, #tpu.memory_space<vmem>>, vector<4x8x64xf32>
    %c0_135 = arith.constant 0 : index
    %c12_136 = arith.constant 12 : index
    %c0_137 = arith.constant 0 : index
    %121 = tpu.strided_load %arg18[%c0_135, %c12_136, %c0_137] {strides = array<i32: 1, 8, 1>} : memref<4x80x64xf32, #tpu.memory_space<vmem>>, vector<4x8x64xf32>
    %c0_138 = arith.constant 0 : index
    %c13 = arith.constant 13 : index
    %c0_139 = arith.constant 0 : index
    %122 = tpu.strided_load %arg18[%c0_138, %c13, %c0_139] {strides = array<i32: 1, 8, 1>} : memref<4x80x64xf32, #tpu.memory_space<vmem>>, vector<4x8x64xf32>
    %c0_140 = arith.constant 0 : index
    %c14 = arith.constant 14 : index
    %c0_141 = arith.constant 0 : index
    %123 = tpu.strided_load %arg18[%c0_140, %c14, %c0_141] {strides = array<i32: 1, 8, 1>} : memref<4x80x64xf32, #tpu.memory_space<vmem>>, vector<4x8x64xf32>
    %c0_142 = arith.constant 0 : index
    %c15 = arith.constant 15 : index
    %c0_143 = arith.constant 0 : index
    %124 = tpu.strided_load %arg18[%c0_142, %c15, %c0_143] {strides = array<i32: 1, 8, 1>} : memref<4x80x64xf32, #tpu.memory_space<vmem>>, vector<4x8x64xf32>
    %c0_144 = arith.constant 0 : index
    %c16_145 = arith.constant 16 : index
    %c0_146 = arith.constant 0 : index
    %125 = tpu.strided_load %arg18[%c0_144, %c16_145, %c0_146] {strides = array<i32: 1, 8, 1>} : memref<4x80x64xf32, #tpu.memory_space<vmem>>, vector<4x8x64xf32>
    %c0_147 = arith.constant 0 : index
    %c17 = arith.constant 17 : index
    %c0_148 = arith.constant 0 : index
    %126 = tpu.strided_load %arg18[%c0_147, %c17, %c0_148] {strides = array<i32: 1, 8, 1>} : memref<4x80x64xf32, #tpu.memory_space<vmem>>, vector<4x8x64xf32>
    %c0_149 = arith.constant 0 : index
    %c18 = arith.constant 18 : index
    %c0_150 = arith.constant 0 : index
    %127 = tpu.strided_load %arg18[%c0_149, %c18, %c0_150] {strides = array<i32: 1, 8, 1>} : memref<4x80x64xf32, #tpu.memory_space<vmem>>, vector<4x8x64xf32>
    %c0_151 = arith.constant 0 : index
    %c19 = arith.constant 19 : index
    %c0_152 = arith.constant 0 : index
    %128 = tpu.strided_load %arg18[%c0_151, %c19, %c0_152] {strides = array<i32: 1, 8, 1>} : memref<4x80x64xf32, #tpu.memory_space<vmem>>, vector<4x8x64xf32>
    %129 = tpu.concatenate %113, %114, %115, %116, %117, %118, %119, %120, %121, %122, %123, %124, %125, %126, %127, %128 in 2 : vector<4x8x64xf32>, vector<4x8x64xf32>, vector<4x8x64xf32>, vector<4x8x64xf32>, vector<4x8x64xf32>, vector<4x8x64xf32>, vector<4x8x64xf32>, vector<4x8x64xf32>, vector<4x8x64xf32>, vector<4x8x64xf32>, vector<4x8x64xf32>, vector<4x8x64xf32>, vector<4x8x64xf32>, vector<4x8x64xf32>, vector<4x8x64xf32>, vector<4x8x64xf32> -> vector<4x8x1024xf32>
    %130 = vector.shape_cast %129 : vector<4x8x1024xf32> to vector<32x1024xf32>
    %c0_153 = arith.constant 0 : index
    %c0_154 = arith.constant 0 : index
    %131 = vector.load %arg12[%c0_153, %c0_154] : memref<1024x64xf32, #tpu.memory_space<vmem>>, vector<1024x64xf32>
    %cst_155 = arith.constant dense<0.000000e+00> : vector<32x64xf32>
    %132 = tpu.matmul %130, %131, %cst_155 {dimension_numbers = #tpu.dot_dimension_numbers<[1], [0], [0], [1], [0, 0, 1, 1], [], []>} : vector<32x1024xf32>, vector<1024x64xf32>, vector<32x64xf32> -> vector<32x64xf32>
    %c0_156 = arith.constant 0 : index
    %c0_157 = arith.constant 0 : index
    %133 = vector.load %arg13[%c0_156, %c0_157] : memref<1x64xf32, #tpu.memory_space<vmem>>, vector<1x64xf32>
    %134 = vector.broadcast %133 : vector<1x64xf32> to vector<32x64xf32>
    %135 = arith.addf %132, %134 : vector<32x64xf32>
    %136 = vector.shape_cast %135 : vector<32x64xf32> to vector<4x8x64xf32>
    %cst_158 = arith.constant dense<0.000000e+00> : vector<4x64xf32>
    %137 = vector.multi_reduction <add>, %136, %cst_158 [1] : vector<4x8x64xf32> to vector<4x64xf32>
    %138 = vector.shape_cast %137 : vector<4x64xf32> to vector<4x1x64xf32>
    %cst_159 = arith.constant 8.000000e+00 : f32
    %139 = vector.broadcast %cst_159 : f32 to vector<4x1x64xf32>
    %140 = arith.divf %138, %139 : vector<4x1x64xf32>
    %141 = vector.broadcast %140 : vector<4x1x64xf32> to vector<4x8x64xf32>
    %142 = arith.subf %136, %141 : vector<4x8x64xf32>
    %143 = arith.mulf %142, %142 : vector<4x8x64xf32>
    %cst_160 = arith.constant dense<0.000000e+00> : vector<4x64xf32>
    %144 = vector.multi_reduction <add>, %143, %cst_160 [1] : vector<4x8x64xf32> to vector<4x64xf32>
    %145 = vector.shape_cast %144 : vector<4x64xf32> to vector<4x1x64xf32>
    %cst_161 = arith.constant 7.000000e+00 : f32
    %146 = vector.broadcast %cst_161 : f32 to vector<4x1x64xf32>
    %147 = arith.divf %145, %146 : vector<4x1x64xf32>
    %148 = math.sqrt %147 : vector<4x1x64xf32>
    %cst_162 = arith.constant 9.99999993E-9 : f32
    %149 = vector.broadcast %cst_162 : f32 to vector<4x1x64xf32>
    %150 = arith.addf %148, %149 : vector<4x1x64xf32>
    %151 = tpu.reciprocal %150 {approx = true} : vector<4x1x64xf32> -> vector<4x1x64xf32>
    %152 = arith.mulf %150, %151 : vector<4x1x64xf32>
    %cst_163 = arith.constant 2.000000e+00 : f32
    %153 = vector.broadcast %cst_163 : f32 to vector<4x1x64xf32>
    %154 = arith.subf %153, %152 : vector<4x1x64xf32>
    %155 = arith.mulf %151, %154 : vector<4x1x64xf32>
    %c0_164 = arith.constant 0 : index
    %c0_165 = arith.constant 0 : index
    %156 = vector.load %arg14[%c0_164, %c0_165] : memref<1x64xf32, #tpu.memory_space<vmem>>, vector<1x64xf32>
    %157 = vector.shape_cast %156 : vector<1x64xf32> to vector<1x1x64xf32>
    %c0_166 = arith.constant 0 : index
    %c0_167 = arith.constant 0 : index
    %158 = vector.load %arg15[%c0_166, %c0_167] : memref<1x64xf32, #tpu.memory_space<vmem>>, vector<1x64xf32>
    %159 = vector.shape_cast %158 : vector<1x64xf32> to vector<1x1x64xf32>
    %160 = vector.broadcast %140 : vector<4x1x64xf32> to vector<4x8x64xf32>
    %161 = arith.subf %136, %160 : vector<4x8x64xf32>
    %162 = vector.broadcast %157 : vector<1x1x64xf32> to vector<4x8x64xf32>
    %163 = arith.mulf %162, %161 : vector<4x8x64xf32>
    %164 = vector.broadcast %155 : vector<4x1x64xf32> to vector<4x8x64xf32>
    %165 = arith.mulf %163, %164 : vector<4x8x64xf32>
    %166 = vector.broadcast %159 : vector<1x1x64xf32> to vector<4x8x64xf32>
    %167 = arith.addf %165, %166 : vector<4x8x64xf32>
    %cst_168 = arith.constant 0.000000e+00 : f32
    %168 = vector.broadcast %cst_168 : f32 to vector<4x8x64xf32>
    %169 = arith.cmpf ogt, %167, %168 : vector<4x8x64xf32>
    %cst_169 = arith.constant 2.000000e-01 : f32
    %170 = vector.broadcast %cst_169 : f32 to vector<4x8x64xf32>
    %171 = arith.mulf %170, %167 : vector<4x8x64xf32>
    %172 = arith.select %169, %167, %171 : vector<4x8x64xi1>, vector<4x8x64xf32>
    %c0_170 = arith.constant 0 : index
    %c0_171 = arith.constant 0 : index
    %c0_172 = arith.constant 0 : index
    %173 = vector.load %arg16[%c0_170, %c0_171, %c0_172] : memref<4x8x64xf32, #tpu.memory_space<vmem>>, vector<4x8x64xf32>
    tpu.vector_store %arg16[%c0_170, %c0_171, %c0_172], %172 {strides = array<i32>} : memref<4x8x64xf32, #tpu.memory_space<vmem>>, vector<4x8x64xf32>,
    return
  }
  func.func @transform_0(%arg0: i32) -> (i32, i32, i32) {
    %c0_i32 = arith.constant 0 : i32
    %c0_i32_0 = arith.constant 0 : i32
    %c0_i32_1 = arith.constant 0 : i32
    return %arg0, %c0_i32, %c0_i32_0 : i32, i32, i32
  }
  func.func @transform_1(%arg0: i32) -> (i32, i32) {
    %c0_i32 = arith.constant 0 : i32
    %c0_i32_0 = arith.constant 0 : i32
    %c0_i32_1 = arith.constant 0 : i32
    return %c0_i32, %c0_i32_0 : i32, i32
  }
  func.func @transform_2(%arg0: i32) -> (i32, i32) {
    %c0_i32 = arith.constant 0 : i32
    %c0_i32_0 = arith.constant 0 : i32
    %c0_i32_1 = arith.constant 0 : i32
    return %c0_i32, %c0_i32_0 : i32, i32
  }
  func.func @transform_3(%arg0: i32) -> (i32, i32) {
    %c0_i32 = arith.constant 0 : i32
    %c0_i32_0 = arith.constant 0 : i32
    %c0_i32_1 = arith.constant 0 : i32
    return %c0_i32, %c0_i32_0 : i32, i32
  }
  func.func @transform_4(%arg0: i32) -> (i32, i32) {
    %c0_i32 = arith.constant 0 : i32
    %c0_i32_0 = arith.constant 0 : i32
    %c0_i32_1 = arith.constant 0 : i32
    return %c0_i32, %c0_i32_0 : i32, i32
  }
  func.func @transform_5(%arg0: i32) -> (i32, i32) {
    %c0_i32 = arith.constant 0 : i32
    %c0_i32_0 = arith.constant 0 : i32
    %c0_i32_1 = arith.constant 0 : i32
    return %c0_i32, %c0_i32_0 : i32, i32
  }
  func.func @transform_6(%arg0: i32) -> (i32, i32) {
    %c0_i32 = arith.constant 0 : i32
    %c0_i32_0 = arith.constant 0 : i32
    %c0_i32_1 = arith.constant 0 : i32
    return %c0_i32, %c0_i32_0 : i32, i32
  }
  func.func @transform_7(%arg0: i32) -> (i32, i32) {
    %c0_i32 = arith.constant 0 : i32
    %c0_i32_0 = arith.constant 0 : i32
    %c0_i32_1 = arith.constant 0 : i32
    return %c0_i32, %c0_i32_0 : i32, i32
  }
  func.func @transform_8(%arg0: i32) -> (i32, i32) {
    %c0_i32 = arith.constant 0 : i32
    %c0_i32_0 = arith.constant 0 : i32
    %c0_i32_1 = arith.constant 0 : i32
    return %c0_i32, %c0_i32_0 : i32, i32
  }
  func.func @transform_9(%arg0: i32) -> (i32, i32) {
    %c0_i32 = arith.constant 0 : i32
    %c0_i32_0 = arith.constant 0 : i32
    %c0_i32_1 = arith.constant 0 : i32
    return %c0_i32, %c0_i32_0 : i32, i32
  }
  func.func @transform_10(%arg0: i32) -> (i32, i32) {
    %c0_i32 = arith.constant 0 : i32
    %c0_i32_0 = arith.constant 0 : i32
    %c0_i32_1 = arith.constant 0 : i32
    return %c0_i32, %c0_i32_0 : i32, i32
  }
  func.func @transform_11(%arg0: i32) -> (i32, i32) {
    %c0_i32 = arith.constant 0 : i32
    %c0_i32_0 = arith.constant 0 : i32
    %c0_i32_1 = arith.constant 0 : i32
    return %c0_i32, %c0_i32_0 : i32, i32
  }
  func.func @transform_12(%arg0: i32) -> (i32, i32) {
    %c0_i32 = arith.constant 0 : i32
    %c0_i32_0 = arith.constant 0 : i32
    %c0_i32_1 = arith.constant 0 : i32
    return %c0_i32, %c0_i32_0 : i32, i32
  }
  func.func @transform_13(%arg0: i32) -> (i32, i32) {
    %c0_i32 = arith.constant 0 : i32
    %c0_i32_0 = arith.constant 0 : i32
    %c0_i32_1 = arith.constant 0 : i32
    return %c0_i32, %c0_i32_0 : i32, i32
  }
  func.func @transform_14(%arg0: i32) -> (i32, i32) {
    %c0_i32 = arith.constant 0 : i32
    %c0_i32_0 = arith.constant 0 : i32
    %c0_i32_1 = arith.constant 0 : i32
    return %c0_i32, %c0_i32_0 : i32, i32
  }
  func.func @transform_15(%arg0: i32) -> (i32, i32, i32) {
    %c0_i32 = arith.constant 0 : i32
    %c0_i32_0 = arith.constant 0 : i32
    %c0_i32_1 = arith.constant 0 : i32
    return %arg0, %c0_i32, %c0_i32_0 : i32, i32, i32
  }
}

</mosaic_0001>

<llo_original>
// kernel: tpu_custom_call.1
$region0: #{tpu_custom_call.1}
  #allocation0 [shape = 'u32[]', space=smem, size = 0x4, offset = 0x4, fixed_abs, tag = 'smem constant byte address 0x4 - core index']
  #allocation1 [shape = 'u32[144,128]{1,0:T(1,128)}', space=vmem, size = 0x12000, scoped, tag = 'internal scratch']
  #allocation2 [shape = 'f32[4,80,192]{2,1,0:T(8,128)}', space=vmem, size = 0x50000, scoped, tag = 'scratch operand']
  #allocation3 [shape = 'f32[4,80,64]{2,1,0:T(8,128)}', space=vmem, size = 0x28000, scoped, tag = 'scratch operand']
  %s0 = inlined_call_operand.vmem [shape: f32[8,64,64], index: 0, kind: input, shape index: {}]
  %s1 = inlined_call_operand.vmem [shape: f32[192,32], index: 1, kind: input, shape index: {}]
  %s2 = inlined_call_operand.vmem [shape: f32[1,32], index: 2, kind: input, shape index: {}]
  %s3 = inlined_call_operand.vmem [shape: f32[288,32], index: 3, kind: input, shape index: {}]
  %s4 = inlined_call_operand.vmem [shape: f32[1,32], index: 4, kind: input, shape index: {}]
  %s5 = inlined_call_operand.vmem [shape: f32[384,32], index: 5, kind: input, shape index: {}]
  %s6 = inlined_call_operand.vmem [shape: f32[1,32], index: 6, kind: input, shape index: {}]
  %s7 = inlined_call_operand.vmem [shape: f32[480,32], index: 7, kind: input, shape index: {}]
  %s8 = inlined_call_operand.vmem [shape: f32[1,32], index: 8, kind: input, shape index: {}]
  %s9 = inlined_call_operand.vmem [shape: f32[192,64], index: 9, kind: input, shape index: {}]
  %s10 = inlined_call_operand.vmem [shape: f32[1,64], index: 10, kind: input, shape index: {}]
  %s11 = inlined_call_operand.vmem [shape: f32[1024,64], index: 11, kind: input, shape index: {}]
  %s12 = inlined_call_operand.vmem [shape: f32[1,64], index: 12, kind: input, shape index: {}]
  %s13 = inlined_call_operand.vmem [shape: f32[1,64], index: 13, kind: input, shape index: {}]
  %s14 = inlined_call_operand.vmem [shape: f32[1,64], index: 14, kind: input, shape index: {}]
  %s15 = inlined_call_operand.hbm [shape: f32[8,8,64], index: 15, kind: output, shape index: {}]
  %s16 = sld [smem:[#allocation0]]
  $region93: #{tpu_custom_call.1} parent=0
    _
  %s18 = ssub.s32 1, %s16
  %s19 = scalar_select 0, %s18, %s16
  $region1: #{tpu_custom_call.1} parent=0
    #allocation4 [shape = 'u8[32768]{0}', space=vmem, size = 0x8000, scoped, tag = 'output window, operand 0']
    #allocation5 [shape = 's32[2]{0}', space=sflag, size = 0x8, scoped, tag = 'scoped memory for tpu_custom_call.1']
    %20 = vsyncpa [#allocation5], 0
    %s21 = scalar_lea.sflag [#allocation5], 1
    %22 = vsyncpa %s21, 0
    loop: start=0, step=1, limit=4
    $region2: #{tpu_custom_call.1} parent=1 // loop_pre_header
      _
    $region3: #{tpu_custom_call.1} parent=1 // loop_header
      %s24 = sphi 0, %s28
      %p25 = scmp.ge.s32.totalorder %s24, 4
      %s34 = sphi 0, %s36
      %s37 = sphi 0, %s34
      %s38 = sphi 0, %s37
      %s54 = sphi 0, %s38
      %s58 = sphi 0, %s58
      %s60 = sphi 0, %s58
      %s61 = sphi 0, %s60
      %s75 = sphi 0, %s61
      %s79 = sphi 0, %s79
      %s81 = sphi 0, %s79
      %s82 = sphi 0, %s81
      %s96 = sphi 0, %s82
      %s100 = sphi 0, %s100
      %s102 = sphi 0, %s100
      %s103 = sphi 0, %s102
      %s117 = sphi 0, %s103
      %s121 = sphi 0, %s121
      %s123 = sphi 0, %s121
      %s124 = sphi 0, %s123
      %s138 = sphi 0, %s124
      %s142 = sphi 0, %s142
      %s144 = sphi 0, %s142
      %s145 = sphi 0, %s144
      %s159 = sphi 0, %s145
      %s163 = sphi 0, %s163
      %s165 = sphi 0, %s163
      %s166 = sphi 0, %s165
      %s180 = sphi 0, %s166
      %s184 = sphi 0, %s184
      %s186 = sphi 0, %s184
      %s187 = sphi 0, %s186
      %s201 = sphi 0, %s187
      %s205 = sphi 0, %s205
      %s207 = sphi 0, %s205
      %s208 = sphi 0, %s207
      %s222 = sphi 0, %s208
      %s226 = sphi 0, %s226
      %s228 = sphi 0, %s226
      %s229 = sphi 0, %s228
      %s243 = sphi 0, %s229
      %s247 = sphi 0, %s247
      %s249 = sphi 0, %s247
      %s250 = sphi 0, %s249
      %s264 = sphi 0, %s250
      %s268 = sphi 0, %s268
      %s270 = sphi 0, %s268
      %s271 = sphi 0, %s270
      %s285 = sphi 0, %s271
      %s289 = sphi 0, %s289
      %s291 = sphi 0, %s289
      %s292 = sphi 0, %s291
      %s306 = sphi 0, %s292
      %s310 = sphi 0, %s310
      %s312 = sphi 0, %s310
      %s313 = sphi 0, %s312
      %s327 = sphi 0, %s313
      %s331 = sphi 0, %s331
      %s333 = sphi 0, %s331
      %s334 = sphi 0, %s333
      %s348 = sphi 0, %s334
      %s354 = sphi 0, %s356
      %s357 = sphi 0, %s354
      %s358 = sphi 0, %s357
      %s374 = sphi 0, %s358
    $region4: #{tpu_custom_call.1} parent=1 // loop_header_branch
      %27 = sbr.rel (%p25) target = $region8
    $region5: #{tpu_custom_call.1} parent=1 // loop_body
      %s29 = ssub.s32 %s24, 1
      %s30 = ssub.s32 %s24, 2
      %s31 = sadd.s32 %s24, 1
      %s32 = ssub.s32 %s24, %s31
      %p33 = scmp.eq.s32.totalorder %s32, 0
      %s35 = sadd.s32 %s34, 1
      %s36 = scalar_select %p33, %s34, %s35
      %p39 = pneg %p33
      %p40 = scmp.eq.s32.totalorder %s24, 1
      %p41 = por %p39, %p40
      %p42 = scmp.ne.s32.totalorder %s34, %s37
      %p43 = scmp.eq.s32.totalorder %s24, 0
      %p44 = por %p42, %p43
      %p45 = scmp.ne.s32.totalorder %s34, %s37
      %p46 = scmp.eq.s32.totalorder %s29, 1
      %p47 = por %p45, %p46
      %p48 = scmp.ne.s32.totalorder %s37, %s38
      %p49 = scmp.eq.s32.totalorder %s29, 0
      %p50 = por %p48, %p49
      %p51 = scmp.ne.s32.totalorder %s37, %s38
      %p52 = scmp.eq.s32.totalorder %s30, 1
      %p53 = por %p51, %p52
      %p55 = scmp.ne.s32.totalorder %s38, %s54
      %p56 = scmp.eq.s32.totalorder %s30, 0
      %p57 = por %p55, %p56
      %s59 = sadd.s32 %s58, 1
      %p62 = scmp.eq.s32.totalorder %s24, 1
      %p63 = scmp.ne.s32.totalorder %s58, %s60
      %p64 = scmp.eq.s32.totalorder %s24, 0
      %p65 = por %p63, %p64
      %p66 = scmp.ne.s32.totalorder %s58, %s60
      %p67 = scmp.eq.s32.totalorder %s29, 1
      %p68 = por %p66, %p67
      %p69 = scmp.ne.s32.totalorder %s60, %s61
      %p70 = scmp.eq.s32.totalorder %s29, 0
      %p71 = por %p69, %p70
      %p72 = scmp.ne.s32.totalorder %s60, %s61
      %p73 = scmp.eq.s32.totalorder %s30, 1
      %p74 = por %p72, %p73
      %p76 = scmp.ne.s32.totalorder %s61, %s75
      %p77 = scmp.eq.s32.totalorder %s30, 0
      %p78 = por %p76, %p77
      %s80 = sadd.s32 %s79, 1
      %p83 = scmp.eq.s32.totalorder %s24, 1
      %p84 = scmp.ne.s32.totalorder %s79, %s81
      %p85 = scmp.eq.s32.totalorder %s24, 0
      %p86 = por %p84, %p85
      %p87 = scmp.ne.s32.totalorder %s79, %s81
      %p88 = scmp.eq.s32.totalorder %s29, 1
      %p89 = por %p87, %p88
      %p90 = scmp.ne.s32.totalorder %s81, %s82
      %p91 = scmp.eq.s32.totalorder %s29, 0
      %p92 = por %p90, %p91
      %p93 = scmp.ne.s32.totalorder %s81, %s82
      %p94 = scmp.eq.s32.totalorder %s30, 1
      %p95 = por %p93, %p94
      %p97 = scmp.ne.s32.totalorder %s82, %s96
      %p98 = scmp.eq.s32.totalorder %s30, 0
      %p99 = por %p97, %p98
      %s101 = sadd.s32 %s100, 1
      %p104 = scmp.eq.s32.totalorder %s24, 1
      %p105 = scmp.ne.s32.totalorder %s100, %s102
      %p106 = scmp.eq.s32.totalorder %s24, 0
      %p107 = por %p105, %p106
      %p108 = scmp.ne.s32.totalorder %s100, %s102
      %p109 = scmp.eq.s32.totalorder %s29, 1
      %p110 = por %p108, %p109
      %p111 = scmp.ne.s32.totalorder %s102, %s103
      %p112 = scmp.eq.s32.totalorder %s29, 0
      %p113 = por %p111, %p112
      %p114 = scmp.ne.s32.totalorder %s102, %s103
      %p115 = scmp.eq.s32.totalorder %s30, 1
      %p116 = por %p114, %p115
      %p118 = scmp.ne.s32.totalorder %s103, %s117
      %p119 = scmp.eq.s32.totalorder %s30, 0
      %p120 = por %p118, %p119
      %s122 = sadd.s32 %s121, 1
      %p125 = scmp.eq.s32.totalorder %s24, 1
      %p126 = scmp.ne.s32.totalorder %s121, %s123
      %p127 = scmp.eq.s32.totalorder %s24, 0
      %p128 = por %p126, %p127
      %p129 = scmp.ne.s32.totalorder %s121, %s123
      %p130 = scmp.eq.s32.totalorder %s29, 1
      %p131 = por %p129, %p130
      %p132 = scmp.ne.s32.totalorder %s123, %s124
      %p133 = scmp.eq.s32.totalorder %s29, 0
      %p134 = por %p132, %p133
      %p135 = scmp.ne.s32.totalorder %s123, %s124
      %p136 = scmp.eq.s32.totalorder %s30, 1
      %p137 = por %p135, %p136
      %p139 = scmp.ne.s32.totalorder %s124, %s138
      %p140 = scmp.eq.s32.totalorder %s30, 0
      %p141 = por %p139, %p140
      %s143 = sadd.s32 %s142, 1
      %p146 = scmp.eq.s32.totalorder %s24, 1
      %p147 = scmp.ne.s32.totalorder %s142, %s144
      %p148 = scmp.eq.s32.totalorder %s24, 0
      %p149 = por %p147, %p148
      %p150 = scmp.ne.s32.totalorder %s142, %s144
      %p151 = scmp.eq.s32.totalorder %s29, 1
      %p152 = por %p150, %p151
      %p153 = scmp.ne.s32.totalorder %s144, %s145
      %p154 = scmp.eq.s32.totalorder %s29, 0
      %p155 = por %p153, %p154
      %p156 = scmp.ne.s32.totalorder %s144, %s145
      %p157 = scmp.eq.s32.totalorder %s30, 1
      %p158 = por %p156, %p157
      %p160 = scmp.ne.s32.totalorder %s145, %s159
      %p161 = scmp.eq.s32.totalorder %s30, 0
      %p162 = por %p160, %p161
      %s164 = sadd.s32 %s163, 1
      %p167 = scmp.eq.s32.totalorder %s24, 1
      %p168 = scmp.ne.s32.totalorder %s163, %s165
      %p169 = scmp.eq.s32.totalorder %s24, 0
      %p170 = por %p168, %p169
      %p171 = scmp.ne.s32.totalorder %s163, %s165
      %p172 = scmp.eq.s32.totalorder %s29, 1
      %p173 = por %p171, %p172
      %p174 = scmp.ne.s32.totalorder %s165, %s166
      %p175 = scmp.eq.s32.totalorder %s29, 0
      %p176 = por %p174, %p175
      %p177 = scmp.ne.s32.totalorder %s165, %s166
      %p178 = scmp.eq.s32.totalorder %s30, 1
      %p179 = por %p177, %p178
      %p181 = scmp.ne.s32.totalorder %s166, %s180
      %p182 = scmp.eq.s32.totalorder %s30, 0
      %p183 = por %p181, %p182
      %s185 = sadd.s32 %s184, 1
      %p188 = scmp.eq.s32.totalorder %s24, 1
      %p189 = scmp.ne.s32.totalorder %s184, %s186
      %p190 = scmp.eq.s32.totalorder %s24, 0
      %p191 = por %p189, %p190
      %p192 = scmp.ne.s32.totalorder %s184, %s186
      %p193 = scmp.eq.s32.totalorder %s29, 1
      %p194 = por %p192, %p193
      %p195 = scmp.ne.s32.totalorder %s186, %s187
      %p196 = scmp.eq.s32.totalorder %s29, 0
      %p197 = por %p195, %p196
      %p198 = scmp.ne.s32.totalorder %s186, %s187
      %p199 = scmp.eq.s32.totalorder %s30, 1
      %p200 = por %p198, %p199
      %p202 = scmp.ne.s32.totalorder %s187, %s201
      %p203 = scmp.eq.s32.totalorder %s30, 0
      %p204 = por %p202, %p203
      %s206 = sadd.s32 %s205, 1
      %p209 = scmp.eq.s32.totalorder %s24, 1
      %p210 = scmp.ne.s32.totalorder %s205, %s207
      %p211 = scmp.eq.s32.totalorder %s24, 0
      %p212 = por %p210, %p211
      %p213 = scmp.ne.s32.totalorder %s205, %s207
      %p214 = scmp.eq.s32.totalorder %s29, 1
      %p215 = por %p213, %p214
      %p216 = scmp.ne.s32.totalorder %s207, %s208
      %p217 = scmp.eq.s32.totalorder %s29, 0
      %p218 = por %p216, %p217
      %p219 = scmp.ne.s32.totalorder %s207, %s208
      %p220 = scmp.eq.s32.totalorder %s30, 1
      %p221 = por %p219, %p220
      %p223 = scmp.ne.s32.totalorder %s208, %s222
      %p224 = scmp.eq.s32.totalorder %s30, 0
      %p225 = por %p223, %p224
      %s227 = sadd.s32 %s226, 1
      %p230 = scmp.eq.s32.totalorder %s24, 1
      %p231 = scmp.ne.s32.totalorder %s226, %s228
      %p232 = scmp.eq.s32.totalorder %s24, 0
      %p233 = por %p231, %p232
      %p234 = scmp.ne.s32.totalorder %s226, %s228
      %p235 = scmp.eq.s32.totalorder %s29, 1
      %p236 = por %p234, %p235
      %p237 = scmp.ne.s32.totalorder %s228, %s229
      %p238 = scmp.eq.s32.totalorder %s29, 0
      %p239 = por %p237, %p238
      %p240 = scmp.ne.s32.totalorder %s228, %s229
      %p241 = scmp.eq.s32.totalorder %s30, 1
      %p242 = por %p240, %p241
      %p244 = scmp.ne.s32.totalorder %s229, %s243
      %p245 = scmp.eq.s32.totalorder %s30, 0
      %p246 = por %p244, %p245
      %s248 = sadd.s32 %s247, 1
      %p251 = scmp.eq.s32.totalorder %s24, 1
      %p252 = scmp.ne.s32.totalorder %s247, %s249
      %p253 = scmp.eq.s32.totalorder %s24, 0
      %p254 = por %p252, %p253
      %p255 = scmp.ne.s32.totalorder %s247, %s249
      %p256 = scmp.eq.s32.totalorder %s29, 1
      %p257 = por %p255, %p256
      %p258 = scmp.ne.s32.totalorder %s249, %s250
      %p259 = scmp.eq.s32.totalorder %s29, 0
      %p260 = por %p258, %p259
      %p261 = scmp.ne.s32.totalorder %s249, %s250
      %p262 = scmp.eq.s32.totalorder %s30, 1
      %p263 = por %p261, %p262
      %p265 = scmp.ne.s32.totalorder %s250, %s264
      %p266 = scmp.eq.s32.totalorder %s30, 0
      %p267 = por %p265, %p266
      %s269 = sadd.s32 %s268, 1
      %p272 = scmp.eq.s32.totalorder %s24, 1
      %p273 = scmp.ne.s32.totalorder %s268, %s270
      %p274 = scmp.eq.s32.totalorder %s24, 0
      %p275 = por %p273, %p274
      %p276 = scmp.ne.s32.totalorder %s268, %s270
      %p277 = scmp.eq.s32.totalorder %s29, 1
      %p278 = por %p276, %p277
      %p279 = scmp.ne.s32.totalorder %s270, %s271
      %p280 = scmp.eq.s32.totalorder %s29, 0
      %p281 = por %p279, %p280
      %p282 = scmp.ne.s32.totalorder %s270, %s271
      %p283 = scmp.eq.s32.totalorder %s30, 1
      %p284 = por %p282, %p283
      %p286 = scmp.ne.s32.totalorder %s271, %s285
      %p287 = scmp.eq.s32.totalorder %s30, 0
      %p288 = por %p286, %p287
      %s290 = sadd.s32 %s289, 1
      %p293 = scmp.eq.s32.totalorder %s24, 1
      %p294 = scmp.ne.s32.totalorder %s289, %s291
      %p295 = scmp.eq.s32.totalorder %s24, 0
      %p296 = por %p294, %p295
      %p297 = scmp.ne.s32.totalorder %s289, %s291
      %p298 = scmp.eq.s32.totalorder %s29, 1
      %p299 = por %p297, %p298
      %p300 = scmp.ne.s32.totalorder %s291, %s292
      %p301 = scmp.eq.s32.totalorder %s29, 0
      %p302 = por %p300, %p301
      %p303 = scmp.ne.s32.totalorder %s291, %s292
      %p304 = scmp.eq.s32.totalorder %s30, 1
      %p305 = por %p303, %p304
      %p307 = scmp.ne.s32.totalorder %s292, %s306
      %p308 = scmp.eq.s32.totalorder %s30, 0
      %p309 = por %p307, %p308
      %s311 = sadd.s32 %s310, 1
      %p314 = scmp.eq.s32.totalorder %s24, 1
      %p315 = scmp.ne.s32.totalorder %s310, %s312
      %p316 = scmp.eq.s32.totalorder %s24, 0
      %p317 = por %p315, %p316
      %p318 = scmp.ne.s32.totalorder %s310, %s312
      %p319 = scmp.eq.s32.totalorder %s29, 1
      %p320 = por %p318, %p319
      %p321 = scmp.ne.s32.totalorder %s312, %s313
      %p322 = scmp.eq.s32.totalorder %s29, 0
      %p323 = por %p321, %p322
      %p324 = scmp.ne.s32.totalorder %s312, %s313
      %p325 = scmp.eq.s32.totalorder %s30, 1
      %p326 = por %p324, %p325
      %p328 = scmp.ne.s32.totalorder %s313, %s327
      %p329 = scmp.eq.s32.totalorder %s30, 0
      %p330 = por %p328, %p329
      %s332 = sadd.s32 %s331, 1
      %p335 = scmp.eq.s32.totalorder %s24, 1
      %p336 = scmp.ne.s32.totalorder %s331, %s333
      %p337 = scmp.eq.s32.totalorder %s24, 0
      %p338 = por %p336, %p337
      %p339 = scmp.ne.s32.totalorder %s331, %s333
      %p340 = scmp.eq.s32.totalorder %s29, 1
      %p341 = por %p339, %p340
      %p342 = scmp.ne.s32.totalorder %s333, %s334
      %p343 = scmp.eq.s32.totalorder %s29, 0
      %p344 = por %p342, %p343
      %p345 = scmp.ne.s32.totalorder %s333, %s334
      %p346 = scmp.eq.s32.totalorder %s30, 1
      %p347 = por %p345, %p346
      %p349 = scmp.ne.s32.totalorder %s334, %s348
      %p350 = scmp.eq.s32.totalorder %s30, 0
      %p351 = por %p349, %p350
      %s352 = ssub.s32 %s24, %s31
      %p353 = scmp.eq.s32.totalorder %s352, 0
      %s355 = sadd.s32 %s354, 1
      %s356 = scalar_select %p353, %s354, %s355
      %p359 = pneg %p353
      %p360 = scmp.eq.s32.totalorder %s24, 1
      %p361 = por %p359, %p360
      %p362 = scmp.ne.s32.totalorder %s354, %s357
      %p363 = scmp.eq.s32.totalorder %s24, 0
      %p364 = por %p362, %p363
      %p365 = scmp.ne.s32.totalorder %s354, %s357
      %p366 = scmp.eq.s32.totalorder %s29, 1
      %p367 = por %p365, %p366
      %p368 = scmp.ne.s32.totalorder %s357, %s358
      %p369 = scmp.eq.s32.totalorder %s29, 0
      %p370 = por %p368, %p369
      %p371 = scmp.ne.s32.totalorder %s357, %s358
      %p372 = scmp.eq.s32.totalorder %s30, 1
      %p373 = por %p371, %p372
      %p375 = scmp.ne.s32.totalorder %s358, %s374
      %p376 = scmp.eq.s32.totalorder %s30, 0
      %p377 = por %p375, %p376
      %p378 = scmp.le.s32.totalorder 1, %s24
      %p379 = scmp.lt.s32.totalorder %s24, 3
      %p380 = pnand %p378, %p379
      %p381 = pneg %p380
      // Predicated region
      $region9: #{tpu_custom_call.1} parent=5 // pred_check
        _
      $region10: #{tpu_custom_call.1} parent=5 // pred_check_branch
        %383 = sbr.rel (%p380) target = $region12
      $region11: #{tpu_custom_call.1} parent=5 // pred_region
        %s384 = ssub.s32 %s24, 1
        // Predicated region
        $region13: #{tpu_custom_call.1} parent=11 // pred_check
          %p385 = pneg %p71
        $region14: #{tpu_custom_call.1} parent=11 // pred_check_branch
          %387 = sbr.rel (%p385) target = $region16
        $region15: #{tpu_custom_call.1} parent=11 // pred_region
          _
        $region16: #{tpu_custom_call.1} parent=11 // pred_fallthru
          _
        // Predicated region
        $region17: #{tpu_custom_call.1} parent=11 // pred_check
          %p388 = pneg %p92
        $region18: #{tpu_custom_call.1} parent=11 // pred_check_branch
          %390 = sbr.rel (%p388) target = $region20
        $region19: #{tpu_custom_call.1} parent=11 // pred_region
          _
        $region20: #{tpu_custom_call.1} parent=11 // pred_fallthru
          _
        // Predicated region
        $region21: #{tpu_custom_call.1} parent=11 // pred_check
          %p391 = pneg %p113
        $region22: #{tpu_custom_call.1} parent=11 // pred_check_branch
          %393 = sbr.rel (%p391) target = $region24
        $region23: #{tpu_custom_call.1} parent=11 // pred_region
          _
        $region24: #{tpu_custom_call.1} parent=11 // pred_fallthru
          _
        // Predicated region
        $region25: #{tpu_custom_call.1} parent=11 // pred_check
          %p394 = pneg %p134
        $region26: #{tpu_custom_call.1} parent=11 // pred_check_branch
          %396 = sbr.rel (%p394) target = $region28
        $region27: #{tpu_custom_call.1} parent=11 // pred_region
          _
        $region28: #{tpu_custom_call.1} parent=11 // pred_fallthru
          _
        // Predicated region
        $region29: #{tpu_custom_call.1} parent=11 // pred_check
          %p397 = pneg %p155
        $region30: #{tpu_custom_call.1} parent=11 // pred_check_branch
          %399 = sbr.rel (%p397) target = $region32
        $region31: #{tpu_custom_call.1} parent=11 // pred_region
          _
        $region32: #{tpu_custom_call.1} parent=11 // pred_fallthru
          _
        // Predicated region
        $region33: #{tpu_custom_call.1} parent=11 // pred_check
          %p400 = pneg %p176
        $region34: #{tpu_custom_call.1} parent=11 // pred_check_branch
          %402 = sbr.rel (%p400) target = $region36
        $region35: #{tpu_custom_call.1} parent=11 // pred_region
          _
        $region36: #{tpu_custom_call.1} parent=11 // pred_fallthru
          _
        // Predicated region
        $region37: #{tpu_custom_call.1} parent=11 // pred_check
          %p403 = pneg %p197
        $region38: #{tpu_custom_call.1} parent=11 // pred_check_branch
          %405 = sbr.rel (%p403) target = $region40
        $region39: #{tpu_custom_call.1} parent=11 // pred_region
          _
        $region40: #{tpu_custom_call.1} parent=11 // pred_fallthru
          _
        // Predicated region
        $region41: #{tpu_custom_call.1} parent=11 // pred_check
          %p406 = pneg %p218
        $region42: #{tpu_custom_call.1} parent=11 // pred_check_branch
          %408 = sbr.rel (%p406) target = $region44
        $region43: #{tpu_custom_call.1} parent=11 // pred_region
          _
        $region44: #{tpu_custom_call.1} parent=11 // pred_fallthru
          _
        // Predicated region
        $region45: #{tpu_custom_call.1} parent=11 // pred_check
          %p409 = pneg %p239
        $region46: #{tpu_custom_call.1} parent=11 // pred_check_branch
          %411 = sbr.rel (%p409) target = $region48
        $region47: #{tpu_custom_call.1} parent=11 // pred_region
          _
        $region48: #{tpu_custom_call.1} parent=11 // pred_fallthru
          _
        // Predicated region
        $region49: #{tpu_custom_call.1} parent=11 // pred_check
          %p412 = pneg %p260
        $region50: #{tpu_custom_call.1} parent=11 // pred_check_branch
          %414 = sbr.rel (%p412) target = $region52
        $region51: #{tpu_custom_call.1} parent=11 // pred_region
          _
        $region52: #{tpu_custom_call.1} parent=11 // pred_fallthru
          _
        // Predicated region
        $region53: #{tpu_custom_call.1} parent=11 // pred_check
          %p415 = pneg %p281
        $region54: #{tpu_custom_call.1} parent=11 // pred_check_branch
          %417 = sbr.rel (%p415) target = $region56
        $region55: #{tpu_custom_call.1} parent=11 // pred_region
          _
        $region56: #{tpu_custom_call.1} parent=11 // pred_fallthru
          _
        // Predicated region
        $region57: #{tpu_custom_call.1} parent=11 // pred_check
          %p418 = pneg %p302
        $region58: #{tpu_custom_call.1} parent=11 // pred_check_branch
          %420 = sbr.rel (%p418) target = $region60
        $region59: #{tpu_custom_call.1} parent=11 // pred_region
          _
        $region60: #{tpu_custom_call.1} parent=11 // pred_fallthru
          _
        // Predicated region
        $region61: #{tpu_custom_call.1} parent=11 // pred_check
          %p421 = pneg %p323
        $region62: #{tpu_custom_call.1} parent=11 // pred_check_branch
          %423 = sbr.rel (%p421) target = $region64
        $region63: #{tpu_custom_call.1} parent=11 // pred_region
          _
        $region64: #{tpu_custom_call.1} parent=11 // pred_fallthru
          _
        // Predicated region
        $region65: #{tpu_custom_call.1} parent=11 // pred_check
          %p424 = pneg %p344
        $region66: #{tpu_custom_call.1} parent=11 // pred_check_branch
          %426 = sbr.rel (%p424) target = $region68
        $region67: #{tpu_custom_call.1} parent=11 // pred_region
          _
        $region68: #{tpu_custom_call.1} parent=11 // pred_fallthru
          _
      $region12: #{tpu_custom_call.1} parent=5 // pred_fallthru
        _
      %p427 = scmp.lt.s32.totalorder %s24, 2
      // Predicated region
      $region69: #{tpu_custom_call.1} parent=5 // pred_check
        %p428 = pneg %p427
      $region70: #{tpu_custom_call.1} parent=5 // pred_check_branch
        %430 = sbr.rel (%p428) target = $region72
      $region71: #{tpu_custom_call.1} parent=5 // pred_region
        // Predicated region
        $region73: #{tpu_custom_call.1} parent=71 // pred_check
          %p431 = pneg %p44
        $region74: #{tpu_custom_call.1} parent=71 // pred_check_branch
          %433 = sbr.rel (%p431) target = $region76
        $region75: #{tpu_custom_call.1} parent=71 // pred_region
          %s434 = smul.u32 4, %s24
          %p435 = scmp.lt.s32.totalorder %s434, 7
          %s436 = scalar_select %p435, %s434, 7
          %s437 = smul.addr %s436, 8
          %s438 = smul.addr %s437, 8
          %s439 = scalar_lea.vmem %s0, %s438
          %s440 = smul.u32 4, %s24
        $region76: #{tpu_custom_call.1} parent=71 // pred_fallthru
          _
      $region72: #{tpu_custom_call.1} parent=5 // pred_fallthru
        _
      %p441 = scmp.le.s32.totalorder 1, %s24
      %p442 = scmp.lt.s32.totalorder %s24, 3
      %p443 = pnand %p441, %p442
      %p444 = pneg %p443
      // Predicated region
      $region77: #{tpu_custom_call.1} parent=5 // pred_check
        _
      $region78: #{tpu_custom_call.1} parent=5 // pred_check_branch
        %446 = sbr.rel (%p443) target = $region80
      $region79: #{tpu_custom_call.1} parent=5 // pred_region
        %s447 = ssub.s32 %s24, 1
        %s448 = smul.u32 4, %s29
        %p449 = scmp.lt.s32.totalorder %s448, 7
        %s450 = scalar_select %p449, %s448, 7
        %s451 = smul.addr %s450, 8
        %s452 = smul.addr %s451, 8
        %s453 = scalar_lea.vmem %s0, %s452
        %p454 = pneg %p50
        %p455 = pneg %p47
        %p456 = pneg %p71
        %p457 = pneg %p68
        %p458 = pneg %p92
        %p459 = pneg %p89
        %p460 = pneg %p113
        %p461 = pneg %p110
        %p462 = pneg %p134
        %p463 = pneg %p131
        %p464 = pneg %p155
        %p465 = pneg %p152
        %p466 = pneg %p176
        %p467 = pneg %p173
        %p468 = pneg %p197
        %p469 = pneg %p194
        %p470 = pneg %p218
        %p471 = pneg %p215
        %p472 = pneg %p239
        %p473 = pneg %p236
        %p474 = pneg %p260
        %p475 = pneg %p257
        %p476 = pneg %p281
        %p477 = pneg %p278
        %p478 = pneg %p302
        %p479 = pneg %p299
        %p480 = pneg %p323
        %p481 = pneg %p320
        %p482 = pneg %p344
        %p483 = pneg %p341
        %p484 = pneg %p370
        %p485 = pneg %p367
        %s486 = sand.u32 %s357, 1
        %s487 = scalar_lea.sflag [#allocation5], %s486
        %s488 = sand.u32 %s357, 1
        %s489 = smul.addr %s488, 32
        %s490 = scalar_lea.vmem [#allocation4], %s489
        %s491 = smul.u32 4, %s29
        %p492 = scmp.lt.s32.totalorder %s491, 7
        %s493 = scalar_select %p492, %s491, 7
        %s494 = smul.addr %s493, 8
        %s495 = smul.addr %s494, 8
        %s496 = scalar_lea.vmem %s0, %s495
        %s497 = smul.u32 4, %s29
        %s498 = smul.u32 4, %s29
        %499 = vst [vmem:[#allocation2] sm:$0xff] 0.0
        %vm500 = vcmask 523264
        %501 = vst.msk [vmem:[#allocation2 + $0x8] sm:$0xff] %vm500, 0.0
        %502 = vst [vmem:[#allocation2 + $0xa0] sm:$0xff] 0.0
        %503 = vst.msk [vmem:[#allocation2 + $0xa8] sm:$0xff] %vm500, 0.0
        %504 = vst [vmem:[#allocation2 + $0x140] sm:$0xff] 0.0
        %505 = vst.msk [vmem:[#allocation2 + $0x148] sm:$0xff] %vm500, 0.0
        %506 = vst [vmem:[#allocation2 + $0x1e0] sm:$0xff] 0.0
        %507 = vst.msk [vmem:[#allocation2 + $0x1e8] sm:$0xff] %vm500, 0.0
        %508 = vst [vmem:[#allocation2 + $0x90] sm:$0xff] 0.0
        %509 = vst.msk [vmem:[#allocation2 + $0x98] sm:$0xff] %vm500, 0.0
        %510 = vst [vmem:[#allocation2 + $0x130] sm:$0xff] 0.0
        %511 = vst.msk [vmem:[#allocation2 + $0x138] sm:$0xff] %vm500, 0.0
        %512 = vst [vmem:[#allocation2 + $0x1d0] sm:$0xff] 0.0
        %513 = vst.msk [vmem:[#allocation2 + $0x1d8] sm:$0xff] %vm500, 0.0
        %514 = vst [vmem:[#allocation2 + $0x270] sm:$0xff] 0.0
        %515 = vst.msk [vmem:[#allocation2 + $0x278] sm:$0xff] %vm500, 0.0
        %516 = vst.msk [vmem:[#allocation3] sm:$0xff] %vm500, 0.0
        %517 = vst.msk [vmem:[#allocation3 + $0x50] sm:$0xff] %vm500, 0.0
        %518 = vst.msk [vmem:[#allocation3 + $0xa0] sm:$0xff] %vm500, 0.0
        %519 = vst.msk [vmem:[#allocation3 + $0xf0] sm:$0xff] %vm500, 0.0
        %520 = vst.msk [vmem:[#allocation3 + $0x48] sm:$0xff] %vm500, 0.0
        %521 = vst.msk [vmem:[#allocation3 + $0x98] sm:$0xff] %vm500, 0.0
        %522 = vst.msk [vmem:[#allocation3 + $0xe8] sm:$0xff] %vm500, 0.0
        %523 = vst.msk [vmem:[#allocation3 + $0x138] sm:$0xff] %vm500, 0.0
        %v524 = vld [vmem:[%s496] sm:$0xff]
        %v525 = vld [vmem:[%s496 + $0x8] sm:$0xff]
        %v526 = vld [vmem:[%s496 + $0x10] sm:$0xff]
        %v527 = vld [vmem:[%s496 + $0x18] sm:$0xff]
        %v528 = vld [vmem:[%s496 + $0x20] sm:$0xff]
        %v529 = vld [vmem:[%s496 + $0x28] sm:$0xff]
        %v530 = vld [vmem:[%s496 + $0x30] sm:$0xff]
        %v531 = vld [vmem:[%s496 + $0x38] sm:$0xff]
        %v532 = vld [vmem:[%s496 + $0x40] sm:$0xff]
        %v533 = vld [vmem:[%s496 + $0x48] sm:$0xff]
        %v534 = vld [vmem:[%s496 + $0x50] sm:$0xff]
        %v535 = vld [vmem:[%s496 + $0x58] sm:$0xff]
        %v536 = vld [vmem:[%s496 + $0x60] sm:$0xff]
        %v537 = vld [vmem:[%s496 + $0x68] sm:$0xff]
        %v538 = vld [vmem:[%s496 + $0x70] sm:$0xff]
        %v539 = vld [vmem:[%s496 + $0x78] sm:$0xff]
        %v540 = vld [vmem:[%s496 + $0x80] sm:$0xff]
        %v541 = vld [vmem:[%s496 + $0x88] sm:$0xff]
        %v542 = vld [vmem:[%s496 + $0x90] sm:$0xff]
        %v543 = vld [vmem:[%s496 + $0x98] sm:$0xff]
        %v544 = vld [vmem:[%s496 + $0xa0] sm:$0xff]
        %v545 = vld [vmem:[%s496 + $0xa8] sm:$0xff]
        %v546 = vld [vmem:[%s496 + $0xb0] sm:$0xff]
        %v547 = vld [vmem:[%s496 + $0xb8] sm:$0xff]
        %v548 = vld [vmem:[%s496 + $0xc0] sm:$0xff]
        %v549 = vld [vmem:[%s496 + $0xc8] sm:$0xff]
        %v550 = vld [vmem:[%s496 + $0xd0] sm:$0xff]
        %v551 = vld [vmem:[%s496 + $0xd8] sm:$0xff]
        %v552 = vld [vmem:[%s496 + $0xe0] sm:$0xff]
        %v553 = vld [vmem:[%s496 + $0xe8] sm:$0xff]
        %v554 = vld [vmem:[%s496 + $0xf0] sm:$0xff]
        %v555 = vld [vmem:[%s496 + $0xf8] sm:$0xff]
        %556 = vst.msk [vmem:[#allocation2 + $0x10] sm:$0xff] %vm500, %v524
        %557 = vst.msk [vmem:[#allocation2 + $0x20] sm:$0xff] %vm500, %v525
        %558 = vst.msk [vmem:[#allocation2 + $0x30] sm:$0xff] %vm500, %v526
        %559 = vst.msk [vmem:[#allocation2 + $0x40] sm:$0xff] %vm500, %v527
        %560 = vst.msk [vmem:[#allocation2 + $0x50] sm:$0xff] %vm500, %v528
        %561 = vst.msk [vmem:[#allocation2 + $0x60] sm:$0xff] %vm500, %v529
        %562 = vst.msk [vmem:[#allocation2 + $0x70] sm:$0xff] %vm500, %v530
        %563 = vst.msk [vmem:[#allocation2 + $0x80] sm:$0xff] %vm500, %v531
        %564 = vst.msk [vmem:[#allocation2 + $0xb0] sm:$0xff] %vm500, %v532
        %565 = vst.msk [vmem:[#allocation2 + $0xc0] sm:$0xff] %vm500, %v533
        %566 = vst.msk [vmem:[#allocation2 + $0xd0] sm:$0xff] %vm500, %v534
        %567 = vst.msk [vmem:[#allocation2 + $0xe0] sm:$0xff] %vm500, %v535
        %568 = vst.msk [vmem:[#allocation2 + $0xf0] sm:$0xff] %vm500, %v536
        %569 = vst.msk [vmem:[#allocation2 + $0x100] sm:$0xff] %vm500, %v537
        %570 = vst.msk [vmem:[#allocation2 + $0x110] sm:$0xff] %vm500, %v538
        %571 = vst.msk [vmem:[#allocation2 + $0x120] sm:$0xff] %vm500, %v539
        %572 = vst.msk [vmem:[#allocation2 + $0x150] sm:$0xff] %vm500, %v540
        %573 = vst.msk [vmem:[#allocation2 + $0x160] sm:$0xff] %vm500, %v541
        %574 = vst.msk [vmem:[#allocation2 + $0x170] sm:$0xff] %vm500, %v542
        %575 = vst.msk [vmem:[#allocation2 + $0x180] sm:$0xff] %vm500, %v543
        %576 = vst.msk [vmem:[#allocation2 + $0x190] sm:$0xff] %vm500, %v544
        %577 = vst.msk [vmem:[#allocation2 + $0x1a0] sm:$0xff] %vm500, %v545
        %578 = vst.msk [vmem:[#allocation2 + $0x1b0] sm:$0xff] %vm500, %v546
        %579 = vst.msk [vmem:[#allocation2 + $0x1c0] sm:$0xff] %vm500, %v547
        %580 = vst.msk [vmem:[#allocation2 + $0x1f0] sm:$0xff] %vm500, %v548
        %581 = vst.msk [vmem:[#allocation2 + $0x200] sm:$0xff] %vm500, %v549
        %582 = vst.msk [vmem:[#allocation2 + $0x210] sm:$0xff] %vm500, %v550
        %583 = vst.msk [vmem:[#allocation2 + $0x220] sm:$0xff] %vm500, %v551
        %584 = vst.msk [vmem:[#allocation2 + $0x230] sm:$0xff] %vm500, %v552
        %585 = vst.msk [vmem:[#allocation2 + $0x240] sm:$0xff] %vm500, %v553
        %586 = vst.msk [vmem:[#allocation2 + $0x250] sm:$0xff] %vm500, %v554
        %587 = vst.msk [vmem:[#allocation2 + $0x260] sm:$0xff] %vm500, %v555
        %v588 = vld [vmem:[#allocation2] sm:$0x80]
        %v589 = vld [vmem:[#allocation2 + $0x10] sm:$0xff]
        %v590 = vld [vmem:[#allocation2 + $0x20] sm:$0xff]
        %v591 = vld [vmem:[#allocation2 + $0x30] sm:$0xff]
        %v592 = vld [vmem:[#allocation2 + $0x40] sm:$0xff]
        %v593 = vld [vmem:[#allocation2 + $0x50] sm:$0xff]
        %v594 = vld [vmem:[#allocation2 + $0x60] sm:$0xff]
        %v595 = vld [vmem:[#allocation2 + $0x70] sm:$0xff]
        %v596 = vld [vmem:[#allocation2 + $0x80] sm:$0x7f]
        %v597 = vld [vmem:[#allocation2 + $0xa0] sm:$0x80]
        %v598 = vld [vmem:[#allocation2 + $0xb0] sm:$0xff]
        %v599 = vld [vmem:[#allocation2 + $0xc0] sm:$0xff]
        %v600 = vld [vmem:[#allocation2 + $0xd0] sm:$0xff]
        %v601 = vld [vmem:[#allocation2 + $0xe0] sm:$0xff]
        %v602 = vld [vmem:[#allocation2 + $0xf0] sm:$0xff]
        %v603 = vld [vmem:[#allocation2 + $0x100] sm:$0xff]
        %v604 = vld [vmem:[#allocation2 + $0x110] sm:$0xff]
        %v605 = vld [vmem:[#allocation2 + $0x120] sm:$0x7f]
        %v606 = vld [vmem:[#allocation2 + $0x140] sm:$0x80]
        %v607 = vld [vmem:[#allocation2 + $0x150] sm:$0xff]
        %v608 = vld [vmem:[#allocation2 + $0x160] sm:$0xff]
        %v609 = vld [vmem:[#allocation2 + $0x170] sm:$0xff]
        %v610 = vld [vmem:[#allocation2 + $0x180] sm:$0xff]
        %v611 = vld [vmem:[#allocation2 + $0x190] sm:$0xff]
        %v612 = vld [vmem:[#allocation2 + $0x1a0] sm:$0xff]
        %v613 = vld [vmem:[#allocation2 + $0x1b0] sm:$0xff]
        %v614 = vld [vmem:[#allocation2 + $0x1c0] sm:$0x7f]
        %v615 = vld [vmem:[#allocation2 + $0x1e0] sm:$0x80]
        %v616 = vld [vmem:[#allocation2 + $0x1f0] sm:$0xff]
        %v617 = vld [vmem:[#allocation2 + $0x200] sm:$0xff]
        %v618 = vld [vmem:[#allocation2 + $0x210] sm:$0xff]
        %v619 = vld [vmem:[#allocation2 + $0x220] sm:$0xff]
        %v620 = vld [vmem:[#allocation2 + $0x230] sm:$0xff]
        %v621 = vld [vmem:[#allocation2 + $0x240] sm:$0xff]
        %v622 = vld [vmem:[#allocation2 + $0x250] sm:$0xff]
        %v623 = vld [vmem:[#allocation2 + $0x260] sm:$0x7f]
        %vm660 = vcmask 1040384
        %v661 = vrot.slane %v588, 7
        %v662 = vrot.slane %v589, 7
        %v663 = vsel %vm660, %v661, %v662
        %v664 = vrot.slane %v590, 7
        %v665 = vsel %vm660, %v662, %v664
        %v666 = vrot.slane %v591, 7
        %v667 = vsel %vm660, %v664, %v666
        %v668 = vrot.slane %v592, 7
        %v669 = vsel %vm660, %v666, %v668
        %v670 = vrot.slane %v593, 7
        %v671 = vsel %vm660, %v668, %v670
        %v672 = vrot.slane %v594, 7
        %v673 = vsel %vm660, %v670, %v672
        %v674 = vrot.slane %v595, 7
        %v675 = vsel %vm660, %v672, %v674
        %v676 = vrot.slane %v596, 7
        %v677 = vsel %vm660, %v674, %v676
        %v678 = vrot.slane %v597, 7
        %v679 = vrot.slane %v598, 7
        %v680 = vsel %vm660, %v678, %v679
        %v681 = vrot.slane %v599, 7
        %v682 = vsel %vm660, %v679, %v681
        %v683 = vrot.slane %v600, 7
        %v684 = vsel %vm660, %v681, %v683
        %v685 = vrot.slane %v601, 7
        %v686 = vsel %vm660, %v683, %v685
        %v687 = vrot.slane %v602, 7
        %v688 = vsel %vm660, %v685, %v687
        %v689 = vrot.slane %v603, 7
        %v690 = vsel %vm660, %v687, %v689
        %v691 = vrot.slane %v604, 7
        %v692 = vsel %vm660, %v689, %v691
        %v693 = vrot.slane %v605, 7
        %v694 = vsel %vm660, %v691, %v693
        %v695 = vrot.slane %v606, 7
        %v696 = vrot.slane %v607, 7
        %v697 = vsel %vm660, %v695, %v696
        %v698 = vrot.slane %v608, 7
        %v699 = vsel %vm660, %v696, %v698
        %v700 = vrot.slane %v609, 7
        %v701 = vsel %vm660, %v698, %v700
        %v702 = vrot.slane %v610, 7
        %v703 = vsel %vm660, %v700, %v702
        %v704 = vrot.slane %v611, 7
        %v705 = vsel %vm660, %v702, %v704
        %v706 = vrot.slane %v612, 7
        %v707 = vsel %vm660, %v704, %v706
        %v708 = vrot.slane %v613, 7
        %v709 = vsel %vm660, %v706, %v708
        %v710 = vrot.slane %v614, 7
        %v711 = vsel %vm660, %v708, %v710
        %v712 = vrot.slane %v615, 7
        %v713 = vrot.slane %v616, 7
        %v714 = vsel %vm660, %v712, %v713
        %v715 = vrot.slane %v617, 7
        %v716 = vsel %vm660, %v713, %v715
        %v717 = vrot.slane %v618, 7
        %v718 = vsel %vm660, %v715, %v717
        %v719 = vrot.slane %v619, 7
        %v720 = vsel %vm660, %v717, %v719
        %v721 = vrot.slane %v620, 7
        %v722 = vsel %vm660, %v719, %v721
        %v723 = vrot.slane %v621, 7
        %v724 = vsel %vm660, %v721, %v723
        %v725 = vrot.slane %v622, 7
        %v726 = vsel %vm660, %v723, %v725
        %v727 = vrot.slane %v623, 7
        %v728 = vsel %vm660, %v725, %v727
        %v729 = vld [vmem:[%s1] sm:$0xff]
        %v730 = vld [vmem:[%s1 + $0x8] sm:$0xff]
        %v731 = vld [vmem:[%s1 + $0x10] sm:$0xff]
        %v732 = vld [vmem:[%s1 + $0x18] sm:$0xff]
        %v733 = vld [vmem:[%s1 + $0x20] sm:$0xff]
        %v734 = vld [vmem:[%s1 + $0x28] sm:$0xff]
        %v735 = vld [vmem:[%s1 + $0x30] sm:$0xff]
        %v736 = vld [vmem:[%s1 + $0x38] sm:$0xff]
        %v737 = vld [vmem:[#allocation2 + $0x80] sm:$0xff]
        %v738 = vld [vmem:[#allocation2 + $0x120] sm:$0xff]
        %v739 = vld [vmem:[#allocation2 + $0x1c0] sm:$0xff]
        %v740 = vld [vmem:[#allocation2 + $0x260] sm:$0xff]
        %v741 = vld [vmem:[%s1 + $0x40] sm:$0xff]
        %v742 = vld [vmem:[%s1 + $0x48] sm:$0xff]
        %v743 = vld [vmem:[%s1 + $0x50] sm:$0xff]
        %v744 = vld [vmem:[%s1 + $0x58] sm:$0xff]
        %v745 = vld [vmem:[%s1 + $0x60] sm:$0xff]
        %v746 = vld [vmem:[%s1 + $0x68] sm:$0xff]
        %v747 = vld [vmem:[%s1 + $0x70] sm:$0xff]
        %v748 = vld [vmem:[%s1 + $0x78] sm:$0xff]
        %v749 = vsel %vm500, %v589, 0
        %v751 = vsel %vm500, %v590, 0
        %v753 = vsel %vm500, %v591, 0
        %v755 = vsel %vm500, %v592, 0
        %v757 = vsel %vm500, %v593, 0
        %v759 = vsel %vm500, %v594, 0
        %v761 = vsel %vm500, %v595, 0
        %v764 = vsel %vm500, %v737, 0
        %v766 = vsel %vm500, %v598, 0
        %v768 = vsel %vm500, %v599, 0
        %v770 = vsel %vm500, %v600, 0
        %v772 = vsel %vm500, %v601, 0
        %v774 = vsel %vm500, %v602, 0
        %v776 = vsel %vm500, %v603, 0
        %v778 = vsel %vm500, %v604, 0
        %v781 = vsel %vm500, %v738, 0
        %v783 = vsel %vm500, %v607, 0
        %v785 = vsel %vm500, %v608, 0
        %v787 = vsel %vm500, %v609, 0
        %v789 = vsel %vm500, %v610, 0
        %v791 = vsel %vm500, %v611, 0
        %v793 = vsel %vm500, %v612, 0
        %v795 = vsel %vm500, %v613, 0
        %v798 = vsel %vm500, %v739, 0
        %v800 = vsel %vm500, %v616, 0
        %v802 = vsel %vm500, %v617, 0
        %v804 = vsel %vm500, %v618, 0
        %v806 = vsel %vm500, %v619, 0
        %v808 = vsel %vm500, %v620, 0
        %v810 = vsel %vm500, %v621, 0
        %v812 = vsel %vm500, %v622, 0
        %v815 = vsel %vm500, %v740, 0
        %817 = vmatprep.subr.mxu0 0.0
        %818 = vmatpush1.msra.mxu0 %v741
        %819 = vmatprep.subr.mxu0 0.0
        %820 = vmatpush1.msra.mxu0 %v742
        %821 = vmatprep.subr.mxu0 0.0
        %822 = vmatpush1.msra.mxu0 %v743
        %823 = vmatprep.subr.mxu0 0.0
        %824 = vmatpush1.msra.mxu0 %v744
        %825 = vmatprep.subr.mxu0 0.0
        %826 = vmatpush1.msra.mxu0 %v745
        %827 = vmatprep.subr.mxu0 0.0
        %828 = vmatpush1.msra.mxu0 %v746
        %829 = vmatprep.subr.mxu0 0.0
        %830 = vmatpush1.msra.mxu0 %v747
        %831 = vmatprep.subr.mxu0 0.0
        %832 = vmatpush1.msra.mxu0 %v748
        %833 = vmatprep.subr.mxu0 0.0
        %834 = vmatpush1.msra.mxu0 0.0
        %835 = vmatprep.subr.mxu0 0.0
        %836 = vmatpush1.msra.mxu0 0.0
        %837 = vmatprep.subr.mxu0 0.0
        %838 = vmatpush1.msra.mxu0 0.0
        %839 = vmatprep.subr.mxu0 0.0
        %840 = vmatpush1.msra.mxu0 0.0
        %841 = vmatprep.subr.mxu0 0.0
        %842 = vmatpush1.msra.mxu0 0.0
        %843 = vmatprep.subr.mxu0 0.0
        %844 = vmatpush1.msra.mxu0 0.0
        %845 = vmatprep.subr.mxu0 0.0
        %846 = vmatpush1.msra.mxu0 0.0
        %847 = vmatprep.subr.mxu0 0.0
        %848 = vmatpush1.msra.mxu0 0.0
        %849 = vmatprep.subr.mxu0 0.0
        %850 = vmatpush1.msra.mxu0 0.0
        %851 = vmatprep.subr.mxu0 0.0
        %852 = vmatpush1.msra.mxu0 0.0
        %853 = vmatprep.subr.mxu0 0.0
        %854 = vmatpush1.msra.mxu0 0.0
        %855 = vmatprep.subr.mxu0 0.0
        %856 = vmatpush1.msra.mxu0 0.0
        %857 = vmatprep.subr.mxu0 0.0
        %858 = vmatpush1.msra.mxu0 0.0
        %859 = vmatprep.subr.mxu0 0.0
        %860 = vmatpush1.msra.mxu0 0.0
        %861 = vmatprep.subr.mxu0 0.0
        %862 = vmatpush1.msra.mxu0 0.0
        %863 = vmatprep.subr.mxu0 0.0
        %864 = vmatpush1.msra.mxu0 0.0
        %865 = vmatprep.subr.mxu0 0.0
        %866 = vmatpush1.msra.mxu0 0.0
        %867 = vmatprep.subr.mxu0 0.0
        %868 = vmatpush1.msra.mxu0 0.0
        %869 = vmatprep.subr.mxu0 0.0
        %870 = vmatpush1.msra.mxu0 0.0
        %871 = vmatprep.subr.mxu0 0.0
        %872 = vmatpush1.msra.mxu0 0.0
        %873 = vmatprep.subr.mxu0 0.0
        %874 = vmatpush1.msra.mxu0 0.0
        %875 = vmatprep.subr.mxu0 0.0
        %876 = vmatpush1.msra.mxu0 0.0
        %877 = vmatprep.subr.mxu0 0.0
        %878 = vmatpush1.msra.mxu0 0.0
        %879 = vmatprep.subr.mxu0 0.0
        %880 = vmatpush1.msra.mxu0 0.0
        %881 = vmatprep.mubr.f32.mxu0 0.0
        %882 = vmatmul.mubr.f32.gmra.mrb[0].mxu0 %v749
        %v883 = vpop.f32.mrb[0].mxu0
        %v884 = vadd.f32 0.0, %v883
        %v885 = vpop.f32.mrb[0].mxu0
        %886 = vmatprep.mubr.f32.mxu0 0.0
        %887 = vmatmul.mubr.f32.gmra.mrb[0].mxu0 %v751
        %v888 = vpop.f32.mrb[0].mxu0
        %v889 = vadd.f32 0.0, %v888
        %v890 = vpop.f32.mrb[0].mxu0
        %891 = vmatprep.mubr.f32.mxu0 0.0
        %892 = vmatmul.mubr.f32.gmra.mrb[0].mxu0 %v753
        %v893 = vpop.f32.mrb[0].mxu0
        %v894 = vadd.f32 0.0, %v893
        %v895 = vpop.f32.mrb[0].mxu0
        %896 = vmatprep.mubr.f32.mxu0 0.0
        %897 = vmatmul.mubr.f32.gmra.mrb[0].mxu0 %v755
        %v898 = vpop.f32.mrb[0].mxu0
        %v899 = vadd.f32 0.0, %v898
        %v900 = vpop.f32.mrb[0].mxu0
        %901 = vmatprep.mubr.f32.mxu0 0.0
        %902 = vmatmul.mubr.f32.gmra.mrb[0].mxu0 %v757
        %v903 = vpop.f32.mrb[0].mxu0
        %v904 = vadd.f32 0.0, %v903
        %v905 = vpop.f32.mrb[0].mxu0
        %906 = vmatprep.mubr.f32.mxu0 0.0
        %907 = vmatmul.mubr.f32.gmra.mrb[0].mxu0 %v759
        %v908 = vpop.f32.mrb[0].mxu0
        %v909 = vadd.f32 0.0, %v908
        %v910 = vpop.f32.mrb[0].mxu0
        %911 = vmatprep.mubr.f32.mxu0 0.0
        %912 = vmatmul.mubr.f32.gmra.mrb[0].mxu0 %v761
        %v913 = vpop.f32.mrb[0].mxu0
        %v914 = vadd.f32 0.0, %v913
        %v915 = vpop.f32.mrb[0].mxu0
        %916 = vmatprep.mubr.f32.mxu0 0.0
        %917 = vmatmul.mubr.f32.gmra.mrb[0].mxu0 %v764
        %v918 = vpop.f32.mrb[0].mxu0
        %v919 = vadd.f32 0.0, %v918
        %v920 = vpop.f32.mrb[0].mxu0
        %921 = vmatprep.mubr.f32.mxu0 0.0
        %922 = vmatmul.mubr.f32.gmra.mrb[0].mxu0 %v766
        %v923 = vpop.f32.mrb[0].mxu0
        %v924 = vadd.f32 0.0, %v923
        %v925 = vpop.f32.mrb[0].mxu0
        %926 = vmatprep.mubr.f32.mxu0 0.0
        %927 = vmatmul.mubr.f32.gmra.mrb[0].mxu0 %v768
        %v928 = vpop.f32.mrb[0].mxu0
        %v929 = vadd.f32 0.0, %v928
        %v930 = vpop.f32.mrb[0].mxu0
        %931 = vmatprep.mubr.f32.mxu0 0.0
        %932 = vmatmul.mubr.f32.gmra.mrb[0].mxu0 %v770
        %v933 = vpop.f32.mrb[0].mxu0
        %v934 = vadd.f32 0.0, %v933
        %v935 = vpop.f32.mrb[0].mxu0
        %936 = vmatprep.mubr.f32.mxu0 0.0
        %937 = vmatmul.mubr.f32.gmra.mrb[0].mxu0 %v772
        %v938 = vpop.f32.mrb[0].mxu0
        %v939 = vadd.f32 0.0, %v938
        %v940 = vpop.f32.mrb[0].mxu0
        %941 = vmatprep.mubr.f32.mxu0 0.0
        %942 = vmatmul.mubr.f32.gmra.mrb[0].mxu0 %v774
        %v943 = vpop.f32.mrb[0].mxu0
        %v944 = vadd.f32 0.0, %v943
        %v945 = vpop.f32.mrb[0].mxu0
        %946 = vmatprep.mubr.f32.mxu0 0.0
        %947 = vmatmul.mubr.f32.gmra.mrb[0].mxu0 %v776
        %v948 = vpop.f32.mrb[0].mxu0
        %v949 = vadd.f32 0.0, %v948
        %v950 = vpop.f32.mrb[0].mxu0
        %951 = vmatprep.mubr.f32.mxu0 0.0
        %952 = vmatmul.mubr.f32.gmra.mrb[0].mxu0 %v778
        %v953 = vpop.f32.mrb[0].mxu0
        %v954 = vadd.f32 0.0, %v953
        %v955 = vpop.f32.mrb[0].mxu0
        %956 = vmatprep.mubr.f32.mxu0 0.0
        %957 = vmatmul.mubr.f32.gmra.mrb[0].mxu0 %v781
        %v958 = vpop.f32.mrb[0].mxu0
        %v959 = vadd.f32 0.0, %v958
        %v960 = vpop.f32.mrb[0].mxu0
        %961 = vmatprep.mubr.f32.mxu0 0.0
        %962 = vmatmul.mubr.f32.gmra.mrb[0].mxu0 %v783
        %v963 = vpop.f32.mrb[0].mxu0
        %v964 = vadd.f32 0.0, %v963
        %v965 = vpop.f32.mrb[0].mxu0
        %966 = vmatprep.mubr.f32.mxu0 0.0
        %967 = vmatmul.mubr.f32.gmra.mrb[0].mxu0 %v785
        %v968 = vpop.f32.mrb[0].mxu0
        %v969 = vadd.f32 0.0, %v968
        %v970 = vpop.f32.mrb[0].mxu0
        %971 = vmatprep.mubr.f32.mxu0 0.0
        %972 = vmatmul.mubr.f32.gmra.mrb[0].mxu0 %v787
        %v973 = vpop.f32.mrb[0].mxu0
        %v974 = vadd.f32 0.0, %v973
        %v975 = vpop.f32.mrb[0].mxu0
        %976 = vmatprep.mubr.f32.mxu0 0.0
        %977 = vmatmul.mubr.f32.gmra.mrb[0].mxu0 %v789
        %v978 = vpop.f32.mrb[0].mxu0
        %v979 = vadd.f32 0.0, %v978
        %v980 = vpop.f32.mrb[0].mxu0
        %981 = vmatprep.mubr.f32.mxu0 0.0
        %982 = vmatmul.mubr.f32.gmra.mrb[0].mxu0 %v791
        %v983 = vpop.f32.mrb[0].mxu0
        %v984 = vadd.f32 0.0, %v983
        %v985 = vpop.f32.mrb[0].mxu0
        %986 = vmatprep.mubr.f32.mxu0 0.0
        %987 = vmatmul.mubr.f32.gmra.mrb[0].mxu0 %v793
        %v988 = vpop.f32.mrb[0].mxu0
        %v989 = vadd.f32 0.0, %v988
        %v990 = vpop.f32.mrb[0].mxu0
        %991 = vmatprep.mubr.f32.mxu0 0.0
        %992 = vmatmul.mubr.f32.gmra.mrb[0].mxu0 %v795
        %v993 = vpop.f32.mrb[0].mxu0
        %v994 = vadd.f32 0.0, %v993
        %v995 = vpop.f32.mrb[0].mxu0
        %996 = vmatprep.mubr.f32.mxu0 0.0
        %997 = vmatmul.mubr.f32.gmra.mrb[0].mxu0 %v798
        %v998 = vpop.f32.mrb[0].mxu0
        %v999 = vadd.f32 0.0, %v998
        %v1000 = vpop.f32.mrb[0].mxu0
        %1001 = vmatprep.mubr.f32.mxu0 0.0
        %1002 = vmatmul.mubr.f32.gmra.mrb[0].mxu0 %v800
        %v1003 = vpop.f32.mrb[0].mxu0
        %v1004 = vadd.f32 0.0, %v1003
        %v1005 = vpop.f32.mrb[0].mxu0
        %1006 = vmatprep.mubr.f32.mxu0 0.0
        %1007 = vmatmul.mubr.f32.gmra.mrb[0].mxu0 %v802
        %v1008 = vpop.f32.mrb[0].mxu0
        %v1009 = vadd.f32 0.0, %v1008
        %v1010 = vpop.f32.mrb[0].mxu0
        %1011 = vmatprep.mubr.f32.mxu0 0.0
        %1012 = vmatmul.mubr.f32.gmra.mrb[0].mxu0 %v804
        %v1013 = vpop.f32.mrb[0].mxu0
        %v1014 = vadd.f32 0.0, %v1013
        %v1015 = vpop.f32.mrb[0].mxu0
        %1016 = vmatprep.mubr.f32.mxu0 0.0
        %1017 = vmatmul.mubr.f32.gmra.mrb[0].mxu0 %v806
        %v1018 = vpop.f32.mrb[0].mxu0
        %v1019 = vadd.f32 0.0, %v1018
        %v1020 = vpop.f32.mrb[0].mxu0
        %1021 = vmatprep.mubr.f32.mxu0 0.0
        %1022 = vmatmul.mubr.f32.gmra.mrb[0].mxu0 %v808
        %v1023 = vpop.f32.mrb[0].mxu0
        %v1024 = vadd.f32 0.0, %v1023
        %v1025 = vpop.f32.mrb[0].mxu0
        %1026 = vmatprep.mubr.f32.mxu0 0.0
        %1027 = vmatmul.mubr.f32.gmra.mrb[0].mxu0 %v810
        %v1028 = vpop.f32.mrb[0].mxu0
        %v1029 = vadd.f32 0.0, %v1028
        %v1030 = vpop.f32.mrb[0].mxu0
        %1031 = vmatprep.mubr.f32.mxu0 0.0
        %1032 = vmatmul.mubr.f32.gmra.mrb[0].mxu0 %v812
        %v1033 = vpop.f32.mrb[0].mxu0
        %v1034 = vadd.f32 0.0, %v1033
        %v1035 = vpop.f32.mrb[0].mxu0
        %1036 = vmatprep.mubr.f32.mxu0 0.0
        %1037 = vmatmul.mubr.f32.gmra.mrb[0].mxu0 %v815
        %v1038 = vpop.f32.mrb[0].mxu0
        %v1039 = vadd.f32 0.0, %v1038
        %v1040 = vpop.f32.mrb[0].mxu0
        %1041 = vdwg.mxu0
        %v1042 = vsel %vm500, %v663, 0
        %v1044 = vsel %vm500, %v665, 0
        %v1046 = vsel %vm500, %v667, 0
        %v1048 = vsel %vm500, %v669, 0
        %v1050 = vsel %vm500, %v671, 0
        %v1052 = vsel %vm500, %v673, 0
        %v1054 = vsel %vm500, %v675, 0
        %v1056 = vsel %vm500, %v677, 0
        %v1058 = vsel %vm500, %v680, 0
        %v1060 = vsel %vm500, %v682, 0
        %v1062 = vsel %vm500, %v684, 0
        %v1064 = vsel %vm500, %v686, 0
        %v1066 = vsel %vm500, %v688, 0
        %v1068 = vsel %vm500, %v690, 0
        %v1070 = vsel %vm500, %v692, 0
        %v1072 = vsel %vm500, %v694, 0
        %v1074 = vsel %vm500, %v697, 0
        %v1076 = vsel %vm500, %v699, 0
        %v1078 = vsel %vm500, %v701, 0
        %v1080 = vsel %vm500, %v703, 0
        %v1082 = vsel %vm500, %v705, 0
        %v1084 = vsel %vm500, %v707, 0
        %v1086 = vsel %vm500, %v709, 0
        %v1088 = vsel %vm500, %v711, 0
        %v1090 = vsel %vm500, %v714, 0
        %v1092 = vsel %vm500, %v716, 0
        %v1094 = vsel %vm500, %v718, 0
        %v1096 = vsel %vm500, %v720, 0
        %v1098 = vsel %vm500, %v722, 0
        %v1100 = vsel %vm500, %v724, 0
        %v1102 = vsel %vm500, %v726, 0
        %v1104 = vsel %vm500, %v728, 0
        %1106 = vmatprep.subr.mxu0 0.0
        %1107 = vmatpush1.msra.mxu0 %v729
        %1108 = vmatprep.subr.mxu0 0.0
        %1109 = vmatpush1.msra.mxu0 %v730
        %1110 = vmatprep.subr.mxu0 0.0
        %1111 = vmatpush1.msra.mxu0 %v731
        %1112 = vmatprep.subr.mxu0 0.0
        %1113 = vmatpush1.msra.mxu0 %v732
        %1114 = vmatprep.subr.mxu0 0.0
        %1115 = vmatpush1.msra.mxu0 %v733
        %1116 = vmatprep.subr.mxu0 0.0
        %1117 = vmatpush1.msra.mxu0 %v734
        %1118 = vmatprep.subr.mxu0 0.0
        %1119 = vmatpush1.msra.mxu0 %v735
        %1120 = vmatprep.subr.mxu0 0.0
        %1121 = vmatpush1.msra.mxu0 %v736
        %1122 = vmatprep.subr.mxu0 0.0
        %1123 = vmatpush1.msra.mxu0 0.0
        %1124 = vmatprep.subr.mxu0 0.0
        %1125 = vmatpush1.msra.mxu0 0.0
        %1126 = vmatprep.subr.mxu0 0.0
        %1127 = vmatpush1.msra.mxu0 0.0
        %1128 = vmatprep.subr.mxu0 0.0
        %1129 = vmatpush1.msra.mxu0 0.0
        %1130 = vmatprep.subr.mxu0 0.0
        %1131 = vmatpush1.msra.mxu0 0.0
        %1132 = vmatprep.subr.mxu0 0.0
        %1133 = vmatpush1.msra.mxu0 0.0
        %1134 = vmatprep.subr.mxu0 0.0
        %1135 = vmatpush1.msra.mxu0 0.0
        %1136 = vmatprep.subr.mxu0 0.0
        %1137 = vmatpush1.msra.mxu0 0.0
        %1138 = vmatprep.subr.mxu0 0.0
        %1139 = vmatpush1.msra.mxu0 0.0
        %1140 = vmatprep.subr.mxu0 0.0
        %1141 = vmatpush1.msra.mxu0 0.0
        %1142 = vmatprep.subr.mxu0 0.0
        %1143 = vmatpush1.msra.mxu0 0.0
        %1144 = vmatprep.subr.mxu0 0.0
        %1145 = vmatpush1.msra.mxu0 0.0
        %1146 = vmatprep.subr.mxu0 0.0
        %1147 = vmatpush1.msra.mxu0 0.0
        %1148 = vmatprep.subr.mxu0 0.0
        %1149 = vmatpush1.msra.mxu0 0.0
        %1150 = vmatprep.subr.mxu0 0.0
        %1151 = vmatpush1.msra.mxu0 0.0
        %1152 = vmatprep.subr.mxu0 0.0
        %1153 = vmatpush1.msra.mxu0 0.0
        %1154 = vmatprep.subr.mxu0 0.0
        %1155 = vmatpush1.msra.mxu0 0.0
        %1156 = vmatprep.subr.mxu0 0.0
        %1157 = vmatpush1.msra.mxu0 0.0
        %1158 = vmatprep.subr.mxu0 0.0
        %1159 = vmatpush1.msra.mxu0 0.0
        %1160 = vmatprep.subr.mxu0 0.0
        %1161 = vmatpush1.msra.mxu0 0.0
        %1162 = vmatprep.subr.mxu0 0.0
        %1163 = vmatpush1.msra.mxu0 0.0
        %1164 = vmatprep.subr.mxu0 0.0
        %1165 = vmatpush1.msra.mxu0 0.0
        %1166 = vmatprep.subr.mxu0 0.0
        %1167 = vmatpush1.msra.mxu0 0.0
        %1168 = vmatprep.subr.mxu0 0.0
        %1169 = vmatpush1.msra.mxu0 0.0
        %1170 = vmatprep.mubr.f32.mxu0 0.0
        %1171 = vmatmul.mubr.f32.gmra.mrb[0].mxu0 %v1042
        %v1172 = vpop.f32.mrb[0].mxu0
        %v1173 = vadd.f32 %v884, %v1172
        %v1174 = vpop.f32.mrb[0].mxu0
        %1175 = vmatprep.mubr.f32.mxu0 0.0
        %1176 = vmatmul.mubr.f32.gmra.mrb[0].mxu0 %v1044
        %v1177 = vpop.f32.mrb[0].mxu0
        %v1178 = vadd.f32 %v889, %v1177
        %v1179 = vpop.f32.mrb[0].mxu0
        %1180 = vmatprep.mubr.f32.mxu0 0.0
        %1181 = vmatmul.mubr.f32.gmra.mrb[0].mxu0 %v1046
        %v1182 = vpop.f32.mrb[0].mxu0
        %v1183 = vadd.f32 %v894, %v1182
        %v1184 = vpop.f32.mrb[0].mxu0
        %1185 = vmatprep.mubr.f32.mxu0 0.0
        %1186 = vmatmul.mubr.f32.gmra.mrb[0].mxu0 %v1048
        %v1187 = vpop.f32.mrb[0].mxu0
        %v1188 = vadd.f32 %v899, %v1187
        %v1189 = vpop.f32.mrb[0].mxu0
        %1190 = vmatprep.mubr.f32.mxu0 0.0
        %1191 = vmatmul.mubr.f32.gmra.mrb[0].mxu0 %v1050
        %v1192 = vpop.f32.mrb[0].mxu0
        %v1193 = vadd.f32 %v904, %v1192
        %v1194 = vpop.f32.mrb[0].mxu0
        %1195 = vmatprep.mubr.f32.mxu0 0.0
        %1196 = vmatmul.mubr.f32.gmra.mrb[0].mxu0 %v1052
        %v1197 = vpop.f32.mrb[0].mxu0
        %v1198 = vadd.f32 %v909, %v1197
        %v1199 = vpop.f32.mrb[0].mxu0
        %1200 = vmatprep.mubr.f32.mxu0 0.0
        %1201 = vmatmul.mubr.f32.gmra.mrb[0].mxu0 %v1054
        %v1202 = vpop.f32.mrb[0].mxu0
        %v1203 = vadd.f32 %v914, %v1202
        %v1204 = vpop.f32.mrb[0].mxu0
        %1205 = vmatprep.mubr.f32.mxu0 0.0
        %1206 = vmatmul.mubr.f32.gmra.mrb[0].mxu0 %v1056
        %v1207 = vpop.f32.mrb[0].mxu0
        %v1208 = vadd.f32 %v919, %v1207
        %v1209 = vpop.f32.mrb[0].mxu0
        %1210 = vmatprep.mubr.f32.mxu0 0.0
        %1211 = vmatmul.mubr.f32.gmra.mrb[0].mxu0 %v1058
        %v1212 = vpop.f32.mrb[0].mxu0
        %v1213 = vadd.f32 %v924, %v1212
        %v1214 = vpop.f32.mrb[0].mxu0
        %1215 = vmatprep.mubr.f32.mxu0 0.0
        %1216 = vmatmul.mubr.f32.gmra.mrb[0].mxu0 %v1060
        %v1217 = vpop.f32.mrb[0].mxu0
        %v1218 = vadd.f32 %v929, %v1217
        %v1219 = vpop.f32.mrb[0].mxu0
        %1220 = vmatprep.mubr.f32.mxu0 0.0
        %1221 = vmatmul.mubr.f32.gmra.mrb[0].mxu0 %v1062
        %v1222 = vpop.f32.mrb[0].mxu0
        %v1223 = vadd.f32 %v934, %v1222
        %v1224 = vpop.f32.mrb[0].mxu0
        %1225 = vmatprep.mubr.f32.mxu0 0.0
        %1226 = vmatmul.mubr.f32.gmra.mrb[0].mxu0 %v1064
        %v1227 = vpop.f32.mrb[0].mxu0
        %v1228 = vadd.f32 %v939, %v1227
        %v1229 = vpop.f32.mrb[0].mxu0
        %1230 = vmatprep.mubr.f32.mxu0 0.0
        %1231 = vmatmul.mubr.f32.gmra.mrb[0].mxu0 %v1066
        %v1232 = vpop.f32.mrb[0].mxu0
        %v1233 = vadd.f32 %v944, %v1232
        %v1234 = vpop.f32.mrb[0].mxu0
        %1235 = vmatprep.mubr.f32.mxu0 0.0
        %1236 = vmatmul.mubr.f32.gmra.mrb[0].mxu0 %v1068
        %v1237 = vpop.f32.mrb[0].mxu0
        %v1238 = vadd.f32 %v949, %v1237
        %v1239 = vpop.f32.mrb[0].mxu0
        %1240 = vmatprep.mubr.f32.mxu0 0.0
        %1241 = vmatmul.mubr.f32.gmra.mrb[0].mxu0 %v1070
        %v1242 = vpop.f32.mrb[0].mxu0
        %v1243 = vadd.f32 %v954, %v1242
        %v1244 = vpop.f32.mrb[0].mxu0
        %1245 = vmatprep.mubr.f32.mxu0 0.0
        %1246 = vmatmul.mubr.f32.gmra.mrb[0].mxu0 %v1072
        %v1247 = vpop.f32.mrb[0].mxu0
        %v1248 = vadd.f32 %v959, %v1247
        %v1249 = vpop.f32.mrb[0].mxu0
        %1250 = vmatprep.mubr.f32.mxu0 0.0
        %1251 = vmatmul.mubr.f32.gmra.mrb[0].mxu0 %v1074
        %v1252 = vpop.f32.mrb[0].mxu0
        %v1253 = vadd.f32 %v964, %v1252
        %v1254 = vpop.f32.mrb[0].mxu0
        %1255 = vmatprep.mubr.f32.mxu0 0.0
        %1256 = vmatmul.mubr.f32.gmra.mrb[0].mxu0 %v1076
        %v1257 = vpop.f32.mrb[0].mxu0
        %v1258 = vadd.f32 %v969, %v1257
        %v1259 = vpop.f32.mrb[0].mxu0
        %1260 = vmatprep.mubr.f32.mxu0 0.0
        %1261 = vmatmul.mubr.f32.gmra.mrb[0].mxu0 %v1078
        %v1262 = vpop.f32.mrb[0].mxu0
        %v1263 = vadd.f32 %v974, %v1262
        %v1264 = vpop.f32.mrb[0].mxu0
        %1265 = vmatprep.mubr.f32.mxu0 0.0
        %1266 = vmatmul.mubr.f32.gmra.mrb[0].mxu0 %v1080
        %v1267 = vpop.f32.mrb[0].mxu0
        %v1268 = vadd.f32 %v979, %v1267
        %v1269 = vpop.f32.mrb[0].mxu0
        %1270 = vmatprep.mubr.f32.mxu0 0.0
        %1271 = vmatmul.mubr.f32.gmra.mrb[0].mxu0 %v1082
        %v1272 = vpop.f32.mrb[0].mxu0
        %v1273 = vadd.f32 %v984, %v1272
        %v1274 = vpop.f32.mrb[0].mxu0
        %1275 = vmatprep.mubr.f32.mxu0 0.0
        %1276 = vmatmul.mubr.f32.gmra.mrb[0].mxu0 %v1084
        %v1277 = vpop.f32.mrb[0].mxu0
        %v1278 = vadd.f32 %v989, %v1277
        %v1279 = vpop.f32.mrb[0].mxu0
        %1280 = vmatprep.mubr.f32.mxu0 0.0
        %1281 = vmatmul.mubr.f32.gmra.mrb[0].mxu0 %v1086
        %v1282 = vpop.f32.mrb[0].mxu0
        %v1283 = vadd.f32 %v994, %v1282
        %v1284 = vpop.f32.mrb[0].mxu0
        %1285 = vmatprep.mubr.f32.mxu0 0.0
        %1286 = vmatmul.mubr.f32.gmra.mrb[0].mxu0 %v1088
        %v1287 = vpop.f32.mrb[0].mxu0
        %v1288 = vadd.f32 %v999, %v1287
        %v1289 = vpop.f32.mrb[0].mxu0
        %1290 = vmatprep.mubr.f32.mxu0 0.0
        %1291 = vmatmul.mubr.f32.gmra.mrb[0].mxu0 %v1090
        %v1292 = vpop.f32.mrb[0].mxu0
        %v1293 = vadd.f32 %v1004, %v1292
        %v1294 = vpop.f32.mrb[0].mxu0
        %1295 = vmatprep.mubr.f32.mxu0 0.0
        %1296 = vmatmul.mubr.f32.gmra.mrb[0].mxu0 %v1092
        %v1297 = vpop.f32.mrb[0].mxu0
        %v1298 = vadd.f32 %v1009, %v1297
        %v1299 = vpop.f32.mrb[0].mxu0
        %1300 = vmatprep.mubr.f32.mxu0 0.0
        %1301 = vmatmul.mubr.f32.gmra.mrb[0].mxu0 %v1094
        %v1302 = vpop.f32.mrb[0].mxu0
        %v1303 = vadd.f32 %v1014, %v1302
        %v1304 = vpop.f32.mrb[0].mxu0
        %1305 = vmatprep.mubr.f32.mxu0 0.0
        %1306 = vmatmul.mubr.f32.gmra.mrb[0].mxu0 %v1096
        %v1307 = vpop.f32.mrb[0].mxu0
        %v1308 = vadd.f32 %v1019, %v1307
        %v1309 = vpop.f32.mrb[0].mxu0
        %1310 = vmatprep.mubr.f32.mxu0 0.0
        %1311 = vmatmul.mubr.f32.gmra.mrb[0].mxu0 %v1098
        %v1312 = vpop.f32.mrb[0].mxu0
        %v1313 = vadd.f32 %v1024, %v1312
        %v1314 = vpop.f32.mrb[0].mxu0
        %1315 = vmatprep.mubr.f32.mxu0 0.0
        %1316 = vmatmul.mubr.f32.gmra.mrb[0].mxu0 %v1100
        %v1317 = vpop.f32.mrb[0].mxu0
        %v1318 = vadd.f32 %v1029, %v1317
        %v1319 = vpop.f32.mrb[0].mxu0
        %1320 = vmatprep.mubr.f32.mxu0 0.0
        %1321 = vmatmul.mubr.f32.gmra.mrb[0].mxu0 %v1102
        %v1322 = vpop.f32.mrb[0].mxu0
        %v1323 = vadd.f32 %v1034, %v1322
        %v1324 = vpop.f32.mrb[0].mxu0
        %1325 = vmatprep.mubr.f32.mxu0 0.0
        %1326 = vmatmul.mubr.f32.gmra.mrb[0].mxu0 %v1104
        %v1327 = vpop.f32.mrb[0].mxu0
        %v1328 = vadd.f32 %v1039, %v1327
        %v1329 = vpop.f32.mrb[0].mxu0
        %1330 = vdwg.mxu0
        %v1331 = vld [vmem:[#allocation2 + $0x10] sm:$0xfe]
        %v1332 = vld [vmem:[#allocation2 + $0x20] sm:$0xff]
        %v1333 = vld [vmem:[#allocation2 + $0x30] sm:$0xff]
        %v1334 = vld [vmem:[#allocation2 + $0x40] sm:$0xff]
        %v1335 = vld [vmem:[#allocation2 + $0x50] sm:$0xff]
        %v1336 = vld [vmem:[#allocation2 + $0x60] sm:$0xff]
        %v1337 = vld [vmem:[#allocation2 + $0x70] sm:$0xff]
        %v1338 = vld [vmem:[#allocation2 + $0x80] sm:$0xff]
        %v1339 = vld [vmem:[#allocation2 + $0x90] sm:$0x1]
        %v1340 = vld [vmem:[#allocation2 + $0xb0] sm:$0xfe]
        %v1341 = vld [vmem:[#allocation2 + $0xc0] sm:$0xff]
        %v1342 = vld [vmem:[#allocation2 + $0xd0] sm:$0xff]
        %v1343 = vld [vmem:[#allocation2 + $0xe0] sm:$0xff]
        %v1344 = vld [vmem:[#allocation2 + $0xf0] sm:$0xff]
        %v1345 = vld [vmem:[#allocation2 + $0x100] sm:$0xff]
        %v1346 = vld [vmem:[#allocation2 + $0x110] sm:$0xff]
        %v1347 = vld [vmem:[#allocation2 + $0x120] sm:$0xff]
        %v1348 = vld [vmem:[#allocation2 + $0x130] sm:$0x1]
        %v1349 = vld [vmem:[#allocation2 + $0x150] sm:$0xfe]
        %v1350 = vld [vmem:[#allocation2 + $0x160] sm:$0xff]
        %v1351 = vld [vmem:[#allocation2 + $0x170] sm:$0xff]
        %v1352 = vld [vmem:[#allocation2 + $0x180] sm:$0xff]
        %v1353 = vld [vmem:[#allocation2 + $0x190] sm:$0xff]
        %v1354 = vld [vmem:[#allocation2 + $0x1a0] sm:$0xff]
        %v1355 = vld [vmem:[#allocation2 + $0x1b0] sm:$0xff]
        %v1356 = vld [vmem:[#allocation2 + $0x1c0] sm:$0xff]
        %v1357 = vld [vmem:[#allocation2 + $0x1d0] sm:$0x1]
        %v1358 = vld [vmem:[#allocation2 + $0x1f0] sm:$0xfe]
        %v1359 = vld [vmem:[#allocation2 + $0x200] sm:$0xff]
        %v1360 = vld [vmem:[#allocation2 + $0x210] sm:$0xff]
        %v1361 = vld [vmem:[#allocation2 + $0x220] sm:$0xff]
        %v1362 = vld [vmem:[#allocation2 + $0x230] sm:$0xff]
        %v1363 = vld [vmem:[#allocation2 + $0x240] sm:$0xff]
        %v1364 = vld [vmem:[#allocation2 + $0x250] sm:$0xff]
        %v1365 = vld [vmem:[#allocation2 + $0x260] sm:$0xff]
        %v1366 = vld [vmem:[#allocation2 + $0x270] sm:$0x1]
        %vm1403 = vcmask 1046528
        %v1404 = vrot.slane %v1331, 1
        %v1405 = vrot.slane %v1332, 1
        %v1406 = vsel %vm1403, %v1404, %v1405
        %v1407 = vrot.slane %v1333, 1
        %v1408 = vsel %vm1403, %v1405, %v1407
        %v1409 = vrot.slane %v1334, 1
        %v1410 = vsel %vm1403, %v1407, %v1409
        %v1411 = vrot.slane %v1335, 1
        %v1412 = vsel %vm1403, %v1409, %v1411
        %v1413 = vrot.slane %v1336, 1
        %v1414 = vsel %vm1403, %v1411, %v1413
        %v1415 = vrot.slane %v1337, 1
        %v1416 = vsel %vm1403, %v1413, %v1415
        %v1417 = vrot.slane %v1338, 1
        %v1418 = vsel %vm1403, %v1415, %v1417
        %v1419 = vrot.slane %v1339, 1
        %v1420 = vsel %vm1403, %v1417, %v1419
        %v1421 = vrot.slane %v1340, 1
        %v1422 = vrot.slane %v1341, 1
        %v1423 = vsel %vm1403, %v1421, %v1422
        %v1424 = vrot.slane %v1342, 1
        %v1425 = vsel %vm1403, %v1422, %v1424
        %v1426 = vrot.slane %v1343, 1
        %v1427 = vsel %vm1403, %v1424, %v1426
        %v1428 = vrot.slane %v1344, 1
        %v1429 = vsel %vm1403, %v1426, %v1428
        %v1430 = vrot.slane %v1345, 1
        %v1431 = vsel %vm1403, %v1428, %v1430
        %v1432 = vrot.slane %v1346, 1
        %v1433 = vsel %vm1403, %v1430, %v1432
        %v1434 = vrot.slane %v1347, 1
        %v1435 = vsel %vm1403, %v1432, %v1434
        %v1436 = vrot.slane %v1348, 1
        %v1437 = vsel %vm1403, %v1434, %v1436
        %v1438 = vrot.slane %v1349, 1
        %v1439 = vrot.slane %v1350, 1
        %v1440 = vsel %vm1403, %v1438, %v1439
        %v1441 = vrot.slane %v1351, 1
        %v1442 = vsel %vm1403, %v1439, %v1441
        %v1443 = vrot.slane %v1352, 1
        %v1444 = vsel %vm1403, %v1441, %v1443
        %v1445 = vrot.slane %v1353, 1
        %v1446 = vsel %vm1403, %v1443, %v1445
        %v1447 = vrot.slane %v1354, 1
        %v1448 = vsel %vm1403, %v1445, %v1447
        %v1449 = vrot.slane %v1355, 1
        %v1450 = vsel %vm1403, %v1447, %v1449
        %v1451 = vrot.slane %v1356, 1
        %v1452 = vsel %vm1403, %v1449, %v1451
        %v1453 = vrot.slane %v1357, 1
        %v1454 = vsel %vm1403, %v1451, %v1453
        %v1455 = vrot.slane %v1358, 1
        %v1456 = vrot.slane %v1359, 1
        %v1457 = vsel %vm1403, %v1455, %v1456
        %v1458 = vrot.slane %v1360, 1
        %v1459 = vsel %vm1403, %v1456, %v1458
        %v1460 = vrot.slane %v1361, 1
        %v1461 = vsel %vm1403, %v1458, %v1460
        %v1462 = vrot.slane %v1362, 1
        %v1463 = vsel %vm1403, %v1460, %v1462
        %v1464 = vrot.slane %v1363, 1
        %v1465 = vsel %vm1403, %v1462, %v1464
        %v1466 = vrot.slane %v1364, 1
        %v1467 = vsel %vm1403, %v1464, %v1466
        %v1468 = vrot.slane %v1365, 1
        %v1469 = vsel %vm1403, %v1466, %v1468
        %v1470 = vrot.slane %v1366, 1
        %v1471 = vsel %vm1403, %v1468, %v1470
        %v1472 = vld [vmem:[%s1 + $0x80] sm:$0xff]
        %v1473 = vld [vmem:[%s1 + $0x88] sm:$0xff]
        %v1474 = vld [vmem:[%s1 + $0x90] sm:$0xff]
        %v1475 = vld [vmem:[%s1 + $0x98] sm:$0xff]
        %v1476 = vld [vmem:[%s1 + $0xa0] sm:$0xff]
        %v1477 = vld [vmem:[%s1 + $0xa8] sm:$0xff]
        %v1478 = vld [vmem:[%s1 + $0xb0] sm:$0xff]
        %v1479 = vld [vmem:[%s1 + $0xb8] sm:$0xff]
        %v1480 = vsel %vm500, %v1406, 0
        %v1482 = vsel %vm500, %v1408, 0
        %v1484 = vsel %vm500, %v1410, 0
        %v1486 = vsel %vm500, %v1412, 0
        %v1488 = vsel %vm500, %v1414, 0
        %v1490 = vsel %vm500, %v1416, 0
        %v1492 = vsel %vm500, %v1418, 0
        %v1494 = vsel %vm500, %v1420, 0
        %v1496 = vsel %vm500, %v1423, 0
        %v1498 = vsel %vm500, %v1425, 0
        %v1500 = vsel %vm500, %v1427, 0
        %v1502 = vsel %vm500, %v1429, 0
        %v1504 = vsel %vm500, %v1431, 0
        %v1506 = vsel %vm500, %v1433, 0
        %v1508 = vsel %vm500, %v1435, 0
        %v1510 = vsel %vm500, %v1437, 0
        %v1512 = vsel %vm500, %v1440, 0
        %v1514 = vsel %vm500, %v1442, 0
        %v1516 = vsel %vm500, %v1444, 0
        %v1518 = vsel %vm500, %v1446, 0
        %v1520 = vsel %vm500, %v1448, 0
        %v1522 = vsel %vm500, %v1450, 0
        %v1524 = vsel %vm500, %v1452, 0
        %v1526 = vsel %vm500, %v1454, 0
        %v1528 = vsel %vm500, %v1457, 0
        %v1530 = vsel %vm500, %v1459, 0
        %v1532 = vsel %vm500, %v1461, 0
        %v1534 = vsel %vm500, %v1463, 0
        %v1536 = vsel %vm500, %v1465, 0
        %v1538 = vsel %vm500, %v1467, 0
        %v1540 = vsel %vm500, %v1469, 0
        %v1542 = vsel %vm500, %v1471, 0
        %1544 = vmatprep.subr.mxu0 0.0
        %1545 = vmatpush1.msra.mxu0 %v1472
        %1546 = vmatprep.subr.mxu0 0.0
        %1547 = vmatpush1.msra.mxu0 %v1473
        %1548 = vmatprep.subr.mxu0 0.0
        %1549 = vmatpush1.msra.mxu0 %v1474
        %1550 = vmatprep.subr.mxu0 0.0
        %1551 = vmatpush1.msra.mxu0 %v1475
        %1552 = vmatprep.subr.mxu0 0.0
        %1553 = vmatpush1.msra.mxu0 %v1476
        %1554 = vmatprep.subr.mxu0 0.0
        %1555 = vmatpush1.msra.mxu0 %v1477
        %1556 = vmatprep.subr.mxu0 0.0
        %1557 = vmatpush1.msra.mxu0 %v1478
        %1558 = vmatprep.subr.mxu0 0.0
        %1559 = vmatpush1.msra.mxu0 %v1479
        %1560 = vmatprep.subr.mxu0 0.0
        %1561 = vmatpush1.msra.mxu0 0.0
        %1562 = vmatprep.subr.mxu0 0.0
        %1563 = vmatpush1.msra.mxu0 0.0
        %1564 = vmatprep.subr.mxu0 0.0
        %1565 = vmatpush1.msra.mxu0 0.0
        %1566 = vmatprep.subr.mxu0 0.0
        %1567 = vmatpush1.msra.mxu0 0.0
        %1568 = vmatprep.subr.mxu0 0.0
        %1569 = vmatpush1.msra.mxu0 0.0
        %1570 = vmatprep.subr.mxu0 0.0
        %1571 = vmatpush1.msra.mxu0 0.0
        %1572 = vmatprep.subr.mxu0 0.0
        %1573 = vmatpush1.msra.mxu0 0.0
        %1574 = vmatprep.subr.mxu0 0.0
        %1575 = vmatpush1.msra.mxu0 0.0
        %1576 = vmatprep.subr.mxu0 0.0
        %1577 = vmatpush1.msra.mxu0 0.0
        %1578 = vmatprep.subr.mxu0 0.0
        %1579 = vmatpush1.msra.mxu0 0.0
        %1580 = vmatprep.subr.mxu0 0.0
        %1581 = vmatpush1.msra.mxu0 0.0
        %1582 = vmatprep.subr.mxu0 0.0
        %1583 = vmatpush1.msra.mxu0 0.0
        %1584 = vmatprep.subr.mxu0 0.0
        %1585 = vmatpush1.msra.mxu0 0.0
        %1586 = vmatprep.subr.mxu0 0.0
        %1587 = vmatpush1.msra.mxu0 0.0
        %1588 = vmatprep.subr.mxu0 0.0
        %1589 = vmatpush1.msra.mxu0 0.0
        %1590 = vmatprep.subr.mxu0 0.0
        %1591 = vmatpush1.msra.mxu0 0.0
        %1592 = vmatprep.subr.mxu0 0.0
        %1593 = vmatpush1.msra.mxu0 0.0
        %1594 = vmatprep.subr.mxu0 0.0
        %1595 = vmatpush1.msra.mxu0 0.0
        %1596 = vmatprep.subr.mxu0 0.0
        %1597 = vmatpush1.msra.mxu0 0.0
        %1598 = vmatprep.subr.mxu0 0.0
        %1599 = vmatpush1.msra.mxu0 0.0
        %1600 = vmatprep.subr.mxu0 0.0
        %1601 = vmatpush1.msra.mxu0 0.0
        %1602 = vmatprep.subr.mxu0 0.0
        %1603 = vmatpush1.msra.mxu0 0.0
        %1604 = vmatprep.subr.mxu0 0.0
        %1605 = vmatpush1.msra.mxu0 0.0
        %1606 = vmatprep.subr.mxu0 0.0
        %1607 = vmatpush1.msra.mxu0 0.0
        %1608 = vmatprep.mubr.f32.mxu0 0.0
        %1609 = vmatmul.mubr.f32.gmra.mrb[0].mxu0 %v1480
        %v1610 = vpop.f32.mrb[0].mxu0
        %v1611 = vadd.f32 0.0, %v1610
        %v1612 = vpop.f32.mrb[0].mxu0
        %1613 = vmatprep.mubr.f32.mxu0 0.0
        %1614 = vmatmul.mubr.f32.gmra.mrb[0].mxu0 %v1482
        %v1615 = vpop.f32.mrb[0].mxu0
        %v1616 = vadd.f32 0.0, %v1615
        %v1617 = vpop.f32.mrb[0].mxu0
        %1618 = vmatprep.mubr.f32.mxu0 0.0
        %1619 = vmatmul.mubr.f32.gmra.mrb[0].mxu0 %v1484
        %v1620 = vpop.f32.mrb[0].mxu0
        %v1621 = vadd.f32 0.0, %v1620
        %v1622 = vpop.f32.mrb[0].mxu0
        %1623 = vmatprep.mubr.f32.mxu0 0.0
        %1624 = vmatmul.mubr.f32.gmra.mrb[0].mxu0 %v1486
        %v1625 = vpop.f32.mrb[0].mxu0
        %v1626 = vadd.f32 0.0, %v1625
        %v1627 = vpop.f32.mrb[0].mxu0
        %1628 = vmatprep.mubr.f32.mxu0 0.0
        %1629 = vmatmul.mubr.f32.gmra.mrb[0].mxu0 %v1488
        %v1630 = vpop.f32.mrb[0].mxu0
        %v1631 = vadd.f32 0.0, %v1630
        %v1632 = vpop.f32.mrb[0].mxu0
        %1633 = vmatprep.mubr.f32.mxu0 0.0
        %1634 = vmatmul.mubr.f32.gmra.mrb[0].mxu0 %v1490
        %v1635 = vpop.f32.mrb[0].mxu0
        %v1636 = vadd.f32 0.0, %v1635
        %v1637 = vpop.f32.mrb[0].mxu0
        %1638 = vmatprep.mubr.f32.mxu0 0.0
        %1639 = vmatmul.mubr.f32.gmra.mrb[0].mxu0 %v1492
        %v1640 = vpop.f32.mrb[0].mxu0
        %v1641 = vadd.f32 0.0, %v1640
        %v1642 = vpop.f32.mrb[0].mxu0
        %1643 = vmatprep.mubr.f32.mxu0 0.0
        %1644 = vmatmul.mubr.f32.gmra.mrb[0].mxu0 %v1494
        %v1645 = vpop.f32.mrb[0].mxu0
        %v1646 = vadd.f32 0.0, %v1645
        %v1647 = vpop.f32.mrb[0].mxu0
        %1648 = vmatprep.mubr.f32.mxu0 0.0
        %1649 = vmatmul.mubr.f32.gmra.mrb[0].mxu0 %v1496
        %v1650 = vpop.f32.mrb[0].mxu0
        %v1651 = vadd.f32 0.0, %v1650
        %v1652 = vpop.f32.mrb[0].mxu0
        %1653 = vmatprep.mubr.f32.mxu0 0.0
        %1654 = vmatmul.mubr.f32.gmra.mrb[0].mxu0 %v1498
        %v1655 = vpop.f32.mrb[0].mxu0
        %v1656 = vadd.f32 0.0, %v1655
        %v1657 = vpop.f32.mrb[0].mxu0
        %1658 = vmatprep.mubr.f32.mxu0 0.0
        %1659 = vmatmul.mubr.f32.gmra.mrb[0].mxu0 %v1500
        %v1660 = vpop.f32.mrb[0].mxu0
        %v1661 = vadd.f32 0.0, %v1660
        %v1662 = vpop.f32.mrb[0].mxu0
        %1663 = vmatprep.mubr.f32.mxu0 0.0
        %1664 = vmatmul.mubr.f32.gmra.mrb[0].mxu0 %v1502
        %v1665 = vpop.f32.mrb[0].mxu0
        %v1666 = vadd.f32 0.0, %v1665
        %v1667 = vpop.f32.mrb[0].mxu0
        %1668 = vmatprep.mubr.f32.mxu0 0.0
        %1669 = vmatmul.mubr.f32.gmra.mrb[0].mxu0 %v1504
        %v1670 = vpop.f32.mrb[0].mxu0
        %v1671 = vadd.f32 0.0, %v1670
        %v1672 = vpop.f32.mrb[0].mxu0
        %1673 = vmatprep.mubr.f32.mxu0 0.0
        %1674 = vmatmul.mubr.f32.gmra.mrb[0].mxu0 %v1506
        %v1675 = vpop.f32.mrb[0].mxu0
        %v1676 = vadd.f32 0.0, %v1675
        %v1677 = vpop.f32.mrb[0].mxu0
        %1678 = vmatprep.mubr.f32.mxu0 0.0
        %1679 = vmatmul.mubr.f32.gmra.mrb[0].mxu0 %v1508
        %v1680 = vpop.f32.mrb[0].mxu0
        %v1681 = vadd.f32 0.0, %v1680
        %v1682 = vpop.f32.mrb[0].mxu0
        %1683 = vmatprep.mubr.f32.mxu0 0.0
        %1684 = vmatmul.mubr.f32.gmra.mrb[0].mxu0 %v1510
        %v1685 = vpop.f32.mrb[0].mxu0
        %v1686 = vadd.f32 0.0, %v1685
        %v1687 = vpop.f32.mrb[0].mxu0
        %1688 = vmatprep.mubr.f32.mxu0 0.0
        %1689 = vmatmul.mubr.f32.gmra.mrb[0].mxu0 %v1512
        %v1690 = vpop.f32.mrb[0].mxu0
        %v1691 = vadd.f32 0.0, %v1690
        %v1692 = vpop.f32.mrb[0].mxu0
        %1693 = vmatprep.mubr.f32.mxu0 0.0
        %1694 = vmatmul.mubr.f32.gmra.mrb[0].mxu0 %v1514
        %v1695 = vpop.f32.mrb[0].mxu0
        %v1696 = vadd.f32 0.0, %v1695
        %v1697 = vpop.f32.mrb[0].mxu0
        %1698 = vmatprep.mubr.f32.mxu0 0.0
        %1699 = vmatmul.mubr.f32.gmra.mrb[0].mxu0 %v1516
        %v1700 = vpop.f32.mrb[0].mxu0
        %v1701 = vadd.f32 0.0, %v1700
        %v1702 = vpop.f32.mrb[0].mxu0
        %1703 = vmatprep.mubr.f32.mxu0 0.0
        %1704 = vmatmul.mubr.f32.gmra.mrb[0].mxu0 %v1518
        %v1705 = vpop.f32.mrb[0].mxu0
        %v1706 = vadd.f32 0.0, %v1705
        %v1707 = vpop.f32.mrb[0].mxu0
        %1708 = vmatprep.mubr.f32.mxu0 0.0
        %1709 = vmatmul.mubr.f32.gmra.mrb[0].mxu0 %v1520
        %v1710 = vpop.f32.mrb[0].mxu0
        %v1711 = vadd.f32 0.0, %v1710
        %v1712 = vpop.f32.mrb[0].mxu0
        %1713 = vmatprep.mubr.f32.mxu0 0.0
        %1714 = vmatmul.mubr.f32.gmra.mrb[0].mxu0 %v1522
        %v1715 = vpop.f32.mrb[0].mxu0
        %v1716 = vadd.f32 0.0, %v1715
        %v1717 = vpop.f32.mrb[0].mxu0
        %1718 = vmatprep.mubr.f32.mxu0 0.0
        %1719 = vmatmul.mubr.f32.gmra.mrb[0].mxu0 %v1524
        %v1720 = vpop.f32.mrb[0].mxu0
        %v1721 = vadd.f32 0.0, %v1720
        %v1722 = vpop.f32.mrb[0].mxu0
        %1723 = vmatprep.mubr.f32.mxu0 0.0
        %1724 = vmatmul.mubr.f32.gmra.mrb[0].mxu0 %v1526
        %v1725 = vpop.f32.mrb[0].mxu0
        %v1726 = vadd.f32 0.0, %v1725
        %v1727 = vpop.f32.mrb[0].mxu0
        %1728 = vmatprep.mubr.f32.mxu0 0.0
        %1729 = vmatmul.mubr.f32.gmra.mrb[0].mxu0 %v1528
        %v1730 = vpop.f32.mrb[0].mxu0
        %v1731 = vadd.f32 0.0, %v1730
        %v1732 = vpop.f32.mrb[0].mxu0
        %1733 = vmatprep.mubr.f32.mxu0 0.0
        %1734 = vmatmul.mubr.f32.gmra.mrb[0].mxu0 %v1530
        %v1735 = vpop.f32.mrb[0].mxu0
        %v1736 = vadd.f32 0.0, %v1735
        %v1737 = vpop.f32.mrb[0].mxu0
        %1738 = vmatprep.mubr.f32.mxu0 0.0
        %1739 = vmatmul.mubr.f32.gmra.mrb[0].mxu0 %v1532
        %v1740 = vpop.f32.mrb[0].mxu0
        %v1741 = vadd.f32 0.0, %v1740
        %v1742 = vpop.f32.mrb[0].mxu0
        %1743 = vmatprep.mubr.f32.mxu0 0.0
        %1744 = vmatmul.mubr.f32.gmra.mrb[0].mxu0 %v1534
        %v1745 = vpop.f32.mrb[0].mxu0
        %v1746 = vadd.f32 0.0, %v1745
        %v1747 = vpop.f32.mrb[0].mxu0
        %1748 = vmatprep.mubr.f32.mxu0 0.0
        %1749 = vmatmul.mubr.f32.gmra.mrb[0].mxu0 %v1536
        %v1750 = vpop.f32.mrb[0].mxu0
        %v1751 = vadd.f32 0.0, %v1750
        %v1752 = vpop.f32.mrb[0].mxu0
        %1753 = vmatprep.mubr.f32.mxu0 0.0
        %1754 = vmatmul.mubr.f32.gmra.mrb[0].mxu0 %v1538
        %v1755 = vpop.f32.mrb[0].mxu0
        %v1756 = vadd.f32 0.0, %v1755
        %v1757 = vpop.f32.mrb[0].mxu0
        %1758 = vmatprep.mubr.f32.mxu0 0.0
        %1759 = vmatmul.mubr.f32.gmra.mrb[0].mxu0 %v1540
        %v1760 = vpop.f32.mrb[0].mxu0
        %v1761 = vadd.f32 0.0, %v1760
        %v1762 = vpop.f32.mrb[0].mxu0
        %1763 = vmatprep.mubr.f32.mxu0 0.0
        %1764 = vmatmul.mubr.f32.gmra.mrb[0].mxu0 %v1542
        %v1765 = vpop.f32.mrb[0].mxu0
        %v1766 = vadd.f32 0.0, %v1765
        %v1767 = vpop.f32.mrb[0].mxu0
        %1768 = vdwg.mxu0
        %v1769 = vadd.f32 %v1173, %v1611
        %v1770 = vadd.f32 %v1178, %v1616
        %v1771 = vadd.f32 %v1183, %v1621
        %v1772 = vadd.f32 %v1188, %v1626
        %v1773 = vadd.f32 %v1193, %v1631
        %v1774 = vadd.f32 %v1198, %v1636
        %v1775 = vadd.f32 %v1203, %v1641
        %v1776 = vadd.f32 %v1208, %v1646
        %v1777 = vadd.f32 %v1213, %v1651
        %v1778 = vadd.f32 %v1218, %v1656
        %v1779 = vadd.f32 %v1223, %v1661
        %v1780 = vadd.f32 %v1228, %v1666
        %v1781 = vadd.f32 %v1233, %v1671
        %v1782 = vadd.f32 %v1238, %v1676
        %v1783 = vadd.f32 %v1243, %v1681
        %v1784 = vadd.f32 %v1248, %v1686
        %v1785 = vadd.f32 %v1253, %v1691
        %v1786 = vadd.f32 %v1258, %v1696
        %v1787 = vadd.f32 %v1263, %v1701
        %v1788 = vadd.f32 %v1268, %v1706
        %v1789 = vadd.f32 %v1273, %v1711
        %v1790 = vadd.f32 %v1278, %v1716
        %v1791 = vadd.f32 %v1283, %v1721
        %v1792 = vadd.f32 %v1288, %v1726
        %v1793 = vadd.f32 %v1293, %v1731
        %v1794 = vadd.f32 %v1298, %v1736
        %v1795 = vadd.f32 %v1303, %v1741
        %v1796 = vadd.f32 %v1308, %v1746
        %v1797 = vadd.f32 %v1313, %v1751
        %v1798 = vadd.f32 %v1318, %v1756
        %v1799 = vadd.f32 %v1323, %v1761
        %v1800 = vadd.f32 %v1328, %v1766
        %v1801 = vld [vmem:[%s2] sm:$0x1]
        %v1803 = vlaneseq
        %v1804 = vshrl.u32 %v1803, 7
        %v1805 = vsub.s32 0, %v1804
        %v1806 = vrot.slane %v1801, %v1805
        %v1808 = vadd.f32 %v1769, %v1806
        %v1809 = vadd.f32 %v1770, %v1806
        %v1810 = vadd.f32 %v1771, %v1806
        %v1811 = vadd.f32 %v1772, %v1806
        %v1812 = vadd.f32 %v1773, %v1806
        %v1813 = vadd.f32 %v1774, %v1806
        %v1814 = vadd.f32 %v1775, %v1806
        %v1815 = vadd.f32 %v1776, %v1806
        %v1816 = vadd.f32 %v1777, %v1806
        %v1817 = vadd.f32 %v1778, %v1806
        %v1818 = vadd.f32 %v1779, %v1806
        %v1819 = vadd.f32 %v1780, %v1806
        %v1820 = vadd.f32 %v1781, %v1806
        %v1821 = vadd.f32 %v1782, %v1806
        %v1822 = vadd.f32 %v1783, %v1806
        %v1823 = vadd.f32 %v1784, %v1806
        %v1824 = vadd.f32 %v1785, %v1806
        %v1825 = vadd.f32 %v1786, %v1806
        %v1826 = vadd.f32 %v1787, %v1806
        %v1827 = vadd.f32 %v1788, %v1806
        %v1828 = vadd.f32 %v1789, %v1806
        %v1829 = vadd.f32 %v1790, %v1806
        %v1830 = vadd.f32 %v1791, %v1806
        %v1831 = vadd.f32 %v1792, %v1806
        %v1832 = vadd.f32 %v1793, %v1806
        %v1833 = vadd.f32 %v1794, %v1806
        %v1834 = vadd.f32 %v1795, %v1806
        %v1835 = vadd.f32 %v1796, %v1806
        %v1836 = vadd.f32 %v1797, %v1806
        %v1837 = vadd.f32 %v1798, %v1806
        %v1838 = vadd.f32 %v1799, %v1806
        %v1839 = vadd.f32 %v1800, %v1806
        %vm1840 = vcmp.gt.f32.partialorder %v1808, 0.0
        %vm1841 = vcmp.gt.f32.partialorder %v1809, 0.0
        %vm1842 = vcmp.gt.f32.partialorder %v1810, 0.0
        %vm1843 = vcmp.gt.f32.partialorder %v1811, 0.0
        %vm1844 = vcmp.gt.f32.partialorder %v1812, 0.0
        %vm1845 = vcmp.gt.f32.partialorder %v1813, 0.0
        %vm1846 = vcmp.gt.f32.partialorder %v1814, 0.0
        %vm1847 = vcmp.gt.f32.partialorder %v1815, 0.0
        %vm1848 = vcmp.gt.f32.partialorder %v1816, 0.0
        %vm1849 = vcmp.gt.f32.partialorder %v1817, 0.0
        %vm1850 = vcmp.gt.f32.partialorder %v1818, 0.0
        %vm1851 = vcmp.gt.f32.partialorder %v1819, 0.0
        %vm1852 = vcmp.gt.f32.partialorder %v1820, 0.0
        %vm1853 = vcmp.gt.f32.partialorder %v1821, 0.0
        %vm1854 = vcmp.gt.f32.partialorder %v1822, 0.0
        %vm1855 = vcmp.gt.f32.partialorder %v1823, 0.0
        %vm1856 = vcmp.gt.f32.partialorder %v1824, 0.0
        %vm1857 = vcmp.gt.f32.partialorder %v1825, 0.0
        %vm1858 = vcmp.gt.f32.partialorder %v1826, 0.0
        %vm1859 = vcmp.gt.f32.partialorder %v1827, 0.0
        %vm1860 = vcmp.gt.f32.partialorder %v1828, 0.0
        %vm1861 = vcmp.gt.f32.partialorder %v1829, 0.0
        %vm1862 = vcmp.gt.f32.partialorder %v1830, 0.0
        %vm1863 = vcmp.gt.f32.partialorder %v1831, 0.0
        %vm1864 = vcmp.gt.f32.partialorder %v1832, 0.0
        %vm1865 = vcmp.gt.f32.partialorder %v1833, 0.0
        %vm1866 = vcmp.gt.f32.partialorder %v1834, 0.0
        %vm1867 = vcmp.gt.f32.partialorder %v1835, 0.0
        %vm1868 = vcmp.gt.f32.partialorder %v1836, 0.0
        %vm1869 = vcmp.gt.f32.partialorder %v1837, 0.0
        %vm1870 = vcmp.gt.f32.partialorder %v1838, 0.0
        %vm1871 = vcmp.gt.f32.partialorder %v1839, 0.0
        %v1872 = vmul.f32 %v1808, 0.2
        %v1873 = vmul.f32 %v1809, 0.2
        %v1874 = vmul.f32 %v1810, 0.2
        %v1875 = vmul.f32 %v1811, 0.2
        %v1876 = vmul.f32 %v1812, 0.2
        %v1877 = vmul.f32 %v1813, 0.2
        %v1878 = vmul.f32 %v1814, 0.2
        %v1879 = vmul.f32 %v1815, 0.2
        %v1880 = vmul.f32 %v1816, 0.2
        %v1881 = vmul.f32 %v1817, 0.2
        %v1882 = vmul.f32 %v1818, 0.2
        %v1883 = vmul.f32 %v1819, 0.2
        %v1884 = vmul.f32 %v1820, 0.2
        %v1885 = vmul.f32 %v1821, 0.2
        %v1886 = vmul.f32 %v1822, 0.2
        %v1887 = vmul.f32 %v1823, 0.2
        %v1888 = vmul.f32 %v1824, 0.2
        %v1889 = vmul.f32 %v1825, 0.2
        %v1890 = vmul.f32 %v1826, 0.2
        %v1891 = vmul.f32 %v1827, 0.2
        %v1892 = vmul.f32 %v1828, 0.2
        %v1893 = vmul.f32 %v1829, 0.2
        %v1894 = vmul.f32 %v1830, 0.2
        %v1895 = vmul.f32 %v1831, 0.2
        %v1896 = vmul.f32 %v1832, 0.2
        %v1897 = vmul.f32 %v1833, 0.2
        %v1898 = vmul.f32 %v1834, 0.2
        %v1899 = vmul.f32 %v1835, 0.2
        %v1900 = vmul.f32 %v1836, 0.2
        %v1901 = vmul.f32 %v1837, 0.2
        %v1902 = vmul.f32 %v1838, 0.2
        %v1903 = vmul.f32 %v1839, 0.2
        %v1904 = vsel %vm1840, %v1808, %v1872
        %v1905 = vsel %vm1841, %v1809, %v1873
        %v1906 = vsel %vm1842, %v1810, %v1874
        %v1907 = vsel %vm1843, %v1811, %v1875
        %v1908 = vsel %vm1844, %v1812, %v1876
        %v1909 = vsel %vm1845, %v1813, %v1877
        %v1910 = vsel %vm1846, %v1814, %v1878
        %v1911 = vsel %vm1847, %v1815, %v1879
        %v1912 = vsel %vm1848, %v1816, %v1880
        %v1913 = vsel %vm1849, %v1817, %v1881
        %v1914 = vsel %vm1850, %v1818, %v1882
        %v1915 = vsel %vm1851, %v1819, %v1883
        %v1916 = vsel %vm1852, %v1820, %v1884
        %v1917 = vsel %vm1853, %v1821, %v1885
        %v1918 = vsel %vm1854, %v1822, %v1886
        %v1919 = vsel %vm1855, %v1823, %v1887
        %v1920 = vsel %vm1856, %v1824, %v1888
        %v1921 = vsel %vm1857, %v1825, %v1889
        %v1922 = vsel %vm1858, %v1826, %v1890
        %v1923 = vsel %vm1859, %v1827, %v1891
        %v1924 = vsel %vm1860, %v1828, %v1892
        %v1925 = vsel %vm1861, %v1829, %v1893
        %v1926 = vsel %vm1862, %v1830, %v1894
        %v1927 = vsel %vm1863, %v1831, %v1895
        %v1928 = vsel %vm1864, %v1832, %v1896
        %v1929 = vsel %vm1865, %v1833, %v1897
        %v1930 = vsel %vm1866, %v1834, %v1898
        %v1931 = vsel %vm1867, %v1835, %v1899
        %v1932 = vsel %vm1868, %v1836, %v1900
        %v1933 = vsel %vm1869, %v1837, %v1901
        %v1934 = vsel %vm1870, %v1838, %v1902
        %v1935 = vsel %vm1871, %v1839, %v1903
        %1968 = vrot.lane.b32.xlu0 %v1904, 64
        %v1969 = vpop.permute.xlu0 %1968
        %1970 = vrot.lane.b32.xlu0 %v1905, 64
        %v1971 = vpop.permute.xlu0 %1970
        %1972 = vrot.lane.b32.xlu0 %v1906, 64
        %v1973 = vpop.permute.xlu0 %1972
        %1974 = vrot.lane.b32.xlu0 %v1907, 64
        %v1975 = vpop.permute.xlu0 %1974
        %1976 = vrot.lane.b32.xlu0 %v1908, 64
        %v1977 = vpop.permute.xlu0 %1976
        %1978 = vrot.lane.b32.xlu0 %v1909, 64
        %v1979 = vpop.permute.xlu0 %1978
        %1980 = vrot.lane.b32.xlu0 %v1910, 64
        %v1981 = vpop.permute.xlu0 %1980
        %1982 = vrot.lane.b32.xlu0 %v1911, 64
        %v1983 = vpop.permute.xlu0 %1982
        %1984 = vrot.lane.b32.xlu0 %v1912, 64
        %v1985 = vpop.permute.xlu0 %1984
        %1986 = vrot.lane.b32.xlu0 %v1913, 64
        %v1987 = vpop.permute.xlu0 %1986
        %1988 = vrot.lane.b32.xlu0 %v1914, 64
        %v1989 = vpop.permute.xlu0 %1988
        %1990 = vrot.lane.b32.xlu0 %v1915, 64
        %v1991 = vpop.permute.xlu0 %1990
        %1992 = vrot.lane.b32.xlu0 %v1916, 64
        %v1993 = vpop.permute.xlu0 %1992
        %1994 = vrot.lane.b32.xlu0 %v1917, 64
        %v1995 = vpop.permute.xlu0 %1994
        %1996 = vrot.lane.b32.xlu0 %v1918, 64
        %v1997 = vpop.permute.xlu0 %1996
        %1998 = vrot.lane.b32.xlu0 %v1919, 64
        %v1999 = vpop.permute.xlu0 %1998
        %2000 = vrot.lane.b32.xlu0 %v1920, 64
        %v2001 = vpop.permute.xlu0 %2000
        %2002 = vrot.lane.b32.xlu0 %v1921, 64
        %v2003 = vpop.permute.xlu0 %2002
        %2004 = vrot.lane.b32.xlu0 %v1922, 64
        %v2005 = vpop.permute.xlu0 %2004
        %2006 = vrot.lane.b32.xlu0 %v1923, 64
        %v2007 = vpop.permute.xlu0 %2006
        %2008 = vrot.lane.b32.xlu0 %v1924, 64
        %v2009 = vpop.permute.xlu0 %2008
        %2010 = vrot.lane.b32.xlu0 %v1925, 64
        %v2011 = vpop.permute.xlu0 %2010
        %2012 = vrot.lane.b32.xlu0 %v1926, 64
        %v2013 = vpop.permute.xlu0 %2012
        %2014 = vrot.lane.b32.xlu0 %v1927, 64
        %v2015 = vpop.permute.xlu0 %2014
        %2016 = vrot.lane.b32.xlu0 %v1928, 64
        %v2017 = vpop.permute.xlu0 %2016
        %2018 = vrot.lane.b32.xlu0 %v1929, 64
        %v2019 = vpop.permute.xlu0 %2018
        %2020 = vrot.lane.b32.xlu0 %v1930, 64
        %v2021 = vpop.permute.xlu0 %2020
        %2022 = vrot.lane.b32.xlu0 %v1931, 64
        %v2023 = vpop.permute.xlu0 %2022
        %2024 = vrot.lane.b32.xlu0 %v1932, 64
        %v2025 = vpop.permute.xlu0 %2024
        %2026 = vrot.lane.b32.xlu0 %v1933, 64
        %v2027 = vpop.permute.xlu0 %2026
        %2028 = vrot.lane.b32.xlu0 %v1934, 64
        %v2029 = vpop.permute.xlu0 %2028
        %2030 = vrot.lane.b32.xlu0 %v1935, 64
        %v2031 = vpop.permute.xlu0 %2030
        %vm2064 = vcmask 785920
        %2065 = vst.msk [vmem:[#allocation2 + $0x10] sm:$0xff] %vm2064, %v1969
        %2066 = vst.msk [vmem:[#allocation2 + $0x20] sm:$0xff] %vm2064, %v1971
        %2067 = vst.msk [vmem:[#allocation2 + $0x30] sm:$0xff] %vm2064, %v1973
        %2068 = vst.msk [vmem:[#allocation2 + $0x40] sm:$0xff] %vm2064, %v1975
        %2069 = vst.msk [vmem:[#allocation2 + $0x50] sm:$0xff] %vm2064, %v1977
        %2070 = vst.msk [vmem:[#allocation2 + $0x60] sm:$0xff] %vm2064, %v1979
        %2071 = vst.msk [vmem:[#allocation2 + $0x70] sm:$0xff] %vm2064, %v1981
        %2072 = vst.msk [vmem:[#allocation2 + $0x80] sm:$0xff] %vm2064, %v1983
        %2073 = vst.msk [vmem:[#allocation2 + $0xb0] sm:$0xff] %vm2064, %v1985
        %2074 = vst.msk [vmem:[#allocation2 + $0xc0] sm:$0xff] %vm2064, %v1987
        %2075 = vst.msk [vmem:[#allocation2 + $0xd0] sm:$0xff] %vm2064, %v1989
        %2076 = vst.msk [vmem:[#allocation2 + $0xe0] sm:$0xff] %vm2064, %v1991
        %2077 = vst.msk [vmem:[#allocation2 + $0xf0] sm:$0xff] %vm2064, %v1993
        %2078 = vst.msk [vmem:[#allocation2 + $0x100] sm:$0xff] %vm2064, %v1995
        %2079 = vst.msk [vmem:[#allocation2 + $0x110] sm:$0xff] %vm2064, %v1997
        %2080 = vst.msk [vmem:[#allocation2 + $0x120] sm:$0xff] %vm2064, %v1999
        %2081 = vst.msk [vmem:[#allocation2 + $0x150] sm:$0xff] %vm2064, %v2001
        %2082 = vst.msk [vmem:[#allocation2 + $0x160] sm:$0xff] %vm2064, %v2003
        %2083 = vst.msk [vmem:[#allocation2 + $0x170] sm:$0xff] %vm2064, %v2005
        %2084 = vst.msk [vmem:[#allocation2 + $0x180] sm:$0xff] %vm2064, %v2007
        %2085 = vst.msk [vmem:[#allocation2 + $0x190] sm:$0xff] %vm2064, %v2009
        %2086 = vst.msk [vmem:[#allocation2 + $0x1a0] sm:$0xff] %vm2064, %v2011
        %2087 = vst.msk [vmem:[#allocation2 + $0x1b0] sm:$0xff] %vm2064, %v2013
        %2088 = vst.msk [vmem:[#allocation2 + $0x1c0] sm:$0xff] %vm2064, %v2015
        %2089 = vst.msk [vmem:[#allocation2 + $0x1f0] sm:$0xff] %vm2064, %v2017
        %2090 = vst.msk [vmem:[#allocation2 + $0x200] sm:$0xff] %vm2064, %v2019
        %2091 = vst.msk [vmem:[#allocation2 + $0x210] sm:$0xff] %vm2064, %v2021
        %2092 = vst.msk [vmem:[#allocation2 + $0x220] sm:$0xff] %vm2064, %v2023
        %2093 = vst.msk [vmem:[#allocation2 + $0x230] sm:$0xff] %vm2064, %v2025
        %2094 = vst.msk [vmem:[#allocation2 + $0x240] sm:$0xff] %vm2064, %v2027
        %2095 = vst.msk [vmem:[#allocation2 + $0x250] sm:$0xff] %vm2064, %v2029
        %2096 = vst.msk [vmem:[#allocation2 + $0x260] sm:$0xff] %vm2064, %v2031
        %v2097 = vld [vmem:[#allocation2] sm:$0xc0]
        %v2098 = vld [vmem:[#allocation2 + $0x10] sm:$0xff]
        %v2099 = vld [vmem:[#allocation2 + $0x20] sm:$0xff]
        %v2100 = vld [vmem:[#allocation2 + $0x30] sm:$0xff]
        %v2101 = vld [vmem:[#allocation2 + $0x40] sm:$0xff]
        %v2102 = vld [vmem:[#allocation2 + $0x50] sm:$0xff]
        %v2103 = vld [vmem:[#allocation2 + $0x60] sm:$0xff]
        %v2104 = vld [vmem:[#allocation2 + $0x70] sm:$0xff]
        %v2105 = vld [vmem:[#allocation2 + $0x80] sm:$0x3f]
        %v2106 = vld [vmem:[#allocation2 + $0xa0] sm:$0xc0]
        %v2107 = vld [vmem:[#allocation2 + $0xb0] sm:$0xff]
        %v2108 = vld [vmem:[#allocation2 + $0xc0] sm:$0xff]
        %v2109 = vld [vmem:[#allocation2 + $0xd0] sm:$0xff]
        %v2110 = vld [vmem:[#allocation2 + $0xe0] sm:$0xff]
        %v2111 = vld [vmem:[#allocation2 + $0xf0] sm:$0xff]
        %v2112 = vld [vmem:[#allocation2 + $0x100] sm:$0xff]
        %v2113 = vld [vmem:[#allocation2 + $0x110] sm:$0xff]
        %v2114 = vld [vmem:[#allocation2 + $0x120] sm:$0x3f]
        %v2115 = vld [vmem:[#allocation2 + $0x140] sm:$0xc0]
        %v2116 = vld [vmem:[#allocation2 + $0x150] sm:$0xff]
        %v2117 = vld [vmem:[#allocation2 + $0x160] sm:$0xff]
        %v2118 = vld [vmem:[#allocation2 + $0x170] sm:$0xff]
        %v2119 = vld [vmem:[#allocation2 + $0x180] sm:$0xff]
        %v2120 = vld [vmem:[#allocation2 + $0x190] sm:$0xff]
        %v2121 = vld [vmem:[#allocation2 + $0x1a0] sm:$0xff]
        %v2122 = vld [vmem:[#allocation2 + $0x1b0] sm:$0xff]
        %v2123 = vld [vmem:[#allocation2 + $0x1c0] sm:$0x3f]
        %v2124 = vld [vmem:[#allocation2 + $0x1e0] sm:$0xc0]
        %v2125 = vld [vmem:[#allocation2 + $0x1f0] sm:$0xff]
        %v2126 = vld [vmem:[#allocation2 + $0x200] sm:$0xff]
        %v2127 = vld [vmem:[#allocation2 + $0x210] sm:$0xff]
        %v2128 = vld [vmem:[#allocation2 + $0x220] sm:$0xff]
        %v2129 = vld [vmem:[#allocation2 + $0x230] sm:$0xff]
        %v2130 = vld [vmem:[#allocation2 + $0x240] sm:$0xff]
        %v2131 = vld [vmem:[#allocation2 + $0x250] sm:$0xff]
        %v2132 = vld [vmem:[#allocation2 + $0x260] sm:$0x3f]
        %vm2169 = vcmask 1041408
        %v2170 = vrot.slane %v2097, 6
        %v2171 = vrot.slane %v2098, 6
        %v2172 = vsel %vm2169, %v2170, %v2171
        %v2173 = vrot.slane %v2099, 6
        %v2174 = vsel %vm2169, %v2171, %v2173
        %v2175 = vrot.slane %v2100, 6
        %v2176 = vsel %vm2169, %v2173, %v2175
        %v2177 = vrot.slane %v2101, 6
        %v2178 = vsel %vm2169, %v2175, %v2177
        %v2179 = vrot.slane %v2102, 6
        %v2180 = vsel %vm2169, %v2177, %v2179
        %v2181 = vrot.slane %v2103, 6
        %v2182 = vsel %vm2169, %v2179, %v2181
        %v2183 = vrot.slane %v2104, 6
        %v2184 = vsel %vm2169, %v2181, %v2183
        %v2185 = vrot.slane %v2105, 6
        %v2186 = vsel %vm2169, %v2183, %v2185
        %v2187 = vrot.slane %v2106, 6
        %v2188 = vrot.slane %v2107, 6
        %v2189 = vsel %vm2169, %v2187, %v2188
        %v2190 = vrot.slane %v2108, 6
        %v2191 = vsel %vm2169, %v2188, %v2190
        %v2192 = vrot.slane %v2109, 6
        %v2193 = vsel %vm2169, %v2190, %v2192
        %v2194 = vrot.slane %v2110, 6
        %v2195 = vsel %vm2169, %v2192, %v2194
        %v2196 = vrot.slane %v2111, 6
        %v2197 = vsel %vm2169, %v2194, %v2196
        %v2198 = vrot.slane %v2112, 6
        %v2199 = vsel %vm2169, %v2196, %v2198
        %v2200 = vrot.slane %v2113, 6
        %v2201 = vsel %vm2169, %v2198, %v2200
        %v2202 = vrot.slane %v2114, 6
        %v2203 = vsel %vm2169, %v2200, %v2202
        %v2204 = vrot.slane %v2115, 6
        %v2205 = vrot.slane %v2116, 6
        %v2206 = vsel %vm2169, %v2204, %v2205
        %v2207 = vrot.slane %v2117, 6
        %v2208 = vsel %vm2169, %v2205, %v2207
        %v2209 = vrot.slane %v2118, 6
        %v2210 = vsel %vm2169, %v2207, %v2209
        %v2211 = vrot.slane %v2119, 6
        %v2212 = vsel %vm2169, %v2209, %v2211
        %v2213 = vrot.slane %v2120, 6
        %v2214 = vsel %vm2169, %v2211, %v2213
        %v2215 = vrot.slane %v2121, 6
        %v2216 = vsel %vm2169, %v2213, %v2215
        %v2217 = vrot.slane %v2122, 6
        %v2218 = vsel %vm2169, %v2215, %v2217
        %v2219 = vrot.slane %v2123, 6
        %v2220 = vsel %vm2169, %v2217, %v2219
        %v2221 = vrot.slane %v2124, 6
        %v2222 = vrot.slane %v2125, 6
        %v2223 = vsel %vm2169, %v2221, %v2222
        %v2224 = vrot.slane %v2126, 6
        %v2225 = vsel %vm2169, %v2222, %v2224
        %v2226 = vrot.slane %v2127, 6
        %v2227 = vsel %vm2169, %v2224, %v2226
        %v2228 = vrot.slane %v2128, 6
        %v2229 = vsel %vm2169, %v2226, %v2228
        %v2230 = vrot.slane %v2129, 6
        %v2231 = vsel %vm2169, %v2228, %v2230
        %v2232 = vrot.slane %v2130, 6
        %v2233 = vsel %vm2169, %v2230, %v2232
        %v2234 = vrot.slane %v2131, 6
        %v2235 = vsel %vm2169, %v2232, %v2234
        %v2236 = vrot.slane %v2132, 6
        %v2237 = vsel %vm2169, %v2234, %v2236
        %v2238 = vld [vmem:[%s3] sm:$0xff]
        %v2239 = vld [vmem:[%s3 + $0x8] sm:$0xff]
        %v2240 = vld [vmem:[%s3 + $0x10] sm:$0xff]
        %v2241 = vld [vmem:[%s3 + $0x18] sm:$0xff]
        %v2242 = vld [vmem:[%s3 + $0x20] sm:$0xff]
        %v2243 = vld [vmem:[%s3 + $0x28] sm:$0xff]
        %v2244 = vld [vmem:[%s3 + $0x30] sm:$0xff]
        %v2245 = vld [vmem:[%s3 + $0x38] sm:$0xff]
        %v2246 = vld [vmem:[%s3 + $0x40] sm:$0xff]
        %v2247 = vld [vmem:[%s3 + $0x48] sm:$0xff]
        %v2248 = vld [vmem:[%s3 + $0x50] sm:$0xff]
        %v2249 = vld [vmem:[%s3 + $0x58] sm:$0xff]
        %v2250 = vld [vmem:[#allocation2 + $0x80] sm:$0xff]
        %v2251 = vld [vmem:[#allocation2 + $0x120] sm:$0xff]
        %v2252 = vld [vmem:[#allocation2 + $0x1c0] sm:$0xff]
        %v2253 = vld [vmem:[#allocation2 + $0x260] sm:$0xff]
        %v2254 = vld [vmem:[%s3 + $0x60] sm:$0xff]
        %v2255 = vld [vmem:[%s3 + $0x68] sm:$0xff]
        %v2256 = vld [vmem:[%s3 + $0x70] sm:$0xff]
        %v2257 = vld [vmem:[%s3 + $0x78] sm:$0xff]
        %v2258 = vld [vmem:[%s3 + $0x80] sm:$0xff]
        %v2259 = vld [vmem:[%s3 + $0x88] sm:$0xff]
        %v2260 = vld [vmem:[%s3 + $0x90] sm:$0xff]
        %v2261 = vld [vmem:[%s3 + $0x98] sm:$0xff]
        %v2262 = vld [vmem:[%s3 + $0xa0] sm:$0xff]
        %v2263 = vld [vmem:[%s3 + $0xa8] sm:$0xff]
        %v2264 = vld [vmem:[%s3 + $0xb0] sm:$0xff]
        %v2265 = vld [vmem:[%s3 + $0xb8] sm:$0xff]
        %vm2266 = vcmask 785408
        %v2267 = vsel %vm2266, %v2098, 0
        %v2269 = vsel %vm2266, %v2099, 0
        %v2271 = vsel %vm2266, %v2100, 0
        %v2273 = vsel %vm2266, %v2101, 0
        %v2275 = vsel %vm2266, %v2102, 0
        %v2277 = vsel %vm2266, %v2103, 0
        %v2279 = vsel %vm2266, %v2104, 0
        %v2282 = vsel %vm2266, %v2250, 0
        %v2284 = vsel %vm2266, %v2107, 0
        %v2286 = vsel %vm2266, %v2108, 0
        %v2288 = vsel %vm2266, %v2109, 0
        %v2290 = vsel %vm2266, %v2110, 0
        %v2292 = vsel %vm2266, %v2111, 0
        %v2294 = vsel %vm2266, %v2112, 0
        %v2296 = vsel %vm2266, %v2113, 0
        %v2299 = vsel %vm2266, %v2251, 0
        %v2301 = vsel %vm2266, %v2116, 0
        %v2303 = vsel %vm2266, %v2117, 0
        %v2305 = vsel %vm2266, %v2118, 0
        %v2307 = vsel %vm2266, %v2119, 0
        %v2309 = vsel %vm2266, %v2120, 0
        %v2311 = vsel %vm2266, %v2121, 0
        %v2313 = vsel %vm2266, %v2122, 0
        %v2316 = vsel %vm2266, %v2252, 0
        %v2318 = vsel %vm2266, %v2125, 0
        %v2320 = vsel %vm2266, %v2126, 0
        %v2322 = vsel %vm2266, %v2127, 0
        %v2324 = vsel %vm2266, %v2128, 0
        %v2326 = vsel %vm2266, %v2129, 0
        %v2328 = vsel %vm2266, %v2130, 0
        %v2330 = vsel %vm2266, %v2131, 0
        %v2333 = vsel %vm2266, %v2253, 0
        %2335 = vmatprep.subr.mxu0 0.0
        %2336 = vmatpush1.msra.mxu0 %v2254
        %2337 = vmatprep.subr.mxu0 0.0
        %2338 = vmatpush1.msra.mxu0 %v2255
        %2339 = vmatprep.subr.mxu0 0.0
        %2340 = vmatpush1.msra.mxu0 %v2256
        %2341 = vmatprep.subr.mxu0 0.0
        %2342 = vmatpush1.msra.mxu0 %v2257
        %2343 = vmatprep.subr.mxu0 0.0
        %2344 = vmatpush1.msra.mxu0 %v2258
        %2345 = vmatprep.subr.mxu0 0.0
        %2346 = vmatpush1.msra.mxu0 %v2259
        %2347 = vmatprep.subr.mxu0 0.0
        %2348 = vmatpush1.msra.mxu0 %v2260
        %2349 = vmatprep.subr.mxu0 0.0
        %2350 = vmatpush1.msra.mxu0 %v2261
        %2351 = vmatprep.subr.mxu0 0.0
        %2352 = vmatpush1.msra.mxu0 %v2262
        %2353 = vmatprep.subr.mxu0 0.0
        %2354 = vmatpush1.msra.mxu0 %v2263
        %2355 = vmatprep.subr.mxu0 0.0
        %2356 = vmatpush1.msra.mxu0 %v2264
        %2357 = vmatprep.subr.mxu0 0.0
        %2358 = vmatpush1.msra.mxu0 %v2265
        %2359 = vmatprep.subr.mxu0 0.0
        %2360 = vmatpush1.msra.mxu0 0.0
        %2361 = vmatprep.subr.mxu0 0.0
        %2362 = vmatpush1.msra.mxu0 0.0
        %2363 = vmatprep.subr.mxu0 0.0
        %2364 = vmatpush1.msra.mxu0 0.0
        %2365 = vmatprep.subr.mxu0 0.0
        %2366 = vmatpush1.msra.mxu0 0.0
        %2367 = vmatprep.subr.mxu0 0.0
        %2368 = vmatpush1.msra.mxu0 0.0
        %2369 = vmatprep.subr.mxu0 0.0
        %2370 = vmatpush1.msra.mxu0 0.0
        %2371 = vmatprep.subr.mxu0 0.0
        %2372 = vmatpush1.msra.mxu0 0.0
        %2373 = vmatprep.subr.mxu0 0.0
        %2374 = vmatpush1.msra.mxu0 0.0
        %2375 = vmatprep.subr.mxu0 0.0
        %2376 = vmatpush1.msra.mxu0 0.0
        %2377 = vmatprep.subr.mxu0 0.0
        %2378 = vmatpush1.msra.mxu0 0.0
        %2379 = vmatprep.subr.mxu0 0.0
        %2380 = vmatpush1.msra.mxu0 0.0
        %2381 = vmatprep.subr.mxu0 0.0
        %2382 = vmatpush1.msra.mxu0 0.0
        %2383 = vmatprep.subr.mxu0 0.0
        %2384 = vmatpush1.msra.mxu0 0.0
        %2385 = vmatprep.subr.mxu0 0.0
        %2386 = vmatpush1.msra.mxu0 0.0
        %2387 = vmatprep.subr.mxu0 0.0
        %2388 = vmatpush1.msra.mxu0 0.0
        %2389 = vmatprep.subr.mxu0 0.0
        %2390 = vmatpush1.msra.mxu0 0.0
        %2391 = vmatprep.subr.mxu0 0.0
        %2392 = vmatpush1.msra.mxu0 0.0
        %2393 = vmatprep.subr.mxu0 0.0
        %2394 = vmatpush1.msra.mxu0 0.0
        %2395 = vmatprep.subr.mxu0 0.0
        %2396 = vmatpush1.msra.mxu0 0.0
        %2397 = vmatprep.subr.mxu0 0.0
        %2398 = vmatpush1.msra.mxu0 0.0
        %2399 = vmatprep.mubr.f32.mxu0 0.0
        %2400 = vmatmul.mubr.f32.gmra.mrb[0].mxu0 %v2267
        %v2401 = vpop.f32.mrb[0].mxu0
        %v2402 = vadd.f32 0.0, %v2401
        %v2403 = vpop.f32.mrb[0].mxu0
        %2404 = vmatprep.mubr.f32.mxu0 0.0
        %2405 = vmatmul.mubr.f32.gmra.mrb[0].mxu0 %v2269
        %v2406 = vpop.f32.mrb[0].mxu0
        %v2407 = vadd.f32 0.0, %v2406
        %v2408 = vpop.f32.mrb[0].mxu0
        %2409 = vmatprep.mubr.f32.mxu0 0.0
        %2410 = vmatmul.mubr.f32.gmra.mrb[0].mxu0 %v2271
        %v2411 = vpop.f32.mrb[0].mxu0
        %v2412 = vadd.f32 0.0, %v2411
        %v2413 = vpop.f32.mrb[0].mxu0
        %2414 = vmatprep.mubr.f32.mxu0 0.0
        %2415 = vmatmul.mubr.f32.gmra.mrb[0].mxu0 %v2273
        %v2416 = vpop.f32.mrb[0].mxu0
        %v2417 = vadd.f32 0.0, %v2416
        %v2418 = vpop.f32.mrb[0].mxu0
        %2419 = vmatprep.mubr.f32.mxu0 0.0
        %2420 = vmatmul.mubr.f32.gmra.mrb[0].mxu0 %v2275
        %v2421 = vpop.f32.mrb[0].mxu0
        %v2422 = vadd.f32 0.0, %v2421
        %v2423 = vpop.f32.mrb[0].mxu0
        %2424 = vmatprep.mubr.f32.mxu0 0.0
        %2425 = vmatmul.mubr.f32.gmra.mrb[0].mxu0 %v2277
        %v2426 = vpop.f32.mrb[0].mxu0
        %v2427 = vadd.f32 0.0, %v2426
        %v2428 = vpop.f32.mrb[0].mxu0
        %2429 = vmatprep.mubr.f32.mxu0 0.0
        %2430 = vmatmul.mubr.f32.gmra.mrb[0].mxu0 %v2279
        %v2431 = vpop.f32.mrb[0].mxu0
        %v2432 = vadd.f32 0.0, %v2431
        %v2433 = vpop.f32.mrb[0].mxu0
        %2434 = vmatprep.mubr.f32.mxu0 0.0
        %2435 = vmatmul.mubr.f32.gmra.mrb[0].mxu0 %v2282
        %v2436 = vpop.f32.mrb[0].mxu0
        %v2437 = vadd.f32 0.0, %v2436
        %v2438 = vpop.f32.mrb[0].mxu0
        %2439 = vmatprep.mubr.f32.mxu0 0.0
        %2440 = vmatmul.mubr.f32.gmra.mrb[0].mxu0 %v2284
        %v2441 = vpop.f32.mrb[0].mxu0
        %v2442 = vadd.f32 0.0, %v2441
        %v2443 = vpop.f32.mrb[0].mxu0
        %2444 = vmatprep.mubr.f32.mxu0 0.0
        %2445 = vmatmul.mubr.f32.gmra.mrb[0].mxu0 %v2286
        %v2446 = vpop.f32.mrb[0].mxu0
        %v2447 = vadd.f32 0.0, %v2446
        %v2448 = vpop.f32.mrb[0].mxu0
        %2449 = vmatprep.mubr.f32.mxu0 0.0
        %2450 = vmatmul.mubr.f32.gmra.mrb[0].mxu0 %v2288
        %v2451 = vpop.f32.mrb[0].mxu0
        %v2452 = vadd.f32 0.0, %v2451
        %v2453 = vpop.f32.mrb[0].mxu0
        %2454 = vmatprep.mubr.f32.mxu0 0.0
        %2455 = vmatmul.mubr.f32.gmra.mrb[0].mxu0 %v2290
        %v2456 = vpop.f32.mrb[0].mxu0
        %v2457 = vadd.f32 0.0, %v2456
        %v2458 = vpop.f32.mrb[0].mxu0
        %2459 = vmatprep.mubr.f32.mxu0 0.0
        %2460 = vmatmul.mubr.f32.gmra.mrb[0].mxu0 %v2292
        %v2461 = vpop.f32.mrb[0].mxu0
        %v2462 = vadd.f32 0.0, %v2461
        %v2463 = vpop.f32.mrb[0].mxu0
        %2464 = vmatprep.mubr.f32.mxu0 0.0
        %2465 = vmatmul.mubr.f32.gmra.mrb[0].mxu0 %v2294
        %v2466 = vpop.f32.mrb[0].mxu0
        %v2467 = vadd.f32 0.0, %v2466
        %v2468 = vpop.f32.mrb[0].mxu0
        %2469 = vmatprep.mubr.f32.mxu0 0.0
        %2470 = vmatmul.mubr.f32.gmra.mrb[0].mxu0 %v2296
        %v2471 = vpop.f32.mrb[0].mxu0
        %v2472 = vadd.f32 0.0, %v2471
        %v2473 = vpop.f32.mrb[0].mxu0
        %2474 = vmatprep.mubr.f32.mxu0 0.0
        %2475 = vmatmul.mubr.f32.gmra.mrb[0].mxu0 %v2299
        %v2476 = vpop.f32.mrb[0].mxu0
        %v2477 = vadd.f32 0.0, %v2476
        %v2478 = vpop.f32.mrb[0].mxu0
        %2479 = vmatprep.mubr.f32.mxu0 0.0
        %2480 = vmatmul.mubr.f32.gmra.mrb[0].mxu0 %v2301
        %v2481 = vpop.f32.mrb[0].mxu0
        %v2482 = vadd.f32 0.0, %v2481
        %v2483 = vpop.f32.mrb[0].mxu0
        %2484 = vmatprep.mubr.f32.mxu0 0.0
        %2485 = vmatmul.mubr.f32.gmra.mrb[0].mxu0 %v2303
        %v2486 = vpop.f32.mrb[0].mxu0
        %v2487 = vadd.f32 0.0, %v2486
        %v2488 = vpop.f32.mrb[0].mxu0
        %2489 = vmatprep.mubr.f32.mxu0 0.0
        %2490 = vmatmul.mubr.f32.gmra.mrb[0].mxu0 %v2305
        %v2491 = vpop.f32.mrb[0].mxu0
        %v2492 = vadd.f32 0.0, %v2491
        %v2493 = vpop.f32.mrb[0].mxu0
        %2494 = vmatprep.mubr.f32.mxu0 0.0
        %2495 = vmatmul.mubr.f32.gmra.mrb[0].mxu0 %v2307
        %v2496 = vpop.f32.mrb[0].mxu0
        %v2497 = vadd.f32 0.0, %v2496
        %v2498 = vpop.f32.mrb[0].mxu0
        %2499 = vmatprep.mubr.f32.mxu0 0.0
        %2500 = vmatmul.mubr.f32.gmra.mrb[0].mxu0 %v2309
        %v2501 = vpop.f32.mrb[0].mxu0
        %v2502 = vadd.f32 0.0, %v2501
        %v2503 = vpop.f32.mrb[0].mxu0
        %2504 = vmatprep.mubr.f32.mxu0 0.0
        %2505 = vmatmul.mubr.f32.gmra.mrb[0].mxu0 %v2311
        %v2506 = vpop.f32.mrb[0].mxu0
        %v2507 = vadd.f32 0.0, %v2506
        %v2508 = vpop.f32.mrb[0].mxu0
        %2509 = vmatprep.mubr.f32.mxu0 0.0
        %2510 = vmatmul.mubr.f32.gmra.mrb[0].mxu0 %v2313
        %v2511 = vpop.f32.mrb[0].mxu0
        %v2512 = vadd.f32 0.0, %v2511
        %v2513 = vpop.f32.mrb[0].mxu0
        %2514 = vmatprep.mubr.f32.mxu0 0.0
        %2515 = vmatmul.mubr.f32.gmra.mrb[0].mxu0 %v2316
        %v2516 = vpop.f32.mrb[0].mxu0
        %v2517 = vadd.f32 0.0, %v2516
        %v2518 = vpop.f32.mrb[0].mxu0
        %2519 = vmatprep.mubr.f32.mxu0 0.0
        %2520 = vmatmul.mubr.f32.gmra.mrb[0].mxu0 %v2318
        %v2521 = vpop.f32.mrb[0].mxu0
        %v2522 = vadd.f32 0.0, %v2521
        %v2523 = vpop.f32.mrb[0].mxu0
        %2524 = vmatprep.mubr.f32.mxu0 0.0
        %2525 = vmatmul.mubr.f32.gmra.mrb[0].mxu0 %v2320
        %v2526 = vpop.f32.mrb[0].mxu0
        %v2527 = vadd.f32 0.0, %v2526
        %v2528 = vpop.f32.mrb[0].mxu0
        %2529 = vmatprep.mubr.f32.mxu0 0.0
        %2530 = vmatmul.mubr.f32.gmra.mrb[0].mxu0 %v2322
        %v2531 = vpop.f32.mrb[0].mxu0
        %v2532 = vadd.f32 0.0, %v2531
        %v2533 = vpop.f32.mrb[0].mxu0
        %2534 = vmatprep.mubr.f32.mxu0 0.0
        %2535 = vmatmul.mubr.f32.gmra.mrb[0].mxu0 %v2324
        %v2536 = vpop.f32.mrb[0].mxu0
        %v2537 = vadd.f32 0.0, %v2536
        %v2538 = vpop.f32.mrb[0].mxu0
        %2539 = vmatprep.mubr.f32.mxu0 0.0
        %2540 = vmatmul.mubr.f32.gmra.mrb[0].mxu0 %v2326
        %v2541 = vpop.f32.mrb[0].mxu0
        %v2542 = vadd.f32 0.0, %v2541
        %v2543 = vpop.f32.mrb[0].mxu0
        %2544 = vmatprep.mubr.f32.mxu0 0.0
        %2545 = vmatmul.mubr.f32.gmra.mrb[0].mxu0 %v2328
        %v2546 = vpop.f32.mrb[0].mxu0
        %v2547 = vadd.f32 0.0, %v2546
        %v2548 = vpop.f32.mrb[0].mxu0
        %2549 = vmatprep.mubr.f32.mxu0 0.0
        %2550 = vmatmul.mubr.f32.gmra.mrb[0].mxu0 %v2330
        %v2551 = vpop.f32.mrb[0].mxu0
        %v2552 = vadd.f32 0.0, %v2551
        %v2553 = vpop.f32.mrb[0].mxu0
        %2554 = vmatprep.mubr.f32.mxu0 0.0
        %2555 = vmatmul.mubr.f32.gmra.mrb[0].mxu0 %v2333
        %v2556 = vpop.f32.mrb[0].mxu0
        %v2557 = vadd.f32 0.0, %v2556
        %v2558 = vpop.f32.mrb[0].mxu0
        %2559 = vdwg.mxu0
        %v2560 = vsel %vm2266, %v2172, 0
        %v2562 = vsel %vm2266, %v2174, 0
        %v2564 = vsel %vm2266, %v2176, 0
        %v2566 = vsel %vm2266, %v2178, 0
        %v2568 = vsel %vm2266, %v2180, 0
        %v2570 = vsel %vm2266, %v2182, 0
        %v2572 = vsel %vm2266, %v2184, 0
        %v2574 = vsel %vm2266, %v2186, 0
        %v2576 = vsel %vm2266, %v2189, 0
        %v2578 = vsel %vm2266, %v2191, 0
        %v2580 = vsel %vm2266, %v2193, 0
        %v2582 = vsel %vm2266, %v2195, 0
        %v2584 = vsel %vm2266, %v2197, 0
        %v2586 = vsel %vm2266, %v2199, 0
        %v2588 = vsel %vm2266, %v2201, 0
        %v2590 = vsel %vm2266, %v2203, 0
        %v2592 = vsel %vm2266, %v2206, 0
        %v2594 = vsel %vm2266, %v2208, 0
        %v2596 = vsel %vm2266, %v2210, 0
        %v2598 = vsel %vm2266, %v2212, 0
        %v2600 = vsel %vm2266, %v2214, 0
        %v2602 = vsel %vm2266, %v2216, 0
        %v2604 = vsel %vm2266, %v2218, 0
        %v2606 = vsel %vm2266, %v2220, 0
        %v2608 = vsel %vm2266, %v2223, 0
        %v2610 = vsel %vm2266, %v2225, 0
        %v2612 = vsel %vm2266, %v2227, 0
        %v2614 = vsel %vm2266, %v2229, 0
        %v2616 = vsel %vm2266, %v2231, 0
        %v2618 = vsel %vm2266, %v2233, 0
        %v2620 = vsel %vm2266, %v2235, 0
        %v2622 = vsel %vm2266, %v2237, 0
        %2624 = vmatprep.subr.mxu0 0.0
        %2625 = vmatpush1.msra.mxu0 %v2238
        %2626 = vmatprep.subr.mxu0 0.0
        %2627 = vmatpush1.msra.mxu0 %v2239
        %2628 = vmatprep.subr.mxu0 0.0
        %2629 = vmatpush1.msra.mxu0 %v2240
        %2630 = vmatprep.subr.mxu0 0.0
        %2631 = vmatpush1.msra.mxu0 %v2241
        %2632 = vmatprep.subr.mxu0 0.0
        %2633 = vmatpush1.msra.mxu0 %v2242
        %2634 = vmatprep.subr.mxu0 0.0
        %2635 = vmatpush1.msra.mxu0 %v2243
        %2636 = vmatprep.subr.mxu0 0.0
        %2637 = vmatpush1.msra.mxu0 %v2244
        %2638 = vmatprep.subr.mxu0 0.0
        %2639 = vmatpush1.msra.mxu0 %v2245
        %2640 = vmatprep.subr.mxu0 0.0
        %2641 = vmatpush1.msra.mxu0 %v2246
        %2642 = vmatprep.subr.mxu0 0.0
        %2643 = vmatpush1.msra.mxu0 %v2247
        %2644 = vmatprep.subr.mxu0 0.0
        %2645 = vmatpush1.msra.mxu0 %v2248
        %2646 = vmatprep.subr.mxu0 0.0
        %2647 = vmatpush1.msra.mxu0 %v2249
        %2648 = vmatprep.subr.mxu0 0.0
        %2649 = vmatpush1.msra.mxu0 0.0
        %2650 = vmatprep.subr.mxu0 0.0
        %2651 = vmatpush1.msra.mxu0 0.0
        %2652 = vmatprep.subr.mxu0 0.0
        %2653 = vmatpush1.msra.mxu0 0.0
        %2654 = vmatprep.subr.mxu0 0.0
        %2655 = vmatpush1.msra.mxu0 0.0
        %2656 = vmatprep.subr.mxu0 0.0
        %2657 = vmatpush1.msra.mxu0 0.0
        %2658 = vmatprep.subr.mxu0 0.0
        %2659 = vmatpush1.msra.mxu0 0.0
        %2660 = vmatprep.subr.mxu0 0.0
        %2661 = vmatpush1.msra.mxu0 0.0
        %2662 = vmatprep.subr.mxu0 0.0
        %2663 = vmatpush1.msra.mxu0 0.0
        %2664 = vmatprep.subr.mxu0 0.0
        %2665 = vmatpush1.msra.mxu0 0.0
        %2666 = vmatprep.subr.mxu0 0.0
        %2667 = vmatpush1.msra.mxu0 0.0
        %2668 = vmatprep.subr.mxu0 0.0
        %2669 = vmatpush1.msra.mxu0 0.0
        %2670 = vmatprep.subr.mxu0 0.0
        %2671 = vmatpush1.msra.mxu0 0.0
        %2672 = vmatprep.subr.mxu0 0.0
        %2673 = vmatpush1.msra.mxu0 0.0
        %2674 = vmatprep.subr.mxu0 0.0
        %2675 = vmatpush1.msra.mxu0 0.0
        %2676 = vmatprep.subr.mxu0 0.0
        %2677 = vmatpush1.msra.mxu0 0.0
        %2678 = vmatprep.subr.mxu0 0.0
        %2679 = vmatpush1.msra.mxu0 0.0
        %2680 = vmatprep.subr.mxu0 0.0
        %2681 = vmatpush1.msra.mxu0 0.0
        %2682 = vmatprep.subr.mxu0 0.0
        %2683 = vmatpush1.msra.mxu0 0.0
        %2684 = vmatprep.subr.mxu0 0.0
        %2685 = vmatpush1.msra.mxu0 0.0
        %2686 = vmatprep.subr.mxu0 0.0
        %2687 = vmatpush1.msra.mxu0 0.0
        %2688 = vmatprep.mubr.f32.mxu0 0.0
        %2689 = vmatmul.mubr.f32.gmra.mrb[0].mxu0 %v2560
        %v2690 = vpop.f32.mrb[0].mxu0
        %v2691 = vadd.f32 %v2402, %v2690
        %v2692 = vpop.f32.mrb[0].mxu0
        %2693 = vmatprep.mubr.f32.mxu0 0.0
        %2694 = vmatmul.mubr.f32.gmra.mrb[0].mxu0 %v2562
        %v2695 = vpop.f32.mrb[0].mxu0
        %v2696 = vadd.f32 %v2407, %v2695
        %v2697 = vpop.f32.mrb[0].mxu0
        %2698 = vmatprep.mubr.f32.mxu0 0.0
        %2699 = vmatmul.mubr.f32.gmra.mrb[0].mxu0 %v2564
        %v2700 = vpop.f32.mrb[0].mxu0
        %v2701 = vadd.f32 %v2412, %v2700
        %v2702 = vpop.f32.mrb[0].mxu0
        %2703 = vmatprep.mubr.f32.mxu0 0.0
        %2704 = vmatmul.mubr.f32.gmra.mrb[0].mxu0 %v2566
        %v2705 = vpop.f32.mrb[0].mxu0
        %v2706 = vadd.f32 %v2417, %v2705
        %v2707 = vpop.f32.mrb[0].mxu0
        %2708 = vmatprep.mubr.f32.mxu0 0.0
        %2709 = vmatmul.mubr.f32.gmra.mrb[0].mxu0 %v2568
        %v2710 = vpop.f32.mrb[0].mxu0
        %v2711 = vadd.f32 %v2422, %v2710
        %v2712 = vpop.f32.mrb[0].mxu0
        %2713 = vmatprep.mubr.f32.mxu0 0.0
        %2714 = vmatmul.mubr.f32.gmra.mrb[0].mxu0 %v2570
        %v2715 = vpop.f32.mrb[0].mxu0
        %v2716 = vadd.f32 %v2427, %v2715
        %v2717 = vpop.f32.mrb[0].mxu0
        %2718 = vmatprep.mubr.f32.mxu0 0.0
        %2719 = vmatmul.mubr.f32.gmra.mrb[0].mxu0 %v2572
        %v2720 = vpop.f32.mrb[0].mxu0
        %v2721 = vadd.f32 %v2432, %v2720
        %v2722 = vpop.f32.mrb[0].mxu0
        %2723 = vmatprep.mubr.f32.mxu0 0.0
        %2724 = vmatmul.mubr.f32.gmra.mrb[0].mxu0 %v2574
        %v2725 = vpop.f32.mrb[0].mxu0
        %v2726 = vadd.f32 %v2437, %v2725
        %v2727 = vpop.f32.mrb[0].mxu0
        %2728 = vmatprep.mubr.f32.mxu0 0.0
        %2729 = vmatmul.mubr.f32.gmra.mrb[0].mxu0 %v2576
        %v2730 = vpop.f32.mrb[0].mxu0
        %v2731 = vadd.f32 %v2442, %v2730
        %v2732 = vpop.f32.mrb[0].mxu0
        %2733 = vmatprep.mubr.f32.mxu0 0.0
        %2734 = vmatmul.mubr.f32.gmra.mrb[0].mxu0 %v2578
        %v2735 = vpop.f32.mrb[0].mxu0
        %v2736 = vadd.f32 %v2447, %v2735
        %v2737 = vpop.f32.mrb[0].mxu0
        %2738 = vmatprep.mubr.f32.mxu0 0.0
        %2739 = vmatmul.mubr.f32.gmra.mrb[0].mxu0 %v2580
        %v2740 = vpop.f32.mrb[0].mxu0
        %v2741 = vadd.f32 %v2452, %v2740
        %v2742 = vpop.f32.mrb[0].mxu0
        %2743 = vmatprep.mubr.f32.mxu0 0.0
        %2744 = vmatmul.mubr.f32.gmra.mrb[0].mxu0 %v2582
        %v2745 = vpop.f32.mrb[0].mxu0
        %v2746 = vadd.f32 %v2457, %v2745
        %v2747 = vpop.f32.mrb[0].mxu0
        %2748 = vmatprep.mubr.f32.mxu0 0.0
        %2749 = vmatmul.mubr.f32.gmra.mrb[0].mxu0 %v2584
        %v2750 = vpop.f32.mrb[0].mxu0
        %v2751 = vadd.f32 %v2462, %v2750
        %v2752 = vpop.f32.mrb[0].mxu0
        %2753 = vmatprep.mubr.f32.mxu0 0.0
        %2754 = vmatmul.mubr.f32.gmra.mrb[0].mxu0 %v2586
        %v2755 = vpop.f32.mrb[0].mxu0
        %v2756 = vadd.f32 %v2467, %v2755
        %v2757 = vpop.f32.mrb[0].mxu0
        %2758 = vmatprep.mubr.f32.mxu0 0.0
        %2759 = vmatmul.mubr.f32.gmra.mrb[0].mxu0 %v2588
        %v2760 = vpop.f32.mrb[0].mxu0
        %v2761 = vadd.f32 %v2472, %v2760
        %v2762 = vpop.f32.mrb[0].mxu0
        %2763 = vmatprep.mubr.f32.mxu0 0.0
        %2764 = vmatmul.mubr.f32.gmra.mrb[0].mxu0 %v2590
        %v2765 = vpop.f32.mrb[0].mxu0
        %v2766 = vadd.f32 %v2477, %v2765
        %v2767 = vpop.f32.mrb[0].mxu0
        %2768 = vmatprep.mubr.f32.mxu0 0.0
        %2769 = vmatmul.mubr.f32.gmra.mrb[0].mxu0 %v2592
        %v2770 = vpop.f32.mrb[0].mxu0
        %v2771 = vadd.f32 %v2482, %v2770
        %v2772 = vpop.f32.mrb[0].mxu0
        %2773 = vmatprep.mubr.f32.mxu0 0.0
        %2774 = vmatmul.mubr.f32.gmra.mrb[0].mxu0 %v2594
        %v2775 = vpop.f32.mrb[0].mxu0
        %v2776 = vadd.f32 %v2487, %v2775
        %v2777 = vpop.f32.mrb[0].mxu0
        %2778 = vmatprep.mubr.f32.mxu0 0.0
        %2779 = vmatmul.mubr.f32.gmra.mrb[0].mxu0 %v2596
        %v2780 = vpop.f32.mrb[0].mxu0
        %v2781 = vadd.f32 %v2492, %v2780
        %v2782 = vpop.f32.mrb[0].mxu0
        %2783 = vmatprep.mubr.f32.mxu0 0.0
        %2784 = vmatmul.mubr.f32.gmra.mrb[0].mxu0 %v2598
        %v2785 = vpop.f32.mrb[0].mxu0
        %v2786 = vadd.f32 %v2497, %v2785
        %v2787 = vpop.f32.mrb[0].mxu0
        %2788 = vmatprep.mubr.f32.mxu0 0.0
        %2789 = vmatmul.mubr.f32.gmra.mrb[0].mxu0 %v2600
        %v2790 = vpop.f32.mrb[0].mxu0
        %v2791 = vadd.f32 %v2502, %v2790
        %v2792 = vpop.f32.mrb[0].mxu0
        %2793 = vmatprep.mubr.f32.mxu0 0.0
        %2794 = vmatmul.mubr.f32.gmra.mrb[0].mxu0 %v2602
        %v2795 = vpop.f32.mrb[0].mxu0
        %v2796 = vadd.f32 %v2507, %v2795
        %v2797 = vpop.f32.mrb[0].mxu0
        %2798 = vmatprep.mubr.f32.mxu0 0.0
        %2799 = vmatmul.mubr.f32.gmra.mrb[0].mxu0 %v2604
        %v2800 = vpop.f32.mrb[0].mxu0
        %v2801 = vadd.f32 %v2512, %v2800
        %v2802 = vpop.f32.mrb[0].mxu0
        %2803 = vmatprep.mubr.f32.mxu0 0.0
        %2804 = vmatmul.mubr.f32.gmra.mrb[0].mxu0 %v2606
        %v2805 = vpop.f32.mrb[0].mxu0
        %v2806 = vadd.f32 %v2517, %v2805
        %v2807 = vpop.f32.mrb[0].mxu0
        %2808 = vmatprep.mubr.f32.mxu0 0.0
        %2809 = vmatmul.mubr.f32.gmra.mrb[0].mxu0 %v2608
        %v2810 = vpop.f32.mrb[0].mxu0
        %v2811 = vadd.f32 %v2522, %v2810
        %v2812 = vpop.f32.mrb[0].mxu0
        %2813 = vmatprep.mubr.f32.mxu0 0.0
        %2814 = vmatmul.mubr.f32.gmra.mrb[0].mxu0 %v2610
        %v2815 = vpop.f32.mrb[0].mxu0
        %v2816 = vadd.f32 %v2527, %v2815
        %v2817 = vpop.f32.mrb[0].mxu0
        %2818 = vmatprep.mubr.f32.mxu0 0.0
        %2819 = vmatmul.mubr.f32.gmra.mrb[0].mxu0 %v2612
        %v2820 = vpop.f32.mrb[0].mxu0
        %v2821 = vadd.f32 %v2532, %v2820
        %v2822 = vpop.f32.mrb[0].mxu0
        %2823 = vmatprep.mubr.f32.mxu0 0.0
        %2824 = vmatmul.mubr.f32.gmra.mrb[0].mxu0 %v2614
        %v2825 = vpop.f32.mrb[0].mxu0
        %v2826 = vadd.f32 %v2537, %v2825
        %v2827 = vpop.f32.mrb[0].mxu0
        %2828 = vmatprep.mubr.f32.mxu0 0.0
        %2829 = vmatmul.mubr.f32.gmra.mrb[0].mxu0 %v2616
        %v2830 = vpop.f32.mrb[0].mxu0
        %v2831 = vadd.f32 %v2542, %v2830
        %v2832 = vpop.f32.mrb[0].mxu0
        %2833 = vmatprep.mubr.f32.mxu0 0.0
        %2834 = vmatmul.mubr.f32.gmra.mrb[0].mxu0 %v2618
        %v2835 = vpop.f32.mrb[0].mxu0
        %v2836 = vadd.f32 %v2547, %v2835
        %v2837 = vpop.f32.mrb[0].mxu0
        %2838 = vmatprep.mubr.f32.mxu0 0.0
        %2839 = vmatmul.mubr.f32.gmra.mrb[0].mxu0 %v2620
        %v2840 = vpop.f32.mrb[0].mxu0
        %v2841 = vadd.f32 %v2552, %v2840
        %v2842 = vpop.f32.mrb[0].mxu0
        %2843 = vmatprep.mubr.f32.mxu0 0.0
        %2844 = vmatmul.mubr.f32.gmra.mrb[0].mxu0 %v2622
        %v2845 = vpop.f32.mrb[0].mxu0
        %v2846 = vadd.f32 %v2557, %v2845
        %v2847 = vpop.f32.mrb[0].mxu0
        %2848 = vdwg.mxu0
        %v2849 = vld [vmem:[#allocation2 + $0x10] sm:$0xfc]
        %v2850 = vld [vmem:[#allocation2 + $0x20] sm:$0xff]
        %v2851 = vld [vmem:[#allocation2 + $0x30] sm:$0xff]
        %v2852 = vld [vmem:[#allocation2 + $0x40] sm:$0xff]
        %v2853 = vld [vmem:[#allocation2 + $0x50] sm:$0xff]
        %v2854 = vld [vmem:[#allocation2 + $0x60] sm:$0xff]
        %v2855 = vld [vmem:[#allocation2 + $0x70] sm:$0xff]
        %v2856 = vld [vmem:[#allocation2 + $0x80] sm:$0xff]
        %v2857 = vld [vmem:[#allocation2 + $0x90] sm:$0x3]
        %v2858 = vld [vmem:[#allocation2 + $0xb0] sm:$0xfc]
        %v2859 = vld [vmem:[#allocation2 + $0xc0] sm:$0xff]
        %v2860 = vld [vmem:[#allocation2 + $0xd0] sm:$0xff]
        %v2861 = vld [vmem:[#allocation2 + $0xe0] sm:$0xff]
        %v2862 = vld [vmem:[#allocation2 + $0xf0] sm:$0xff]
        %v2863 = vld [vmem:[#allocation2 + $0x100] sm:$0xff]
        %v2864 = vld [vmem:[#allocation2 + $0x110] sm:$0xff]
        %v2865 = vld [vmem:[#allocation2 + $0x120] sm:$0xff]
        %v2866 = vld [vmem:[#allocation2 + $0x130] sm:$0x3]
        %v2867 = vld [vmem:[#allocation2 + $0x150] sm:$0xfc]
        %v2868 = vld [vmem:[#allocation2 + $0x160] sm:$0xff]
        %v2869 = vld [vmem:[#allocation2 + $0x170] sm:$0xff]
        %v2870 = vld [vmem:[#allocation2 + $0x180] sm:$0xff]
        %v2871 = vld [vmem:[#allocation2 + $0x190] sm:$0xff]
        %v2872 = vld [vmem:[#allocation2 + $0x1a0] sm:$0xff]
        %v2873 = vld [vmem:[#allocation2 + $0x1b0] sm:$0xff]
        %v2874 = vld [vmem:[#allocation2 + $0x1c0] sm:$0xff]
        %v2875 = vld [vmem:[#allocation2 + $0x1d0] sm:$0x3]
        %v2876 = vld [vmem:[#allocation2 + $0x1f0] sm:$0xfc]
        %v2877 = vld [vmem:[#allocation2 + $0x200] sm:$0xff]
        %v2878 = vld [vmem:[#allocation2 + $0x210] sm:$0xff]
        %v2879 = vld [vmem:[#allocation2 + $0x220] sm:$0xff]
        %v2880 = vld [vmem:[#allocation2 + $0x230] sm:$0xff]
        %v2881 = vld [vmem:[#allocation2 + $0x240] sm:$0xff]
        %v2882 = vld [vmem:[#allocation2 + $0x250] sm:$0xff]
        %v2883 = vld [vmem:[#allocation2 + $0x260] sm:$0xff]
        %v2884 = vld [vmem:[#allocation2 + $0x270] sm:$0x3]
        %vm2921 = vcmask 1045504
        %v2922 = vrot.slane %v2849, 2
        %v2923 = vrot.slane %v2850, 2
        %v2924 = vsel %vm2921, %v2922, %v2923
        %v2925 = vrot.slane %v2851, 2
        %v2926 = vsel %vm2921, %v2923, %v2925
        %v2927 = vrot.slane %v2852, 2
        %v2928 = vsel %vm2921, %v2925, %v2927
        %v2929 = vrot.slane %v2853, 2
        %v2930 = vsel %vm2921, %v2927, %v2929
        %v2931 = vrot.slane %v2854, 2
        %v2932 = vsel %vm2921, %v2929, %v2931
        %v2933 = vrot.slane %v2855, 2
        %v2934 = vsel %vm2921, %v2931, %v2933
        %v2935 = vrot.slane %v2856, 2
        %v2936 = vsel %vm2921, %v2933, %v2935
        %v2937 = vrot.slane %v2857, 2
        %v2938 = vsel %vm2921, %v2935, %v2937
        %v2939 = vrot.slane %v2858, 2
        %v2940 = vrot.slane %v2859, 2
        %v2941 = vsel %vm2921, %v2939, %v2940
        %v2942 = vrot.slane %v2860, 2
        %v2943 = vsel %vm2921, %v2940, %v2942
        %v2944 = vrot.slane %v2861, 2
        %v2945 = vsel %vm2921, %v2942, %v2944
        %v2946 = vrot.slane %v2862, 2
        %v2947 = vsel %vm2921, %v2944, %v2946
        %v2948 = vrot.slane %v2863, 2
        %v2949 = vsel %vm2921, %v2946, %v2948
        %v2950 = vrot.slane %v2864, 2
        %v2951 = vsel %vm2921, %v2948, %v2950
        %v2952 = vrot.slane %v2865, 2
        %v2953 = vsel %vm2921, %v2950, %v2952
        %v2954 = vrot.slane %v2866, 2
        %v2955 = vsel %vm2921, %v2952, %v2954
        %v2956 = vrot.slane %v2867, 2
        %v2957 = vrot.slane %v2868, 2
        %v2958 = vsel %vm2921, %v2956, %v2957
        %v2959 = vrot.slane %v2869, 2
        %v2960 = vsel %vm2921, %v2957, %v2959
        %v2961 = vrot.slane %v2870, 2
        %v2962 = vsel %vm2921, %v2959, %v2961
        %v2963 = vrot.slane %v2871, 2
        %v2964 = vsel %vm2921, %v2961, %v2963
        %v2965 = vrot.slane %v2872, 2
        %v2966 = vsel %vm2921, %v2963, %v2965
        %v2967 = vrot.slane %v2873, 2
        %v2968 = vsel %vm2921, %v2965, %v2967
        %v2969 = vrot.slane %v2874, 2
        %v2970 = vsel %vm2921, %v2967, %v2969
        %v2971 = vrot.slane %v2875, 2
        %v2972 = vsel %vm2921, %v2969, %v2971
        %v2973 = vrot.slane %v2876, 2
        %v2974 = vrot.slane %v2877, 2
        %v2975 = vsel %vm2921, %v2973, %v2974
        %v2976 = vrot.slane %v2878, 2
        %v2977 = vsel %vm2921, %v2974, %v2976
        %v2978 = vrot.slane %v2879, 2
        %v2979 = vsel %vm2921, %v2976, %v2978
        %v2980 = vrot.slane %v2880, 2
        %v2981 = vsel %vm2921, %v2978, %v2980
        %v2982 = vrot.slane %v2881, 2
        %v2983 = vsel %vm2921, %v2980, %v2982
        %v2984 = vrot.slane %v2882, 2
        %v2985 = vsel %vm2921, %v2982, %v2984
        %v2986 = vrot.slane %v2883, 2
        %v2987 = vsel %vm2921, %v2984, %v2986
        %v2988 = vrot.slane %v2884, 2
        %v2989 = vsel %vm2921, %v2986, %v2988
        %v2990 = vld [vmem:[%s3 + $0xc0] sm:$0xff]
        %v2991 = vld [vmem:[%s3 + $0xc8] sm:$0xff]
        %v2992 = vld [vmem:[%s3 + $0xd0] sm:$0xff]
        %v2993 = vld [vmem:[%s3 + $0xd8] sm:$0xff]
        %v2994 = vld [vmem:[%s3 + $0xe0] sm:$0xff]
        %v2995 = vld [vmem:[%s3 + $0xe8] sm:$0xff]
        %v2996 = vld [vmem:[%s3 + $0xf0] sm:$0xff]
        %v2997 = vld [vmem:[%s3 + $0xf8] sm:$0xff]
        %v2998 = vld [vmem:[%s3 + $0x100] sm:$0xff]
        %v2999 = vld [vmem:[%s3 + $0x108] sm:$0xff]
        %v3000 = vld [vmem:[%s3 + $0x110] sm:$0xff]
        %v3001 = vld [vmem:[%s3 + $0x118] sm:$0xff]
        %v3002 = vsel %vm2266, %v2924, 0
        %v3004 = vsel %vm2266, %v2926, 0
        %v3006 = vsel %vm2266, %v2928, 0
        %v3008 = vsel %vm2266, %v2930, 0
        %v3010 = vsel %vm2266, %v2932, 0
        %v3012 = vsel %vm2266, %v2934, 0
        %v3014 = vsel %vm2266, %v2936, 0
        %v3016 = vsel %vm2266, %v2938, 0
        %v3018 = vsel %vm2266, %v2941, 0
        %v3020 = vsel %vm2266, %v2943, 0
        %v3022 = vsel %vm2266, %v2945, 0
        %v3024 = vsel %vm2266, %v2947, 0
        %v3026 = vsel %vm2266, %v2949, 0
        %v3028 = vsel %vm2266, %v2951, 0
        %v3030 = vsel %vm2266, %v2953, 0
        %v3032 = vsel %vm2266, %v2955, 0
        %v3034 = vsel %vm2266, %v2958, 0
        %v3036 = vsel %vm2266, %v2960, 0
        %v3038 = vsel %vm2266, %v2962, 0
        %v3040 = vsel %vm2266, %v2964, 0
        %v3042 = vsel %vm2266, %v2966, 0
        %v3044 = vsel %vm2266, %v2968, 0
        %v3046 = vsel %vm2266, %v2970, 0
        %v3048 = vsel %vm2266, %v2972, 0
        %v3050 = vsel %vm2266, %v2975, 0
        %v3052 = vsel %vm2266, %v2977, 0
        %v3054 = vsel %vm2266, %v2979, 0
        %v3056 = vsel %vm2266, %v2981, 0
        %v3058 = vsel %vm2266, %v2983, 0
        %v3060 = vsel %vm2266, %v2985, 0
        %v3062 = vsel %vm2266, %v2987, 0
        %v3064 = vsel %vm2266, %v2989, 0
        %3066 = vmatprep.subr.mxu0 0.0
        %3067 = vmatpush1.msra.mxu0 %v2990
        %3068 = vmatprep.subr.mxu0 0.0
        %3069 = vmatpush1.msra.mxu0 %v2991
        %3070 = vmatprep.subr.mxu0 0.0
        %3071 = vmatpush1.msra.mxu0 %v2992
        %3072 = vmatprep.subr.mxu0 0.0
        %3073 = vmatpush1.msra.mxu0 %v2993
        %3074 = vmatprep.subr.mxu0 0.0
        %3075 = vmatpush1.msra.mxu0 %v2994
        %3076 = vmatprep.subr.mxu0 0.0
        %3077 = vmatpush1.msra.mxu0 %v2995
        %3078 = vmatprep.subr.mxu0 0.0
        %3079 = vmatpush1.msra.mxu0 %v2996
        %3080 = vmatprep.subr.mxu0 0.0
        %3081 = vmatpush1.msra.mxu0 %v2997
        %3082 = vmatprep.subr.mxu0 0.0
        %3083 = vmatpush1.msra.mxu0 %v2998
        %3084 = vmatprep.subr.mxu0 0.0
        %3085 = vmatpush1.msra.mxu0 %v2999
        %3086 = vmatprep.subr.mxu0 0.0
        %3087 = vmatpush1.msra.mxu0 %v3000
        %3088 = vmatprep.subr.mxu0 0.0
        %3089 = vmatpush1.msra.mxu0 %v3001
        %3090 = vmatprep.subr.mxu0 0.0
        %3091 = vmatpush1.msra.mxu0 0.0
        %3092 = vmatprep.subr.mxu0 0.0
        %3093 = vmatpush1.msra.mxu0 0.0
        %3094 = vmatprep.subr.mxu0 0.0
        %3095 = vmatpush1.msra.mxu0 0.0
        %3096 = vmatprep.subr.mxu0 0.0
        %3097 = vmatpush1.msra.mxu0 0.0
        %3098 = vmatprep.subr.mxu0 0.0
        %3099 = vmatpush1.msra.mxu0 0.0
        %3100 = vmatprep.subr.mxu0 0.0
        %3101 = vmatpush1.msra.mxu0 0.0
        %3102 = vmatprep.subr.mxu0 0.0
        %3103 = vmatpush1.msra.mxu0 0.0
        %3104 = vmatprep.subr.mxu0 0.0
        %3105 = vmatpush1.msra.mxu0 0.0
        %3106 = vmatprep.subr.mxu0 0.0
        %3107 = vmatpush1.msra.mxu0 0.0
        %3108 = vmatprep.subr.mxu0 0.0
        %3109 = vmatpush1.msra.mxu0 0.0
        %3110 = vmatprep.subr.mxu0 0.0
        %3111 = vmatpush1.msra.mxu0 0.0
        %3112 = vmatprep.subr.mxu0 0.0
        %3113 = vmatpush1.msra.mxu0 0.0
        %3114 = vmatprep.subr.mxu0 0.0
        %3115 = vmatpush1.msra.mxu0 0.0
        %3116 = vmatprep.subr.mxu0 0.0
        %3117 = vmatpush1.msra.mxu0 0.0
        %3118 = vmatprep.subr.mxu0 0.0
        %3119 = vmatpush1.msra.mxu0 0.0
        %3120 = vmatprep.subr.mxu0 0.0
        %3121 = vmatpush1.msra.mxu0 0.0
        %3122 = vmatprep.subr.mxu0 0.0
        %3123 = vmatpush1.msra.mxu0 0.0
        %3124 = vmatprep.subr.mxu0 0.0
        %3125 = vmatpush1.msra.mxu0 0.0
        %3126 = vmatprep.subr.mxu0 0.0
        %3127 = vmatpush1.msra.mxu0 0.0
        %3128 = vmatprep.subr.mxu0 0.0
        %3129 = vmatpush1.msra.mxu0 0.0
        %3130 = vmatprep.mubr.f32.mxu0 0.0
        %3131 = vmatmul.mubr.f32.gmra.mrb[0].mxu0 %v3002
        %v3132 = vpop.f32.mrb[0].mxu0
        %v3133 = vadd.f32 0.0, %v3132
        %v3134 = vpop.f32.mrb[0].mxu0
        %3135 = vmatprep.mubr.f32.mxu0 0.0
        %3136 = vmatmul.mubr.f32.gmra.mrb[0].mxu0 %v3004
        %v3137 = vpop.f32.mrb[0].mxu0
        %v3138 = vadd.f32 0.0, %v3137
        %v3139 = vpop.f32.mrb[0].mxu0
        %3140 = vmatprep.mubr.f32.mxu0 0.0
        %3141 = vmatmul.mubr.f32.gmra.mrb[0].mxu0 %v3006
        %v3142 = vpop.f32.mrb[0].mxu0
        %v3143 = vadd.f32 0.0, %v3142
        %v3144 = vpop.f32.mrb[0].mxu0
        %3145 = vmatprep.mubr.f32.mxu0 0.0
        %3146 = vmatmul.mubr.f32.gmra.mrb[0].mxu0 %v3008
        %v3147 = vpop.f32.mrb[0].mxu0
        %v3148 = vadd.f32 0.0, %v3147
        %v3149 = vpop.f32.mrb[0].mxu0
        %3150 = vmatprep.mubr.f32.mxu0 0.0
        %3151 = vmatmul.mubr.f32.gmra.mrb[0].mxu0 %v3010
        %v3152 = vpop.f32.mrb[0].mxu0
        %v3153 = vadd.f32 0.0, %v3152
        %v3154 = vpop.f32.mrb[0].mxu0
        %3155 = vmatprep.mubr.f32.mxu0 0.0
        %3156 = vmatmul.mubr.f32.gmra.mrb[0].mxu0 %v3012
        %v3157 = vpop.f32.mrb[0].mxu0
        %v3158 = vadd.f32 0.0, %v3157
        %v3159 = vpop.f32.mrb[0].mxu0
        %3160 = vmatprep.mubr.f32.mxu0 0.0
        %3161 = vmatmul.mubr.f32.gmra.mrb[0].mxu0 %v3014
        %v3162 = vpop.f32.mrb[0].mxu0
        %v3163 = vadd.f32 0.0, %v3162
        %v3164 = vpop.f32.mrb[0].mxu0
        %3165 = vmatprep.mubr.f32.mxu0 0.0
        %3166 = vmatmul.mubr.f32.gmra.mrb[0].mxu0 %v3016
        %v3167 = vpop.f32.mrb[0].mxu0
        %v3168 = vadd.f32 0.0, %v3167
        %v3169 = vpop.f32.mrb[0].mxu0
        %3170 = vmatprep.mubr.f32.mxu0 0.0
        %3171 = vmatmul.mubr.f32.gmra.mrb[0].mxu0 %v3018
        %v3172 = vpop.f32.mrb[0].mxu0
        %v3173 = vadd.f32 0.0, %v3172
        %v3174 = vpop.f32.mrb[0].mxu0
        %3175 = vmatprep.mubr.f32.mxu0 0.0
        %3176 = vmatmul.mubr.f32.gmra.mrb[0].mxu0 %v3020
        %v3177 = vpop.f32.mrb[0].mxu0
        %v3178 = vadd.f32 0.0, %v3177
        %v3179 = vpop.f32.mrb[0].mxu0
        %3180 = vmatprep.mubr.f32.mxu0 0.0
        %3181 = vmatmul.mubr.f32.gmra.mrb[0].mxu0 %v3022
        %v3182 = vpop.f32.mrb[0].mxu0
        %v3183 = vadd.f32 0.0, %v3182
        %v3184 = vpop.f32.mrb[0].mxu0
        %3185 = vmatprep.mubr.f32.mxu0 0.0
        %3186 = vmatmul.mubr.f32.gmra.mrb[0].mxu0 %v3024
        %v3187 = vpop.f32.mrb[0].mxu0
        %v3188 = vadd.f32 0.0, %v3187
        %v3189 = vpop.f32.mrb[0].mxu0
        %3190 = vmatprep.mubr.f32.mxu0 0.0
        %3191 = vmatmul.mubr.f32.gmra.mrb[0].mxu0 %v3026
        %v3192 = vpop.f32.mrb[0].mxu0
        %v3193 = vadd.f32 0.0, %v3192
        %v3194 = vpop.f32.mrb[0].mxu0
        %3195 = vmatprep.mubr.f32.mxu0 0.0
        %3196 = vmatmul.mubr.f32.gmra.mrb[0].mxu0 %v3028
        %v3197 = vpop.f32.mrb[0].mxu0
        %v3198 = vadd.f32 0.0, %v3197
        %v3199 = vpop.f32.mrb[0].mxu0
        %3200 = vmatprep.mubr.f32.mxu0 0.0
        %3201 = vmatmul.mubr.f32.gmra.mrb[0].mxu0 %v3030
        %v3202 = vpop.f32.mrb[0].mxu0
        %v3203 = vadd.f32 0.0, %v3202
        %v3204 = vpop.f32.mrb[0].mxu0
        %3205 = vmatprep.mubr.f32.mxu0 0.0
        %3206 = vmatmul.mubr.f32.gmra.mrb[0].mxu0 %v3032
        %v3207 = vpop.f32.mrb[0].mxu0
        %v3208 = vadd.f32 0.0, %v3207
        %v3209 = vpop.f32.mrb[0].mxu0
        %3210 = vmatprep.mubr.f32.mxu0 0.0
        %3211 = vmatmul.mubr.f32.gmra.mrb[0].mxu0 %v3034
        %v3212 = vpop.f32.mrb[0].mxu0
        %v3213 = vadd.f32 0.0, %v3212
        %v3214 = vpop.f32.mrb[0].mxu0
        %3215 = vmatprep.mubr.f32.mxu0 0.0
        %3216 = vmatmul.mubr.f32.gmra.mrb[0].mxu0 %v3036
        %v3217 = vpop.f32.mrb[0].mxu0
        %v3218 = vadd.f32 0.0, %v3217
        %v3219 = vpop.f32.mrb[0].mxu0
        %3220 = vmatprep.mubr.f32.mxu0 0.0
        %3221 = vmatmul.mubr.f32.gmra.mrb[0].mxu0 %v3038
        %v3222 = vpop.f32.mrb[0].mxu0
        %v3223 = vadd.f32 0.0, %v3222
        %v3224 = vpop.f32.mrb[0].mxu0
        %3225 = vmatprep.mubr.f32.mxu0 0.0
        %3226 = vmatmul.mubr.f32.gmra.mrb[0].mxu0 %v3040
        %v3227 = vpop.f32.mrb[0].mxu0
        %v3228 = vadd.f32 0.0, %v3227
        %v3229 = vpop.f32.mrb[0].mxu0
        %3230 = vmatprep.mubr.f32.mxu0 0.0
        %3231 = vmatmul.mubr.f32.gmra.mrb[0].mxu0 %v3042
        %v3232 = vpop.f32.mrb[0].mxu0
        %v3233 = vadd.f32 0.0, %v3232
        %v3234 = vpop.f32.mrb[0].mxu0
        %3235 = vmatprep.mubr.f32.mxu0 0.0
        %3236 = vmatmul.mubr.f32.gmra.mrb[0].mxu0 %v3044
        %v3237 = vpop.f32.mrb[0].mxu0
        %v3238 = vadd.f32 0.0, %v3237
        %v3239 = vpop.f32.mrb[0].mxu0
        %3240 = vmatprep.mubr.f32.mxu0 0.0
        %3241 = vmatmul.mubr.f32.gmra.mrb[0].mxu0 %v3046
        %v3242 = vpop.f32.mrb[0].mxu0
        %v3243 = vadd.f32 0.0, %v3242
        %v3244 = vpop.f32.mrb[0].mxu0
        %3245 = vmatprep.mubr.f32.mxu0 0.0
        %3246 = vmatmul.mubr.f32.gmra.mrb[0].mxu0 %v3048
        %v3247 = vpop.f32.mrb[0].mxu0
        %v3248 = vadd.f32 0.0, %v3247
        %v3249 = vpop.f32.mrb[0].mxu0
        %3250 = vmatprep.mubr.f32.mxu0 0.0
        %3251 = vmatmul.mubr.f32.gmra.mrb[0].mxu0 %v3050
        %v3252 = vpop.f32.mrb[0].mxu0
        %v3253 = vadd.f32 0.0, %v3252
        %v3254 = vpop.f32.mrb[0].mxu0
        %3255 = vmatprep.mubr.f32.mxu0 0.0
        %3256 = vmatmul.mubr.f32.gmra.mrb[0].mxu0 %v3052
        %v3257 = vpop.f32.mrb[0].mxu0
        %v3258 = vadd.f32 0.0, %v3257
        %v3259 = vpop.f32.mrb[0].mxu0
        %3260 = vmatprep.mubr.f32.mxu0 0.0
        %3261 = vmatmul.mubr.f32.gmra.mrb[0].mxu0 %v3054
        %v3262 = vpop.f32.mrb[0].mxu0
        %v3263 = vadd.f32 0.0, %v3262
        %v3264 = vpop.f32.mrb[0].mxu0
        %3265 = vmatprep.mubr.f32.mxu0 0.0
        %3266 = vmatmul.mubr.f32.gmra.mrb[0].mxu0 %v3056
        %v3267 = vpop.f32.mrb[0].mxu0
        %v3268 = vadd.f32 0.0, %v3267
        %v3269 = vpop.f32.mrb[0].mxu0
        %3270 = vmatprep.mubr.f32.mxu0 0.0
        %3271 = vmatmul.mubr.f32.gmra.mrb[0].mxu0 %v3058
        %v3272 = vpop.f32.mrb[0].mxu0
        %v3273 = vadd.f32 0.0, %v3272
        %v3274 = vpop.f32.mrb[0].mxu0
        %3275 = vmatprep.mubr.f32.mxu0 0.0
        %3276 = vmatmul.mubr.f32.gmra.mrb[0].mxu0 %v3060
        %v3277 = vpop.f32.mrb[0].mxu0
        %v3278 = vadd.f32 0.0, %v3277
        %v3279 = vpop.f32.mrb[0].mxu0
        %3280 = vmatprep.mubr.f32.mxu0 0.0
        %3281 = vmatmul.mubr.f32.gmra.mrb[0].mxu0 %v3062
        %v3282 = vpop.f32.mrb[0].mxu0
        %v3283 = vadd.f32 0.0, %v3282
        %v3284 = vpop.f32.mrb[0].mxu0
        %3285 = vmatprep.mubr.f32.mxu0 0.0
        %3286 = vmatmul.mubr.f32.gmra.mrb[0].mxu0 %v3064
        %v3287 = vpop.f32.mrb[0].mxu0
        %v3288 = vadd.f32 0.0, %v3287
        %v3289 = vpop.f32.mrb[0].mxu0
        %3290 = vdwg.mxu0
        %v3291 = vadd.f32 %v2691, %v3133
        %v3292 = vadd.f32 %v2696, %v3138
        %v3293 = vadd.f32 %v2701, %v3143
        %v3294 = vadd.f32 %v2706, %v3148
        %v3295 = vadd.f32 %v2711, %v3153
        %v3296 = vadd.f32 %v2716, %v3158
        %v3297 = vadd.f32 %v2721, %v3163
        %v3298 = vadd.f32 %v2726, %v3168
        %v3299 = vadd.f32 %v2731, %v3173
        %v3300 = vadd.f32 %v2736, %v3178
        %v3301 = vadd.f32 %v2741, %v3183
        %v3302 = vadd.f32 %v2746, %v3188
        %v3303 = vadd.f32 %v2751, %v3193
        %v3304 = vadd.f32 %v2756, %v3198
        %v3305 = vadd.f32 %v2761, %v3203
        %v3306 = vadd.f32 %v2766, %v3208
        %v3307 = vadd.f32 %v2771, %v3213
        %v3308 = vadd.f32 %v2776, %v3218
        %v3309 = vadd.f32 %v2781, %v3223
        %v3310 = vadd.f32 %v2786, %v3228
        %v3311 = vadd.f32 %v2791, %v3233
        %v3312 = vadd.f32 %v2796, %v3238
        %v3313 = vadd.f32 %v2801, %v3243
        %v3314 = vadd.f32 %v2806, %v3248
        %v3315 = vadd.f32 %v2811, %v3253
        %v3316 = vadd.f32 %v2816, %v3258
        %v3317 = vadd.f32 %v2821, %v3263
        %v3318 = vadd.f32 %v2826, %v3268
        %v3319 = vadd.f32 %v2831, %v3273
        %v3320 = vadd.f32 %v2836, %v3278
        %v3321 = vadd.f32 %v2841, %v3283
        %v3322 = vadd.f32 %v2846, %v3288
        %v3323 = vld [vmem:[%s4] sm:$0x1]
        %v3325 = vlaneseq
        %v3326 = vshrl.u32 %v3325, 7
        %v3327 = vsub.s32 0, %v3326
        %v3328 = vrot.slane %v3323, %v3327
        %v3330 = vadd.f32 %v3291, %v3328
        %v3331 = vadd.f32 %v3292, %v3328
        %v3332 = vadd.f32 %v3293, %v3328
        %v3333 = vadd.f32 %v3294, %v3328
        %v3334 = vadd.f32 %v3295, %v3328
        %v3335 = vadd.f32 %v3296, %v3328
        %v3336 = vadd.f32 %v3297, %v3328
        %v3337 = vadd.f32 %v3298, %v3328
        %v3338 = vadd.f32 %v3299, %v3328
        %v3339 = vadd.f32 %v3300, %v3328
        %v3340 = vadd.f32 %v3301, %v3328
        %v3341 = vadd.f32 %v3302, %v3328
        %v3342 = vadd.f32 %v3303, %v3328
        %v3343 = vadd.f32 %v3304, %v3328
        %v3344 = vadd.f32 %v3305, %v3328
        %v3345 = vadd.f32 %v3306, %v3328
        %v3346 = vadd.f32 %v3307, %v3328
        %v3347 = vadd.f32 %v3308, %v3328
        %v3348 = vadd.f32 %v3309, %v3328
        %v3349 = vadd.f32 %v3310, %v3328
        %v3350 = vadd.f32 %v3311, %v3328
        %v3351 = vadd.f32 %v3312, %v3328
        %v3352 = vadd.f32 %v3313, %v3328
        %v3353 = vadd.f32 %v3314, %v3328
        %v3354 = vadd.f32 %v3315, %v3328
        %v3355 = vadd.f32 %v3316, %v3328
        %v3356 = vadd.f32 %v3317, %v3328
        %v3357 = vadd.f32 %v3318, %v3328
        %v3358 = vadd.f32 %v3319, %v3328
        %v3359 = vadd.f32 %v3320, %v3328
        %v3360 = vadd.f32 %v3321, %v3328
        %v3361 = vadd.f32 %v3322, %v3328
        %vm3362 = vcmp.gt.f32.partialorder %v3330, 0.0
        %vm3363 = vcmp.gt.f32.partialorder %v3331, 0.0
        %vm3364 = vcmp.gt.f32.partialorder %v3332, 0.0
        %vm3365 = vcmp.gt.f32.partialorder %v3333, 0.0
        %vm3366 = vcmp.gt.f32.partialorder %v3334, 0.0
        %vm3367 = vcmp.gt.f32.partialorder %v3335, 0.0
        %vm3368 = vcmp.gt.f32.partialorder %v3336, 0.0
        %vm3369 = vcmp.gt.f32.partialorder %v3337, 0.0
        %vm3370 = vcmp.gt.f32.partialorder %v3338, 0.0
        %vm3371 = vcmp.gt.f32.partialorder %v3339, 0.0
        %vm3372 = vcmp.gt.f32.partialorder %v3340, 0.0
        %vm3373 = vcmp.gt.f32.partialorder %v3341, 0.0
        %vm3374 = vcmp.gt.f32.partialorder %v3342, 0.0
        %vm3375 = vcmp.gt.f32.partialorder %v3343, 0.0
        %vm3376 = vcmp.gt.f32.partialorder %v3344, 0.0
        %vm3377 = vcmp.gt.f32.partialorder %v3345, 0.0
        %vm3378 = vcmp.gt.f32.partialorder %v3346, 0.0
        %vm3379 = vcmp.gt.f32.partialorder %v3347, 0.0
        %vm3380 = vcmp.gt.f32.partialorder %v3348, 0.0
        %vm3381 = vcmp.gt.f32.partialorder %v3349, 0.0
        %vm3382 = vcmp.gt.f32.partialorder %v3350, 0.0
        %vm3383 = vcmp.gt.f32.partialorder %v3351, 0.0
        %vm3384 = vcmp.gt.f32.partialorder %v3352, 0.0
        %vm3385 = vcmp.gt.f32.partialorder %v3353, 0.0
        %vm3386 = vcmp.gt.f32.partialorder %v3354, 0.0
        %vm3387 = vcmp.gt.f32.partialorder %v3355, 0.0
        %vm3388 = vcmp.gt.f32.partialorder %v3356, 0.0
        %vm3389 = vcmp.gt.f32.partialorder %v3357, 0.0
        %vm3390 = vcmp.gt.f32.partialorder %v3358, 0.0
        %vm3391 = vcmp.gt.f32.partialorder %v3359, 0.0
        %vm3392 = vcmp.gt.f32.partialorder %v3360, 0.0
        %vm3393 = vcmp.gt.f32.partialorder %v3361, 0.0
        %v3394 = vmul.f32 %v3330, 0.2
        %v3395 = vmul.f32 %v3331, 0.2
        %v3396 = vmul.f32 %v3332, 0.2
        %v3397 = vmul.f32 %v3333, 0.2
        %v3398 = vmul.f32 %v3334, 0.2
        %v3399 = vmul.f32 %v3335, 0.2
        %v3400 = vmul.f32 %v3336, 0.2
        %v3401 = vmul.f32 %v3337, 0.2
        %v3402 = vmul.f32 %v3338, 0.2
        %v3403 = vmul.f32 %v3339, 0.2
        %v3404 = vmul.f32 %v3340, 0.2
        %v3405 = vmul.f32 %v3341, 0.2
        %v3406 = vmul.f32 %v3342, 0.2
        %v3407 = vmul.f32 %v3343, 0.2
        %v3408 = vmul.f32 %v3344, 0.2
        %v3409 = vmul.f32 %v3345, 0.2
        %v3410 = vmul.f32 %v3346, 0.2
        %v3411 = vmul.f32 %v3347, 0.2
        %v3412 = vmul.f32 %v3348, 0.2
        %v3413 = vmul.f32 %v3349, 0.2
        %v3414 = vmul.f32 %v3350, 0.2
        %v3415 = vmul.f32 %v3351, 0.2
        %v3416 = vmul.f32 %v3352, 0.2
        %v3417 = vmul.f32 %v3353, 0.2
        %v3418 = vmul.f32 %v3354, 0.2
        %v3419 = vmul.f32 %v3355, 0.2
        %v3420 = vmul.f32 %v3356, 0.2
        %v3421 = vmul.f32 %v3357, 0.2
        %v3422 = vmul.f32 %v3358, 0.2
        %v3423 = vmul.f32 %v3359, 0.2
        %v3424 = vmul.f32 %v3360, 0.2
        %v3425 = vmul.f32 %v3361, 0.2
        %v3426 = vsel %vm3362, %v3330, %v3394
        %v3427 = vsel %vm3363, %v3331, %v3395
        %v3428 = vsel %vm3364, %v3332, %v3396
        %v3429 = vsel %vm3365, %v3333, %v3397
        %v3430 = vsel %vm3366, %v3334, %v3398
        %v3431 = vsel %vm3367, %v3335, %v3399
        %v3432 = vsel %vm3368, %v3336, %v3400
        %v3433 = vsel %vm3369, %v3337, %v3401
        %v3434 = vsel %vm3370, %v3338, %v3402
        %v3435 = vsel %vm3371, %v3339, %v3403
        %v3436 = vsel %vm3372, %v3340, %v3404
        %v3437 = vsel %vm3373, %v3341, %v3405
        %v3438 = vsel %vm3374, %v3342, %v3406
        %v3439 = vsel %vm3375, %v3343, %v3407
        %v3440 = vsel %vm3376, %v3344, %v3408
        %v3441 = vsel %vm3377, %v3345, %v3409
        %v3442 = vsel %vm3378, %v3346, %v3410
        %v3443 = vsel %vm3379, %v3347, %v3411
        %v3444 = vsel %vm3380, %v3348, %v3412
        %v3445 = vsel %vm3381, %v3349, %v3413
        %v3446 = vsel %vm3382, %v3350, %v3414
        %v3447 = vsel %vm3383, %v3351, %v3415
        %v3448 = vsel %vm3384, %v3352, %v3416
        %v3449 = vsel %vm3385, %v3353, %v3417
        %v3450 = vsel %vm3386, %v3354, %v3418
        %v3451 = vsel %vm3387, %v3355, %v3419
        %v3452 = vsel %vm3388, %v3356, %v3420
        %v3453 = vsel %vm3389, %v3357, %v3421
        %v3454 = vsel %vm3390, %v3358, %v3422
        %v3455 = vsel %vm3391, %v3359, %v3423
        %v3456 = vsel %vm3392, %v3360, %v3424
        %v3457 = vsel %vm3393, %v3361, %v3425
        %3490 = vrot.lane.b32.xlu0 %v3426, 96
        %v3491 = vpop.permute.xlu0 %3490
        %3492 = vrot.lane.b32.xlu0 %v3427, 96
        %v3493 = vpop.permute.xlu0 %3492
        %3494 = vrot.lane.b32.xlu0 %v3428, 96
        %v3495 = vpop.permute.xlu0 %3494
        %3496 = vrot.lane.b32.xlu0 %v3429, 96
        %v3497 = vpop.permute.xlu0 %3496
        %3498 = vrot.lane.b32.xlu0 %v3430, 96
        %v3499 = vpop.permute.xlu0 %3498
        %3500 = vrot.lane.b32.xlu0 %v3431, 96
        %v3501 = vpop.permute.xlu0 %3500
        %3502 = vrot.lane.b32.xlu0 %v3432, 96
        %v3503 = vpop.permute.xlu0 %3502
        %3504 = vrot.lane.b32.xlu0 %v3433, 96
        %v3505 = vpop.permute.xlu0 %3504
        %3506 = vrot.lane.b32.xlu0 %v3434, 96
        %v3507 = vpop.permute.xlu0 %3506
        %3508 = vrot.lane.b32.xlu0 %v3435, 96
        %v3509 = vpop.permute.xlu0 %3508
        %3510 = vrot.lane.b32.xlu0 %v3436, 96
        %v3511 = vpop.permute.xlu0 %3510
        %3512 = vrot.lane.b32.xlu0 %v3437, 96
        %v3513 = vpop.permute.xlu0 %3512
        %3514 = vrot.lane.b32.xlu0 %v3438, 96
        %v3515 = vpop.permute.xlu0 %3514
        %3516 = vrot.lane.b32.xlu0 %v3439, 96
        %v3517 = vpop.permute.xlu0 %3516
        %3518 = vrot.lane.b32.xlu0 %v3440, 96
        %v3519 = vpop.permute.xlu0 %3518
        %3520 = vrot.lane.b32.xlu0 %v3441, 96
        %v3521 = vpop.permute.xlu0 %3520
        %3522 = vrot.lane.b32.xlu0 %v3442, 96
        %v3523 = vpop.permute.xlu0 %3522
        %3524 = vrot.lane.b32.xlu0 %v3443, 96
        %v3525 = vpop.permute.xlu0 %3524
        %3526 = vrot.lane.b32.xlu0 %v3444, 96
        %v3527 = vpop.permute.xlu0 %3526
        %3528 = vrot.lane.b32.xlu0 %v3445, 96
        %v3529 = vpop.permute.xlu0 %3528
        %3530 = vrot.lane.b32.xlu0 %v3446, 96
        %v3531 = vpop.permute.xlu0 %3530
        %3532 = vrot.lane.b32.xlu0 %v3447, 96
        %v3533 = vpop.permute.xlu0 %3532
        %3534 = vrot.lane.b32.xlu0 %v3448, 96
        %v3535 = vpop.permute.xlu0 %3534
        %3536 = vrot.lane.b32.xlu0 %v3449, 96
        %v3537 = vpop.permute.xlu0 %3536
        %3538 = vrot.lane.b32.xlu0 %v3450, 96
        %v3539 = vpop.permute.xlu0 %3538
        %3540 = vrot.lane.b32.xlu0 %v3451, 96
        %v3541 = vpop.permute.xlu0 %3540
        %3542 = vrot.lane.b32.xlu0 %v3452, 96
        %v3543 = vpop.permute.xlu0 %3542
        %3544 = vrot.lane.b32.xlu0 %v3453, 96
        %v3545 = vpop.permute.xlu0 %3544
        %3546 = vrot.lane.b32.xlu0 %v3454, 96
        %v3547 = vpop.permute.xlu0 %3546
        %3548 = vrot.lane.b32.xlu0 %v3455, 96
        %v3549 = vpop.permute.xlu0 %3548
        %3550 = vrot.lane.b32.xlu0 %v3456, 96
        %v3551 = vpop.permute.xlu0 %3550
        %3552 = vrot.lane.b32.xlu0 %v3457, 96
        %v3553 = vpop.permute.xlu0 %3552
        %vm3586 = vcmask 1048320
        %3587 = vst.msk [vmem:[#allocation2 + $0x10] sm:$0xff] %vm3586, %v3491
        %3588 = vst.msk [vmem:[#allocation2 + $0x20] sm:$0xff] %vm3586, %v3493
        %3589 = vst.msk [vmem:[#allocation2 + $0x30] sm:$0xff] %vm3586, %v3495
        %3590 = vst.msk [vmem:[#allocation2 + $0x40] sm:$0xff] %vm3586, %v3497
        %3591 = vst.msk [vmem:[#allocation2 + $0x50] sm:$0xff] %vm3586, %v3499
        %3592 = vst.msk [vmem:[#allocation2 + $0x60] sm:$0xff] %vm3586, %v3501
        %3593 = vst.msk [vmem:[#allocation2 + $0x70] sm:$0xff] %vm3586, %v3503
        %3594 = vst.msk [vmem:[#allocation2 + $0x80] sm:$0xff] %vm3586, %v3505
        %3595 = vst.msk [vmem:[#allocation2 + $0xb0] sm:$0xff] %vm3586, %v3507
        %3596 = vst.msk [vmem:[#allocation2 + $0xc0] sm:$0xff] %vm3586, %v3509
        %3597 = vst.msk [vmem:[#allocation2 + $0xd0] sm:$0xff] %vm3586, %v3511
        %3598 = vst.msk [vmem:[#allocation2 + $0xe0] sm:$0xff] %vm3586, %v3513
        %3599 = vst.msk [vmem:[#allocation2 + $0xf0] sm:$0xff] %vm3586, %v3515
        %3600 = vst.msk [vmem:[#allocation2 + $0x100] sm:$0xff] %vm3586, %v3517
        %3601 = vst.msk [vmem:[#allocation2 + $0x110] sm:$0xff] %vm3586, %v3519
        %3602 = vst.msk [vmem:[#allocation2 + $0x120] sm:$0xff] %vm3586, %v3521
        %3603 = vst.msk [vmem:[#allocation2 + $0x150] sm:$0xff] %vm3586, %v3523
        %3604 = vst.msk [vmem:[#allocation2 + $0x160] sm:$0xff] %vm3586, %v3525
        %3605 = vst.msk [vmem:[#allocation2 + $0x170] sm:$0xff] %vm3586, %v3527
        %3606 = vst.msk [vmem:[#allocation2 + $0x180] sm:$0xff] %vm3586, %v3529
        %3607 = vst.msk [vmem:[#allocation2 + $0x190] sm:$0xff] %vm3586, %v3531
        %3608 = vst.msk [vmem:[#allocation2 + $0x1a0] sm:$0xff] %vm3586, %v3533
        %3609 = vst.msk [vmem:[#allocation2 + $0x1b0] sm:$0xff] %vm3586, %v3535
        %3610 = vst.msk [vmem:[#allocation2 + $0x1c0] sm:$0xff] %vm3586, %v3537
        %3611 = vst.msk [vmem:[#allocation2 + $0x1f0] sm:$0xff] %vm3586, %v3539
        %3612 = vst.msk [vmem:[#allocation2 + $0x200] sm:$0xff] %vm3586, %v3541
        %3613 = vst.msk [vmem:[#allocation2 + $0x210] sm:$0xff] %vm3586, %v3543
        %3614 = vst.msk [vmem:[#allocation2 + $0x220] sm:$0xff] %vm3586, %v3545
        %3615 = vst.msk [vmem:[#allocation2 + $0x230] sm:$0xff] %vm3586, %v3547
        %3616 = vst.msk [vmem:[#allocation2 + $0x240] sm:$0xff] %vm3586, %v3549
        %3617 = vst.msk [vmem:[#allocation2 + $0x250] sm:$0xff] %vm3586, %v3551
        %3618 = vst.msk [vmem:[#allocation2 + $0x260] sm:$0xff] %vm3586, %v3553
        %v3619 = vld [vmem:[#allocation2] sm:$0xf0]
        %v3620 = vld [vmem:[#allocation2 + $0x10] sm:$0xff]
        %v3621 = vld [vmem:[#allocation2 + $0x20] sm:$0xff]
        %v3622 = vld [vmem:[#allocation2 + $0x30] sm:$0xff]
        %v3623 = vld [vmem:[#allocation2 + $0x40] sm:$0xff]
        %v3624 = vld [vmem:[#allocation2 + $0x50] sm:$0xff]
        %v3625 = vld [vmem:[#allocation2 + $0x60] sm:$0xff]
        %v3626 = vld [vmem:[#allocation2 + $0x70] sm:$0xff]
        %v3627 = vld [vmem:[#allocation2 + $0x80] sm:$0xf]
        %v3628 = vld [vmem:[#allocation2 + $0xa0] sm:$0xf0]
        %v3629 = vld [vmem:[#allocation2 + $0xb0] sm:$0xff]
        %v3630 = vld [vmem:[#allocation2 + $0xc0] sm:$0xff]
        %v3631 = vld [vmem:[#allocation2 + $0xd0] sm:$0xff]
        %v3632 = vld [vmem:[#allocation2 + $0xe0] sm:$0xff]
        %v3633 = vld [vmem:[#allocation2 + $0xf0] sm:$0xff]
        %v3634 = vld [vmem:[#allocation2 + $0x100] sm:$0xff]
        %v3635 = vld [vmem:[#allocation2 + $0x110] sm:$0xff]
        %v3636 = vld [vmem:[#allocation2 + $0x120] sm:$0xf]
        %v3637 = vld [vmem:[#allocation2 + $0x140] sm:$0xf0]
        %v3638 = vld [vmem:[#allocation2 + $0x150] sm:$0xff]
        %v3639 = vld [vmem:[#allocation2 + $0x160] sm:$0xff]
        %v3640 = vld [vmem:[#allocation2 + $0x170] sm:$0xff]
        %v3641 = vld [vmem:[#allocation2 + $0x180] sm:$0xff]
        %v3642 = vld [vmem:[#allocation2 + $0x190] sm:$0xff]
        %v3643 = vld [vmem:[#allocation2 + $0x1a0] sm:$0xff]
        %v3644 = vld [vmem:[#allocation2 + $0x1b0] sm:$0xff]
        %v3645 = vld [vmem:[#allocation2 + $0x1c0] sm:$0xf]
        %v3646 = vld [vmem:[#allocation2 + $0x1e0] sm:$0xf0]
        %v3647 = vld [vmem:[#allocation2 + $0x1f0] sm:$0xff]
        %v3648 = vld [vmem:[#allocation2 + $0x200] sm:$0xff]
        %v3649 = vld [vmem:[#allocation2 + $0x210] sm:$0xff]
        %v3650 = vld [vmem:[#allocation2 + $0x220] sm:$0xff]
        %v3651 = vld [vmem:[#allocation2 + $0x230] sm:$0xff]
        %v3652 = vld [vmem:[#allocation2 + $0x240] sm:$0xff]
        %v3653 = vld [vmem:[#allocation2 + $0x250] sm:$0xff]
        %v3654 = vld [vmem:[#allocation2 + $0x260] sm:$0xf]
        %vm3691 = vcmask 1043456
        %v3692 = vrot.slane %v3619, 4
        %v3693 = vrot.slane %v3620, 4
        %v3694 = vsel %vm3691, %v3692, %v3693
        %v3695 = vrot.slane %v3621, 4
        %v3696 = vsel %vm3691, %v3693, %v3695
        %v3697 = vrot.slane %v3622, 4
        %v3698 = vsel %vm3691, %v3695, %v3697
        %v3699 = vrot.slane %v3623, 4
        %v3700 = vsel %vm3691, %v3697, %v3699
        %v3701 = vrot.slane %v3624, 4
        %v3702 = vsel %vm3691, %v3699, %v3701
        %v3703 = vrot.slane %v3625, 4
        %v3704 = vsel %vm3691, %v3701, %v3703
        %v3705 = vrot.slane %v3626, 4
        %v3706 = vsel %vm3691, %v3703, %v3705
        %v3707 = vrot.slane %v3627, 4
        %v3708 = vsel %vm3691, %v3705, %v3707
        %v3709 = vrot.slane %v3628, 4
        %v3710 = vrot.slane %v3629, 4
        %v3711 = vsel %vm3691, %v3709, %v3710
        %v3712 = vrot.slane %v3630, 4
        %v3713 = vsel %vm3691, %v3710, %v3712
        %v3714 = vrot.slane %v3631, 4
        %v3715 = vsel %vm3691, %v3712, %v3714
        %v3716 = vrot.slane %v3632, 4
        %v3717 = vsel %vm3691, %v3714, %v3716
        %v3718 = vrot.slane %v3633, 4
        %v3719 = vsel %vm3691, %v3716, %v3718
        %v3720 = vrot.slane %v3634, 4
        %v3721 = vsel %vm3691, %v3718, %v3720
        %v3722 = vrot.slane %v3635, 4
        %v3723 = vsel %vm3691, %v3720, %v3722
        %v3724 = vrot.slane %v3636, 4
        %v3725 = vsel %vm3691, %v3722, %v3724
        %v3726 = vrot.slane %v3637, 4
        %v3727 = vrot.slane %v3638, 4
        %v3728 = vsel %vm3691, %v3726, %v3727
        %v3729 = vrot.slane %v3639, 4
        %v3730 = vsel %vm3691, %v3727, %v3729
        %v3731 = vrot.slane %v3640, 4
        %v3732 = vsel %vm3691, %v3729, %v3731
        %v3733 = vrot.slane %v3641, 4
        %v3734 = vsel %vm3691, %v3731, %v3733
        %v3735 = vrot.slane %v3642, 4
        %v3736 = vsel %vm3691, %v3733, %v3735
        %v3737 = vrot.slane %v3643, 4
        %v3738 = vsel %vm3691, %v3735, %v3737
        %v3739 = vrot.slane %v3644, 4
        %v3740 = vsel %vm3691, %v3737, %v3739
        %v3741 = vrot.slane %v3645, 4
        %v3742 = vsel %vm3691, %v3739, %v3741
        %v3743 = vrot.slane %v3646, 4
        %v3744 = vrot.slane %v3647, 4
        %v3745 = vsel %vm3691, %v3743, %v3744
        %v3746 = vrot.slane %v3648, 4
        %v3747 = vsel %vm3691, %v3744, %v3746
        %v3748 = vrot.slane %v3649, 4
        %v3749 = vsel %vm3691, %v3746, %v3748
        %v3750 = vrot.slane %v3650, 4
        %v3751 = vsel %vm3691, %v3748, %v3750
        %v3752 = vrot.slane %v3651, 4
        %v3753 = vsel %vm3691, %v3750, %v3752
        %v3754 = vrot.slane %v3652, 4
        %v3755 = vsel %vm3691, %v3752, %v3754
        %v3756 = vrot.slane %v3653, 4
        %v3757 = vsel %vm3691, %v3754, %v3756
        %v3758 = vrot.slane %v3654, 4
        %v3759 = vsel %vm3691, %v3756, %v3758
        %v3792 = vld [vmem:[%s5] sm:$0xff]
        %v3793 = vld [vmem:[%s5 + $0x8] sm:$0xff]
        %v3794 = vld [vmem:[%s5 + $0x10] sm:$0xff]
        %v3795 = vld [vmem:[%s5 + $0x18] sm:$0xff]
        %v3796 = vld [vmem:[%s5 + $0x20] sm:$0xff]
        %v3797 = vld [vmem:[%s5 + $0x28] sm:$0xff]
        %v3798 = vld [vmem:[%s5 + $0x30] sm:$0xff]
        %v3799 = vld [vmem:[%s5 + $0x38] sm:$0xff]
        %v3800 = vld [vmem:[%s5 + $0x40] sm:$0xff]
        %v3801 = vld [vmem:[%s5 + $0x48] sm:$0xff]
        %v3802 = vld [vmem:[%s5 + $0x50] sm:$0xff]
        %v3803 = vld [vmem:[%s5 + $0x58] sm:$0xff]
        %v3804 = vld [vmem:[%s5 + $0x60] sm:$0xff]
        %v3805 = vld [vmem:[%s5 + $0x68] sm:$0xff]
        %v3806 = vld [vmem:[%s5 + $0x70] sm:$0xff]
        %v3807 = vld [vmem:[%s5 + $0x78] sm:$0xff]
        %v3808 = vld [vmem:[#allocation2 + $0x80] sm:$0xff]
        %v3809 = vld [vmem:[#allocation2 + $0x120] sm:$0xff]
        %v3810 = vld [vmem:[#allocation2 + $0x1c0] sm:$0xff]
        %v3811 = vld [vmem:[#allocation2 + $0x260] sm:$0xff]
        %v3812 = vld [vmem:[%s5 + $0x80] sm:$0xff]
        %v3813 = vld [vmem:[%s5 + $0x88] sm:$0xff]
        %v3814 = vld [vmem:[%s5 + $0x90] sm:$0xff]
        %v3815 = vld [vmem:[%s5 + $0x98] sm:$0xff]
        %v3816 = vld [vmem:[%s5 + $0xa0] sm:$0xff]
        %v3817 = vld [vmem:[%s5 + $0xa8] sm:$0xff]
        %v3818 = vld [vmem:[%s5 + $0xb0] sm:$0xff]
        %v3819 = vld [vmem:[%s5 + $0xb8] sm:$0xff]
        %v3820 = vld [vmem:[%s5 + $0xc0] sm:$0xff]
        %v3821 = vld [vmem:[%s5 + $0xc8] sm:$0xff]
        %v3822 = vld [vmem:[%s5 + $0xd0] sm:$0xff]
        %v3823 = vld [vmem:[%s5 + $0xd8] sm:$0xff]
        %v3824 = vld [vmem:[%s5 + $0xe0] sm:$0xff]
        %v3825 = vld [vmem:[%s5 + $0xe8] sm:$0xff]
        %v3826 = vld [vmem:[%s5 + $0xf0] sm:$0xff]
        %v3827 = vld [vmem:[%s5 + $0xf8] sm:$0xff]
        %3828 = vmatprep.subr.mxu0 0.0
        %3829 = vmatpush1.msra.mxu0 %v3812
        %3830 = vmatprep.subr.mxu0 0.0
        %3831 = vmatpush1.msra.mxu0 %v3813
        %3832 = vmatprep.subr.mxu0 0.0
        %3833 = vmatpush1.msra.mxu0 %v3814
        %3834 = vmatprep.subr.mxu0 0.0
        %3835 = vmatpush1.msra.mxu0 %v3815
        %3836 = vmatprep.subr.mxu0 0.0
        %3837 = vmatpush1.msra.mxu0 %v3816
        %3838 = vmatprep.subr.mxu0 0.0
        %3839 = vmatpush1.msra.mxu0 %v3817
        %3840 = vmatprep.subr.mxu0 0.0
        %3841 = vmatpush1.msra.mxu0 %v3818
        %3842 = vmatprep.subr.mxu0 0.0
        %3843 = vmatpush1.msra.mxu0 %v3819
        %3844 = vmatprep.subr.mxu0 0.0
        %3845 = vmatpush1.msra.mxu0 %v3820
        %3846 = vmatprep.subr.mxu0 0.0
        %3847 = vmatpush1.msra.mxu0 %v3821
        %3848 = vmatprep.subr.mxu0 0.0
        %3849 = vmatpush1.msra.mxu0 %v3822
        %3850 = vmatprep.subr.mxu0 0.0
        %3851 = vmatpush1.msra.mxu0 %v3823
        %3852 = vmatprep.subr.mxu0 0.0
        %3853 = vmatpush1.msra.mxu0 %v3824
        %3854 = vmatprep.subr.mxu0 0.0
        %3855 = vmatpush1.msra.mxu0 %v3825
        %3856 = vmatprep.subr.mxu0 0.0
        %3857 = vmatpush1.msra.mxu0 %v3826
        %3858 = vmatprep.subr.mxu0 0.0
        %3859 = vmatpush1.msra.mxu0 %v3827
        %3860 = vmatprep.subr.mxu0 0.0
        %3861 = vmatpush1.msra.mxu0 0.0
        %3862 = vmatprep.subr.mxu0 0.0
        %3863 = vmatpush1.msra.mxu0 0.0
        %3864 = vmatprep.subr.mxu0 0.0
        %3865 = vmatpush1.msra.mxu0 0.0
        %3866 = vmatprep.subr.mxu0 0.0
        %3867 = vmatpush1.msra.mxu0 0.0
        %3868 = vmatprep.subr.mxu0 0.0
        %3869 = vmatpush1.msra.mxu0 0.0
        %3870 = vmatprep.subr.mxu0 0.0
        %3871 = vmatpush1.msra.mxu0 0.0
        %3872 = vmatprep.subr.mxu0 0.0
        %3873 = vmatpush1.msra.mxu0 0.0
        %3874 = vmatprep.subr.mxu0 0.0
        %3875 = vmatpush1.msra.mxu0 0.0
        %3876 = vmatprep.subr.mxu0 0.0
        %3877 = vmatpush1.msra.mxu0 0.0
        %3878 = vmatprep.subr.mxu0 0.0
        %3879 = vmatpush1.msra.mxu0 0.0
        %3880 = vmatprep.subr.mxu0 0.0
        %3881 = vmatpush1.msra.mxu0 0.0
        %3882 = vmatprep.subr.mxu0 0.0
        %3883 = vmatpush1.msra.mxu0 0.0
        %3884 = vmatprep.subr.mxu0 0.0
        %3885 = vmatpush1.msra.mxu0 0.0
        %3886 = vmatprep.subr.mxu0 0.0
        %3887 = vmatpush1.msra.mxu0 0.0
        %3888 = vmatprep.subr.mxu0 0.0
        %3889 = vmatpush1.msra.mxu0 0.0
        %3890 = vmatprep.subr.mxu0 0.0
        %3891 = vmatpush1.msra.mxu0 0.0
        %3892 = vmatprep.mubr.f32.mxu0 0.0
        %3893 = vmatmul.mubr.f32.gmra.mrb[0].mxu0 %v3620
        %v3894 = vpop.f32.mrb[0].mxu0
        %v3895 = vadd.f32 0.0, %v3894
        %v3896 = vpop.f32.mrb[0].mxu0
        %3897 = vmatprep.mubr.f32.mxu0 0.0
        %3898 = vmatmul.mubr.f32.gmra.mrb[0].mxu0 %v3621
        %v3899 = vpop.f32.mrb[0].mxu0
        %v3900 = vadd.f32 0.0, %v3899
        %v3901 = vpop.f32.mrb[0].mxu0
        %3902 = vmatprep.mubr.f32.mxu0 0.0
        %3903 = vmatmul.mubr.f32.gmra.mrb[0].mxu0 %v3622
        %v3904 = vpop.f32.mrb[0].mxu0
        %v3905 = vadd.f32 0.0, %v3904
        %v3906 = vpop.f32.mrb[0].mxu0
        %3907 = vmatprep.mubr.f32.mxu0 0.0
        %3908 = vmatmul.mubr.f32.gmra.mrb[0].mxu0 %v3623
        %v3909 = vpop.f32.mrb[0].mxu0
        %v3910 = vadd.f32 0.0, %v3909
        %v3911 = vpop.f32.mrb[0].mxu0
        %3912 = vmatprep.mubr.f32.mxu0 0.0
        %3913 = vmatmul.mubr.f32.gmra.mrb[0].mxu0 %v3624
        %v3914 = vpop.f32.mrb[0].mxu0
        %v3915 = vadd.f32 0.0, %v3914
        %v3916 = vpop.f32.mrb[0].mxu0
        %3917 = vmatprep.mubr.f32.mxu0 0.0
        %3918 = vmatmul.mubr.f32.gmra.mrb[0].mxu0 %v3625
        %v3919 = vpop.f32.mrb[0].mxu0
        %v3920 = vadd.f32 0.0, %v3919
        %v3921 = vpop.f32.mrb[0].mxu0
        %3922 = vmatprep.mubr.f32.mxu0 0.0
        %3923 = vmatmul.mubr.f32.gmra.mrb[0].mxu0 %v3626
        %v3924 = vpop.f32.mrb[0].mxu0
        %v3925 = vadd.f32 0.0, %v3924
        %v3926 = vpop.f32.mrb[0].mxu0
        %3927 = vmatprep.mubr.f32.mxu0 0.0
        %3928 = vmatmul.mubr.f32.gmra.mrb[0].mxu0 %v3808
        %v3929 = vpop.f32.mrb[0].mxu0
        %v3930 = vadd.f32 0.0, %v3929
        %v3931 = vpop.f32.mrb[0].mxu0
        %3932 = vmatprep.mubr.f32.mxu0 0.0
        %3933 = vmatmul.mubr.f32.gmra.mrb[0].mxu0 %v3629
        %v3934 = vpop.f32.mrb[0].mxu0
        %v3935 = vadd.f32 0.0, %v3934
        %v3936 = vpop.f32.mrb[0].mxu0
        %3937 = vmatprep.mubr.f32.mxu0 0.0
        %3938 = vmatmul.mubr.f32.gmra.mrb[0].mxu0 %v3630
        %v3939 = vpop.f32.mrb[0].mxu0
        %v3940 = vadd.f32 0.0, %v3939
        %v3941 = vpop.f32.mrb[0].mxu0
        %3942 = vmatprep.mubr.f32.mxu0 0.0
        %3943 = vmatmul.mubr.f32.gmra.mrb[0].mxu0 %v3631
        %v3944 = vpop.f32.mrb[0].mxu0
        %v3945 = vadd.f32 0.0, %v3944
        %v3946 = vpop.f32.mrb[0].mxu0
        %3947 = vmatprep.mubr.f32.mxu0 0.0
        %3948 = vmatmul.mubr.f32.gmra.mrb[0].mxu0 %v3632
        %v3949 = vpop.f32.mrb[0].mxu0
        %v3950 = vadd.f32 0.0, %v3949
        %v3951 = vpop.f32.mrb[0].mxu0
        %3952 = vmatprep.mubr.f32.mxu0 0.0
        %3953 = vmatmul.mubr.f32.gmra.mrb[0].mxu0 %v3633
        %v3954 = vpop.f32.mrb[0].mxu0
        %v3955 = vadd.f32 0.0, %v3954
        %v3956 = vpop.f32.mrb[0].mxu0
        %3957 = vmatprep.mubr.f32.mxu0 0.0
        %3958 = vmatmul.mubr.f32.gmra.mrb[0].mxu0 %v3634
        %v3959 = vpop.f32.mrb[0].mxu0
        %v3960 = vadd.f32 0.0, %v3959
        %v3961 = vpop.f32.mrb[0].mxu0
        %3962 = vmatprep.mubr.f32.mxu0 0.0
        %3963 = vmatmul.mubr.f32.gmra.mrb[0].mxu0 %v3635
        %v3964 = vpop.f32.mrb[0].mxu0
        %v3965 = vadd.f32 0.0, %v3964
        %v3966 = vpop.f32.mrb[0].mxu0
        %3967 = vmatprep.mubr.f32.mxu0 0.0
        %3968 = vmatmul.mubr.f32.gmra.mrb[0].mxu0 %v3809
        %v3969 = vpop.f32.mrb[0].mxu0
        %v3970 = vadd.f32 0.0, %v3969
        %v3971 = vpop.f32.mrb[0].mxu0
        %3972 = vmatprep.mubr.f32.mxu0 0.0
        %3973 = vmatmul.mubr.f32.gmra.mrb[0].mxu0 %v3638
        %v3974 = vpop.f32.mrb[0].mxu0
        %v3975 = vadd.f32 0.0, %v3974
        %v3976 = vpop.f32.mrb[0].mxu0
        %3977 = vmatprep.mubr.f32.mxu0 0.0
        %3978 = vmatmul.mubr.f32.gmra.mrb[0].mxu0 %v3639
        %v3979 = vpop.f32.mrb[0].mxu0
        %v3980 = vadd.f32 0.0, %v3979
        %v3981 = vpop.f32.mrb[0].mxu0
        %3982 = vmatprep.mubr.f32.mxu0 0.0
        %3983 = vmatmul.mubr.f32.gmra.mrb[0].mxu0 %v3640
        %v3984 = vpop.f32.mrb[0].mxu0
        %v3985 = vadd.f32 0.0, %v3984
        %v3986 = vpop.f32.mrb[0].mxu0
        %3987 = vmatprep.mubr.f32.mxu0 0.0
        %3988 = vmatmul.mubr.f32.gmra.mrb[0].mxu0 %v3641
        %v3989 = vpop.f32.mrb[0].mxu0
        %v3990 = vadd.f32 0.0, %v3989
        %v3991 = vpop.f32.mrb[0].mxu0
        %3992 = vmatprep.mubr.f32.mxu0 0.0
        %3993 = vmatmul.mubr.f32.gmra.mrb[0].mxu0 %v3642
        %v3994 = vpop.f32.mrb[0].mxu0
        %v3995 = vadd.f32 0.0, %v3994
        %v3996 = vpop.f32.mrb[0].mxu0
        %3997 = vmatprep.mubr.f32.mxu0 0.0
        %3998 = vmatmul.mubr.f32.gmra.mrb[0].mxu0 %v3643
        %v3999 = vpop.f32.mrb[0].mxu0
        %v4000 = vadd.f32 0.0, %v3999
        %v4001 = vpop.f32.mrb[0].mxu0
        %4002 = vmatprep.mubr.f32.mxu0 0.0
        %4003 = vmatmul.mubr.f32.gmra.mrb[0].mxu0 %v3644
        %v4004 = vpop.f32.mrb[0].mxu0
        %v4005 = vadd.f32 0.0, %v4004
        %v4006 = vpop.f32.mrb[0].mxu0
        %4007 = vmatprep.mubr.f32.mxu0 0.0
        %4008 = vmatmul.mubr.f32.gmra.mrb[0].mxu0 %v3810
        %v4009 = vpop.f32.mrb[0].mxu0
        %v4010 = vadd.f32 0.0, %v4009
        %v4011 = vpop.f32.mrb[0].mxu0
        %4012 = vmatprep.mubr.f32.mxu0 0.0
        %4013 = vmatmul.mubr.f32.gmra.mrb[0].mxu0 %v3647
        %v4014 = vpop.f32.mrb[0].mxu0
        %v4015 = vadd.f32 0.0, %v4014
        %v4016 = vpop.f32.mrb[0].mxu0
        %4017 = vmatprep.mubr.f32.mxu0 0.0
        %4018 = vmatmul.mubr.f32.gmra.mrb[0].mxu0 %v3648
        %v4019 = vpop.f32.mrb[0].mxu0
        %v4020 = vadd.f32 0.0, %v4019
        %v4021 = vpop.f32.mrb[0].mxu0
        %4022 = vmatprep.mubr.f32.mxu0 0.0
        %4023 = vmatmul.mubr.f32.gmra.mrb[0].mxu0 %v3649
        %v4024 = vpop.f32.mrb[0].mxu0
        %v4025 = vadd.f32 0.0, %v4024
        %v4026 = vpop.f32.mrb[0].mxu0
        %4027 = vmatprep.mubr.f32.mxu0 0.0
        %4028 = vmatmul.mubr.f32.gmra.mrb[0].mxu0 %v3650
        %v4029 = vpop.f32.mrb[0].mxu0
        %v4030 = vadd.f32 0.0, %v4029
        %v4031 = vpop.f32.mrb[0].mxu0
        %4032 = vmatprep.mubr.f32.mxu0 0.0
        %4033 = vmatmul.mubr.f32.gmra.mrb[0].mxu0 %v3651
        %v4034 = vpop.f32.mrb[0].mxu0
        %v4035 = vadd.f32 0.0, %v4034
        %v4036 = vpop.f32.mrb[0].mxu0
        %4037 = vmatprep.mubr.f32.mxu0 0.0
        %4038 = vmatmul.mubr.f32.gmra.mrb[0].mxu0 %v3652
        %v4039 = vpop.f32.mrb[0].mxu0
        %v4040 = vadd.f32 0.0, %v4039
        %v4041 = vpop.f32.mrb[0].mxu0
        %4042 = vmatprep.mubr.f32.mxu0 0.0
        %4043 = vmatmul.mubr.f32.gmra.mrb[0].mxu0 %v3653
        %v4044 = vpop.f32.mrb[0].mxu0
        %v4045 = vadd.f32 0.0, %v4044
        %v4046 = vpop.f32.mrb[0].mxu0
        %4047 = vmatprep.mubr.f32.mxu0 0.0
        %4048 = vmatmul.mubr.f32.gmra.mrb[0].mxu0 %v3811
        %v4049 = vpop.f32.mrb[0].mxu0
        %v4050 = vadd.f32 0.0, %v4049
        %v4051 = vpop.f32.mrb[0].mxu0
        %4052 = vdwg.mxu0
        %4053 = vmatprep.subr.mxu0 0.0
        %4054 = vmatpush1.msra.mxu0 %v3792
        %4055 = vmatprep.subr.mxu0 0.0
        %4056 = vmatpush1.msra.mxu0 %v3793
        %4057 = vmatprep.subr.mxu0 0.0
        %4058 = vmatpush1.msra.mxu0 %v3794
        %4059 = vmatprep.subr.mxu0 0.0
        %4060 = vmatpush1.msra.mxu0 %v3795
        %4061 = vmatprep.subr.mxu0 0.0
        %4062 = vmatpush1.msra.mxu0 %v3796
        %4063 = vmatprep.subr.mxu0 0.0
        %4064 = vmatpush1.msra.mxu0 %v3797
        %4065 = vmatprep.subr.mxu0 0.0
        %4066 = vmatpush1.msra.mxu0 %v3798
        %4067 = vmatprep.subr.mxu0 0.0
        %4068 = vmatpush1.msra.mxu0 %v3799
        %4069 = vmatprep.subr.mxu0 0.0
        %4070 = vmatpush1.msra.mxu0 %v3800
        %4071 = vmatprep.subr.mxu0 0.0
        %4072 = vmatpush1.msra.mxu0 %v3801
        %4073 = vmatprep.subr.mxu0 0.0
        %4074 = vmatpush1.msra.mxu0 %v3802
        %4075 = vmatprep.subr.mxu0 0.0
        %4076 = vmatpush1.msra.mxu0 %v3803
        %4077 = vmatprep.subr.mxu0 0.0
        %4078 = vmatpush1.msra.mxu0 %v3804
        %4079 = vmatprep.subr.mxu0 0.0
        %4080 = vmatpush1.msra.mxu0 %v3805
        %4081 = vmatprep.subr.mxu0 0.0
        %4082 = vmatpush1.msra.mxu0 %v3806
        %4083 = vmatprep.subr.mxu0 0.0
        %4084 = vmatpush1.msra.mxu0 %v3807
        %4085 = vmatprep.subr.mxu0 0.0
        %4086 = vmatpush1.msra.mxu0 0.0
        %4087 = vmatprep.subr.mxu0 0.0
        %4088 = vmatpush1.msra.mxu0 0.0
        %4089 = vmatprep.subr.mxu0 0.0
        %4090 = vmatpush1.msra.mxu0 0.0
        %4091 = vmatprep.subr.mxu0 0.0
        %4092 = vmatpush1.msra.mxu0 0.0
        %4093 = vmatprep.subr.mxu0 0.0
        %4094 = vmatpush1.msra.mxu0 0.0
        %4095 = vmatprep.subr.mxu0 0.0
        %4096 = vmatpush1.msra.mxu0 0.0
        %4097 = vmatprep.subr.mxu0 0.0
        %4098 = vmatpush1.msra.mxu0 0.0
        %4099 = vmatprep.subr.mxu0 0.0
        %4100 = vmatpush1.msra.mxu0 0.0
        %4101 = vmatprep.subr.mxu0 0.0
        %4102 = vmatpush1.msra.mxu0 0.0
        %4103 = vmatprep.subr.mxu0 0.0
        %4104 = vmatpush1.msra.mxu0 0.0
        %4105 = vmatprep.subr.mxu0 0.0
        %4106 = vmatpush1.msra.mxu0 0.0
        %4107 = vmatprep.subr.mxu0 0.0
        %4108 = vmatpush1.msra.mxu0 0.0
        %4109 = vmatprep.subr.mxu0 0.0
        %4110 = vmatpush1.msra.mxu0 0.0
        %4111 = vmatprep.subr.mxu0 0.0
        %4112 = vmatpush1.msra.mxu0 0.0
        %4113 = vmatprep.subr.mxu0 0.0
        %4114 = vmatpush1.msra.mxu0 0.0
        %4115 = vmatprep.subr.mxu0 0.0
        %4116 = vmatpush1.msra.mxu0 0.0
        %4117 = vmatprep.mubr.f32.mxu0 0.0
        %4118 = vmatmul.mubr.f32.gmra.mrb[0].mxu0 %v3694
        %v4119 = vpop.f32.mrb[0].mxu0
        %v4120 = vadd.f32 %v3895, %v4119
        %v4121 = vpop.f32.mrb[0].mxu0
        %4122 = vmatprep.mubr.f32.mxu0 0.0
        %4123 = vmatmul.mubr.f32.gmra.mrb[0].mxu0 %v3696
        %v4124 = vpop.f32.mrb[0].mxu0
        %v4125 = vadd.f32 %v3900, %v4124
        %v4126 = vpop.f32.mrb[0].mxu0
        %4127 = vmatprep.mubr.f32.mxu0 0.0
        %4128 = vmatmul.mubr.f32.gmra.mrb[0].mxu0 %v3698
        %v4129 = vpop.f32.mrb[0].mxu0
        %v4130 = vadd.f32 %v3905, %v4129
        %v4131 = vpop.f32.mrb[0].mxu0
        %4132 = vmatprep.mubr.f32.mxu0 0.0
        %4133 = vmatmul.mubr.f32.gmra.mrb[0].mxu0 %v3700
        %v4134 = vpop.f32.mrb[0].mxu0
        %v4135 = vadd.f32 %v3910, %v4134
        %v4136 = vpop.f32.mrb[0].mxu0
        %4137 = vmatprep.mubr.f32.mxu0 0.0
        %4138 = vmatmul.mubr.f32.gmra.mrb[0].mxu0 %v3702
        %v4139 = vpop.f32.mrb[0].mxu0
        %v4140 = vadd.f32 %v3915, %v4139
        %v4141 = vpop.f32.mrb[0].mxu0
        %4142 = vmatprep.mubr.f32.mxu0 0.0
        %4143 = vmatmul.mubr.f32.gmra.mrb[0].mxu0 %v3704
        %v4144 = vpop.f32.mrb[0].mxu0
        %v4145 = vadd.f32 %v3920, %v4144
        %v4146 = vpop.f32.mrb[0].mxu0
        %4147 = vmatprep.mubr.f32.mxu0 0.0
        %4148 = vmatmul.mubr.f32.gmra.mrb[0].mxu0 %v3706
        %v4149 = vpop.f32.mrb[0].mxu0
        %v4150 = vadd.f32 %v3925, %v4149
        %v4151 = vpop.f32.mrb[0].mxu0
        %4152 = vmatprep.mubr.f32.mxu0 0.0
        %4153 = vmatmul.mubr.f32.gmra.mrb[0].mxu0 %v3708
        %v4154 = vpop.f32.mrb[0].mxu0
        %v4155 = vadd.f32 %v3930, %v4154
        %v4156 = vpop.f32.mrb[0].mxu0
        %4157 = vmatprep.mubr.f32.mxu0 0.0
        %4158 = vmatmul.mubr.f32.gmra.mrb[0].mxu0 %v3711
        %v4159 = vpop.f32.mrb[0].mxu0
        %v4160 = vadd.f32 %v3935, %v4159
        %v4161 = vpop.f32.mrb[0].mxu0
        %4162 = vmatprep.mubr.f32.mxu0 0.0
        %4163 = vmatmul.mubr.f32.gmra.mrb[0].mxu0 %v3713
        %v4164 = vpop.f32.mrb[0].mxu0
        %v4165 = vadd.f32 %v3940, %v4164
        %v4166 = vpop.f32.mrb[0].mxu0
        %4167 = vmatprep.mubr.f32.mxu0 0.0
        %4168 = vmatmul.mubr.f32.gmra.mrb[0].mxu0 %v3715
        %v4169 = vpop.f32.mrb[0].mxu0
        %v4170 = vadd.f32 %v3945, %v4169
        %v4171 = vpop.f32.mrb[0].mxu0
        %4172 = vmatprep.mubr.f32.mxu0 0.0
        %4173 = vmatmul.mubr.f32.gmra.mrb[0].mxu0 %v3717
        %v4174 = vpop.f32.mrb[0].mxu0
        %v4175 = vadd.f32 %v3950, %v4174
        %v4176 = vpop.f32.mrb[0].mxu0
        %4177 = vmatprep.mubr.f32.mxu0 0.0
        %4178 = vmatmul.mubr.f32.gmra.mrb[0].mxu0 %v3719
        %v4179 = vpop.f32.mrb[0].mxu0
        %v4180 = vadd.f32 %v3955, %v4179
        %v4181 = vpop.f32.mrb[0].mxu0
        %4182 = vmatprep.mubr.f32.mxu0 0.0
        %4183 = vmatmul.mubr.f32.gmra.mrb[0].mxu0 %v3721
        %v4184 = vpop.f32.mrb[0].mxu0
        %v4185 = vadd.f32 %v3960, %v4184
        %v4186 = vpop.f32.mrb[0].mxu0
        %4187 = vmatprep.mubr.f32.mxu0 0.0
        %4188 = vmatmul.mubr.f32.gmra.mrb[0].mxu0 %v3723
        %v4189 = vpop.f32.mrb[0].mxu0
        %v4190 = vadd.f32 %v3965, %v4189
        %v4191 = vpop.f32.mrb[0].mxu0
        %4192 = vmatprep.mubr.f32.mxu0 0.0
        %4193 = vmatmul.mubr.f32.gmra.mrb[0].mxu0 %v3725
        %v4194 = vpop.f32.mrb[0].mxu0
        %v4195 = vadd.f32 %v3970, %v4194
        %v4196 = vpop.f32.mrb[0].mxu0
        %4197 = vmatprep.mubr.f32.mxu0 0.0
        %4198 = vmatmul.mubr.f32.gmra.mrb[0].mxu0 %v3728
        %v4199 = vpop.f32.mrb[0].mxu0
        %v4200 = vadd.f32 %v3975, %v4199
        %v4201 = vpop.f32.mrb[0].mxu0
        %4202 = vmatprep.mubr.f32.mxu0 0.0
        %4203 = vmatmul.mubr.f32.gmra.mrb[0].mxu0 %v3730
        %v4204 = vpop.f32.mrb[0].mxu0
        %v4205 = vadd.f32 %v3980, %v4204
        %v4206 = vpop.f32.mrb[0].mxu0
        %4207 = vmatprep.mubr.f32.mxu0 0.0
        %4208 = vmatmul.mubr.f32.gmra.mrb[0].mxu0 %v3732
        %v4209 = vpop.f32.mrb[0].mxu0
        %v4210 = vadd.f32 %v3985, %v4209
        %v4211 = vpop.f32.mrb[0].mxu0
        %4212 = vmatprep.mubr.f32.mxu0 0.0
        %4213 = vmatmul.mubr.f32.gmra.mrb[0].mxu0 %v3734
        %v4214 = vpop.f32.mrb[0].mxu0
        %v4215 = vadd.f32 %v3990, %v4214
        %v4216 = vpop.f32.mrb[0].mxu0
        %4217 = vmatprep.mubr.f32.mxu0 0.0
        %4218 = vmatmul.mubr.f32.gmra.mrb[0].mxu0 %v3736
        %v4219 = vpop.f32.mrb[0].mxu0
        %v4220 = vadd.f32 %v3995, %v4219
        %v4221 = vpop.f32.mrb[0].mxu0
        %4222 = vmatprep.mubr.f32.mxu0 0.0
        %4223 = vmatmul.mubr.f32.gmra.mrb[0].mxu0 %v3738
        %v4224 = vpop.f32.mrb[0].mxu0
        %v4225 = vadd.f32 %v4000, %v4224
        %v4226 = vpop.f32.mrb[0].mxu0
        %4227 = vmatprep.mubr.f32.mxu0 0.0
        %4228 = vmatmul.mubr.f32.gmra.mrb[0].mxu0 %v3740
        %v4229 = vpop.f32.mrb[0].mxu0
        %v4230 = vadd.f32 %v4005, %v4229
        %v4231 = vpop.f32.mrb[0].mxu0
        %4232 = vmatprep.mubr.f32.mxu0 0.0
        %4233 = vmatmul.mubr.f32.gmra.mrb[0].mxu0 %v3742
        %v4234 = vpop.f32.mrb[0].mxu0
        %v4235 = vadd.f32 %v4010, %v4234
        %v4236 = vpop.f32.mrb[0].mxu0
        %4237 = vmatprep.mubr.f32.mxu0 0.0
        %4238 = vmatmul.mubr.f32.gmra.mrb[0].mxu0 %v3745
        %v4239 = vpop.f32.mrb[0].mxu0
        %v4240 = vadd.f32 %v4015, %v4239
        %v4241 = vpop.f32.mrb[0].mxu0
        %4242 = vmatprep.mubr.f32.mxu0 0.0
        %4243 = vmatmul.mubr.f32.gmra.mrb[0].mxu0 %v3747
        %v4244 = vpop.f32.mrb[0].mxu0
        %v4245 = vadd.f32 %v4020, %v4244
        %v4246 = vpop.f32.mrb[0].mxu0
        %4247 = vmatprep.mubr.f32.mxu0 0.0
        %4248 = vmatmul.mubr.f32.gmra.mrb[0].mxu0 %v3749
        %v4249 = vpop.f32.mrb[0].mxu0
        %v4250 = vadd.f32 %v4025, %v4249
        %v4251 = vpop.f32.mrb[0].mxu0
        %4252 = vmatprep.mubr.f32.mxu0 0.0
        %4253 = vmatmul.mubr.f32.gmra.mrb[0].mxu0 %v3751
        %v4254 = vpop.f32.mrb[0].mxu0
        %v4255 = vadd.f32 %v4030, %v4254
        %v4256 = vpop.f32.mrb[0].mxu0
        %4257 = vmatprep.mubr.f32.mxu0 0.0
        %4258 = vmatmul.mubr.f32.gmra.mrb[0].mxu0 %v3753
        %v4259 = vpop.f32.mrb[0].mxu0
        %v4260 = vadd.f32 %v4035, %v4259
        %v4261 = vpop.f32.mrb[0].mxu0
        %4262 = vmatprep.mubr.f32.mxu0 0.0
        %4263 = vmatmul.mubr.f32.gmra.mrb[0].mxu0 %v3755
        %v4264 = vpop.f32.mrb[0].mxu0
        %v4265 = vadd.f32 %v4040, %v4264
        %v4266 = vpop.f32.mrb[0].mxu0
        %4267 = vmatprep.mubr.f32.mxu0 0.0
        %4268 = vmatmul.mubr.f32.gmra.mrb[0].mxu0 %v3757
        %v4269 = vpop.f32.mrb[0].mxu0
        %v4270 = vadd.f32 %v4045, %v4269
        %v4271 = vpop.f32.mrb[0].mxu0
        %4272 = vmatprep.mubr.f32.mxu0 0.0
        %4273 = vmatmul.mubr.f32.gmra.mrb[0].mxu0 %v3759
        %v4274 = vpop.f32.mrb[0].mxu0
        %v4275 = vadd.f32 %v4050, %v4274
        %v4276 = vpop.f32.mrb[0].mxu0
        %4277 = vdwg.mxu0
        %v4278 = vld [vmem:[#allocation2 + $0x10] sm:$0xf0]
        %v4279 = vld [vmem:[#allocation2 + $0x20] sm:$0xff]
        %v4280 = vld [vmem:[#allocation2 + $0x30] sm:$0xff]
        %v4281 = vld [vmem:[#allocation2 + $0x40] sm:$0xff]
        %v4282 = vld [vmem:[#allocation2 + $0x50] sm:$0xff]
        %v4283 = vld [vmem:[#allocation2 + $0x60] sm:$0xff]
        %v4284 = vld [vmem:[#allocation2 + $0x70] sm:$0xff]
        %v4285 = vld [vmem:[#allocation2 + $0x80] sm:$0xff]
        %v4286 = vld [vmem:[#allocation2 + $0x90] sm:$0xf]
        %v4287 = vld [vmem:[#allocation2 + $0xb0] sm:$0xf0]
        %v4288 = vld [vmem:[#allocation2 + $0xc0] sm:$0xff]
        %v4289 = vld [vmem:[#allocation2 + $0xd0] sm:$0xff]
        %v4290 = vld [vmem:[#allocation2 + $0xe0] sm:$0xff]
        %v4291 = vld [vmem:[#allocation2 + $0xf0] sm:$0xff]
        %v4292 = vld [vmem:[#allocation2 + $0x100] sm:$0xff]
        %v4293 = vld [vmem:[#allocation2 + $0x110] sm:$0xff]
        %v4294 = vld [vmem:[#allocation2 + $0x120] sm:$0xff]
        %v4295 = vld [vmem:[#allocation2 + $0x130] sm:$0xf]
        %v4296 = vld [vmem:[#allocation2 + $0x150] sm:$0xf0]
        %v4297 = vld [vmem:[#allocation2 + $0x160] sm:$0xff]
        %v4298 = vld [vmem:[#allocation2 + $0x170] sm:$0xff]
        %v4299 = vld [vmem:[#allocation2 + $0x180] sm:$0xff]
        %v4300 = vld [vmem:[#allocation2 + $0x190] sm:$0xff]
        %v4301 = vld [vmem:[#allocation2 + $0x1a0] sm:$0xff]
        %v4302 = vld [vmem:[#allocation2 + $0x1b0] sm:$0xff]
        %v4303 = vld [vmem:[#allocation2 + $0x1c0] sm:$0xff]
        %v4304 = vld [vmem:[#allocation2 + $0x1d0] sm:$0xf]
        %v4305 = vld [vmem:[#allocation2 + $0x1f0] sm:$0xf0]
        %v4306 = vld [vmem:[#allocation2 + $0x200] sm:$0xff]
        %v4307 = vld [vmem:[#allocation2 + $0x210] sm:$0xff]
        %v4308 = vld [vmem:[#allocation2 + $0x220] sm:$0xff]
        %v4309 = vld [vmem:[#allocation2 + $0x230] sm:$0xff]
        %v4310 = vld [vmem:[#allocation2 + $0x240] sm:$0xff]
        %v4311 = vld [vmem:[#allocation2 + $0x250] sm:$0xff]
        %v4312 = vld [vmem:[#allocation2 + $0x260] sm:$0xff]
        %v4313 = vld [vmem:[#allocation2 + $0x270] sm:$0xf]
        %v4350 = vrot.slane %v4278, 4
        %v4351 = vrot.slane %v4279, 4
        %v4352 = vsel %vm3691, %v4350, %v4351
        %v4353 = vrot.slane %v4280, 4
        %v4354 = vsel %vm3691, %v4351, %v4353
        %v4355 = vrot.slane %v4281, 4
        %v4356 = vsel %vm3691, %v4353, %v4355
        %v4357 = vrot.slane %v4282, 4
        %v4358 = vsel %vm3691, %v4355, %v4357
        %v4359 = vrot.slane %v4283, 4
        %v4360 = vsel %vm3691, %v4357, %v4359
        %v4361 = vrot.slane %v4284, 4
        %v4362 = vsel %vm3691, %v4359, %v4361
        %v4363 = vrot.slane %v4285, 4
        %v4364 = vsel %vm3691, %v4361, %v4363
        %v4365 = vrot.slane %v4286, 4
        %v4366 = vsel %vm3691, %v4363, %v4365
        %v4367 = vrot.slane %v4287, 4
        %v4368 = vrot.slane %v4288, 4
        %v4369 = vsel %vm3691, %v4367, %v4368
        %v4370 = vrot.slane %v4289, 4
        %v4371 = vsel %vm3691, %v4368, %v4370
        %v4372 = vrot.slane %v4290, 4
        %v4373 = vsel %vm3691, %v4370, %v4372
        %v4374 = vrot.slane %v4291, 4
        %v4375 = vsel %vm3691, %v4372, %v4374
        %v4376 = vrot.slane %v4292, 4
        %v4377 = vsel %vm3691, %v4374, %v4376
        %v4378 = vrot.slane %v4293, 4
        %v4379 = vsel %vm3691, %v4376, %v4378
        %v4380 = vrot.slane %v4294, 4
        %v4381 = vsel %vm3691, %v4378, %v4380
        %v4382 = vrot.slane %v4295, 4
        %v4383 = vsel %vm3691, %v4380, %v4382
        %v4384 = vrot.slane %v4296, 4
        %v4385 = vrot.slane %v4297, 4
        %v4386 = vsel %vm3691, %v4384, %v4385
        %v4387 = vrot.slane %v4298, 4
        %v4388 = vsel %vm3691, %v4385, %v4387
        %v4389 = vrot.slane %v4299, 4
        %v4390 = vsel %vm3691, %v4387, %v4389
        %v4391 = vrot.slane %v4300, 4
        %v4392 = vsel %vm3691, %v4389, %v4391
        %v4393 = vrot.slane %v4301, 4
        %v4394 = vsel %vm3691, %v4391, %v4393
        %v4395 = vrot.slane %v4302, 4
        %v4396 = vsel %vm3691, %v4393, %v4395
        %v4397 = vrot.slane %v4303, 4
        %v4398 = vsel %vm3691, %v4395, %v4397
        %v4399 = vrot.slane %v4304, 4
        %v4400 = vsel %vm3691, %v4397, %v4399
        %v4401 = vrot.slane %v4305, 4
        %v4402 = vrot.slane %v4306, 4
        %v4403 = vsel %vm3691, %v4401, %v4402
        %v4404 = vrot.slane %v4307, 4
        %v4405 = vsel %vm3691, %v4402, %v4404
        %v4406 = vrot.slane %v4308, 4
        %v4407 = vsel %vm3691, %v4404, %v4406
        %v4408 = vrot.slane %v4309, 4
        %v4409 = vsel %vm3691, %v4406, %v4408
        %v4410 = vrot.slane %v4310, 4
        %v4411 = vsel %vm3691, %v4408, %v4410
        %v4412 = vrot.slane %v4311, 4
        %v4413 = vsel %vm3691, %v4410, %v4412
        %v4414 = vrot.slane %v4312, 4
        %v4415 = vsel %vm3691, %v4412, %v4414
        %v4416 = vrot.slane %v4313, 4
        %v4417 = vsel %vm3691, %v4414, %v4416
        %v4450 = vld [vmem:[%s5 + $0x100] sm:$0xff]
        %v4451 = vld [vmem:[%s5 + $0x108] sm:$0xff]
        %v4452 = vld [vmem:[%s5 + $0x110] sm:$0xff]
        %v4453 = vld [vmem:[%s5 + $0x118] sm:$0xff]
        %v4454 = vld [vmem:[%s5 + $0x120] sm:$0xff]
        %v4455 = vld [vmem:[%s5 + $0x128] sm:$0xff]
        %v4456 = vld [vmem:[%s5 + $0x130] sm:$0xff]
        %v4457 = vld [vmem:[%s5 + $0x138] sm:$0xff]
        %v4458 = vld [vmem:[%s5 + $0x140] sm:$0xff]
        %v4459 = vld [vmem:[%s5 + $0x148] sm:$0xff]
        %v4460 = vld [vmem:[%s5 + $0x150] sm:$0xff]
        %v4461 = vld [vmem:[%s5 + $0x158] sm:$0xff]
        %v4462 = vld [vmem:[%s5 + $0x160] sm:$0xff]
        %v4463 = vld [vmem:[%s5 + $0x168] sm:$0xff]
        %v4464 = vld [vmem:[%s5 + $0x170] sm:$0xff]
        %v4465 = vld [vmem:[%s5 + $0x178] sm:$0xff]
        %4466 = vmatprep.subr.mxu0 0.0
        %4467 = vmatpush1.msra.mxu0 %v4450
        %4468 = vmatprep.subr.mxu0 0.0
        %4469 = vmatpush1.msra.mxu0 %v4451
        %4470 = vmatprep.subr.mxu0 0.0
        %4471 = vmatpush1.msra.mxu0 %v4452
        %4472 = vmatprep.subr.mxu0 0.0
        %4473 = vmatpush1.msra.mxu0 %v4453
        %4474 = vmatprep.subr.mxu0 0.0
        %4475 = vmatpush1.msra.mxu0 %v4454
        %4476 = vmatprep.subr.mxu0 0.0
        %4477 = vmatpush1.msra.mxu0 %v4455
        %4478 = vmatprep.subr.mxu0 0.0
        %4479 = vmatpush1.msra.mxu0 %v4456
        %4480 = vmatprep.subr.mxu0 0.0
        %4481 = vmatpush1.msra.mxu0 %v4457
        %4482 = vmatprep.subr.mxu0 0.0
        %4483 = vmatpush1.msra.mxu0 %v4458
        %4484 = vmatprep.subr.mxu0 0.0
        %4485 = vmatpush1.msra.mxu0 %v4459
        %4486 = vmatprep.subr.mxu0 0.0
        %4487 = vmatpush1.msra.mxu0 %v4460
        %4488 = vmatprep.subr.mxu0 0.0
        %4489 = vmatpush1.msra.mxu0 %v4461
        %4490 = vmatprep.subr.mxu0 0.0
        %4491 = vmatpush1.msra.mxu0 %v4462
        %4492 = vmatprep.subr.mxu0 0.0
        %4493 = vmatpush1.msra.mxu0 %v4463
        %4494 = vmatprep.subr.mxu0 0.0
        %4495 = vmatpush1.msra.mxu0 %v4464
        %4496 = vmatprep.subr.mxu0 0.0
        %4497 = vmatpush1.msra.mxu0 %v4465
        %4498 = vmatprep.subr.mxu0 0.0
        %4499 = vmatpush1.msra.mxu0 0.0
        %4500 = vmatprep.subr.mxu0 0.0
        %4501 = vmatpush1.msra.mxu0 0.0
        %4502 = vmatprep.subr.mxu0 0.0
        %4503 = vmatpush1.msra.mxu0 0.0
        %4504 = vmatprep.subr.mxu0 0.0
        %4505 = vmatpush1.msra.mxu0 0.0
        %4506 = vmatprep.subr.mxu0 0.0
        %4507 = vmatpush1.msra.mxu0 0.0
        %4508 = vmatprep.subr.mxu0 0.0
        %4509 = vmatpush1.msra.mxu0 0.0
        %4510 = vmatprep.subr.mxu0 0.0
        %4511 = vmatpush1.msra.mxu0 0.0
        %4512 = vmatprep.subr.mxu0 0.0
        %4513 = vmatpush1.msra.mxu0 0.0
        %4514 = vmatprep.subr.mxu0 0.0
        %4515 = vmatpush1.msra.mxu0 0.0
        %4516 = vmatprep.subr.mxu0 0.0
        %4517 = vmatpush1.msra.mxu0 0.0
        %4518 = vmatprep.subr.mxu0 0.0
        %4519 = vmatpush1.msra.mxu0 0.0
        %4520 = vmatprep.subr.mxu0 0.0
        %4521 = vmatpush1.msra.mxu0 0.0
        %4522 = vmatprep.subr.mxu0 0.0
        %4523 = vmatpush1.msra.mxu0 0.0
        %4524 = vmatprep.subr.mxu0 0.0
        %4525 = vmatpush1.msra.mxu0 0.0
        %4526 = vmatprep.subr.mxu0 0.0
        %4527 = vmatpush1.msra.mxu0 0.0
        %4528 = vmatprep.subr.mxu0 0.0
        %4529 = vmatpush1.msra.mxu0 0.0
        %4530 = vmatprep.mubr.f32.mxu0 0.0
        %4531 = vmatmul.mubr.f32.gmra.mrb[0].mxu0 %v4352
        %v4532 = vpop.f32.mrb[0].mxu0
        %v4533 = vadd.f32 0.0, %v4532
        %v4534 = vpop.f32.mrb[0].mxu0
        %4535 = vmatprep.mubr.f32.mxu0 0.0
        %4536 = vmatmul.mubr.f32.gmra.mrb[0].mxu0 %v4354
        %v4537 = vpop.f32.mrb[0].mxu0
        %v4538 = vadd.f32 0.0, %v4537
        %v4539 = vpop.f32.mrb[0].mxu0
        %4540 = vmatprep.mubr.f32.mxu0 0.0
        %4541 = vmatmul.mubr.f32.gmra.mrb[0].mxu0 %v4356
        %v4542 = vpop.f32.mrb[0].mxu0
        %v4543 = vadd.f32 0.0, %v4542
        %v4544 = vpop.f32.mrb[0].mxu0
        %4545 = vmatprep.mubr.f32.mxu0 0.0
        %4546 = vmatmul.mubr.f32.gmra.mrb[0].mxu0 %v4358
        %v4547 = vpop.f32.mrb[0].mxu0
        %v4548 = vadd.f32 0.0, %v4547
        %v4549 = vpop.f32.mrb[0].mxu0
        %4550 = vmatprep.mubr.f32.mxu0 0.0
        %4551 = vmatmul.mubr.f32.gmra.mrb[0].mxu0 %v4360
        %v4552 = vpop.f32.mrb[0].mxu0
        %v4553 = vadd.f32 0.0, %v4552
        %v4554 = vpop.f32.mrb[0].mxu0
        %4555 = vmatprep.mubr.f32.mxu0 0.0
        %4556 = vmatmul.mubr.f32.gmra.mrb[0].mxu0 %v4362
        %v4557 = vpop.f32.mrb[0].mxu0
        %v4558 = vadd.f32 0.0, %v4557
        %v4559 = vpop.f32.mrb[0].mxu0
        %4560 = vmatprep.mubr.f32.mxu0 0.0
        %4561 = vmatmul.mubr.f32.gmra.mrb[0].mxu0 %v4364
        %v4562 = vpop.f32.mrb[0].mxu0
        %v4563 = vadd.f32 0.0, %v4562
        %v4564 = vpop.f32.mrb[0].mxu0
        %4565 = vmatprep.mubr.f32.mxu0 0.0
        %4566 = vmatmul.mubr.f32.gmra.mrb[0].mxu0 %v4366
        %v4567 = vpop.f32.mrb[0].mxu0
        %v4568 = vadd.f32 0.0, %v4567
        %v4569 = vpop.f32.mrb[0].mxu0
        %4570 = vmatprep.mubr.f32.mxu0 0.0
        %4571 = vmatmul.mubr.f32.gmra.mrb[0].mxu0 %v4369
        %v4572 = vpop.f32.mrb[0].mxu0
        %v4573 = vadd.f32 0.0, %v4572
        %v4574 = vpop.f32.mrb[0].mxu0
        %4575 = vmatprep.mubr.f32.mxu0 0.0
        %4576 = vmatmul.mubr.f32.gmra.mrb[0].mxu0 %v4371
        %v4577 = vpop.f32.mrb[0].mxu0
        %v4578 = vadd.f32 0.0, %v4577
        %v4579 = vpop.f32.mrb[0].mxu0
        %4580 = vmatprep.mubr.f32.mxu0 0.0
        %4581 = vmatmul.mubr.f32.gmra.mrb[0].mxu0 %v4373
        %v4582 = vpop.f32.mrb[0].mxu0
        %v4583 = vadd.f32 0.0, %v4582
        %v4584 = vpop.f32.mrb[0].mxu0
        %4585 = vmatprep.mubr.f32.mxu0 0.0
        %4586 = vmatmul.mubr.f32.gmra.mrb[0].mxu0 %v4375
        %v4587 = vpop.f32.mrb[0].mxu0
        %v4588 = vadd.f32 0.0, %v4587
        %v4589 = vpop.f32.mrb[0].mxu0
        %4590 = vmatprep.mubr.f32.mxu0 0.0
        %4591 = vmatmul.mubr.f32.gmra.mrb[0].mxu0 %v4377
        %v4592 = vpop.f32.mrb[0].mxu0
        %v4593 = vadd.f32 0.0, %v4592
        %v4594 = vpop.f32.mrb[0].mxu0
        %4595 = vmatprep.mubr.f32.mxu0 0.0
        %4596 = vmatmul.mubr.f32.gmra.mrb[0].mxu0 %v4379
        %v4597 = vpop.f32.mrb[0].mxu0
        %v4598 = vadd.f32 0.0, %v4597
        %v4599 = vpop.f32.mrb[0].mxu0
        %4600 = vmatprep.mubr.f32.mxu0 0.0
        %4601 = vmatmul.mubr.f32.gmra.mrb[0].mxu0 %v4381
        %v4602 = vpop.f32.mrb[0].mxu0
        %v4603 = vadd.f32 0.0, %v4602
        %v4604 = vpop.f32.mrb[0].mxu0
        %4605 = vmatprep.mubr.f32.mxu0 0.0
        %4606 = vmatmul.mubr.f32.gmra.mrb[0].mxu0 %v4383
        %v4607 = vpop.f32.mrb[0].mxu0
        %v4608 = vadd.f32 0.0, %v4607
        %v4609 = vpop.f32.mrb[0].mxu0
        %4610 = vmatprep.mubr.f32.mxu0 0.0
        %4611 = vmatmul.mubr.f32.gmra.mrb[0].mxu0 %v4386
        %v4612 = vpop.f32.mrb[0].mxu0
        %v4613 = vadd.f32 0.0, %v4612
        %v4614 = vpop.f32.mrb[0].mxu0
        %4615 = vmatprep.mubr.f32.mxu0 0.0
        %4616 = vmatmul.mubr.f32.gmra.mrb[0].mxu0 %v4388
        %v4617 = vpop.f32.mrb[0].mxu0
        %v4618 = vadd.f32 0.0, %v4617
        %v4619 = vpop.f32.mrb[0].mxu0
        %4620 = vmatprep.mubr.f32.mxu0 0.0
        %4621 = vmatmul.mubr.f32.gmra.mrb[0].mxu0 %v4390
        %v4622 = vpop.f32.mrb[0].mxu0
        %v4623 = vadd.f32 0.0, %v4622
        %v4624 = vpop.f32.mrb[0].mxu0
        %4625 = vmatprep.mubr.f32.mxu0 0.0
        %4626 = vmatmul.mubr.f32.gmra.mrb[0].mxu0 %v4392
        %v4627 = vpop.f32.mrb[0].mxu0
        %v4628 = vadd.f32 0.0, %v4627
        %v4629 = vpop.f32.mrb[0].mxu0
        %4630 = vmatprep.mubr.f32.mxu0 0.0
        %4631 = vmatmul.mubr.f32.gmra.mrb[0].mxu0 %v4394
        %v4632 = vpop.f32.mrb[0].mxu0
        %v4633 = vadd.f32 0.0, %v4632
        %v4634 = vpop.f32.mrb[0].mxu0
        %4635 = vmatprep.mubr.f32.mxu0 0.0
        %4636 = vmatmul.mubr.f32.gmra.mrb[0].mxu0 %v4396
        %v4637 = vpop.f32.mrb[0].mxu0
        %v4638 = vadd.f32 0.0, %v4637
        %v4639 = vpop.f32.mrb[0].mxu0
        %4640 = vmatprep.mubr.f32.mxu0 0.0
        %4641 = vmatmul.mubr.f32.gmra.mrb[0].mxu0 %v4398
        %v4642 = vpop.f32.mrb[0].mxu0
        %v4643 = vadd.f32 0.0, %v4642
        %v4644 = vpop.f32.mrb[0].mxu0
        %4645 = vmatprep.mubr.f32.mxu0 0.0
        %4646 = vmatmul.mubr.f32.gmra.mrb[0].mxu0 %v4400
        %v4647 = vpop.f32.mrb[0].mxu0
        %v4648 = vadd.f32 0.0, %v4647
        %v4649 = vpop.f32.mrb[0].mxu0
        %4650 = vmatprep.mubr.f32.mxu0 0.0
        %4651 = vmatmul.mubr.f32.gmra.mrb[0].mxu0 %v4403
        %v4652 = vpop.f32.mrb[0].mxu0
        %v4653 = vadd.f32 0.0, %v4652
        %v4654 = vpop.f32.mrb[0].mxu0
        %4655 = vmatprep.mubr.f32.mxu0 0.0
        %4656 = vmatmul.mubr.f32.gmra.mrb[0].mxu0 %v4405
        %v4657 = vpop.f32.mrb[0].mxu0
        %v4658 = vadd.f32 0.0, %v4657
        %v4659 = vpop.f32.mrb[0].mxu0
        %4660 = vmatprep.mubr.f32.mxu0 0.0
        %4661 = vmatmul.mubr.f32.gmra.mrb[0].mxu0 %v4407
        %v4662 = vpop.f32.mrb[0].mxu0
        %v4663 = vadd.f32 0.0, %v4662
        %v4664 = vpop.f32.mrb[0].mxu0
        %4665 = vmatprep.mubr.f32.mxu0 0.0
        %4666 = vmatmul.mubr.f32.gmra.mrb[0].mxu0 %v4409
        %v4667 = vpop.f32.mrb[0].mxu0
        %v4668 = vadd.f32 0.0, %v4667
        %v4669 = vpop.f32.mrb[0].mxu0
        %4670 = vmatprep.mubr.f32.mxu0 0.0
        %4671 = vmatmul.mubr.f32.gmra.mrb[0].mxu0 %v4411
        %v4672 = vpop.f32.mrb[0].mxu0
        %v4673 = vadd.f32 0.0, %v4672
        %v4674 = vpop.f32.mrb[0].mxu0
        %4675 = vmatprep.mubr.f32.mxu0 0.0
        %4676 = vmatmul.mubr.f32.gmra.mrb[0].mxu0 %v4413
        %v4677 = vpop.f32.mrb[0].mxu0
        %v4678 = vadd.f32 0.0, %v4677
        %v4679 = vpop.f32.mrb[0].mxu0
        %4680 = vmatprep.mubr.f32.mxu0 0.0
        %4681 = vmatmul.mubr.f32.gmra.mrb[0].mxu0 %v4415
        %v4682 = vpop.f32.mrb[0].mxu0
        %v4683 = vadd.f32 0.0, %v4682
        %v4684 = vpop.f32.mrb[0].mxu0
        %4685 = vmatprep.mubr.f32.mxu0 0.0
        %4686 = vmatmul.mubr.f32.gmra.mrb[0].mxu0 %v4417
        %v4687 = vpop.f32.mrb[0].mxu0
        %v4688 = vadd.f32 0.0, %v4687
        %v4689 = vpop.f32.mrb[0].mxu0
        %4690 = vdwg.mxu0
        %v4691 = vadd.f32 %v4120, %v4533
        %v4692 = vadd.f32 %v4125, %v4538
        %v4693 = vadd.f32 %v4130, %v4543
        %v4694 = vadd.f32 %v4135, %v4548
        %v4695 = vadd.f32 %v4140, %v4553
        %v4696 = vadd.f32 %v4145, %v4558
        %v4697 = vadd.f32 %v4150, %v4563
        %v4698 = vadd.f32 %v4155, %v4568
        %v4699 = vadd.f32 %v4160, %v4573
        %v4700 = vadd.f32 %v4165, %v4578
        %v4701 = vadd.f32 %v4170, %v4583
        %v4702 = vadd.f32 %v4175, %v4588
        %v4703 = vadd.f32 %v4180, %v4593
        %v4704 = vadd.f32 %v4185, %v4598
        %v4705 = vadd.f32 %v4190, %v4603
        %v4706 = vadd.f32 %v4195, %v4608
        %v4707 = vadd.f32 %v4200, %v4613
        %v4708 = vadd.f32 %v4205, %v4618
        %v4709 = vadd.f32 %v4210, %v4623
        %v4710 = vadd.f32 %v4215, %v4628
        %v4711 = vadd.f32 %v4220, %v4633
        %v4712 = vadd.f32 %v4225, %v4638
        %v4713 = vadd.f32 %v4230, %v4643
        %v4714 = vadd.f32 %v4235, %v4648
        %v4715 = vadd.f32 %v4240, %v4653
        %v4716 = vadd.f32 %v4245, %v4658
        %v4717 = vadd.f32 %v4250, %v4663
        %v4718 = vadd.f32 %v4255, %v4668
        %v4719 = vadd.f32 %v4260, %v4673
        %v4720 = vadd.f32 %v4265, %v4678
        %v4721 = vadd.f32 %v4270, %v4683
        %v4722 = vadd.f32 %v4275, %v4688
        %v4723 = vld [vmem:[%s6] sm:$0x1]
        %v4725 = vlaneseq
        %v4726 = vshrl.u32 %v4725, 7
        %v4727 = vsub.s32 0, %v4726
        %v4728 = vrot.slane %v4723, %v4727
        %v4730 = vadd.f32 %v4691, %v4728
        %v4731 = vadd.f32 %v4692, %v4728
        %v4732 = vadd.f32 %v4693, %v4728
        %v4733 = vadd.f32 %v4694, %v4728
        %v4734 = vadd.f32 %v4695, %v4728
        %v4735 = vadd.f32 %v4696, %v4728
        %v4736 = vadd.f32 %v4697, %v4728
        %v4737 = vadd.f32 %v4698, %v4728
        %v4738 = vadd.f32 %v4699, %v4728
        %v4739 = vadd.f32 %v4700, %v4728
        %v4740 = vadd.f32 %v4701, %v4728
        %v4741 = vadd.f32 %v4702, %v4728
        %v4742 = vadd.f32 %v4703, %v4728
        %v4743 = vadd.f32 %v4704, %v4728
        %v4744 = vadd.f32 %v4705, %v4728
        %v4745 = vadd.f32 %v4706, %v4728
        %v4746 = vadd.f32 %v4707, %v4728
        %v4747 = vadd.f32 %v4708, %v4728
        %v4748 = vadd.f32 %v4709, %v4728
        %v4749 = vadd.f32 %v4710, %v4728
        %v4750 = vadd.f32 %v4711, %v4728
        %v4751 = vadd.f32 %v4712, %v4728
        %v4752 = vadd.f32 %v4713, %v4728
        %v4753 = vadd.f32 %v4714, %v4728
        %v4754 = vadd.f32 %v4715, %v4728
        %v4755 = vadd.f32 %v4716, %v4728
        %v4756 = vadd.f32 %v4717, %v4728
        %v4757 = vadd.f32 %v4718, %v4728
        %v4758 = vadd.f32 %v4719, %v4728
        %v4759 = vadd.f32 %v4720, %v4728
        %v4760 = vadd.f32 %v4721, %v4728
        %v4761 = vadd.f32 %v4722, %v4728
        %vm4762 = vcmp.gt.f32.partialorder %v4730, 0.0
        %vm4763 = vcmp.gt.f32.partialorder %v4731, 0.0
        %vm4764 = vcmp.gt.f32.partialorder %v4732, 0.0
        %vm4765 = vcmp.gt.f32.partialorder %v4733, 0.0
        %vm4766 = vcmp.gt.f32.partialorder %v4734, 0.0
        %vm4767 = vcmp.gt.f32.partialorder %v4735, 0.0
        %vm4768 = vcmp.gt.f32.partialorder %v4736, 0.0
        %vm4769 = vcmp.gt.f32.partialorder %v4737, 0.0
        %vm4770 = vcmp.gt.f32.partialorder %v4738, 0.0
        %vm4771 = vcmp.gt.f32.partialorder %v4739, 0.0
        %vm4772 = vcmp.gt.f32.partialorder %v4740, 0.0
        %vm4773 = vcmp.gt.f32.partialorder %v4741, 0.0
        %vm4774 = vcmp.gt.f32.partialorder %v4742, 0.0
        %vm4775 = vcmp.gt.f32.partialorder %v4743, 0.0
        %vm4776 = vcmp.gt.f32.partialorder %v4744, 0.0
        %vm4777 = vcmp.gt.f32.partialorder %v4745, 0.0
        %vm4778 = vcmp.gt.f32.partialorder %v4746, 0.0
        %vm4779 = vcmp.gt.f32.partialorder %v4747, 0.0
        %vm4780 = vcmp.gt.f32.partialorder %v4748, 0.0
        %vm4781 = vcmp.gt.f32.partialorder %v4749, 0.0
        %vm4782 = vcmp.gt.f32.partialorder %v4750, 0.0
        %vm4783 = vcmp.gt.f32.partialorder %v4751, 0.0
        %vm4784 = vcmp.gt.f32.partialorder %v4752, 0.0
        %vm4785 = vcmp.gt.f32.partialorder %v4753, 0.0
        %vm4786 = vcmp.gt.f32.partialorder %v4754, 0.0
        %vm4787 = vcmp.gt.f32.partialorder %v4755, 0.0
        %vm4788 = vcmp.gt.f32.partialorder %v4756, 0.0
        %vm4789 = vcmp.gt.f32.partialorder %v4757, 0.0
        %vm4790 = vcmp.gt.f32.partialorder %v4758, 0.0
        %vm4791 = vcmp.gt.f32.partialorder %v4759, 0.0
        %vm4792 = vcmp.gt.f32.partialorder %v4760, 0.0
        %vm4793 = vcmp.gt.f32.partialorder %v4761, 0.0
        %v4794 = vmul.f32 %v4730, 0.2
        %v4795 = vmul.f32 %v4731, 0.2
        %v4796 = vmul.f32 %v4732, 0.2
        %v4797 = vmul.f32 %v4733, 0.2
        %v4798 = vmul.f32 %v4734, 0.2
        %v4799 = vmul.f32 %v4735, 0.2
        %v4800 = vmul.f32 %v4736, 0.2
        %v4801 = vmul.f32 %v4737, 0.2
        %v4802 = vmul.f32 %v4738, 0.2
        %v4803 = vmul.f32 %v4739, 0.2
        %v4804 = vmul.f32 %v4740, 0.2
        %v4805 = vmul.f32 %v4741, 0.2
        %v4806 = vmul.f32 %v4742, 0.2
        %v4807 = vmul.f32 %v4743, 0.2
        %v4808 = vmul.f32 %v4744, 0.2
        %v4809 = vmul.f32 %v4745, 0.2
        %v4810 = vmul.f32 %v4746, 0.2
        %v4811 = vmul.f32 %v4747, 0.2
        %v4812 = vmul.f32 %v4748, 0.2
        %v4813 = vmul.f32 %v4749, 0.2
        %v4814 = vmul.f32 %v4750, 0.2
        %v4815 = vmul.f32 %v4751, 0.2
        %v4816 = vmul.f32 %v4752, 0.2
        %v4817 = vmul.f32 %v4753, 0.2
        %v4818 = vmul.f32 %v4754, 0.2
        %v4819 = vmul.f32 %v4755, 0.2
        %v4820 = vmul.f32 %v4756, 0.2
        %v4821 = vmul.f32 %v4757, 0.2
        %v4822 = vmul.f32 %v4758, 0.2
        %v4823 = vmul.f32 %v4759, 0.2
        %v4824 = vmul.f32 %v4760, 0.2
        %v4825 = vmul.f32 %v4761, 0.2
        %v4826 = vsel %vm4762, %v4730, %v4794
        %v4827 = vsel %vm4763, %v4731, %v4795
        %v4828 = vsel %vm4764, %v4732, %v4796
        %v4829 = vsel %vm4765, %v4733, %v4797
        %v4830 = vsel %vm4766, %v4734, %v4798
        %v4831 = vsel %vm4767, %v4735, %v4799
        %v4832 = vsel %vm4768, %v4736, %v4800
        %v4833 = vsel %vm4769, %v4737, %v4801
        %v4834 = vsel %vm4770, %v4738, %v4802
        %v4835 = vsel %vm4771, %v4739, %v4803
        %v4836 = vsel %vm4772, %v4740, %v4804
        %v4837 = vsel %vm4773, %v4741, %v4805
        %v4838 = vsel %vm4774, %v4742, %v4806
        %v4839 = vsel %vm4775, %v4743, %v4807
        %v4840 = vsel %vm4776, %v4744, %v4808
        %v4841 = vsel %vm4777, %v4745, %v4809
        %v4842 = vsel %vm4778, %v4746, %v4810
        %v4843 = vsel %vm4779, %v4747, %v4811
        %v4844 = vsel %vm4780, %v4748, %v4812
        %v4845 = vsel %vm4781, %v4749, %v4813
        %v4846 = vsel %vm4782, %v4750, %v4814
        %v4847 = vsel %vm4783, %v4751, %v4815
        %v4848 = vsel %vm4784, %v4752, %v4816
        %v4849 = vsel %vm4785, %v4753, %v4817
        %v4850 = vsel %vm4786, %v4754, %v4818
        %v4851 = vsel %vm4787, %v4755, %v4819
        %v4852 = vsel %vm4788, %v4756, %v4820
        %v4853 = vsel %vm4789, %v4757, %v4821
        %v4854 = vsel %vm4790, %v4758, %v4822
        %v4855 = vsel %vm4791, %v4759, %v4823
        %v4856 = vsel %vm4792, %v4760, %v4824
        %v4857 = vsel %vm4793, %v4761, %v4825
        %vm4858 = vcmask 261120
        %4859 = vst.msk [vmem:[#allocation2 + $0x18] sm:$0xff] %vm4858, %v4826
        %4860 = vst.msk [vmem:[#allocation2 + $0x28] sm:$0xff] %vm4858, %v4827
        %4861 = vst.msk [vmem:[#allocation2 + $0x38] sm:$0xff] %vm4858, %v4828
        %4862 = vst.msk [vmem:[#allocation2 + $0x48] sm:$0xff] %vm4858, %v4829
        %4863 = vst.msk [vmem:[#allocation2 + $0x58] sm:$0xff] %vm4858, %v4830
        %4864 = vst.msk [vmem:[#allocation2 + $0x68] sm:$0xff] %vm4858, %v4831
        %4865 = vst.msk [vmem:[#allocation2 + $0x78] sm:$0xff] %vm4858, %v4832
        %4866 = vst.msk [vmem:[#allocation2 + $0x88] sm:$0xff] %vm4858, %v4833
        %4867 = vst.msk [vmem:[#allocation2 + $0xb8] sm:$0xff] %vm4858, %v4834
        %4868 = vst.msk [vmem:[#allocation2 + $0xc8] sm:$0xff] %vm4858, %v4835
        %4869 = vst.msk [vmem:[#allocation2 + $0xd8] sm:$0xff] %vm4858, %v4836
        %4870 = vst.msk [vmem:[#allocation2 + $0xe8] sm:$0xff] %vm4858, %v4837
        %4871 = vst.msk [vmem:[#allocation2 + $0xf8] sm:$0xff] %vm4858, %v4838
        %4872 = vst.msk [vmem:[#allocation2 + $0x108] sm:$0xff] %vm4858, %v4839
        %4873 = vst.msk [vmem:[#allocation2 + $0x118] sm:$0xff] %vm4858, %v4840
        %4874 = vst.msk [vmem:[#allocation2 + $0x128] sm:$0xff] %vm4858, %v4841
        %4875 = vst.msk [vmem:[#allocation2 + $0x158] sm:$0xff] %vm4858, %v4842
        %4876 = vst.msk [vmem:[#allocation2 + $0x168] sm:$0xff] %vm4858, %v4843
        %4877 = vst.msk [vmem:[#allocation2 + $0x178] sm:$0xff] %vm4858, %v4844
        %4878 = vst.msk [vmem:[#allocation2 + $0x188] sm:$0xff] %vm4858, %v4845
        %4879 = vst.msk [vmem:[#allocation2 + $0x198] sm:$0xff] %vm4858, %v4846
        %4880 = vst.msk [vmem:[#allocation2 + $0x1a8] sm:$0xff] %vm4858, %v4847
        %4881 = vst.msk [vmem:[#allocation2 + $0x1b8] sm:$0xff] %vm4858, %v4848
        %4882 = vst.msk [vmem:[#allocation2 + $0x1c8] sm:$0xff] %vm4858, %v4849
        %4883 = vst.msk [vmem:[#allocation2 + $0x1f8] sm:$0xff] %vm4858, %v4850
        %4884 = vst.msk [vmem:[#allocation2 + $0x208] sm:$0xff] %vm4858, %v4851
        %4885 = vst.msk [vmem:[#allocation2 + $0x218] sm:$0xff] %vm4858, %v4852
        %4886 = vst.msk [vmem:[#allocation2 + $0x228] sm:$0xff] %vm4858, %v4853
        %4887 = vst.msk [vmem:[#allocation2 + $0x238] sm:$0xff] %vm4858, %v4854
        %4888 = vst.msk [vmem:[#allocation2 + $0x248] sm:$0xff] %vm4858, %v4855
        %4889 = vst.msk [vmem:[#allocation2 + $0x258] sm:$0xff] %vm4858, %v4856
        %4890 = vst.msk [vmem:[#allocation2 + $0x268] sm:$0xff] %vm4858, %v4857
        %v4891 = vld [vmem:[#allocation2] sm:$0xff]
        %v4892 = vld [vmem:[#allocation2 + $0x8] sm:$0xff]
        %v4893 = vld [vmem:[#allocation2 + $0x10] sm:$0xff]
        %v4894 = vld [vmem:[#allocation2 + $0x18] sm:$0xff]
        %v4895 = vld [vmem:[#allocation2 + $0x20] sm:$0xff]
        %v4896 = vld [vmem:[#allocation2 + $0x28] sm:$0xff]
        %v4897 = vld [vmem:[#allocation2 + $0x30] sm:$0xff]
        %v4898 = vld [vmem:[#allocation2 + $0x38] sm:$0xff]
        %v4899 = vld [vmem:[#allocation2 + $0x40] sm:$0xff]
        %v4900 = vld [vmem:[#allocation2 + $0x48] sm:$0xff]
        %v4901 = vld [vmem:[#allocation2 + $0x50] sm:$0xff]
        %v4902 = vld [vmem:[#allocation2 + $0x58] sm:$0xff]
        %v4903 = vld [vmem:[#allocation2 + $0x60] sm:$0xff]
        %v4904 = vld [vmem:[#allocation2 + $0x68] sm:$0xff]
        %v4905 = vld [vmem:[#allocation2 + $0x70] sm:$0xff]
        %v4906 = vld [vmem:[#allocation2 + $0x78] sm:$0xff]
        %v4907 = vld [vmem:[#allocation2 + $0xa0] sm:$0xff]
        %v4908 = vld [vmem:[#allocation2 + $0xa8] sm:$0xff]
        %v4909 = vld [vmem:[#allocation2 + $0xb0] sm:$0xff]
        %v4910 = vld [vmem:[#allocation2 + $0xb8] sm:$0xff]
        %v4911 = vld [vmem:[#allocation2 + $0xc0] sm:$0xff]
        %v4912 = vld [vmem:[#allocation2 + $0xc8] sm:$0xff]
        %v4913 = vld [vmem:[#allocation2 + $0xd0] sm:$0xff]
        %v4914 = vld [vmem:[#allocation2 + $0xd8] sm:$0xff]
        %v4915 = vld [vmem:[#allocation2 + $0xe0] sm:$0xff]
        %v4916 = vld [vmem:[#allocation2 + $0xe8] sm:$0xff]
        %v4917 = vld [vmem:[#allocation2 + $0xf0] sm:$0xff]
        %v4918 = vld [vmem:[#allocation2 + $0xf8] sm:$0xff]
        %v4919 = vld [vmem:[#allocation2 + $0x100] sm:$0xff]
        %v4920 = vld [vmem:[#allocation2 + $0x108] sm:$0xff]
        %v4921 = vld [vmem:[#allocation2 + $0x110] sm:$0xff]
        %v4922 = vld [vmem:[#allocation2 + $0x118] sm:$0xff]
        %v4923 = vld [vmem:[#allocation2 + $0x140] sm:$0xff]
        %v4924 = vld [vmem:[#allocation2 + $0x148] sm:$0xff]
        %v4925 = vld [vmem:[#allocation2 + $0x150] sm:$0xff]
        %v4926 = vld [vmem:[#allocation2 + $0x158] sm:$0xff]
        %v4927 = vld [vmem:[#allocation2 + $0x160] sm:$0xff]
        %v4928 = vld [vmem:[#allocation2 + $0x168] sm:$0xff]
        %v4929 = vld [vmem:[#allocation2 + $0x170] sm:$0xff]
        %v4930 = vld [vmem:[#allocation2 + $0x178] sm:$0xff]
        %v4931 = vld [vmem:[#allocation2 + $0x180] sm:$0xff]
        %v4932 = vld [vmem:[#allocation2 + $0x188] sm:$0xff]
        %v4933 = vld [vmem:[#allocation2 + $0x190] sm:$0xff]
        %v4934 = vld [vmem:[#allocation2 + $0x198] sm:$0xff]
        %v4935 = vld [vmem:[#allocation2 + $0x1a0] sm:$0xff]
        %v4936 = vld [vmem:[#allocation2 + $0x1a8] sm:$0xff]
        %v4937 = vld [vmem:[#allocation2 + $0x1b0] sm:$0xff]
        %v4938 = vld [vmem:[#allocation2 + $0x1b8] sm:$0xff]
        %v4939 = vld [vmem:[#allocation2 + $0x1e0] sm:$0xff]
        %v4940 = vld [vmem:[#allocation2 + $0x1e8] sm:$0xff]
        %v4941 = vld [vmem:[#allocation2 + $0x1f0] sm:$0xff]
        %v4942 = vld [vmem:[#allocation2 + $0x1f8] sm:$0xff]
        %v4943 = vld [vmem:[#allocation2 + $0x200] sm:$0xff]
        %v4944 = vld [vmem:[#allocation2 + $0x208] sm:$0xff]
        %v4945 = vld [vmem:[#allocation2 + $0x210] sm:$0xff]
        %v4946 = vld [vmem:[#allocation2 + $0x218] sm:$0xff]
        %v4947 = vld [vmem:[#allocation2 + $0x220] sm:$0xff]
        %v4948 = vld [vmem:[#allocation2 + $0x228] sm:$0xff]
        %v4949 = vld [vmem:[#allocation2 + $0x230] sm:$0xff]
        %v4950 = vld [vmem:[#allocation2 + $0x238] sm:$0xff]
        %v4951 = vld [vmem:[#allocation2 + $0x240] sm:$0xff]
        %v4952 = vld [vmem:[#allocation2 + $0x248] sm:$0xff]
        %v4953 = vld [vmem:[#allocation2 + $0x250] sm:$0xff]
        %v4954 = vld [vmem:[#allocation2 + $0x258] sm:$0xff]
        %v4955 = vld [vmem:[%s7] sm:$0xff]
        %v4956 = vld [vmem:[%s7 + $0x8] sm:$0xff]
        %v4957 = vld [vmem:[%s7 + $0x10] sm:$0xff]
        %v4958 = vld [vmem:[%s7 + $0x18] sm:$0xff]
        %v4959 = vld [vmem:[%s7 + $0x20] sm:$0xff]
        %v4960 = vld [vmem:[%s7 + $0x28] sm:$0xff]
        %v4961 = vld [vmem:[%s7 + $0x30] sm:$0xff]
        %v4962 = vld [vmem:[%s7 + $0x38] sm:$0xff]
        %v4963 = vld [vmem:[%s7 + $0x40] sm:$0xff]
        %v4964 = vld [vmem:[%s7 + $0x48] sm:$0xff]
        %v4965 = vld [vmem:[%s7 + $0x50] sm:$0xff]
        %v4966 = vld [vmem:[%s7 + $0x58] sm:$0xff]
        %v4967 = vld [vmem:[%s7 + $0x60] sm:$0xff]
        %v4968 = vld [vmem:[%s7 + $0x68] sm:$0xff]
        %v4969 = vld [vmem:[%s7 + $0x70] sm:$0xff]
        %v4970 = vld [vmem:[%s7 + $0x78] sm:$0xff]
        %v4971 = vld [vmem:[%s7 + $0x80] sm:$0xff]
        %v4972 = vld [vmem:[%s7 + $0x88] sm:$0xff]
        %v4973 = vld [vmem:[%s7 + $0x90] sm:$0xff]
        %v4974 = vld [vmem:[%s7 + $0x98] sm:$0xff]
        %v4975 = vld [vmem:[#allocation2 + $0x80] sm:$0xff]
        %v4976 = vld [vmem:[#allocation2 + $0x88] sm:$0xff]
        %v4977 = vld [vmem:[#allocation2 + $0x120] sm:$0xff]
        %v4978 = vld [vmem:[#allocation2 + $0x128] sm:$0xff]
        %v4979 = vld [vmem:[#allocation2 + $0x1c0] sm:$0xff]
        %v4980 = vld [vmem:[#allocation2 + $0x1c8] sm:$0xff]
        %v4981 = vld [vmem:[#allocation2 + $0x260] sm:$0xff]
        %v4982 = vld [vmem:[#allocation2 + $0x268] sm:$0xff]
        %v4983 = vld [vmem:[%s7 + $0xa0] sm:$0xff]
        %v4984 = vld [vmem:[%s7 + $0xa8] sm:$0xff]
        %v4985 = vld [vmem:[%s7 + $0xb0] sm:$0xff]
        %v4986 = vld [vmem:[%s7 + $0xb8] sm:$0xff]
        %v4987 = vld [vmem:[%s7 + $0xc0] sm:$0xff]
        %v4988 = vld [vmem:[%s7 + $0xc8] sm:$0xff]
        %v4989 = vld [vmem:[%s7 + $0xd0] sm:$0xff]
        %v4990 = vld [vmem:[%s7 + $0xd8] sm:$0xff]
        %v4991 = vld [vmem:[%s7 + $0xe0] sm:$0xff]
        %v4992 = vld [vmem:[%s7 + $0xe8] sm:$0xff]
        %v4993 = vld [vmem:[%s7 + $0xf0] sm:$0xff]
        %v4994 = vld [vmem:[%s7 + $0xf8] sm:$0xff]
        %v4995 = vld [vmem:[%s7 + $0x100] sm:$0xff]
        %v4996 = vld [vmem:[%s7 + $0x108] sm:$0xff]
        %v4997 = vld [vmem:[%s7 + $0x110] sm:$0xff]
        %v4998 = vld [vmem:[%s7 + $0x118] sm:$0xff]
        %v4999 = vld [vmem:[%s7 + $0x120] sm:$0xff]
        %v5000 = vld [vmem:[%s7 + $0x128] sm:$0xff]
        %v5001 = vld [vmem:[%s7 + $0x130] sm:$0xff]
        %v5002 = vld [vmem:[%s7 + $0x138] sm:$0xff]
        %v5004 = vsel %vm4858, %v4894, 0
        %v5007 = vsel %vm4858, %v4896, 0
        %v5010 = vsel %vm4858, %v4898, 0
        %v5013 = vsel %vm4858, %v4900, 0
        %v5016 = vsel %vm4858, %v4902, 0
        %v5019 = vsel %vm4858, %v4904, 0
        %v5022 = vsel %vm4858, %v4906, 0
        %v5025 = vsel %vm4858, %v4976, 0
        %v5028 = vsel %vm4858, %v4910, 0
        %v5031 = vsel %vm4858, %v4912, 0
        %v5034 = vsel %vm4858, %v4914, 0
        %v5037 = vsel %vm4858, %v4916, 0
        %v5040 = vsel %vm4858, %v4918, 0
        %v5043 = vsel %vm4858, %v4920, 0
        %v5046 = vsel %vm4858, %v4922, 0
        %v5049 = vsel %vm4858, %v4978, 0
        %v5052 = vsel %vm4858, %v4926, 0
        %v5055 = vsel %vm4858, %v4928, 0
        %v5058 = vsel %vm4858, %v4930, 0
        %v5061 = vsel %vm4858, %v4932, 0
        %v5064 = vsel %vm4858, %v4934, 0
        %v5067 = vsel %vm4858, %v4936, 0
        %v5070 = vsel %vm4858, %v4938, 0
        %v5073 = vsel %vm4858, %v4980, 0
        %v5076 = vsel %vm4858, %v4942, 0
        %v5079 = vsel %vm4858, %v4944, 0
        %v5082 = vsel %vm4858, %v4946, 0
        %v5085 = vsel %vm4858, %v4948, 0
        %v5088 = vsel %vm4858, %v4950, 0
        %v5091 = vsel %vm4858, %v4952, 0
        %v5094 = vsel %vm4858, %v4954, 0
        %v5097 = vsel %vm4858, %v4982, 0
        %5099 = vmatprep.subr.mxu0 0.0
        %5100 = vmatpush1.msra.mxu0 %v4983
        %5101 = vmatprep.subr.mxu0 0.0
        %5102 = vmatpush1.msra.mxu0 %v4984
        %5103 = vmatprep.subr.mxu0 0.0
        %5104 = vmatpush1.msra.mxu0 %v4985
        %5105 = vmatprep.subr.mxu0 0.0
        %5106 = vmatpush1.msra.mxu0 %v4986
        %5107 = vmatprep.subr.mxu0 0.0
        %5108 = vmatpush1.msra.mxu0 %v4987
        %5109 = vmatprep.subr.mxu0 0.0
        %5110 = vmatpush1.msra.mxu0 %v4988
        %5111 = vmatprep.subr.mxu0 0.0
        %5112 = vmatpush1.msra.mxu0 %v4989
        %5113 = vmatprep.subr.mxu0 0.0
        %5114 = vmatpush1.msra.mxu0 %v4990
        %5115 = vmatprep.subr.mxu0 0.0
        %5116 = vmatpush1.msra.mxu0 %v4991
        %5117 = vmatprep.subr.mxu0 0.0
        %5118 = vmatpush1.msra.mxu0 %v4992
        %5119 = vmatprep.subr.mxu0 0.0
        %5120 = vmatpush1.msra.mxu0 %v4993
        %5121 = vmatprep.subr.mxu0 0.0
        %5122 = vmatpush1.msra.mxu0 %v4994
        %5123 = vmatprep.subr.mxu0 0.0
        %5124 = vmatpush1.msra.mxu0 %v4995
        %5125 = vmatprep.subr.mxu0 0.0
        %5126 = vmatpush1.msra.mxu0 %v4996
        %5127 = vmatprep.subr.mxu0 0.0
        %5128 = vmatpush1.msra.mxu0 %v4997
        %5129 = vmatprep.subr.mxu0 0.0
        %5130 = vmatpush1.msra.mxu0 %v4998
        %5131 = vmatprep.subr.mxu0 0.0
        %5132 = vmatpush1.msra.mxu0 %v4999
        %5133 = vmatprep.subr.mxu0 0.0
        %5134 = vmatpush1.msra.mxu0 %v5000
        %5135 = vmatprep.subr.mxu0 0.0
        %5136 = vmatpush1.msra.mxu0 %v5001
        %5137 = vmatprep.subr.mxu0 0.0
        %5138 = vmatpush1.msra.mxu0 %v5002
        %5139 = vmatprep.subr.mxu0 0.0
        %5140 = vmatpush1.msra.mxu0 0.0
        %5141 = vmatprep.subr.mxu0 0.0
        %5142 = vmatpush1.msra.mxu0 0.0
        %5143 = vmatprep.subr.mxu0 0.0
        %5144 = vmatpush1.msra.mxu0 0.0
        %5145 = vmatprep.subr.mxu0 0.0
        %5146 = vmatpush1.msra.mxu0 0.0
        %5147 = vmatprep.subr.mxu0 0.0
        %5148 = vmatpush1.msra.mxu0 0.0
        %5149 = vmatprep.subr.mxu0 0.0
        %5150 = vmatpush1.msra.mxu0 0.0
        %5151 = vmatprep.subr.mxu0 0.0
        %5152 = vmatpush1.msra.mxu0 0.0
        %5153 = vmatprep.subr.mxu0 0.0
        %5154 = vmatpush1.msra.mxu0 0.0
        %5155 = vmatprep.subr.mxu0 0.0
        %5156 = vmatpush1.msra.mxu0 0.0
        %5157 = vmatprep.subr.mxu0 0.0
        %5158 = vmatpush1.msra.mxu0 0.0
        %5159 = vmatprep.subr.mxu0 0.0
        %5160 = vmatpush1.msra.mxu0 0.0
        %5161 = vmatprep.subr.mxu0 0.0
        %5162 = vmatpush1.msra.mxu0 0.0
        %5163 = vmatprep.mubr.f32.mxu0 %v5004
        %5164 = vmatmul.mubr.f32.gmra.mrb[0].mxu0 %v4893
        %v5165 = vpop.f32.mrb[0].mxu0
        %v5166 = vadd.f32 0.0, %v5165
        %v5167 = vpop.f32.mrb[0].mxu0
        %5168 = vmatprep.mubr.f32.mxu0 %v5007
        %5169 = vmatmul.mubr.f32.gmra.mrb[0].mxu0 %v4895
        %v5170 = vpop.f32.mrb[0].mxu0
        %v5171 = vadd.f32 0.0, %v5170
        %v5172 = vpop.f32.mrb[0].mxu0
        %5173 = vmatprep.mubr.f32.mxu0 %v5010
        %5174 = vmatmul.mubr.f32.gmra.mrb[0].mxu0 %v4897
        %v5175 = vpop.f32.mrb[0].mxu0
        %v5176 = vadd.f32 0.0, %v5175
        %v5177 = vpop.f32.mrb[0].mxu0
        %5178 = vmatprep.mubr.f32.mxu0 %v5013
        %5179 = vmatmul.mubr.f32.gmra.mrb[0].mxu0 %v4899
        %v5180 = vpop.f32.mrb[0].mxu0
        %v5181 = vadd.f32 0.0, %v5180
        %v5182 = vpop.f32.mrb[0].mxu0
        %5183 = vmatprep.mubr.f32.mxu0 %v5016
        %5184 = vmatmul.mubr.f32.gmra.mrb[0].mxu0 %v4901
        %v5185 = vpop.f32.mrb[0].mxu0
        %v5186 = vadd.f32 0.0, %v5185
        %v5187 = vpop.f32.mrb[0].mxu0
        %5188 = vmatprep.mubr.f32.mxu0 %v5019
        %5189 = vmatmul.mubr.f32.gmra.mrb[0].mxu0 %v4903
        %v5190 = vpop.f32.mrb[0].mxu0
        %v5191 = vadd.f32 0.0, %v5190
        %v5192 = vpop.f32.mrb[0].mxu0
        %5193 = vmatprep.mubr.f32.mxu0 %v5022
        %5194 = vmatmul.mubr.f32.gmra.mrb[0].mxu0 %v4905
        %v5195 = vpop.f32.mrb[0].mxu0
        %v5196 = vadd.f32 0.0, %v5195
        %v5197 = vpop.f32.mrb[0].mxu0
        %5198 = vmatprep.mubr.f32.mxu0 %v5025
        %5199 = vmatmul.mubr.f32.gmra.mrb[0].mxu0 %v4975
        %v5200 = vpop.f32.mrb[0].mxu0
        %v5201 = vadd.f32 0.0, %v5200
        %v5202 = vpop.f32.mrb[0].mxu0
        %5203 = vmatprep.mubr.f32.mxu0 %v5028
        %5204 = vmatmul.mubr.f32.gmra.mrb[0].mxu0 %v4909
        %v5205 = vpop.f32.mrb[0].mxu0
        %v5206 = vadd.f32 0.0, %v5205
        %v5207 = vpop.f32.mrb[0].mxu0
        %5208 = vmatprep.mubr.f32.mxu0 %v5031
        %5209 = vmatmul.mubr.f32.gmra.mrb[0].mxu0 %v4911
        %v5210 = vpop.f32.mrb[0].mxu0
        %v5211 = vadd.f32 0.0, %v5210
        %v5212 = vpop.f32.mrb[0].mxu0
        %5213 = vmatprep.mubr.f32.mxu0 %v5034
        %5214 = vmatmul.mubr.f32.gmra.mrb[0].mxu0 %v4913
        %v5215 = vpop.f32.mrb[0].mxu0
        %v5216 = vadd.f32 0.0, %v5215
        %v5217 = vpop.f32.mrb[0].mxu0
        %5218 = vmatprep.mubr.f32.mxu0 %v5037
        %5219 = vmatmul.mubr.f32.gmra.mrb[0].mxu0 %v4915
        %v5220 = vpop.f32.mrb[0].mxu0
        %v5221 = vadd.f32 0.0, %v5220
        %v5222 = vpop.f32.mrb[0].mxu0
        %5223 = vmatprep.mubr.f32.mxu0 %v5040
        %5224 = vmatmul.mubr.f32.gmra.mrb[0].mxu0 %v4917
        %v5225 = vpop.f32.mrb[0].mxu0
        %v5226 = vadd.f32 0.0, %v5225
        %v5227 = vpop.f32.mrb[0].mxu0
        %5228 = vmatprep.mubr.f32.mxu0 %v5043
        %5229 = vmatmul.mubr.f32.gmra.mrb[0].mxu0 %v4919
        %v5230 = vpop.f32.mrb[0].mxu0
        %v5231 = vadd.f32 0.0, %v5230
        %v5232 = vpop.f32.mrb[0].mxu0
        %5233 = vmatprep.mubr.f32.mxu0 %v5046
        %5234 = vmatmul.mubr.f32.gmra.mrb[0].mxu0 %v4921
        %v5235 = vpop.f32.mrb[0].mxu0
        %v5236 = vadd.f32 0.0, %v5235
        %v5237 = vpop.f32.mrb[0].mxu0
        %5238 = vmatprep.mubr.f32.mxu0 %v5049
        %5239 = vmatmul.mubr.f32.gmra.mrb[0].mxu0 %v4977
        %v5240 = vpop.f32.mrb[0].mxu0
        %v5241 = vadd.f32 0.0, %v5240
        %v5242 = vpop.f32.mrb[0].mxu0
        %5243 = vmatprep.mubr.f32.mxu0 %v5052
        %5244 = vmatmul.mubr.f32.gmra.mrb[0].mxu0 %v4925
        %v5245 = vpop.f32.mrb[0].mxu0
        %v5246 = vadd.f32 0.0, %v5245
        %v5247 = vpop.f32.mrb[0].mxu0
        %5248 = vmatprep.mubr.f32.mxu0 %v5055
        %5249 = vmatmul.mubr.f32.gmra.mrb[0].mxu0 %v4927
        %v5250 = vpop.f32.mrb[0].mxu0
        %v5251 = vadd.f32 0.0, %v5250
        %v5252 = vpop.f32.mrb[0].mxu0
        %5253 = vmatprep.mubr.f32.mxu0 %v5058
        %5254 = vmatmul.mubr.f32.gmra.mrb[0].mxu0 %v4929
        %v5255 = vpop.f32.mrb[0].mxu0
        %v5256 = vadd.f32 0.0, %v5255
        %v5257 = vpop.f32.mrb[0].mxu0
        %5258 = vmatprep.mubr.f32.mxu0 %v5061
        %5259 = vmatmul.mubr.f32.gmra.mrb[0].mxu0 %v4931
        %v5260 = vpop.f32.mrb[0].mxu0
        %v5261 = vadd.f32 0.0, %v5260
        %v5262 = vpop.f32.mrb[0].mxu0
        %5263 = vmatprep.mubr.f32.mxu0 %v5064
        %5264 = vmatmul.mubr.f32.gmra.mrb[0].mxu0 %v4933
        %v5265 = vpop.f32.mrb[0].mxu0
        %v5266 = vadd.f32 0.0, %v5265
        %v5267 = vpop.f32.mrb[0].mxu0
        %5268 = vmatprep.mubr.f32.mxu0 %v5067
        %5269 = vmatmul.mubr.f32.gmra.mrb[0].mxu0 %v4935
        %v5270 = vpop.f32.mrb[0].mxu0
        %v5271 = vadd.f32 0.0, %v5270
        %v5272 = vpop.f32.mrb[0].mxu0
        %5273 = vmatprep.mubr.f32.mxu0 %v5070
        %5274 = vmatmul.mubr.f32.gmra.mrb[0].mxu0 %v4937
        %v5275 = vpop.f32.mrb[0].mxu0
        %v5276 = vadd.f32 0.0, %v5275
        %v5277 = vpop.f32.mrb[0].mxu0
        %5278 = vmatprep.mubr.f32.mxu0 %v5073
        %5279 = vmatmul.mubr.f32.gmra.mrb[0].mxu0 %v4979
        %v5280 = vpop.f32.mrb[0].mxu0
        %v5281 = vadd.f32 0.0, %v5280
        %v5282 = vpop.f32.mrb[0].mxu0
        %5283 = vmatprep.mubr.f32.mxu0 %v5076
        %5284 = vmatmul.mubr.f32.gmra.mrb[0].mxu0 %v4941
        %v5285 = vpop.f32.mrb[0].mxu0
        %v5286 = vadd.f32 0.0, %v5285
        %v5287 = vpop.f32.mrb[0].mxu0
        %5288 = vmatprep.mubr.f32.mxu0 %v5079
        %5289 = vmatmul.mubr.f32.gmra.mrb[0].mxu0 %v4943
        %v5290 = vpop.f32.mrb[0].mxu0
        %v5291 = vadd.f32 0.0, %v5290
        %v5292 = vpop.f32.mrb[0].mxu0
        %5293 = vmatprep.mubr.f32.mxu0 %v5082
        %5294 = vmatmul.mubr.f32.gmra.mrb[0].mxu0 %v4945
        %v5295 = vpop.f32.mrb[0].mxu0
        %v5296 = vadd.f32 0.0, %v5295
        %v5297 = vpop.f32.mrb[0].mxu0
        %5298 = vmatprep.mubr.f32.mxu0 %v5085
        %5299 = vmatmul.mubr.f32.gmra.mrb[0].mxu0 %v4947
        %v5300 = vpop.f32.mrb[0].mxu0
        %v5301 = vadd.f32 0.0, %v5300
        %v5302 = vpop.f32.mrb[0].mxu0
        %5303 = vmatprep.mubr.f32.mxu0 %v5088
        %5304 = vmatmul.mubr.f32.gmra.mrb[0].mxu0 %v4949
        %v5305 = vpop.f32.mrb[0].mxu0
        %v5306 = vadd.f32 0.0, %v5305
        %v5307 = vpop.f32.mrb[0].mxu0
        %5308 = vmatprep.mubr.f32.mxu0 %v5091
        %5309 = vmatmul.mubr.f32.gmra.mrb[0].mxu0 %v4951
        %v5310 = vpop.f32.mrb[0].mxu0
        %v5311 = vadd.f32 0.0, %v5310
        %v5312 = vpop.f32.mrb[0].mxu0
        %5313 = vmatprep.mubr.f32.mxu0 %v5094
        %5314 = vmatmul.mubr.f32.gmra.mrb[0].mxu0 %v4953
        %v5315 = vpop.f32.mrb[0].mxu0
        %v5316 = vadd.f32 0.0, %v5315
        %v5317 = vpop.f32.mrb[0].mxu0
        %5318 = vmatprep.mubr.f32.mxu0 %v5097
        %5319 = vmatmul.mubr.f32.gmra.mrb[0].mxu0 %v4981
        %v5320 = vpop.f32.mrb[0].mxu0
        %v5321 = vadd.f32 0.0, %v5320
        %v5322 = vpop.f32.mrb[0].mxu0
        %5323 = vdwg.mxu0
        %v5325 = vsel %vm4858, %v4892, 0
        %v5328 = vsel %vm4858, %v4908, 0
        %v5331 = vsel %vm4858, %v4924, 0
        %v5334 = vsel %vm4858, %v4940, 0
        %5336 = vmatprep.subr.mxu0 0.0
        %5337 = vmatpush1.msra.mxu0 %v4955
        %5338 = vmatprep.subr.mxu0 0.0
        %5339 = vmatpush1.msra.mxu0 %v4956
        %5340 = vmatprep.subr.mxu0 0.0
        %5341 = vmatpush1.msra.mxu0 %v4957
        %5342 = vmatprep.subr.mxu0 0.0
        %5343 = vmatpush1.msra.mxu0 %v4958
        %5344 = vmatprep.subr.mxu0 0.0
        %5345 = vmatpush1.msra.mxu0 %v4959
        %5346 = vmatprep.subr.mxu0 0.0
        %5347 = vmatpush1.msra.mxu0 %v4960
        %5348 = vmatprep.subr.mxu0 0.0
        %5349 = vmatpush1.msra.mxu0 %v4961
        %5350 = vmatprep.subr.mxu0 0.0
        %5351 = vmatpush1.msra.mxu0 %v4962
        %5352 = vmatprep.subr.mxu0 0.0
        %5353 = vmatpush1.msra.mxu0 %v4963
        %5354 = vmatprep.subr.mxu0 0.0
        %5355 = vmatpush1.msra.mxu0 %v4964
        %5356 = vmatprep.subr.mxu0 0.0
        %5357 = vmatpush1.msra.mxu0 %v4965
        %5358 = vmatprep.subr.mxu0 0.0
        %5359 = vmatpush1.msra.mxu0 %v4966
        %5360 = vmatprep.subr.mxu0 0.0
        %5361 = vmatpush1.msra.mxu0 %v4967
        %5362 = vmatprep.subr.mxu0 0.0
        %5363 = vmatpush1.msra.mxu0 %v4968
        %5364 = vmatprep.subr.mxu0 0.0
        %5365 = vmatpush1.msra.mxu0 %v4969
        %5366 = vmatprep.subr.mxu0 0.0
        %5367 = vmatpush1.msra.mxu0 %v4970
        %5368 = vmatprep.subr.mxu0 0.0
        %5369 = vmatpush1.msra.mxu0 %v4971
        %5370 = vmatprep.subr.mxu0 0.0
        %5371 = vmatpush1.msra.mxu0 %v4972
        %5372 = vmatprep.subr.mxu0 0.0
        %5373 = vmatpush1.msra.mxu0 %v4973
        %5374 = vmatprep.subr.mxu0 0.0
        %5375 = vmatpush1.msra.mxu0 %v4974
        %5376 = vmatprep.subr.mxu0 0.0
        %5377 = vmatpush1.msra.mxu0 0.0
        %5378 = vmatprep.subr.mxu0 0.0
        %5379 = vmatpush1.msra.mxu0 0.0
        %5380 = vmatprep.subr.mxu0 0.0
        %5381 = vmatpush1.msra.mxu0 0.0
        %5382 = vmatprep.subr.mxu0 0.0
        %5383 = vmatpush1.msra.mxu0 0.0
        %5384 = vmatprep.subr.mxu0 0.0
        %5385 = vmatpush1.msra.mxu0 0.0
        %5386 = vmatprep.subr.mxu0 0.0
        %5387 = vmatpush1.msra.mxu0 0.0
        %5388 = vmatprep.subr.mxu0 0.0
        %5389 = vmatpush1.msra.mxu0 0.0
        %5390 = vmatprep.subr.mxu0 0.0
        %5391 = vmatpush1.msra.mxu0 0.0
        %5392 = vmatprep.subr.mxu0 0.0
        %5393 = vmatpush1.msra.mxu0 0.0
        %5394 = vmatprep.subr.mxu0 0.0
        %5395 = vmatpush1.msra.mxu0 0.0
        %5396 = vmatprep.subr.mxu0 0.0
        %5397 = vmatpush1.msra.mxu0 0.0
        %5398 = vmatprep.subr.mxu0 0.0
        %5399 = vmatpush1.msra.mxu0 0.0
        %5400 = vmatprep.mubr.f32.mxu0 %v5325
        %5401 = vmatmul.mubr.f32.gmra.mrb[0].mxu0 %v4891
        %v5402 = vpop.f32.mrb[0].mxu0
        %v5403 = vadd.f32 %v5166, %v5402
        %v5404 = vpop.f32.mrb[0].mxu0
        %5405 = vmatprep.mubr.f32.mxu0 %v5004
        %5406 = vmatmul.mubr.f32.gmra.mrb[0].mxu0 %v4893
        %v5407 = vpop.f32.mrb[0].mxu0
        %v5408 = vadd.f32 %v5171, %v5407
        %v5409 = vpop.f32.mrb[0].mxu0
        %5410 = vmatprep.mubr.f32.mxu0 %v5007
        %5411 = vmatmul.mubr.f32.gmra.mrb[0].mxu0 %v4895
        %v5412 = vpop.f32.mrb[0].mxu0
        %v5413 = vadd.f32 %v5176, %v5412
        %v5414 = vpop.f32.mrb[0].mxu0
        %5415 = vmatprep.mubr.f32.mxu0 %v5010
        %5416 = vmatmul.mubr.f32.gmra.mrb[0].mxu0 %v4897
        %v5417 = vpop.f32.mrb[0].mxu0
        %v5418 = vadd.f32 %v5181, %v5417
        %v5419 = vpop.f32.mrb[0].mxu0
        %5420 = vmatprep.mubr.f32.mxu0 %v5013
        %5421 = vmatmul.mubr.f32.gmra.mrb[0].mxu0 %v4899
        %v5422 = vpop.f32.mrb[0].mxu0
        %v5423 = vadd.f32 %v5186, %v5422
        %v5424 = vpop.f32.mrb[0].mxu0
        %5425 = vmatprep.mubr.f32.mxu0 %v5016
        %5426 = vmatmul.mubr.f32.gmra.mrb[0].mxu0 %v4901
        %v5427 = vpop.f32.mrb[0].mxu0
        %v5428 = vadd.f32 %v5191, %v5427
        %v5429 = vpop.f32.mrb[0].mxu0
        %5430 = vmatprep.mubr.f32.mxu0 %v5019
        %5431 = vmatmul.mubr.f32.gmra.mrb[0].mxu0 %v4903
        %v5432 = vpop.f32.mrb[0].mxu0
        %v5433 = vadd.f32 %v5196, %v5432
        %v5434 = vpop.f32.mrb[0].mxu0
        %5435 = vmatprep.mubr.f32.mxu0 %v5022
        %5436 = vmatmul.mubr.f32.gmra.mrb[0].mxu0 %v4905
        %v5437 = vpop.f32.mrb[0].mxu0
        %v5438 = vadd.f32 %v5201, %v5437
        %v5439 = vpop.f32.mrb[0].mxu0
        %5440 = vmatprep.mubr.f32.mxu0 %v5328
        %5441 = vmatmul.mubr.f32.gmra.mrb[0].mxu0 %v4907
        %v5442 = vpop.f32.mrb[0].mxu0
        %v5443 = vadd.f32 %v5206, %v5442
        %v5444 = vpop.f32.mrb[0].mxu0
        %5445 = vmatprep.mubr.f32.mxu0 %v5028
        %5446 = vmatmul.mubr.f32.gmra.mrb[0].mxu0 %v4909
        %v5447 = vpop.f32.mrb[0].mxu0
        %v5448 = vadd.f32 %v5211, %v5447
        %v5449 = vpop.f32.mrb[0].mxu0
        %5450 = vmatprep.mubr.f32.mxu0 %v5031
        %5451 = vmatmul.mubr.f32.gmra.mrb[0].mxu0 %v4911
        %v5452 = vpop.f32.mrb[0].mxu0
        %v5453 = vadd.f32 %v5216, %v5452
        %v5454 = vpop.f32.mrb[0].mxu0
        %5455 = vmatprep.mubr.f32.mxu0 %v5034
        %5456 = vmatmul.mubr.f32.gmra.mrb[0].mxu0 %v4913
        %v5457 = vpop.f32.mrb[0].mxu0
        %v5458 = vadd.f32 %v5221, %v5457
        %v5459 = vpop.f32.mrb[0].mxu0
        %5460 = vmatprep.mubr.f32.mxu0 %v5037
        %5461 = vmatmul.mubr.f32.gmra.mrb[0].mxu0 %v4915
        %v5462 = vpop.f32.mrb[0].mxu0
        %v5463 = vadd.f32 %v5226, %v5462
        %v5464 = vpop.f32.mrb[0].mxu0
        %5465 = vmatprep.mubr.f32.mxu0 %v5040
        %5466 = vmatmul.mubr.f32.gmra.mrb[0].mxu0 %v4917
        %v5467 = vpop.f32.mrb[0].mxu0
        %v5468 = vadd.f32 %v5231, %v5467
        %v5469 = vpop.f32.mrb[0].mxu0
        %5470 = vmatprep.mubr.f32.mxu0 %v5043
        %5471 = vmatmul.mubr.f32.gmra.mrb[0].mxu0 %v4919
        %v5472 = vpop.f32.mrb[0].mxu0
        %v5473 = vadd.f32 %v5236, %v5472
        %v5474 = vpop.f32.mrb[0].mxu0
        %5475 = vmatprep.mubr.f32.mxu0 %v5046
        %5476 = vmatmul.mubr.f32.gmra.mrb[0].mxu0 %v4921
        %v5477 = vpop.f32.mrb[0].mxu0
        %v5478 = vadd.f32 %v5241, %v5477
        %v5479 = vpop.f32.mrb[0].mxu0
        %5480 = vmatprep.mubr.f32.mxu0 %v5331
        %5481 = vmatmul.mubr.f32.gmra.mrb[0].mxu0 %v4923
        %v5482 = vpop.f32.mrb[0].mxu0
        %v5483 = vadd.f32 %v5246, %v5482
        %v5484 = vpop.f32.mrb[0].mxu0
        %5485 = vmatprep.mubr.f32.mxu0 %v5052
        %5486 = vmatmul.mubr.f32.gmra.mrb[0].mxu0 %v4925
        %v5487 = vpop.f32.mrb[0].mxu0
        %v5488 = vadd.f32 %v5251, %v5487
        %v5489 = vpop.f32.mrb[0].mxu0
        %5490 = vmatprep.mubr.f32.mxu0 %v5055
        %5491 = vmatmul.mubr.f32.gmra.mrb[0].mxu0 %v4927
        %v5492 = vpop.f32.mrb[0].mxu0
        %v5493 = vadd.f32 %v5256, %v5492
        %v5494 = vpop.f32.mrb[0].mxu0
        %5495 = vmatprep.mubr.f32.mxu0 %v5058
        %5496 = vmatmul.mubr.f32.gmra.mrb[0].mxu0 %v4929
        %v5497 = vpop.f32.mrb[0].mxu0
        %v5498 = vadd.f32 %v5261, %v5497
        %v5499 = vpop.f32.mrb[0].mxu0
        %5500 = vmatprep.mubr.f32.mxu0 %v5061
        %5501 = vmatmul.mubr.f32.gmra.mrb[0].mxu0 %v4931
        %v5502 = vpop.f32.mrb[0].mxu0
        %v5503 = vadd.f32 %v5266, %v5502
        %v5504 = vpop.f32.mrb[0].mxu0
        %5505 = vmatprep.mubr.f32.mxu0 %v5064
        %5506 = vmatmul.mubr.f32.gmra.mrb[0].mxu0 %v4933
        %v5507 = vpop.f32.mrb[0].mxu0
        %v5508 = vadd.f32 %v5271, %v5507
        %v5509 = vpop.f32.mrb[0].mxu0
        %5510 = vmatprep.mubr.f32.mxu0 %v5067
        %5511 = vmatmul.mubr.f32.gmra.mrb[0].mxu0 %v4935
        %v5512 = vpop.f32.mrb[0].mxu0
        %v5513 = vadd.f32 %v5276, %v5512
        %v5514 = vpop.f32.mrb[0].mxu0
        %5515 = vmatprep.mubr.f32.mxu0 %v5070
        %5516 = vmatmul.mubr.f32.gmra.mrb[0].mxu0 %v4937
        %v5517 = vpop.f32.mrb[0].mxu0
        %v5518 = vadd.f32 %v5281, %v5517
        %v5519 = vpop.f32.mrb[0].mxu0
        %5520 = vmatprep.mubr.f32.mxu0 %v5334
        %5521 = vmatmul.mubr.f32.gmra.mrb[0].mxu0 %v4939
        %v5522 = vpop.f32.mrb[0].mxu0
        %v5523 = vadd.f32 %v5286, %v5522
        %v5524 = vpop.f32.mrb[0].mxu0
        %5525 = vmatprep.mubr.f32.mxu0 %v5076
        %5526 = vmatmul.mubr.f32.gmra.mrb[0].mxu0 %v4941
        %v5527 = vpop.f32.mrb[0].mxu0
        %v5528 = vadd.f32 %v5291, %v5527
        %v5529 = vpop.f32.mrb[0].mxu0
        %5530 = vmatprep.mubr.f32.mxu0 %v5079
        %5531 = vmatmul.mubr.f32.gmra.mrb[0].mxu0 %v4943
        %v5532 = vpop.f32.mrb[0].mxu0
        %v5533 = vadd.f32 %v5296, %v5532
        %v5534 = vpop.f32.mrb[0].mxu0
        %5535 = vmatprep.mubr.f32.mxu0 %v5082
        %5536 = vmatmul.mubr.f32.gmra.mrb[0].mxu0 %v4945
        %v5537 = vpop.f32.mrb[0].mxu0
        %v5538 = vadd.f32 %v5301, %v5537
        %v5539 = vpop.f32.mrb[0].mxu0
        %5540 = vmatprep.mubr.f32.mxu0 %v5085
        %5541 = vmatmul.mubr.f32.gmra.mrb[0].mxu0 %v4947
        %v5542 = vpop.f32.mrb[0].mxu0
        %v5543 = vadd.f32 %v5306, %v5542
        %v5544 = vpop.f32.mrb[0].mxu0
        %5545 = vmatprep.mubr.f32.mxu0 %v5088
        %5546 = vmatmul.mubr.f32.gmra.mrb[0].mxu0 %v4949
        %v5547 = vpop.f32.mrb[0].mxu0
        %v5548 = vadd.f32 %v5311, %v5547
        %v5549 = vpop.f32.mrb[0].mxu0
        %5550 = vmatprep.mubr.f32.mxu0 %v5091
        %5551 = vmatmul.mubr.f32.gmra.mrb[0].mxu0 %v4951
        %v5552 = vpop.f32.mrb[0].mxu0
        %v5553 = vadd.f32 %v5316, %v5552
        %v5554 = vpop.f32.mrb[0].mxu0
        %5555 = vmatprep.mubr.f32.mxu0 %v5094
        %5556 = vmatmul.mubr.f32.gmra.mrb[0].mxu0 %v4953
        %v5557 = vpop.f32.mrb[0].mxu0
        %v5558 = vadd.f32 %v5321, %v5557
        %v5559 = vpop.f32.mrb[0].mxu0
        %5560 = vdwg.mxu0
        %v5561 = vld [vmem:[#allocation2 + $0x20] sm:$0xff]
        %v5562 = vld [vmem:[#allocation2 + $0x28] sm:$0xff]
        %v5563 = vld [vmem:[#allocation2 + $0x30] sm:$0xff]
        %v5564 = vld [vmem:[#allocation2 + $0x38] sm:$0xff]
        %v5565 = vld [vmem:[#allocation2 + $0x40] sm:$0xff]
        %v5566 = vld [vmem:[#allocation2 + $0x48] sm:$0xff]
        %v5567 = vld [vmem:[#allocation2 + $0x50] sm:$0xff]
        %v5568 = vld [vmem:[#allocation2 + $0x58] sm:$0xff]
        %v5569 = vld [vmem:[#allocation2 + $0x60] sm:$0xff]
        %v5570 = vld [vmem:[#allocation2 + $0x68] sm:$0xff]
        %v5571 = vld [vmem:[#allocation2 + $0x70] sm:$0xff]
        %v5572 = vld [vmem:[#allocation2 + $0x78] sm:$0xff]
        %v5573 = vld [vmem:[#allocation2 + $0x80] sm:$0xff]
        %v5574 = vld [vmem:[#allocation2 + $0x88] sm:$0xff]
        %v5575 = vld [vmem:[#allocation2 + $0x90] sm:$0xff]
        %v5576 = vld [vmem:[#allocation2 + $0x98] sm:$0xff]
        %v5577 = vld [vmem:[#allocation2 + $0xc0] sm:$0xff]
        %v5578 = vld [vmem:[#allocation2 + $0xc8] sm:$0xff]
        %v5579 = vld [vmem:[#allocation2 + $0xd0] sm:$0xff]
        %v5580 = vld [vmem:[#allocation2 + $0xd8] sm:$0xff]
        %v5581 = vld [vmem:[#allocation2 + $0xe0] sm:$0xff]
        %v5582 = vld [vmem:[#allocation2 + $0xe8] sm:$0xff]
        %v5583 = vld [vmem:[#allocation2 + $0xf0] sm:$0xff]
        %v5584 = vld [vmem:[#allocation2 + $0xf8] sm:$0xff]
        %v5585 = vld [vmem:[#allocation2 + $0x100] sm:$0xff]
        %v5586 = vld [vmem:[#allocation2 + $0x108] sm:$0xff]
        %v5587 = vld [vmem:[#allocation2 + $0x110] sm:$0xff]
        %v5588 = vld [vmem:[#allocation2 + $0x118] sm:$0xff]
        %v5589 = vld [vmem:[#allocation2 + $0x120] sm:$0xff]
        %v5590 = vld [vmem:[#allocation2 + $0x128] sm:$0xff]
        %v5591 = vld [vmem:[#allocation2 + $0x130] sm:$0xff]
        %v5592 = vld [vmem:[#allocation2 + $0x138] sm:$0xff]
        %v5593 = vld [vmem:[#allocation2 + $0x160] sm:$0xff]
        %v5594 = vld [vmem:[#allocation2 + $0x168] sm:$0xff]
        %v5595 = vld [vmem:[#allocation2 + $0x170] sm:$0xff]
        %v5596 = vld [vmem:[#allocation2 + $0x178] sm:$0xff]
        %v5597 = vld [vmem:[#allocation2 + $0x180] sm:$0xff]
        %v5598 = vld [vmem:[#allocation2 + $0x188] sm:$0xff]
        %v5599 = vld [vmem:[#allocation2 + $0x190] sm:$0xff]
        %v5600 = vld [vmem:[#allocation2 + $0x198] sm:$0xff]
        %v5601 = vld [vmem:[#allocation2 + $0x1a0] sm:$0xff]
        %v5602 = vld [vmem:[#allocation2 + $0x1a8] sm:$0xff]
        %v5603 = vld [vmem:[#allocation2 + $0x1b0] sm:$0xff]
        %v5604 = vld [vmem:[#allocation2 + $0x1b8] sm:$0xff]
        %v5605 = vld [vmem:[#allocation2 + $0x1c0] sm:$0xff]
        %v5606 = vld [vmem:[#allocation2 + $0x1c8] sm:$0xff]
        %v5607 = vld [vmem:[#allocation2 + $0x1d0] sm:$0xff]
        %v5608 = vld [vmem:[#allocation2 + $0x1d8] sm:$0xff]
        %v5609 = vld [vmem:[#allocation2 + $0x200] sm:$0xff]
        %v5610 = vld [vmem:[#allocation2 + $0x208] sm:$0xff]
        %v5611 = vld [vmem:[#allocation2 + $0x210] sm:$0xff]
        %v5612 = vld [vmem:[#allocation2 + $0x218] sm:$0xff]
        %v5613 = vld [vmem:[#allocation2 + $0x220] sm:$0xff]
        %v5614 = vld [vmem:[#allocation2 + $0x228] sm:$0xff]
        %v5615 = vld [vmem:[#allocation2 + $0x230] sm:$0xff]
        %v5616 = vld [vmem:[#allocation2 + $0x238] sm:$0xff]
        %v5617 = vld [vmem:[#allocation2 + $0x240] sm:$0xff]
        %v5618 = vld [vmem:[#allocation2 + $0x248] sm:$0xff]
        %v5619 = vld [vmem:[#allocation2 + $0x250] sm:$0xff]
        %v5620 = vld [vmem:[#allocation2 + $0x258] sm:$0xff]
        %v5621 = vld [vmem:[#allocation2 + $0x260] sm:$0xff]
        %v5622 = vld [vmem:[#allocation2 + $0x268] sm:$0xff]
        %v5623 = vld [vmem:[#allocation2 + $0x270] sm:$0xff]
        %v5624 = vld [vmem:[#allocation2 + $0x278] sm:$0xff]
        %v5625 = vld [vmem:[%s7 + $0x140] sm:$0xff]
        %v5626 = vld [vmem:[%s7 + $0x148] sm:$0xff]
        %v5627 = vld [vmem:[%s7 + $0x150] sm:$0xff]
        %v5628 = vld [vmem:[%s7 + $0x158] sm:$0xff]
        %v5629 = vld [vmem:[%s7 + $0x160] sm:$0xff]
        %v5630 = vld [vmem:[%s7 + $0x168] sm:$0xff]
        %v5631 = vld [vmem:[%s7 + $0x170] sm:$0xff]
        %v5632 = vld [vmem:[%s7 + $0x178] sm:$0xff]
        %v5633 = vld [vmem:[%s7 + $0x180] sm:$0xff]
        %v5634 = vld [vmem:[%s7 + $0x188] sm:$0xff]
        %v5635 = vld [vmem:[%s7 + $0x190] sm:$0xff]
        %v5636 = vld [vmem:[%s7 + $0x198] sm:$0xff]
        %v5637 = vld [vmem:[%s7 + $0x1a0] sm:$0xff]
        %v5638 = vld [vmem:[%s7 + $0x1a8] sm:$0xff]
        %v5639 = vld [vmem:[%s7 + $0x1b0] sm:$0xff]
        %v5640 = vld [vmem:[%s7 + $0x1b8] sm:$0xff]
        %v5641 = vld [vmem:[%s7 + $0x1c0] sm:$0xff]
        %v5642 = vld [vmem:[%s7 + $0x1c8] sm:$0xff]
        %v5643 = vld [vmem:[%s7 + $0x1d0] sm:$0xff]
        %v5644 = vld [vmem:[%s7 + $0x1d8] sm:$0xff]
        %v5646 = vsel %vm4858, %v5562, 0
        %v5649 = vsel %vm4858, %v5564, 0
        %v5652 = vsel %vm4858, %v5566, 0
        %v5655 = vsel %vm4858, %v5568, 0
        %v5658 = vsel %vm4858, %v5570, 0
        %v5661 = vsel %vm4858, %v5572, 0
        %v5664 = vsel %vm4858, %v5574, 0
        %v5667 = vsel %vm4858, %v5576, 0
        %v5670 = vsel %vm4858, %v5578, 0
        %v5673 = vsel %vm4858, %v5580, 0
        %v5676 = vsel %vm4858, %v5582, 0
        %v5679 = vsel %vm4858, %v5584, 0
        %v5682 = vsel %vm4858, %v5586, 0
        %v5685 = vsel %vm4858, %v5588, 0
        %v5688 = vsel %vm4858, %v5590, 0
        %v5691 = vsel %vm4858, %v5592, 0
        %v5694 = vsel %vm4858, %v5594, 0
        %v5697 = vsel %vm4858, %v5596, 0
        %v5700 = vsel %vm4858, %v5598, 0
        %v5703 = vsel %vm4858, %v5600, 0
        %v5706 = vsel %vm4858, %v5602, 0
        %v5709 = vsel %vm4858, %v5604, 0
        %v5712 = vsel %vm4858, %v5606, 0
        %v5715 = vsel %vm4858, %v5608, 0
        %v5718 = vsel %vm4858, %v5610, 0
        %v5721 = vsel %vm4858, %v5612, 0
        %v5724 = vsel %vm4858, %v5614, 0
        %v5727 = vsel %vm4858, %v5616, 0
        %v5730 = vsel %vm4858, %v5618, 0
        %v5733 = vsel %vm4858, %v5620, 0
        %v5736 = vsel %vm4858, %v5622, 0
        %v5739 = vsel %vm4858, %v5624, 0
        %5741 = vmatprep.subr.mxu0 0.0
        %5742 = vmatpush1.msra.mxu0 %v5625
        %5743 = vmatprep.subr.mxu0 0.0
        %5744 = vmatpush1.msra.mxu0 %v5626
        %5745 = vmatprep.subr.mxu0 0.0
        %5746 = vmatpush1.msra.mxu0 %v5627
        %5747 = vmatprep.subr.mxu0 0.0
        %5748 = vmatpush1.msra.mxu0 %v5628
        %5749 = vmatprep.subr.mxu0 0.0
        %5750 = vmatpush1.msra.mxu0 %v5629
        %5751 = vmatprep.subr.mxu0 0.0
        %5752 = vmatpush1.msra.mxu0 %v5630
        %5753 = vmatprep.subr.mxu0 0.0
        %5754 = vmatpush1.msra.mxu0 %v5631
        %5755 = vmatprep.subr.mxu0 0.0
        %5756 = vmatpush1.msra.mxu0 %v5632
        %5757 = vmatprep.subr.mxu0 0.0
        %5758 = vmatpush1.msra.mxu0 %v5633
        %5759 = vmatprep.subr.mxu0 0.0
        %5760 = vmatpush1.msra.mxu0 %v5634
        %5761 = vmatprep.subr.mxu0 0.0
        %5762 = vmatpush1.msra.mxu0 %v5635
        %5763 = vmatprep.subr.mxu0 0.0
        %5764 = vmatpush1.msra.mxu0 %v5636
        %5765 = vmatprep.subr.mxu0 0.0
        %5766 = vmatpush1.msra.mxu0 %v5637
        %5767 = vmatprep.subr.mxu0 0.0
        %5768 = vmatpush1.msra.mxu0 %v5638
        %5769 = vmatprep.subr.mxu0 0.0
        %5770 = vmatpush1.msra.mxu0 %v5639
        %5771 = vmatprep.subr.mxu0 0.0
        %5772 = vmatpush1.msra.mxu0 %v5640
        %5773 = vmatprep.subr.mxu0 0.0
        %5774 = vmatpush1.msra.mxu0 %v5641
        %5775 = vmatprep.subr.mxu0 0.0
        %5776 = vmatpush1.msra.mxu0 %v5642
        %5777 = vmatprep.subr.mxu0 0.0
        %5778 = vmatpush1.msra.mxu0 %v5643
        %5779 = vmatprep.subr.mxu0 0.0
        %5780 = vmatpush1.msra.mxu0 %v5644
        %5781 = vmatprep.subr.mxu0 0.0
        %5782 = vmatpush1.msra.mxu0 0.0
        %5783 = vmatprep.subr.mxu0 0.0
        %5784 = vmatpush1.msra.mxu0 0.0
        %5785 = vmatprep.subr.mxu0 0.0
        %5786 = vmatpush1.msra.mxu0 0.0
        %5787 = vmatprep.subr.mxu0 0.0
        %5788 = vmatpush1.msra.mxu0 0.0
        %5789 = vmatprep.subr.mxu0 0.0
        %5790 = vmatpush1.msra.mxu0 0.0
        %5791 = vmatprep.subr.mxu0 0.0
        %5792 = vmatpush1.msra.mxu0 0.0
        %5793 = vmatprep.subr.mxu0 0.0
        %5794 = vmatpush1.msra.mxu0 0.0
        %5795 = vmatprep.subr.mxu0 0.0
        %5796 = vmatpush1.msra.mxu0 0.0
        %5797 = vmatprep.subr.mxu0 0.0
        %5798 = vmatpush1.msra.mxu0 0.0
        %5799 = vmatprep.subr.mxu0 0.0
        %5800 = vmatpush1.msra.mxu0 0.0
        %5801 = vmatprep.subr.mxu0 0.0
        %5802 = vmatpush1.msra.mxu0 0.0
        %5803 = vmatprep.subr.mxu0 0.0
        %5804 = vmatpush1.msra.mxu0 0.0
        %5805 = vmatprep.mubr.f32.mxu0 %v5646
        %5806 = vmatmul.mubr.f32.gmra.mrb[0].mxu0 %v5561
        %v5807 = vpop.f32.mrb[0].mxu0
        %v5808 = vadd.f32 0.0, %v5807
        %v5809 = vpop.f32.mrb[0].mxu0
        %5810 = vmatprep.mubr.f32.mxu0 %v5649
        %5811 = vmatmul.mubr.f32.gmra.mrb[0].mxu0 %v5563
        %v5812 = vpop.f32.mrb[0].mxu0
        %v5813 = vadd.f32 0.0, %v5812
        %v5814 = vpop.f32.mrb[0].mxu0
        %5815 = vmatprep.mubr.f32.mxu0 %v5652
        %5816 = vmatmul.mubr.f32.gmra.mrb[0].mxu0 %v5565
        %v5817 = vpop.f32.mrb[0].mxu0
        %v5818 = vadd.f32 0.0, %v5817
        %v5819 = vpop.f32.mrb[0].mxu0
        %5820 = vmatprep.mubr.f32.mxu0 %v5655
        %5821 = vmatmul.mubr.f32.gmra.mrb[0].mxu0 %v5567
        %v5822 = vpop.f32.mrb[0].mxu0
        %v5823 = vadd.f32 0.0, %v5822
        %v5824 = vpop.f32.mrb[0].mxu0
        %5825 = vmatprep.mubr.f32.mxu0 %v5658
        %5826 = vmatmul.mubr.f32.gmra.mrb[0].mxu0 %v5569
        %v5827 = vpop.f32.mrb[0].mxu0
        %v5828 = vadd.f32 0.0, %v5827
        %v5829 = vpop.f32.mrb[0].mxu0
        %5830 = vmatprep.mubr.f32.mxu0 %v5661
        %5831 = vmatmul.mubr.f32.gmra.mrb[0].mxu0 %v5571
        %v5832 = vpop.f32.mrb[0].mxu0
        %v5833 = vadd.f32 0.0, %v5832
        %v5834 = vpop.f32.mrb[0].mxu0
        %5835 = vmatprep.mubr.f32.mxu0 %v5664
        %5836 = vmatmul.mubr.f32.gmra.mrb[0].mxu0 %v5573
        %v5837 = vpop.f32.mrb[0].mxu0
        %v5838 = vadd.f32 0.0, %v5837
        %v5839 = vpop.f32.mrb[0].mxu0
        %5840 = vmatprep.mubr.f32.mxu0 %v5667
        %5841 = vmatmul.mubr.f32.gmra.mrb[0].mxu0 %v5575
        %v5842 = vpop.f32.mrb[0].mxu0
        %v5843 = vadd.f32 0.0, %v5842
        %v5844 = vpop.f32.mrb[0].mxu0
        %5845 = vmatprep.mubr.f32.mxu0 %v5670
        %5846 = vmatmul.mubr.f32.gmra.mrb[0].mxu0 %v5577
        %v5847 = vpop.f32.mrb[0].mxu0
        %v5848 = vadd.f32 0.0, %v5847
        %v5849 = vpop.f32.mrb[0].mxu0
        %5850 = vmatprep.mubr.f32.mxu0 %v5673
        %5851 = vmatmul.mubr.f32.gmra.mrb[0].mxu0 %v5579
        %v5852 = vpop.f32.mrb[0].mxu0
        %v5853 = vadd.f32 0.0, %v5852
        %v5854 = vpop.f32.mrb[0].mxu0
        %5855 = vmatprep.mubr.f32.mxu0 %v5676
        %5856 = vmatmul.mubr.f32.gmra.mrb[0].mxu0 %v5581
        %v5857 = vpop.f32.mrb[0].mxu0
        %v5858 = vadd.f32 0.0, %v5857
        %v5859 = vpop.f32.mrb[0].mxu0
        %5860 = vmatprep.mubr.f32.mxu0 %v5679
        %5861 = vmatmul.mubr.f32.gmra.mrb[0].mxu0 %v5583
        %v5862 = vpop.f32.mrb[0].mxu0
        %v5863 = vadd.f32 0.0, %v5862
        %v5864 = vpop.f32.mrb[0].mxu0
        %5865 = vmatprep.mubr.f32.mxu0 %v5682
        %5866 = vmatmul.mubr.f32.gmra.mrb[0].mxu0 %v5585
        %v5867 = vpop.f32.mrb[0].mxu0
        %v5868 = vadd.f32 0.0, %v5867
        %v5869 = vpop.f32.mrb[0].mxu0
        %5870 = vmatprep.mubr.f32.mxu0 %v5685
        %5871 = vmatmul.mubr.f32.gmra.mrb[0].mxu0 %v5587
        %v5872 = vpop.f32.mrb[0].mxu0
        %v5873 = vadd.f32 0.0, %v5872
        %v5874 = vpop.f32.mrb[0].mxu0
        %5875 = vmatprep.mubr.f32.mxu0 %v5688
        %5876 = vmatmul.mubr.f32.gmra.mrb[0].mxu0 %v5589
        %v5877 = vpop.f32.mrb[0].mxu0
        %v5878 = vadd.f32 0.0, %v5877
        %v5879 = vpop.f32.mrb[0].mxu0
        %5880 = vmatprep.mubr.f32.mxu0 %v5691
        %5881 = vmatmul.mubr.f32.gmra.mrb[0].mxu0 %v5591
        %v5882 = vpop.f32.mrb[0].mxu0
        %v5883 = vadd.f32 0.0, %v5882
        %v5884 = vpop.f32.mrb[0].mxu0
        %5885 = vmatprep.mubr.f32.mxu0 %v5694
        %5886 = vmatmul.mubr.f32.gmra.mrb[0].mxu0 %v5593
        %v5887 = vpop.f32.mrb[0].mxu0
        %v5888 = vadd.f32 0.0, %v5887
        %v5889 = vpop.f32.mrb[0].mxu0
        %5890 = vmatprep.mubr.f32.mxu0 %v5697
        %5891 = vmatmul.mubr.f32.gmra.mrb[0].mxu0 %v5595
        %v5892 = vpop.f32.mrb[0].mxu0
        %v5893 = vadd.f32 0.0, %v5892
        %v5894 = vpop.f32.mrb[0].mxu0
        %5895 = vmatprep.mubr.f32.mxu0 %v5700
        %5896 = vmatmul.mubr.f32.gmra.mrb[0].mxu0 %v5597
        %v5897 = vpop.f32.mrb[0].mxu0
        %v5898 = vadd.f32 0.0, %v5897
        %v5899 = vpop.f32.mrb[0].mxu0
        %5900 = vmatprep.mubr.f32.mxu0 %v5703
        %5901 = vmatmul.mubr.f32.gmra.mrb[0].mxu0 %v5599
        %v5902 = vpop.f32.mrb[0].mxu0
        %v5903 = vadd.f32 0.0, %v5902
        %v5904 = vpop.f32.mrb[0].mxu0
        %5905 = vmatprep.mubr.f32.mxu0 %v5706
        %5906 = vmatmul.mubr.f32.gmra.mrb[0].mxu0 %v5601
        %v5907 = vpop.f32.mrb[0].mxu0
        %v5908 = vadd.f32 0.0, %v5907
        %v5909 = vpop.f32.mrb[0].mxu0
        %5910 = vmatprep.mubr.f32.mxu0 %v5709
        %5911 = vmatmul.mubr.f32.gmra.mrb[0].mxu0 %v5603
        %v5912 = vpop.f32.mrb[0].mxu0
        %v5913 = vadd.f32 0.0, %v5912
        %v5914 = vpop.f32.mrb[0].mxu0
        %5915 = vmatprep.mubr.f32.mxu0 %v5712
        %5916 = vmatmul.mubr.f32.gmra.mrb[0].mxu0 %v5605
        %v5917 = vpop.f32.mrb[0].mxu0
        %v5918 = vadd.f32 0.0, %v5917
        %v5919 = vpop.f32.mrb[0].mxu0
        %5920 = vmatprep.mubr.f32.mxu0 %v5715
        %5921 = vmatmul.mubr.f32.gmra.mrb[0].mxu0 %v5607
        %v5922 = vpop.f32.mrb[0].mxu0
        %v5923 = vadd.f32 0.0, %v5922
        %v5924 = vpop.f32.mrb[0].mxu0
        %5925 = vmatprep.mubr.f32.mxu0 %v5718
        %5926 = vmatmul.mubr.f32.gmra.mrb[0].mxu0 %v5609
        %v5927 = vpop.f32.mrb[0].mxu0
        %v5928 = vadd.f32 0.0, %v5927
        %v5929 = vpop.f32.mrb[0].mxu0
        %5930 = vmatprep.mubr.f32.mxu0 %v5721
        %5931 = vmatmul.mubr.f32.gmra.mrb[0].mxu0 %v5611
        %v5932 = vpop.f32.mrb[0].mxu0
        %v5933 = vadd.f32 0.0, %v5932
        %v5934 = vpop.f32.mrb[0].mxu0
        %5935 = vmatprep.mubr.f32.mxu0 %v5724
        %5936 = vmatmul.mubr.f32.gmra.mrb[0].mxu0 %v5613
        %v5937 = vpop.f32.mrb[0].mxu0
        %v5938 = vadd.f32 0.0, %v5937
        %v5939 = vpop.f32.mrb[0].mxu0
        %5940 = vmatprep.mubr.f32.mxu0 %v5727
        %5941 = vmatmul.mubr.f32.gmra.mrb[0].mxu0 %v5615
        %v5942 = vpop.f32.mrb[0].mxu0
        %v5943 = vadd.f32 0.0, %v5942
        %v5944 = vpop.f32.mrb[0].mxu0
        %5945 = vmatprep.mubr.f32.mxu0 %v5730
        %5946 = vmatmul.mubr.f32.gmra.mrb[0].mxu0 %v5617
        %v5947 = vpop.f32.mrb[0].mxu0
        %v5948 = vadd.f32 0.0, %v5947
        %v5949 = vpop.f32.mrb[0].mxu0
        %5950 = vmatprep.mubr.f32.mxu0 %v5733
        %5951 = vmatmul.mubr.f32.gmra.mrb[0].mxu0 %v5619
        %v5952 = vpop.f32.mrb[0].mxu0
        %v5953 = vadd.f32 0.0, %v5952
        %v5954 = vpop.f32.mrb[0].mxu0
        %5955 = vmatprep.mubr.f32.mxu0 %v5736
        %5956 = vmatmul.mubr.f32.gmra.mrb[0].mxu0 %v5621
        %v5957 = vpop.f32.mrb[0].mxu0
        %v5958 = vadd.f32 0.0, %v5957
        %v5959 = vpop.f32.mrb[0].mxu0
        %5960 = vmatprep.mubr.f32.mxu0 %v5739
        %5961 = vmatmul.mubr.f32.gmra.mrb[0].mxu0 %v5623
        %v5962 = vpop.f32.mrb[0].mxu0
        %v5963 = vadd.f32 0.0, %v5962
        %v5964 = vpop.f32.mrb[0].mxu0
        %5965 = vdwg.mxu0
        %v5966 = vadd.f32 %v5403, %v5808
        %v5967 = vadd.f32 %v5408, %v5813
        %v5968 = vadd.f32 %v5413, %v5818
        %v5969 = vadd.f32 %v5418, %v5823
        %v5970 = vadd.f32 %v5423, %v5828
        %v5971 = vadd.f32 %v5428, %v5833
        %v5972 = vadd.f32 %v5433, %v5838
        %v5973 = vadd.f32 %v5438, %v5843
        %v5974 = vadd.f32 %v5443, %v5848
        %v5975 = vadd.f32 %v5448, %v5853
        %v5976 = vadd.f32 %v5453, %v5858
        %v5977 = vadd.f32 %v5458, %v5863
        %v5978 = vadd.f32 %v5463, %v5868
        %v5979 = vadd.f32 %v5468, %v5873
        %v5980 = vadd.f32 %v5473, %v5878
        %v5981 = vadd.f32 %v5478, %v5883
        %v5982 = vadd.f32 %v5483, %v5888
        %v5983 = vadd.f32 %v5488, %v5893
        %v5984 = vadd.f32 %v5493, %v5898
        %v5985 = vadd.f32 %v5498, %v5903
        %v5986 = vadd.f32 %v5503, %v5908
        %v5987 = vadd.f32 %v5508, %v5913
        %v5988 = vadd.f32 %v5513, %v5918
        %v5989 = vadd.f32 %v5518, %v5923
        %v5990 = vadd.f32 %v5523, %v5928
        %v5991 = vadd.f32 %v5528, %v5933
        %v5992 = vadd.f32 %v5533, %v5938
        %v5993 = vadd.f32 %v5538, %v5943
        %v5994 = vadd.f32 %v5543, %v5948
        %v5995 = vadd.f32 %v5548, %v5953
        %v5996 = vadd.f32 %v5553, %v5958
        %v5997 = vadd.f32 %v5558, %v5963
        %v5998 = vld [vmem:[%s8] sm:$0x1]
        %v6000 = vlaneseq
        %v6001 = vshrl.u32 %v6000, 7
        %v6002 = vsub.s32 0, %v6001
        %v6003 = vrot.slane %v5998, %v6002
        %v6005 = vadd.f32 %v5966, %v6003
        %v6006 = vadd.f32 %v5967, %v6003
        %v6007 = vadd.f32 %v5968, %v6003
        %v6008 = vadd.f32 %v5969, %v6003
        %v6009 = vadd.f32 %v5970, %v6003
        %v6010 = vadd.f32 %v5971, %v6003
        %v6011 = vadd.f32 %v5972, %v6003
        %v6012 = vadd.f32 %v5973, %v6003
        %v6013 = vadd.f32 %v5974, %v6003
        %v6014 = vadd.f32 %v5975, %v6003
        %v6015 = vadd.f32 %v5976, %v6003
        %v6016 = vadd.f32 %v5977, %v6003
        %v6017 = vadd.f32 %v5978, %v6003
        %v6018 = vadd.f32 %v5979, %v6003
        %v6019 = vadd.f32 %v5980, %v6003
        %v6020 = vadd.f32 %v5981, %v6003
        %v6021 = vadd.f32 %v5982, %v6003
        %v6022 = vadd.f32 %v5983, %v6003
        %v6023 = vadd.f32 %v5984, %v6003
        %v6024 = vadd.f32 %v5985, %v6003
        %v6025 = vadd.f32 %v5986, %v6003
        %v6026 = vadd.f32 %v5987, %v6003
        %v6027 = vadd.f32 %v5988, %v6003
        %v6028 = vadd.f32 %v5989, %v6003
        %v6029 = vadd.f32 %v5990, %v6003
        %v6030 = vadd.f32 %v5991, %v6003
        %v6031 = vadd.f32 %v5992, %v6003
        %v6032 = vadd.f32 %v5993, %v6003
        %v6033 = vadd.f32 %v5994, %v6003
        %v6034 = vadd.f32 %v5995, %v6003
        %v6035 = vadd.f32 %v5996, %v6003
        %v6036 = vadd.f32 %v5997, %v6003
        %vm6037 = vcmp.gt.f32.partialorder %v6005, 0.0
        %vm6038 = vcmp.gt.f32.partialorder %v6006, 0.0
        %vm6039 = vcmp.gt.f32.partialorder %v6007, 0.0
        %vm6040 = vcmp.gt.f32.partialorder %v6008, 0.0
        %vm6041 = vcmp.gt.f32.partialorder %v6009, 0.0
        %vm6042 = vcmp.gt.f32.partialorder %v6010, 0.0
        %vm6043 = vcmp.gt.f32.partialorder %v6011, 0.0
        %vm6044 = vcmp.gt.f32.partialorder %v6012, 0.0
        %vm6045 = vcmp.gt.f32.partialorder %v6013, 0.0
        %vm6046 = vcmp.gt.f32.partialorder %v6014, 0.0
        %vm6047 = vcmp.gt.f32.partialorder %v6015, 0.0
        %vm6048 = vcmp.gt.f32.partialorder %v6016, 0.0
        %vm6049 = vcmp.gt.f32.partialorder %v6017, 0.0
        %vm6050 = vcmp.gt.f32.partialorder %v6018, 0.0
        %vm6051 = vcmp.gt.f32.partialorder %v6019, 0.0
        %vm6052 = vcmp.gt.f32.partialorder %v6020, 0.0
        %vm6053 = vcmp.gt.f32.partialorder %v6021, 0.0
        %vm6054 = vcmp.gt.f32.partialorder %v6022, 0.0
        %vm6055 = vcmp.gt.f32.partialorder %v6023, 0.0
        %vm6056 = vcmp.gt.f32.partialorder %v6024, 0.0
        %vm6057 = vcmp.gt.f32.partialorder %v6025, 0.0
        %vm6058 = vcmp.gt.f32.partialorder %v6026, 0.0
        %vm6059 = vcmp.gt.f32.partialorder %v6027, 0.0
        %vm6060 = vcmp.gt.f32.partialorder %v6028, 0.0
        %vm6061 = vcmp.gt.f32.partialorder %v6029, 0.0
        %vm6062 = vcmp.gt.f32.partialorder %v6030, 0.0
        %vm6063 = vcmp.gt.f32.partialorder %v6031, 0.0
        %vm6064 = vcmp.gt.f32.partialorder %v6032, 0.0
        %vm6065 = vcmp.gt.f32.partialorder %v6033, 0.0
        %vm6066 = vcmp.gt.f32.partialorder %v6034, 0.0
        %vm6067 = vcmp.gt.f32.partialorder %v6035, 0.0
        %vm6068 = vcmp.gt.f32.partialorder %v6036, 0.0
        %v6069 = vmul.f32 %v6005, 0.2
        %v6070 = vmul.f32 %v6006, 0.2
        %v6071 = vmul.f32 %v6007, 0.2
        %v6072 = vmul.f32 %v6008, 0.2
        %v6073 = vmul.f32 %v6009, 0.2
        %v6074 = vmul.f32 %v6010, 0.2
        %v6075 = vmul.f32 %v6011, 0.2
        %v6076 = vmul.f32 %v6012, 0.2
        %v6077 = vmul.f32 %v6013, 0.2
        %v6078 = vmul.f32 %v6014, 0.2
        %v6079 = vmul.f32 %v6015, 0.2
        %v6080 = vmul.f32 %v6016, 0.2
        %v6081 = vmul.f32 %v6017, 0.2
        %v6082 = vmul.f32 %v6018, 0.2
        %v6083 = vmul.f32 %v6019, 0.2
        %v6084 = vmul.f32 %v6020, 0.2
        %v6085 = vmul.f32 %v6021, 0.2
        %v6086 = vmul.f32 %v6022, 0.2
        %v6087 = vmul.f32 %v6023, 0.2
        %v6088 = vmul.f32 %v6024, 0.2
        %v6089 = vmul.f32 %v6025, 0.2
        %v6090 = vmul.f32 %v6026, 0.2
        %v6091 = vmul.f32 %v6027, 0.2
        %v6092 = vmul.f32 %v6028, 0.2
        %v6093 = vmul.f32 %v6029, 0.2
        %v6094 = vmul.f32 %v6030, 0.2
        %v6095 = vmul.f32 %v6031, 0.2
        %v6096 = vmul.f32 %v6032, 0.2
        %v6097 = vmul.f32 %v6033, 0.2
        %v6098 = vmul.f32 %v6034, 0.2
        %v6099 = vmul.f32 %v6035, 0.2
        %v6100 = vmul.f32 %v6036, 0.2
        %v6101 = vsel %vm6037, %v6005, %v6069
        %v6102 = vsel %vm6038, %v6006, %v6070
        %v6103 = vsel %vm6039, %v6007, %v6071
        %v6104 = vsel %vm6040, %v6008, %v6072
        %v6105 = vsel %vm6041, %v6009, %v6073
        %v6106 = vsel %vm6042, %v6010, %v6074
        %v6107 = vsel %vm6043, %v6011, %v6075
        %v6108 = vsel %vm6044, %v6012, %v6076
        %v6109 = vsel %vm6045, %v6013, %v6077
        %v6110 = vsel %vm6046, %v6014, %v6078
        %v6111 = vsel %vm6047, %v6015, %v6079
        %v6112 = vsel %vm6048, %v6016, %v6080
        %v6113 = vsel %vm6049, %v6017, %v6081
        %v6114 = vsel %vm6050, %v6018, %v6082
        %v6115 = vsel %vm6051, %v6019, %v6083
        %v6116 = vsel %vm6052, %v6020, %v6084
        %v6117 = vsel %vm6053, %v6021, %v6085
        %v6118 = vsel %vm6054, %v6022, %v6086
        %v6119 = vsel %vm6055, %v6023, %v6087
        %v6120 = vsel %vm6056, %v6024, %v6088
        %v6121 = vsel %vm6057, %v6025, %v6089
        %v6122 = vsel %vm6058, %v6026, %v6090
        %v6123 = vsel %vm6059, %v6027, %v6091
        %v6124 = vsel %vm6060, %v6028, %v6092
        %v6125 = vsel %vm6061, %v6029, %v6093
        %v6126 = vsel %vm6062, %v6030, %v6094
        %v6127 = vsel %vm6063, %v6031, %v6095
        %v6128 = vsel %vm6064, %v6032, %v6096
        %v6129 = vsel %vm6065, %v6033, %v6097
        %v6130 = vsel %vm6066, %v6034, %v6098
        %v6131 = vsel %vm6067, %v6035, %v6099
        %v6132 = vsel %vm6068, %v6036, %v6100
        %6165 = vrot.lane.b32.xlu0 %v6101, 32
        %v6166 = vpop.permute.xlu0 %6165
        %6167 = vrot.lane.b32.xlu0 %v6102, 32
        %v6168 = vpop.permute.xlu0 %6167
        %6169 = vrot.lane.b32.xlu0 %v6103, 32
        %v6170 = vpop.permute.xlu0 %6169
        %6171 = vrot.lane.b32.xlu0 %v6104, 32
        %v6172 = vpop.permute.xlu0 %6171
        %6173 = vrot.lane.b32.xlu0 %v6105, 32
        %v6174 = vpop.permute.xlu0 %6173
        %6175 = vrot.lane.b32.xlu0 %v6106, 32
        %v6176 = vpop.permute.xlu0 %6175
        %6177 = vrot.lane.b32.xlu0 %v6107, 32
        %v6178 = vpop.permute.xlu0 %6177
        %6179 = vrot.lane.b32.xlu0 %v6108, 32
        %v6180 = vpop.permute.xlu0 %6179
        %6181 = vrot.lane.b32.xlu0 %v6109, 32
        %v6182 = vpop.permute.xlu0 %6181
        %6183 = vrot.lane.b32.xlu0 %v6110, 32
        %v6184 = vpop.permute.xlu0 %6183
        %6185 = vrot.lane.b32.xlu0 %v6111, 32
        %v6186 = vpop.permute.xlu0 %6185
        %6187 = vrot.lane.b32.xlu0 %v6112, 32
        %v6188 = vpop.permute.xlu0 %6187
        %6189 = vrot.lane.b32.xlu0 %v6113, 32
        %v6190 = vpop.permute.xlu0 %6189
        %6191 = vrot.lane.b32.xlu0 %v6114, 32
        %v6192 = vpop.permute.xlu0 %6191
        %6193 = vrot.lane.b32.xlu0 %v6115, 32
        %v6194 = vpop.permute.xlu0 %6193
        %6195 = vrot.lane.b32.xlu0 %v6116, 32
        %v6196 = vpop.permute.xlu0 %6195
        %6197 = vrot.lane.b32.xlu0 %v6117, 32
        %v6198 = vpop.permute.xlu0 %6197
        %6199 = vrot.lane.b32.xlu0 %v6118, 32
        %v6200 = vpop.permute.xlu0 %6199
        %6201 = vrot.lane.b32.xlu0 %v6119, 32
        %v6202 = vpop.permute.xlu0 %6201
        %6203 = vrot.lane.b32.xlu0 %v6120, 32
        %v6204 = vpop.permute.xlu0 %6203
        %6205 = vrot.lane.b32.xlu0 %v6121, 32
        %v6206 = vpop.permute.xlu0 %6205
        %6207 = vrot.lane.b32.xlu0 %v6122, 32
        %v6208 = vpop.permute.xlu0 %6207
        %6209 = vrot.lane.b32.xlu0 %v6123, 32
        %v6210 = vpop.permute.xlu0 %6209
        %6211 = vrot.lane.b32.xlu0 %v6124, 32
        %v6212 = vpop.permute.xlu0 %6211
        %6213 = vrot.lane.b32.xlu0 %v6125, 32
        %v6214 = vpop.permute.xlu0 %6213
        %6215 = vrot.lane.b32.xlu0 %v6126, 32
        %v6216 = vpop.permute.xlu0 %6215
        %6217 = vrot.lane.b32.xlu0 %v6127, 32
        %v6218 = vpop.permute.xlu0 %6217
        %6219 = vrot.lane.b32.xlu0 %v6128, 32
        %v6220 = vpop.permute.xlu0 %6219
        %6221 = vrot.lane.b32.xlu0 %v6129, 32
        %v6222 = vpop.permute.xlu0 %6221
        %6223 = vrot.lane.b32.xlu0 %v6130, 32
        %v6224 = vpop.permute.xlu0 %6223
        %6225 = vrot.lane.b32.xlu0 %v6131, 32
        %v6226 = vpop.permute.xlu0 %6225
        %6227 = vrot.lane.b32.xlu0 %v6132, 32
        %v6228 = vpop.permute.xlu0 %6227
        %vm6261 = vcmask 523520
        %6262 = vst.msk [vmem:[#allocation2 + $0x18] sm:$0xff] %vm6261, %v6166
        %6263 = vst.msk [vmem:[#allocation2 + $0x28] sm:$0xff] %vm6261, %v6168
        %6264 = vst.msk [vmem:[#allocation2 + $0x38] sm:$0xff] %vm6261, %v6170
        %6265 = vst.msk [vmem:[#allocation2 + $0x48] sm:$0xff] %vm6261, %v6172
        %6266 = vst.msk [vmem:[#allocation2 + $0x58] sm:$0xff] %vm6261, %v6174
        %6267 = vst.msk [vmem:[#allocation2 + $0x68] sm:$0xff] %vm6261, %v6176
        %6268 = vst.msk [vmem:[#allocation2 + $0x78] sm:$0xff] %vm6261, %v6178
        %6269 = vst.msk [vmem:[#allocation2 + $0x88] sm:$0xff] %vm6261, %v6180
        %6270 = vst.msk [vmem:[#allocation2 + $0xb8] sm:$0xff] %vm6261, %v6182
        %6271 = vst.msk [vmem:[#allocation2 + $0xc8] sm:$0xff] %vm6261, %v6184
        %6272 = vst.msk [vmem:[#allocation2 + $0xd8] sm:$0xff] %vm6261, %v6186
        %6273 = vst.msk [vmem:[#allocation2 + $0xe8] sm:$0xff] %vm6261, %v6188
        %6274 = vst.msk [vmem:[#allocation2 + $0xf8] sm:$0xff] %vm6261, %v6190
        %6275 = vst.msk [vmem:[#allocation2 + $0x108] sm:$0xff] %vm6261, %v6192
        %6276 = vst.msk [vmem:[#allocation2 + $0x118] sm:$0xff] %vm6261, %v6194
        %6277 = vst.msk [vmem:[#allocation2 + $0x128] sm:$0xff] %vm6261, %v6196
        %6278 = vst.msk [vmem:[#allocation2 + $0x158] sm:$0xff] %vm6261, %v6198
        %6279 = vst.msk [vmem:[#allocation2 + $0x168] sm:$0xff] %vm6261, %v6200
        %6280 = vst.msk [vmem:[#allocation2 + $0x178] sm:$0xff] %vm6261, %v6202
        %6281 = vst.msk [vmem:[#allocation2 + $0x188] sm:$0xff] %vm6261, %v6204
        %6282 = vst.msk [vmem:[#allocation2 + $0x198] sm:$0xff] %vm6261, %v6206
        %6283 = vst.msk [vmem:[#allocation2 + $0x1a8] sm:$0xff] %vm6261, %v6208
        %6284 = vst.msk [vmem:[#allocation2 + $0x1b8] sm:$0xff] %vm6261, %v6210
        %6285 = vst.msk [vmem:[#allocation2 + $0x1c8] sm:$0xff] %vm6261, %v6212
        %6286 = vst.msk [vmem:[#allocation2 + $0x1f8] sm:$0xff] %vm6261, %v6214
        %6287 = vst.msk [vmem:[#allocation2 + $0x208] sm:$0xff] %vm6261, %v6216
        %6288 = vst.msk [vmem:[#allocation2 + $0x218] sm:$0xff] %vm6261, %v6218
        %6289 = vst.msk [vmem:[#allocation2 + $0x228] sm:$0xff] %vm6261, %v6220
        %6290 = vst.msk [vmem:[#allocation2 + $0x238] sm:$0xff] %vm6261, %v6222
        %6291 = vst.msk [vmem:[#allocation2 + $0x248] sm:$0xff] %vm6261, %v6224
        %6292 = vst.msk [vmem:[#allocation2 + $0x258] sm:$0xff] %vm6261, %v6226
        %6293 = vst.msk [vmem:[#allocation2 + $0x268] sm:$0xff] %vm6261, %v6228
        %v6294 = vld [vmem:[#allocation2 + $0x10] sm:$0xff]
        %v6295 = vld [vmem:[#allocation2 + $0x18] sm:$0xff]
        %v6296 = vld [vmem:[#allocation2 + $0x20] sm:$0xff]
        %v6297 = vld [vmem:[#allocation2 + $0x28] sm:$0xff]
        %v6298 = vld [vmem:[#allocation2 + $0x30] sm:$0xff]
        %v6299 = vld [vmem:[#allocation2 + $0x38] sm:$0xff]
        %v6300 = vld [vmem:[#allocation2 + $0x40] sm:$0xff]
        %v6301 = vld [vmem:[#allocation2 + $0x48] sm:$0xff]
        %v6302 = vld [vmem:[#allocation2 + $0x50] sm:$0xff]
        %v6303 = vld [vmem:[#allocation2 + $0x58] sm:$0xff]
        %v6304 = vld [vmem:[#allocation2 + $0x60] sm:$0xff]
        %v6305 = vld [vmem:[#allocation2 + $0x68] sm:$0xff]
        %v6306 = vld [vmem:[#allocation2 + $0x70] sm:$0xff]
        %v6307 = vld [vmem:[#allocation2 + $0x78] sm:$0xff]
        %v6308 = vld [vmem:[#allocation2 + $0x80] sm:$0xff]
        %v6309 = vld [vmem:[#allocation2 + $0x88] sm:$0xff]
        %v6310 = vld [vmem:[#allocation2 + $0xb0] sm:$0xff]
        %v6311 = vld [vmem:[#allocation2 + $0xb8] sm:$0xff]
        %v6312 = vld [vmem:[#allocation2 + $0xc0] sm:$0xff]
        %v6313 = vld [vmem:[#allocation2 + $0xc8] sm:$0xff]
        %v6314 = vld [vmem:[#allocation2 + $0xd0] sm:$0xff]
        %v6315 = vld [vmem:[#allocation2 + $0xd8] sm:$0xff]
        %v6316 = vld [vmem:[#allocation2 + $0xe0] sm:$0xff]
        %v6317 = vld [vmem:[#allocation2 + $0xe8] sm:$0xff]
        %v6318 = vld [vmem:[#allocation2 + $0xf0] sm:$0xff]
        %v6319 = vld [vmem:[#allocation2 + $0xf8] sm:$0xff]
        %v6320 = vld [vmem:[#allocation2 + $0x100] sm:$0xff]
        %v6321 = vld [vmem:[#allocation2 + $0x108] sm:$0xff]
        %v6322 = vld [vmem:[#allocation2 + $0x110] sm:$0xff]
        %v6323 = vld [vmem:[#allocation2 + $0x118] sm:$0xff]
        %v6324 = vld [vmem:[#allocation2 + $0x120] sm:$0xff]
        %v6325 = vld [vmem:[#allocation2 + $0x128] sm:$0xff]
        %v6326 = vld [vmem:[#allocation2 + $0x150] sm:$0xff]
        %v6327 = vld [vmem:[#allocation2 + $0x158] sm:$0xff]
        %v6328 = vld [vmem:[#allocation2 + $0x160] sm:$0xff]
        %v6329 = vld [vmem:[#allocation2 + $0x168] sm:$0xff]
        %v6330 = vld [vmem:[#allocation2 + $0x170] sm:$0xff]
        %v6331 = vld [vmem:[#allocation2 + $0x178] sm:$0xff]
        %v6332 = vld [vmem:[#allocation2 + $0x180] sm:$0xff]
        %v6333 = vld [vmem:[#allocation2 + $0x188] sm:$0xff]
        %v6334 = vld [vmem:[#allocation2 + $0x190] sm:$0xff]
        %v6335 = vld [vmem:[#allocation2 + $0x198] sm:$0xff]
        %v6336 = vld [vmem:[#allocation2 + $0x1a0] sm:$0xff]
        %v6337 = vld [vmem:[#allocation2 + $0x1a8] sm:$0xff]
        %v6338 = vld [vmem:[#allocation2 + $0x1b0] sm:$0xff]
        %v6339 = vld [vmem:[#allocation2 + $0x1b8] sm:$0xff]
        %v6340 = vld [vmem:[#allocation2 + $0x1c0] sm:$0xff]
        %v6341 = vld [vmem:[#allocation2 + $0x1c8] sm:$0xff]
        %v6342 = vld [vmem:[#allocation2 + $0x1f0] sm:$0xff]
        %v6343 = vld [vmem:[#allocation2 + $0x1f8] sm:$0xff]
        %v6344 = vld [vmem:[#allocation2 + $0x200] sm:$0xff]
        %v6345 = vld [vmem:[#allocation2 + $0x208] sm:$0xff]
        %v6346 = vld [vmem:[#allocation2 + $0x210] sm:$0xff]
        %v6347 = vld [vmem:[#allocation2 + $0x218] sm:$0xff]
        %v6348 = vld [vmem:[#allocation2 + $0x220] sm:$0xff]
        %v6349 = vld [vmem:[#allocation2 + $0x228] sm:$0xff]
        %v6350 = vld [vmem:[#allocation2 + $0x230] sm:$0xff]
        %v6351 = vld [vmem:[#allocation2 + $0x238] sm:$0xff]
        %v6352 = vld [vmem:[#allocation2 + $0x240] sm:$0xff]
        %v6353 = vld [vmem:[#allocation2 + $0x248] sm:$0xff]
        %v6354 = vld [vmem:[#allocation2 + $0x250] sm:$0xff]
        %v6355 = vld [vmem:[#allocation2 + $0x258] sm:$0xff]
        %v6356 = vld [vmem:[#allocation2 + $0x260] sm:$0xff]
        %v6357 = vld [vmem:[#allocation2 + $0x268] sm:$0xff]
        %v6358 = vld [vmem:[%s9] sm:$0xff]
        %v6359 = vld [vmem:[%s9 + $0x8] sm:$0xff]
        %v6360 = vld [vmem:[%s9 + $0x10] sm:$0xff]
        %v6361 = vld [vmem:[%s9 + $0x18] sm:$0xff]
        %v6362 = vld [vmem:[%s9 + $0x20] sm:$0xff]
        %v6363 = vld [vmem:[%s9 + $0x28] sm:$0xff]
        %v6364 = vld [vmem:[%s9 + $0x30] sm:$0xff]
        %v6365 = vld [vmem:[%s9 + $0x38] sm:$0xff]
        %v6366 = vld [vmem:[%s9 + $0x40] sm:$0xff]
        %v6367 = vld [vmem:[%s9 + $0x48] sm:$0xff]
        %v6368 = vld [vmem:[%s9 + $0x50] sm:$0xff]
        %v6369 = vld [vmem:[%s9 + $0x58] sm:$0xff]
        %v6370 = vld [vmem:[%s9 + $0x60] sm:$0xff]
        %v6371 = vld [vmem:[%s9 + $0x68] sm:$0xff]
        %v6372 = vld [vmem:[%s9 + $0x70] sm:$0xff]
        %v6373 = vld [vmem:[%s9 + $0x78] sm:$0xff]
        %v6374 = vld [vmem:[%s9 + $0x80] sm:$0xff]
        %v6375 = vld [vmem:[%s9 + $0x88] sm:$0xff]
        %v6376 = vld [vmem:[%s9 + $0x90] sm:$0xff]
        %v6377 = vld [vmem:[%s9 + $0x98] sm:$0xff]
        %v6378 = vld [vmem:[%s9 + $0xa0] sm:$0xff]
        %v6379 = vld [vmem:[%s9 + $0xa8] sm:$0xff]
        %v6380 = vld [vmem:[%s9 + $0xb0] sm:$0xff]
        %v6381 = vld [vmem:[%s9 + $0xb8] sm:$0xff]
        %v6382 = vld [vmem:[%s10] sm:$0x1]
        %v6384 = vlaneseq
        %v6385 = vshrl.u32 %v6384, 7
        %v6386 = vsub.s32 0, %v6385
        %v6387 = vrot.slane %v6382, %v6386
        %v6390 = vsel %vm500, %v6295, 0
        %v6393 = vsel %vm500, %v6297, 0
        %v6396 = vsel %vm500, %v6299, 0
        %v6399 = vsel %vm500, %v6301, 0
        %v6402 = vsel %vm500, %v6303, 0
        %v6405 = vsel %vm500, %v6305, 0
        %v6408 = vsel %vm500, %v6307, 0
        %v6411 = vsel %vm500, %v6309, 0
        %v6414 = vsel %vm500, %v6311, 0
        %v6417 = vsel %vm500, %v6313, 0
        %v6420 = vsel %vm500, %v6315, 0
        %v6423 = vsel %vm500, %v6317, 0
        %v6426 = vsel %vm500, %v6319, 0
        %v6429 = vsel %vm500, %v6321, 0
        %v6432 = vsel %vm500, %v6323, 0
        %v6435 = vsel %vm500, %v6325, 0
        %v6438 = vsel %vm500, %v6327, 0
        %v6441 = vsel %vm500, %v6329, 0
        %v6444 = vsel %vm500, %v6331, 0
        %v6447 = vsel %vm500, %v6333, 0
        %v6450 = vsel %vm500, %v6335, 0
        %v6453 = vsel %vm500, %v6337, 0
        %v6456 = vsel %vm500, %v6339, 0
        %v6459 = vsel %vm500, %v6341, 0
        %v6462 = vsel %vm500, %v6343, 0
        %v6465 = vsel %vm500, %v6345, 0
        %v6468 = vsel %vm500, %v6347, 0
        %v6471 = vsel %vm500, %v6349, 0
        %v6474 = vsel %vm500, %v6351, 0
        %v6477 = vsel %vm500, %v6353, 0
        %v6480 = vsel %vm500, %v6355, 0
        %v6483 = vsel %vm500, %v6357, 0
        %6485 = vmatprep.subr.mxu0 0.0
        %6486 = vmatpush1.msra.mxu0 %v6358
        %6487 = vmatprep.subr.mxu0 0.0
        %6488 = vmatpush1.msra.mxu0 %v6359
        %6489 = vmatprep.subr.mxu0 0.0
        %6490 = vmatpush1.msra.mxu0 %v6360
        %6491 = vmatprep.subr.mxu0 0.0
        %6492 = vmatpush1.msra.mxu0 %v6361
        %6493 = vmatprep.subr.mxu0 0.0
        %6494 = vmatpush1.msra.mxu0 %v6362
        %6495 = vmatprep.subr.mxu0 0.0
        %6496 = vmatpush1.msra.mxu0 %v6363
        %6497 = vmatprep.subr.mxu0 0.0
        %6498 = vmatpush1.msra.mxu0 %v6364
        %6499 = vmatprep.subr.mxu0 0.0
        %6500 = vmatpush1.msra.mxu0 %v6365
        %6501 = vmatprep.subr.mxu0 0.0
        %6502 = vmatpush1.msra.mxu0 %v6366
        %6503 = vmatprep.subr.mxu0 0.0
        %6504 = vmatpush1.msra.mxu0 %v6367
        %6505 = vmatprep.subr.mxu0 0.0
        %6506 = vmatpush1.msra.mxu0 %v6368
        %6507 = vmatprep.subr.mxu0 0.0
        %6508 = vmatpush1.msra.mxu0 %v6369
        %6509 = vmatprep.subr.mxu0 0.0
        %6510 = vmatpush1.msra.mxu0 %v6370
        %6511 = vmatprep.subr.mxu0 0.0
        %6512 = vmatpush1.msra.mxu0 %v6371
        %6513 = vmatprep.subr.mxu0 0.0
        %6514 = vmatpush1.msra.mxu0 %v6372
        %6515 = vmatprep.subr.mxu0 0.0
        %6516 = vmatpush1.msra.mxu0 %v6373
        %6517 = vmatprep.subr.mxu0 0.0
        %6518 = vmatpush1.msra.mxu0 %v6374
        %6519 = vmatprep.subr.mxu0 0.0
        %6520 = vmatpush1.msra.mxu0 %v6375
        %6521 = vmatprep.subr.mxu0 0.0
        %6522 = vmatpush1.msra.mxu0 %v6376
        %6523 = vmatprep.subr.mxu0 0.0
        %6524 = vmatpush1.msra.mxu0 %v6377
        %6525 = vmatprep.subr.mxu0 0.0
        %6526 = vmatpush1.msra.mxu0 %v6378
        %6527 = vmatprep.subr.mxu0 0.0
        %6528 = vmatpush1.msra.mxu0 %v6379
        %6529 = vmatprep.subr.mxu0 0.0
        %6530 = vmatpush1.msra.mxu0 %v6380
        %6531 = vmatprep.subr.mxu0 0.0
        %6532 = vmatpush1.msra.mxu0 %v6381
        %6533 = vmatprep.subr.mxu0 0.0
        %6534 = vmatpush1.msra.mxu0 0.0
        %6535 = vmatprep.subr.mxu0 0.0
        %6536 = vmatpush1.msra.mxu0 0.0
        %6537 = vmatprep.subr.mxu0 0.0
        %6538 = vmatpush1.msra.mxu0 0.0
        %6539 = vmatprep.subr.mxu0 0.0
        %6540 = vmatpush1.msra.mxu0 0.0
        %6541 = vmatprep.subr.mxu0 0.0
        %6542 = vmatpush1.msra.mxu0 0.0
        %6543 = vmatprep.subr.mxu0 0.0
        %6544 = vmatpush1.msra.mxu0 0.0
        %6545 = vmatprep.subr.mxu0 0.0
        %6546 = vmatpush1.msra.mxu0 0.0
        %6547 = vmatprep.subr.mxu0 0.0
        %6548 = vmatpush1.msra.mxu0 0.0
        %6549 = vmatprep.mubr.f32.mxu0 %v6390
        %6550 = vmatmul.mubr.f32.gmra.mrb[0].mxu0 %v6294
        %v6551 = vpop.f32.mrb[0].mxu0
        %v6552 = vadd.f32 %v6387, %v6551
        %v6553 = vpop.f32.mrb[0].mxu0
        %6554 = vmatprep.mubr.f32.mxu0 %v6393
        %6555 = vmatmul.mubr.f32.gmra.mrb[0].mxu0 %v6296
        %v6556 = vpop.f32.mrb[0].mxu0
        %v6557 = vadd.f32 %v6387, %v6556
        %v6558 = vpop.f32.mrb[0].mxu0
        %6559 = vmatprep.mubr.f32.mxu0 %v6396
        %6560 = vmatmul.mubr.f32.gmra.mrb[0].mxu0 %v6298
        %v6561 = vpop.f32.mrb[0].mxu0
        %v6562 = vadd.f32 %v6387, %v6561
        %v6563 = vpop.f32.mrb[0].mxu0
        %6564 = vmatprep.mubr.f32.mxu0 %v6399
        %6565 = vmatmul.mubr.f32.gmra.mrb[0].mxu0 %v6300
        %v6566 = vpop.f32.mrb[0].mxu0
        %v6567 = vadd.f32 %v6387, %v6566
        %v6568 = vpop.f32.mrb[0].mxu0
        %6569 = vmatprep.mubr.f32.mxu0 %v6402
        %6570 = vmatmul.mubr.f32.gmra.mrb[0].mxu0 %v6302
        %v6571 = vpop.f32.mrb[0].mxu0
        %v6572 = vadd.f32 %v6387, %v6571
        %v6573 = vpop.f32.mrb[0].mxu0
        %6574 = vmatprep.mubr.f32.mxu0 %v6405
        %6575 = vmatmul.mubr.f32.gmra.mrb[0].mxu0 %v6304
        %v6576 = vpop.f32.mrb[0].mxu0
        %v6577 = vadd.f32 %v6387, %v6576
        %v6578 = vpop.f32.mrb[0].mxu0
        %6579 = vmatprep.mubr.f32.mxu0 %v6408
        %6580 = vmatmul.mubr.f32.gmra.mrb[0].mxu0 %v6306
        %v6581 = vpop.f32.mrb[0].mxu0
        %v6582 = vadd.f32 %v6387, %v6581
        %v6583 = vpop.f32.mrb[0].mxu0
        %6584 = vmatprep.mubr.f32.mxu0 %v6411
        %6585 = vmatmul.mubr.f32.gmra.mrb[0].mxu0 %v6308
        %v6586 = vpop.f32.mrb[0].mxu0
        %v6587 = vadd.f32 %v6387, %v6586
        %v6588 = vpop.f32.mrb[0].mxu0
        %6589 = vmatprep.mubr.f32.mxu0 %v6414
        %6590 = vmatmul.mubr.f32.gmra.mrb[0].mxu0 %v6310
        %v6591 = vpop.f32.mrb[0].mxu0
        %v6592 = vadd.f32 %v6387, %v6591
        %v6593 = vpop.f32.mrb[0].mxu0
        %6594 = vmatprep.mubr.f32.mxu0 %v6417
        %6595 = vmatmul.mubr.f32.gmra.mrb[0].mxu0 %v6312
        %v6596 = vpop.f32.mrb[0].mxu0
        %v6597 = vadd.f32 %v6387, %v6596
        %v6598 = vpop.f32.mrb[0].mxu0
        %6599 = vmatprep.mubr.f32.mxu0 %v6420
        %6600 = vmatmul.mubr.f32.gmra.mrb[0].mxu0 %v6314
        %v6601 = vpop.f32.mrb[0].mxu0
        %v6602 = vadd.f32 %v6387, %v6601
        %v6603 = vpop.f32.mrb[0].mxu0
        %6604 = vmatprep.mubr.f32.mxu0 %v6423
        %6605 = vmatmul.mubr.f32.gmra.mrb[0].mxu0 %v6316
        %v6606 = vpop.f32.mrb[0].mxu0
        %v6607 = vadd.f32 %v6387, %v6606
        %v6608 = vpop.f32.mrb[0].mxu0
        %6609 = vmatprep.mubr.f32.mxu0 %v6426
        %6610 = vmatmul.mubr.f32.gmra.mrb[0].mxu0 %v6318
        %v6611 = vpop.f32.mrb[0].mxu0
        %v6612 = vadd.f32 %v6387, %v6611
        %v6613 = vpop.f32.mrb[0].mxu0
        %6614 = vmatprep.mubr.f32.mxu0 %v6429
        %6615 = vmatmul.mubr.f32.gmra.mrb[0].mxu0 %v6320
        %v6616 = vpop.f32.mrb[0].mxu0
        %v6617 = vadd.f32 %v6387, %v6616
        %v6618 = vpop.f32.mrb[0].mxu0
        %6619 = vmatprep.mubr.f32.mxu0 %v6432
        %6620 = vmatmul.mubr.f32.gmra.mrb[0].mxu0 %v6322
        %v6621 = vpop.f32.mrb[0].mxu0
        %v6622 = vadd.f32 %v6387, %v6621
        %v6623 = vpop.f32.mrb[0].mxu0
        %6624 = vmatprep.mubr.f32.mxu0 %v6435
        %6625 = vmatmul.mubr.f32.gmra.mrb[0].mxu0 %v6324
        %v6626 = vpop.f32.mrb[0].mxu0
        %v6627 = vadd.f32 %v6387, %v6626
        %v6628 = vpop.f32.mrb[0].mxu0
        %6629 = vmatprep.mubr.f32.mxu0 %v6438
        %6630 = vmatmul.mubr.f32.gmra.mrb[0].mxu0 %v6326
        %v6631 = vpop.f32.mrb[0].mxu0
        %v6632 = vadd.f32 %v6387, %v6631
        %v6633 = vpop.f32.mrb[0].mxu0
        %6634 = vmatprep.mubr.f32.mxu0 %v6441
        %6635 = vmatmul.mubr.f32.gmra.mrb[0].mxu0 %v6328
        %v6636 = vpop.f32.mrb[0].mxu0
        %v6637 = vadd.f32 %v6387, %v6636
        %v6638 = vpop.f32.mrb[0].mxu0
        %6639 = vmatprep.mubr.f32.mxu0 %v6444
        %6640 = vmatmul.mubr.f32.gmra.mrb[0].mxu0 %v6330
        %v6641 = vpop.f32.mrb[0].mxu0
        %v6642 = vadd.f32 %v6387, %v6641
        %v6643 = vpop.f32.mrb[0].mxu0
        %6644 = vmatprep.mubr.f32.mxu0 %v6447
        %6645 = vmatmul.mubr.f32.gmra.mrb[0].mxu0 %v6332
        %v6646 = vpop.f32.mrb[0].mxu0
        %v6647 = vadd.f32 %v6387, %v6646
        %v6648 = vpop.f32.mrb[0].mxu0
        %6649 = vmatprep.mubr.f32.mxu0 %v6450
        %6650 = vmatmul.mubr.f32.gmra.mrb[0].mxu0 %v6334
        %v6651 = vpop.f32.mrb[0].mxu0
        %v6652 = vadd.f32 %v6387, %v6651
        %v6653 = vpop.f32.mrb[0].mxu0
        %6654 = vmatprep.mubr.f32.mxu0 %v6453
        %6655 = vmatmul.mubr.f32.gmra.mrb[0].mxu0 %v6336
        %v6656 = vpop.f32.mrb[0].mxu0
        %v6657 = vadd.f32 %v6387, %v6656
        %v6658 = vpop.f32.mrb[0].mxu0
        %6659 = vmatprep.mubr.f32.mxu0 %v6456
        %6660 = vmatmul.mubr.f32.gmra.mrb[0].mxu0 %v6338
        %v6661 = vpop.f32.mrb[0].mxu0
        %v6662 = vadd.f32 %v6387, %v6661
        %v6663 = vpop.f32.mrb[0].mxu0
        %6664 = vmatprep.mubr.f32.mxu0 %v6459
        %6665 = vmatmul.mubr.f32.gmra.mrb[0].mxu0 %v6340
        %v6666 = vpop.f32.mrb[0].mxu0
        %v6667 = vadd.f32 %v6387, %v6666
        %v6668 = vpop.f32.mrb[0].mxu0
        %6669 = vmatprep.mubr.f32.mxu0 %v6462
        %6670 = vmatmul.mubr.f32.gmra.mrb[0].mxu0 %v6342
        %v6671 = vpop.f32.mrb[0].mxu0
        %v6672 = vadd.f32 %v6387, %v6671
        %v6673 = vpop.f32.mrb[0].mxu0
        %6674 = vmatprep.mubr.f32.mxu0 %v6465
        %6675 = vmatmul.mubr.f32.gmra.mrb[0].mxu0 %v6344
        %v6676 = vpop.f32.mrb[0].mxu0
        %v6677 = vadd.f32 %v6387, %v6676
        %v6678 = vpop.f32.mrb[0].mxu0
        %6679 = vmatprep.mubr.f32.mxu0 %v6468
        %6680 = vmatmul.mubr.f32.gmra.mrb[0].mxu0 %v6346
        %v6681 = vpop.f32.mrb[0].mxu0
        %v6682 = vadd.f32 %v6387, %v6681
        %v6683 = vpop.f32.mrb[0].mxu0
        %6684 = vmatprep.mubr.f32.mxu0 %v6471
        %6685 = vmatmul.mubr.f32.gmra.mrb[0].mxu0 %v6348
        %v6686 = vpop.f32.mrb[0].mxu0
        %v6687 = vadd.f32 %v6387, %v6686
        %v6688 = vpop.f32.mrb[0].mxu0
        %6689 = vmatprep.mubr.f32.mxu0 %v6474
        %6690 = vmatmul.mubr.f32.gmra.mrb[0].mxu0 %v6350
        %v6691 = vpop.f32.mrb[0].mxu0
        %v6692 = vadd.f32 %v6387, %v6691
        %v6693 = vpop.f32.mrb[0].mxu0
        %6694 = vmatprep.mubr.f32.mxu0 %v6477
        %6695 = vmatmul.mubr.f32.gmra.mrb[0].mxu0 %v6352
        %v6696 = vpop.f32.mrb[0].mxu0
        %v6697 = vadd.f32 %v6387, %v6696
        %v6698 = vpop.f32.mrb[0].mxu0
        %6699 = vmatprep.mubr.f32.mxu0 %v6480
        %6700 = vmatmul.mubr.f32.gmra.mrb[0].mxu0 %v6354
        %v6701 = vpop.f32.mrb[0].mxu0
        %v6702 = vadd.f32 %v6387, %v6701
        %v6703 = vpop.f32.mrb[0].mxu0
        %6704 = vmatprep.mubr.f32.mxu0 %v6483
        %6705 = vmatmul.mubr.f32.gmra.mrb[0].mxu0 %v6356
        %v6706 = vpop.f32.mrb[0].mxu0
        %v6707 = vadd.f32 %v6387, %v6706
        %v6708 = vpop.f32.mrb[0].mxu0
        %6709 = vdwg.mxu0
        %6710 = vst.msk [vmem:[#allocation3 + $0x8] sm:$0xff] %vm500, %v6552
        %6711 = vst.msk [vmem:[#allocation3 + $0x10] sm:$0xff] %vm500, %v6557
        %6712 = vst.msk [vmem:[#allocation3 + $0x18] sm:$0xff] %vm500, %v6562
        %6713 = vst.msk [vmem:[#allocation3 + $0x20] sm:$0xff] %vm500, %v6567
        %6714 = vst.msk [vmem:[#allocation3 + $0x28] sm:$0xff] %vm500, %v6572
        %6715 = vst.msk [vmem:[#allocation3 + $0x30] sm:$0xff] %vm500, %v6577
        %6716 = vst.msk [vmem:[#allocation3 + $0x38] sm:$0xff] %vm500, %v6582
        %6717 = vst.msk [vmem:[#allocation3 + $0x40] sm:$0xff] %vm500, %v6587
        %6718 = vst.msk [vmem:[#allocation3 + $0x58] sm:$0xff] %vm500, %v6592
        %6719 = vst.msk [vmem:[#allocation3 + $0x60] sm:$0xff] %vm500, %v6597
        %6720 = vst.msk [vmem:[#allocation3 + $0x68] sm:$0xff] %vm500, %v6602
        %6721 = vst.msk [vmem:[#allocation3 + $0x70] sm:$0xff] %vm500, %v6607
        %6722 = vst.msk [vmem:[#allocation3 + $0x78] sm:$0xff] %vm500, %v6612
        %6723 = vst.msk [vmem:[#allocation3 + $0x80] sm:$0xff] %vm500, %v6617
        %6724 = vst.msk [vmem:[#allocation3 + $0x88] sm:$0xff] %vm500, %v6622
        %6725 = vst.msk [vmem:[#allocation3 + $0x90] sm:$0xff] %vm500, %v6627
        %6726 = vst.msk [vmem:[#allocation3 + $0xa8] sm:$0xff] %vm500, %v6632
        %6727 = vst.msk [vmem:[#allocation3 + $0xb0] sm:$0xff] %vm500, %v6637
        %6728 = vst.msk [vmem:[#allocation3 + $0xb8] sm:$0xff] %vm500, %v6642
        %6729 = vst.msk [vmem:[#allocation3 + $0xc0] sm:$0xff] %vm500, %v6647
        %6730 = vst.msk [vmem:[#allocation3 + $0xc8] sm:$0xff] %vm500, %v6652
        %6731 = vst.msk [vmem:[#allocation3 + $0xd0] sm:$0xff] %vm500, %v6657
        %6732 = vst.msk [vmem:[#allocation3 + $0xd8] sm:$0xff] %vm500, %v6662
        %6733 = vst.msk [vmem:[#allocation3 + $0xe0] sm:$0xff] %vm500, %v6667
        %6734 = vst.msk [vmem:[#allocation3 + $0xf8] sm:$0xff] %vm500, %v6672
        %6735 = vst.msk [vmem:[#allocation3 + $0x100] sm:$0xff] %vm500, %v6677
        %6736 = vst.msk [vmem:[#allocation3 + $0x108] sm:$0xff] %vm500, %v6682
        %6737 = vst.msk [vmem:[#allocation3 + $0x110] sm:$0xff] %vm500, %v6687
        %6738 = vst.msk [vmem:[#allocation3 + $0x118] sm:$0xff] %vm500, %v6692
        %6739 = vst.msk [vmem:[#allocation3 + $0x120] sm:$0xff] %vm500, %v6697
        %6740 = vst.msk [vmem:[#allocation3 + $0x128] sm:$0xff] %vm500, %v6702
        %6741 = vst.msk [vmem:[#allocation3 + $0x130] sm:$0xff] %vm500, %v6707
        %s6742 = scalar_lea.vmem [#allocation3], 4
        %v6743 = vld [vmem:[%s6742] ss:$8 sm:$0xf]
        %v6744 = vld [vmem:[%s6742] ss:$8 sm:$0xf0]
        %v6745 = vor.u32 %v6743, %v6744
        %s6746 = scalar_lea.vmem [#allocation3], 84
        %v6747 = vld [vmem:[%s6746] ss:$8 sm:$0xf]
        %v6748 = vld [vmem:[%s6746] ss:$8 sm:$0xf0]
        %v6749 = vor.u32 %v6747, %v6748
        %s6750 = scalar_lea.vmem [#allocation3], 164
        %v6751 = vld [vmem:[%s6750] ss:$8 sm:$0xf]
        %v6752 = vld [vmem:[%s6750] ss:$8 sm:$0xf0]
        %v6753 = vor.u32 %v6751, %v6752
        %s6754 = scalar_lea.vmem [#allocation3], 244
        %v6755 = vld [vmem:[%s6754] ss:$8 sm:$0xf]
        %v6756 = vld [vmem:[%s6754] ss:$8 sm:$0xf0]
        %v6757 = vor.u32 %v6755, %v6756
        %s6758 = scalar_lea.vmem [#allocation3], 5
        %v6759 = vld [vmem:[%s6758] ss:$8 sm:$0xf]
        %v6760 = vld [vmem:[%s6758] ss:$8 sm:$0xf0]
        %v6761 = vor.u32 %v6759, %v6760
        %s6762 = scalar_lea.vmem [#allocation3], 85
        %v6763 = vld [vmem:[%s6762] ss:$8 sm:$0xf]
        %v6764 = vld [vmem:[%s6762] ss:$8 sm:$0xf0]
        %v6765 = vor.u32 %v6763, %v6764
        %s6766 = scalar_lea.vmem [#allocation3], 165
        %v6767 = vld [vmem:[%s6766] ss:$8 sm:$0xf]
        %v6768 = vld [vmem:[%s6766] ss:$8 sm:$0xf0]
        %v6769 = vor.u32 %v6767, %v6768
        %s6770 = scalar_lea.vmem [#allocation3], 245
        %v6771 = vld [vmem:[%s6770] ss:$8 sm:$0xf]
        %v6772 = vld [vmem:[%s6770] ss:$8 sm:$0xf0]
        %v6773 = vor.u32 %v6771, %v6772
        %s6774 = scalar_lea.vmem [#allocation3], 6
        %v6775 = vld [vmem:[%s6774] ss:$8 sm:$0xf]
        %v6776 = vld [vmem:[%s6774] ss:$8 sm:$0xf0]
        %v6777 = vor.u32 %v6775, %v6776
        %s6778 = scalar_lea.vmem [#allocation3], 86
        %v6779 = vld [vmem:[%s6778] ss:$8 sm:$0xf]
        %v6780 = vld [vmem:[%s6778] ss:$8 sm:$0xf0]
        %v6781 = vor.u32 %v6779, %v6780
        %s6782 = scalar_lea.vmem [#allocation3], 166
        %v6783 = vld [vmem:[%s6782] ss:$8 sm:$0xf]
        %v6784 = vld [vmem:[%s6782] ss:$8 sm:$0xf0]
        %v6785 = vor.u32 %v6783, %v6784
        %s6786 = scalar_lea.vmem [#allocation3], 246
        %v6787 = vld [vmem:[%s6786] ss:$8 sm:$0xf]
        %v6788 = vld [vmem:[%s6786] ss:$8 sm:$0xf0]
        %v6789 = vor.u32 %v6787, %v6788
        %s6790 = scalar_lea.vmem [#allocation3], 7
        %v6791 = vld [vmem:[%s6790] ss:$8 sm:$0xf]
        %v6792 = vld [vmem:[%s6790] ss:$8 sm:$0xf0]
        %v6793 = vor.u32 %v6791, %v6792
        %s6794 = scalar_lea.vmem [#allocation3], 87
        %v6795 = vld [vmem:[%s6794] ss:$8 sm:$0xf]
        %v6796 = vld [vmem:[%s6794] ss:$8 sm:$0xf0]
        %v6797 = vor.u32 %v6795, %v6796
        %s6798 = scalar_lea.vmem [#allocation3], 167
        %v6799 = vld [vmem:[%s6798] ss:$8 sm:$0xf]
        %v6800 = vld [vmem:[%s6798] ss:$8 sm:$0xf0]
        %v6801 = vor.u32 %v6799, %v6800
        %s6802 = scalar_lea.vmem [#allocation3], 247
        %v6803 = vld [vmem:[%s6802] ss:$8 sm:$0xf]
        %v6804 = vld [vmem:[%s6802] ss:$8 sm:$0xf0]
        %v6805 = vor.u32 %v6803, %v6804
        %s6806 = scalar_lea.vmem [#allocation3], 8
        %v6807 = vld [vmem:[%s6806] ss:$8 sm:$0xf]
        %v6808 = vld [vmem:[%s6806] ss:$8 sm:$0xf0]
        %v6809 = vor.u32 %v6807, %v6808
        %s6810 = scalar_lea.vmem [#allocation3], 88
        %v6811 = vld [vmem:[%s6810] ss:$8 sm:$0xf]
        %v6812 = vld [vmem:[%s6810] ss:$8 sm:$0xf0]
        %v6813 = vor.u32 %v6811, %v6812
        %s6814 = scalar_lea.vmem [#allocation3], 168
        %v6815 = vld [vmem:[%s6814] ss:$8 sm:$0xf]
        %v6816 = vld [vmem:[%s6814] ss:$8 sm:$0xf0]
        %v6817 = vor.u32 %v6815, %v6816
        %s6818 = scalar_lea.vmem [#allocation3], 248
        %v6819 = vld [vmem:[%s6818] ss:$8 sm:$0xf]
        %v6820 = vld [vmem:[%s6818] ss:$8 sm:$0xf0]
        %v6821 = vor.u32 %v6819, %v6820
        %s6822 = scalar_lea.vmem [#allocation3], 9
        %v6823 = vld [vmem:[%s6822] ss:$8 sm:$0xf]
        %v6824 = vld [vmem:[%s6822] ss:$8 sm:$0xf0]
        %v6825 = vor.u32 %v6823, %v6824
        %s6826 = scalar_lea.vmem [#allocation3], 89
        %v6827 = vld [vmem:[%s6826] ss:$8 sm:$0xf]
        %v6828 = vld [vmem:[%s6826] ss:$8 sm:$0xf0]
        %v6829 = vor.u32 %v6827, %v6828
        %s6830 = scalar_lea.vmem [#allocation3], 169
        %v6831 = vld [vmem:[%s6830] ss:$8 sm:$0xf]
        %v6832 = vld [vmem:[%s6830] ss:$8 sm:$0xf0]
        %v6833 = vor.u32 %v6831, %v6832
        %s6834 = scalar_lea.vmem [#allocation3], 249
        %v6835 = vld [vmem:[%s6834] ss:$8 sm:$0xf]
        %v6836 = vld [vmem:[%s6834] ss:$8 sm:$0xf0]
        %v6837 = vor.u32 %v6835, %v6836
        %s6838 = scalar_lea.vmem [#allocation3], 10
        %v6839 = vld [vmem:[%s6838] ss:$8 sm:$0xf]
        %v6840 = vld [vmem:[%s6838] ss:$8 sm:$0xf0]
        %v6841 = vor.u32 %v6839, %v6840
        %s6842 = scalar_lea.vmem [#allocation3], 90
        %v6843 = vld [vmem:[%s6842] ss:$8 sm:$0xf]
        %v6844 = vld [vmem:[%s6842] ss:$8 sm:$0xf0]
        %v6845 = vor.u32 %v6843, %v6844
        %s6846 = scalar_lea.vmem [#allocation3], 170
        %v6847 = vld [vmem:[%s6846] ss:$8 sm:$0xf]
        %v6848 = vld [vmem:[%s6846] ss:$8 sm:$0xf0]
        %v6849 = vor.u32 %v6847, %v6848
        %s6850 = scalar_lea.vmem [#allocation3], 250
        %v6851 = vld [vmem:[%s6850] ss:$8 sm:$0xf]
        %v6852 = vld [vmem:[%s6850] ss:$8 sm:$0xf0]
        %v6853 = vor.u32 %v6851, %v6852
        %s6854 = scalar_lea.vmem [#allocation3], 11
        %v6855 = vld [vmem:[%s6854] ss:$8 sm:$0xf]
        %v6856 = vld [vmem:[%s6854] ss:$8 sm:$0xf0]
        %v6857 = vor.u32 %v6855, %v6856
        %s6858 = scalar_lea.vmem [#allocation3], 91
        %v6859 = vld [vmem:[%s6858] ss:$8 sm:$0xf]
        %v6860 = vld [vmem:[%s6858] ss:$8 sm:$0xf0]
        %v6861 = vor.u32 %v6859, %v6860
        %s6862 = scalar_lea.vmem [#allocation3], 171
        %v6863 = vld [vmem:[%s6862] ss:$8 sm:$0xf]
        %v6864 = vld [vmem:[%s6862] ss:$8 sm:$0xf0]
        %v6865 = vor.u32 %v6863, %v6864
        %s6866 = scalar_lea.vmem [#allocation3], 251
        %v6867 = vld [vmem:[%s6866] ss:$8 sm:$0xf]
        %v6868 = vld [vmem:[%s6866] ss:$8 sm:$0xf0]
        %v6869 = vor.u32 %v6867, %v6868
        %s6870 = scalar_lea.vmem [#allocation3], 12
        %v6871 = vld [vmem:[%s6870] ss:$8 sm:$0xf]
        %v6872 = vld [vmem:[%s6870] ss:$8 sm:$0xf0]
        %v6873 = vor.u32 %v6871, %v6872
        %s6874 = scalar_lea.vmem [#allocation3], 92
        %v6875 = vld [vmem:[%s6874] ss:$8 sm:$0xf]
        %v6876 = vld [vmem:[%s6874] ss:$8 sm:$0xf0]
        %v6877 = vor.u32 %v6875, %v6876
        %s6878 = scalar_lea.vmem [#allocation3], 172
        %v6879 = vld [vmem:[%s6878] ss:$8 sm:$0xf]
        %v6880 = vld [vmem:[%s6878] ss:$8 sm:$0xf0]
        %v6881 = vor.u32 %v6879, %v6880
        %s6882 = scalar_lea.vmem [#allocation3], 252
        %v6883 = vld [vmem:[%s6882] ss:$8 sm:$0xf]
        %v6884 = vld [vmem:[%s6882] ss:$8 sm:$0xf0]
        %v6885 = vor.u32 %v6883, %v6884
        %s6886 = scalar_lea.vmem [#allocation3], 13
        %v6887 = vld [vmem:[%s6886] ss:$8 sm:$0xf]
        %v6888 = vld [vmem:[%s6886] ss:$8 sm:$0xf0]
        %v6889 = vor.u32 %v6887, %v6888
        %s6890 = scalar_lea.vmem [#allocation3], 93
        %v6891 = vld [vmem:[%s6890] ss:$8 sm:$0xf]
        %v6892 = vld [vmem:[%s6890] ss:$8 sm:$0xf0]
        %v6893 = vor.u32 %v6891, %v6892
        %s6894 = scalar_lea.vmem [#allocation3], 173
        %v6895 = vld [vmem:[%s6894] ss:$8 sm:$0xf]
        %v6896 = vld [vmem:[%s6894] ss:$8 sm:$0xf0]
        %v6897 = vor.u32 %v6895, %v6896
        %s6898 = scalar_lea.vmem [#allocation3], 253
        %v6899 = vld [vmem:[%s6898] ss:$8 sm:$0xf]
        %v6900 = vld [vmem:[%s6898] ss:$8 sm:$0xf0]
        %v6901 = vor.u32 %v6899, %v6900
        %s6902 = scalar_lea.vmem [#allocation3], 14
        %v6903 = vld [vmem:[%s6902] ss:$8 sm:$0xf]
        %v6904 = vld [vmem:[%s6902] ss:$8 sm:$0xf0]
        %v6905 = vor.u32 %v6903, %v6904
        %s6906 = scalar_lea.vmem [#allocation3], 94
        %v6907 = vld [vmem:[%s6906] ss:$8 sm:$0xf]
        %v6908 = vld [vmem:[%s6906] ss:$8 sm:$0xf0]
        %v6909 = vor.u32 %v6907, %v6908
        %s6910 = scalar_lea.vmem [#allocation3], 174
        %v6911 = vld [vmem:[%s6910] ss:$8 sm:$0xf]
        %v6912 = vld [vmem:[%s6910] ss:$8 sm:$0xf0]
        %v6913 = vor.u32 %v6911, %v6912
        %s6914 = scalar_lea.vmem [#allocation3], 254
        %v6915 = vld [vmem:[%s6914] ss:$8 sm:$0xf]
        %v6916 = vld [vmem:[%s6914] ss:$8 sm:$0xf0]
        %v6917 = vor.u32 %v6915, %v6916
        %s6918 = scalar_lea.vmem [#allocation3], 15
        %v6919 = vld [vmem:[%s6918] ss:$8 sm:$0xf]
        %v6920 = vld [vmem:[%s6918] ss:$8 sm:$0xf0]
        %v6921 = vor.u32 %v6919, %v6920
        %s6922 = scalar_lea.vmem [#allocation3], 95
        %v6923 = vld [vmem:[%s6922] ss:$8 sm:$0xf]
        %v6924 = vld [vmem:[%s6922] ss:$8 sm:$0xf0]
        %v6925 = vor.u32 %v6923, %v6924
        %s6926 = scalar_lea.vmem [#allocation3], 175
        %v6927 = vld [vmem:[%s6926] ss:$8 sm:$0xf]
        %v6928 = vld [vmem:[%s6926] ss:$8 sm:$0xf0]
        %v6929 = vor.u32 %v6927, %v6928
        %s6930 = scalar_lea.vmem [#allocation3], 255
        %v6931 = vld [vmem:[%s6930] ss:$8 sm:$0xf]
        %v6932 = vld [vmem:[%s6930] ss:$8 sm:$0xf0]
        %v6933 = vor.u32 %v6931, %v6932
        %s6934 = scalar_lea.vmem [#allocation3], 16
        %v6935 = vld [vmem:[%s6934] ss:$8 sm:$0xf]
        %v6936 = vld [vmem:[%s6934] ss:$8 sm:$0xf0]
        %v6937 = vor.u32 %v6935, %v6936
        %s6938 = scalar_lea.vmem [#allocation3], 96
        %v6939 = vld [vmem:[%s6938] ss:$8 sm:$0xf]
        %v6940 = vld [vmem:[%s6938] ss:$8 sm:$0xf0]
        %v6941 = vor.u32 %v6939, %v6940
        %s6942 = scalar_lea.vmem [#allocation3], 176
        %v6943 = vld [vmem:[%s6942] ss:$8 sm:$0xf]
        %v6944 = vld [vmem:[%s6942] ss:$8 sm:$0xf0]
        %v6945 = vor.u32 %v6943, %v6944
        %s6946 = scalar_lea.vmem [#allocation3], 256
        %v6947 = vld [vmem:[%s6946] ss:$8 sm:$0xf]
        %v6948 = vld [vmem:[%s6946] ss:$8 sm:$0xf0]
        %v6949 = vor.u32 %v6947, %v6948
        %s6950 = scalar_lea.vmem [#allocation3], 17
        %v6951 = vld [vmem:[%s6950] ss:$8 sm:$0xf]
        %v6952 = vld [vmem:[%s6950] ss:$8 sm:$0xf0]
        %v6953 = vor.u32 %v6951, %v6952
        %s6954 = scalar_lea.vmem [#allocation3], 97
        %v6955 = vld [vmem:[%s6954] ss:$8 sm:$0xf]
        %v6956 = vld [vmem:[%s6954] ss:$8 sm:$0xf0]
        %v6957 = vor.u32 %v6955, %v6956
        %s6958 = scalar_lea.vmem [#allocation3], 177
        %v6959 = vld [vmem:[%s6958] ss:$8 sm:$0xf]
        %v6960 = vld [vmem:[%s6958] ss:$8 sm:$0xf0]
        %v6961 = vor.u32 %v6959, %v6960
        %s6962 = scalar_lea.vmem [#allocation3], 257
        %v6963 = vld [vmem:[%s6962] ss:$8 sm:$0xf]
        %v6964 = vld [vmem:[%s6962] ss:$8 sm:$0xf0]
        %v6965 = vor.u32 %v6963, %v6964
        %s6966 = scalar_lea.vmem [#allocation3], 18
        %v6967 = vld [vmem:[%s6966] ss:$8 sm:$0xf]
        %v6968 = vld [vmem:[%s6966] ss:$8 sm:$0xf0]
        %v6969 = vor.u32 %v6967, %v6968
        %s6970 = scalar_lea.vmem [#allocation3], 98
        %v6971 = vld [vmem:[%s6970] ss:$8 sm:$0xf]
        %v6972 = vld [vmem:[%s6970] ss:$8 sm:$0xf0]
        %v6973 = vor.u32 %v6971, %v6972
        %s6974 = scalar_lea.vmem [#allocation3], 178
        %v6975 = vld [vmem:[%s6974] ss:$8 sm:$0xf]
        %v6976 = vld [vmem:[%s6974] ss:$8 sm:$0xf0]
        %v6977 = vor.u32 %v6975, %v6976
        %s6978 = scalar_lea.vmem [#allocation3], 258
        %v6979 = vld [vmem:[%s6978] ss:$8 sm:$0xf]
        %v6980 = vld [vmem:[%s6978] ss:$8 sm:$0xf0]
        %v6981 = vor.u32 %v6979, %v6980
        %s6982 = scalar_lea.vmem [#allocation3], 19
        %v6983 = vld [vmem:[%s6982] ss:$8 sm:$0xf]
        %v6984 = vld [vmem:[%s6982] ss:$8 sm:$0xf0]
        %v6985 = vor.u32 %v6983, %v6984
        %s6986 = scalar_lea.vmem [#allocation3], 99
        %v6987 = vld [vmem:[%s6986] ss:$8 sm:$0xf]
        %v6988 = vld [vmem:[%s6986] ss:$8 sm:$0xf0]
        %v6989 = vor.u32 %v6987, %v6988
        %s6990 = scalar_lea.vmem [#allocation3], 179
        %v6991 = vld [vmem:[%s6990] ss:$8 sm:$0xf]
        %v6992 = vld [vmem:[%s6990] ss:$8 sm:$0xf0]
        %v6993 = vor.u32 %v6991, %v6992
        %s6994 = scalar_lea.vmem [#allocation3], 259
        %v6995 = vld [vmem:[%s6994] ss:$8 sm:$0xf]
        %v6996 = vld [vmem:[%s6994] ss:$8 sm:$0xf0]
        %v6997 = vor.u32 %v6995, %v6996
        %7002 = vrot.lane.b32.xlu0 %v6761, 64
        %v7003 = vpop.permute.xlu0 %7002
        %7004 = vrot.lane.b32.xlu0 %v6765, 64
        %v7005 = vpop.permute.xlu0 %7004
        %7006 = vrot.lane.b32.xlu0 %v6769, 64
        %v7007 = vpop.permute.xlu0 %7006
        %7008 = vrot.lane.b32.xlu0 %v6773, 64
        %v7009 = vpop.permute.xlu0 %7008
        %7018 = vrot.lane.b32.xlu0 %v6793, 64
        %v7019 = vpop.permute.xlu0 %7018
        %7020 = vrot.lane.b32.xlu0 %v6797, 64
        %v7021 = vpop.permute.xlu0 %7020
        %7022 = vrot.lane.b32.xlu0 %v6801, 64
        %v7023 = vpop.permute.xlu0 %7022
        %7024 = vrot.lane.b32.xlu0 %v6805, 64
        %v7025 = vpop.permute.xlu0 %7024
        %7034 = vrot.lane.b32.xlu0 %v6825, 64
        %v7035 = vpop.permute.xlu0 %7034
        %7036 = vrot.lane.b32.xlu0 %v6829, 64
        %v7037 = vpop.permute.xlu0 %7036
        %7038 = vrot.lane.b32.xlu0 %v6833, 64
        %v7039 = vpop.permute.xlu0 %7038
        %7040 = vrot.lane.b32.xlu0 %v6837, 64
        %v7041 = vpop.permute.xlu0 %7040
        %7050 = vrot.lane.b32.xlu0 %v6857, 64
        %v7051 = vpop.permute.xlu0 %7050
        %7052 = vrot.lane.b32.xlu0 %v6861, 64
        %v7053 = vpop.permute.xlu0 %7052
        %7054 = vrot.lane.b32.xlu0 %v6865, 64
        %v7055 = vpop.permute.xlu0 %7054
        %7056 = vrot.lane.b32.xlu0 %v6869, 64
        %v7057 = vpop.permute.xlu0 %7056
        %7066 = vrot.lane.b32.xlu0 %v6889, 64
        %v7067 = vpop.permute.xlu0 %7066
        %7068 = vrot.lane.b32.xlu0 %v6893, 64
        %v7069 = vpop.permute.xlu0 %7068
        %7070 = vrot.lane.b32.xlu0 %v6897, 64
        %v7071 = vpop.permute.xlu0 %7070
        %7072 = vrot.lane.b32.xlu0 %v6901, 64
        %v7073 = vpop.permute.xlu0 %7072
        %7082 = vrot.lane.b32.xlu0 %v6921, 64
        %v7083 = vpop.permute.xlu0 %7082
        %7084 = vrot.lane.b32.xlu0 %v6925, 64
        %v7085 = vpop.permute.xlu0 %7084
        %7086 = vrot.lane.b32.xlu0 %v6929, 64
        %v7087 = vpop.permute.xlu0 %7086
        %7088 = vrot.lane.b32.xlu0 %v6933, 64
        %v7089 = vpop.permute.xlu0 %7088
        %7098 = vrot.lane.b32.xlu0 %v6953, 64
        %v7099 = vpop.permute.xlu0 %7098
        %7100 = vrot.lane.b32.xlu0 %v6957, 64
        %v7101 = vpop.permute.xlu0 %7100
        %7102 = vrot.lane.b32.xlu0 %v6961, 64
        %v7103 = vpop.permute.xlu0 %7102
        %7104 = vrot.lane.b32.xlu0 %v6965, 64
        %v7105 = vpop.permute.xlu0 %7104
        %7114 = vrot.lane.b32.xlu0 %v6985, 64
        %v7115 = vpop.permute.xlu0 %7114
        %7116 = vrot.lane.b32.xlu0 %v6989, 64
        %v7117 = vpop.permute.xlu0 %7116
        %7118 = vrot.lane.b32.xlu0 %v6993, 64
        %v7119 = vpop.permute.xlu0 %7118
        %7120 = vrot.lane.b32.xlu0 %v6997, 64
        %v7121 = vpop.permute.xlu0 %7120
        %v7126 = vsel %vm500, %v6745, %v7003
        %v7127 = vsel %vm500, %v6749, %v7005
        %v7128 = vsel %vm500, %v6753, %v7007
        %v7129 = vsel %vm500, %v6757, %v7009
        %v7130 = vsel %vm500, %v6777, %v7019
        %v7131 = vsel %vm500, %v6781, %v7021
        %v7132 = vsel %vm500, %v6785, %v7023
        %v7133 = vsel %vm500, %v6789, %v7025
        %v7134 = vsel %vm500, %v6809, %v7035
        %v7135 = vsel %vm500, %v6813, %v7037
        %v7136 = vsel %vm500, %v6817, %v7039
        %v7137 = vsel %vm500, %v6821, %v7041
        %v7138 = vsel %vm500, %v6841, %v7051
        %v7139 = vsel %vm500, %v6845, %v7053
        %v7140 = vsel %vm500, %v6849, %v7055
        %v7141 = vsel %vm500, %v6853, %v7057
        %v7142 = vsel %vm500, %v6873, %v7067
        %v7143 = vsel %vm500, %v6877, %v7069
        %v7144 = vsel %vm500, %v6881, %v7071
        %v7145 = vsel %vm500, %v6885, %v7073
        %v7146 = vsel %vm500, %v6905, %v7083
        %v7147 = vsel %vm500, %v6909, %v7085
        %v7148 = vsel %vm500, %v6913, %v7087
        %v7149 = vsel %vm500, %v6917, %v7089
        %v7150 = vsel %vm500, %v6937, %v7099
        %v7151 = vsel %vm500, %v6941, %v7101
        %v7152 = vsel %vm500, %v6945, %v7103
        %v7153 = vsel %vm500, %v6949, %v7105
        %v7154 = vsel %vm500, %v6969, %v7115
        %v7155 = vsel %vm500, %v6973, %v7117
        %v7156 = vsel %vm500, %v6977, %v7119
        %v7157 = vsel %vm500, %v6981, %v7121
        %v7158 = vld [vmem:[%s11] sm:$0xff]
        %v7159 = vld [vmem:[%s11 + $0x8] sm:$0xff]
        %v7160 = vld [vmem:[%s11 + $0x10] sm:$0xff]
        %v7161 = vld [vmem:[%s11 + $0x18] sm:$0xff]
        %v7162 = vld [vmem:[%s11 + $0x20] sm:$0xff]
        %v7163 = vld [vmem:[%s11 + $0x28] sm:$0xff]
        %v7164 = vld [vmem:[%s11 + $0x30] sm:$0xff]
        %v7165 = vld [vmem:[%s11 + $0x38] sm:$0xff]
        %v7166 = vld [vmem:[%s11 + $0x40] sm:$0xff]
        %v7167 = vld [vmem:[%s11 + $0x48] sm:$0xff]
        %v7168 = vld [vmem:[%s11 + $0x50] sm:$0xff]
        %v7169 = vld [vmem:[%s11 + $0x58] sm:$0xff]
        %v7170 = vld [vmem:[%s11 + $0x60] sm:$0xff]
        %v7171 = vld [vmem:[%s11 + $0x68] sm:$0xff]
        %v7172 = vld [vmem:[%s11 + $0x70] sm:$0xff]
        %v7173 = vld [vmem:[%s11 + $0x78] sm:$0xff]
        %v7174 = vld [vmem:[%s11 + $0x80] sm:$0xff]
        %v7175 = vld [vmem:[%s11 + $0x88] sm:$0xff]
        %v7176 = vld [vmem:[%s11 + $0x90] sm:$0xff]
        %v7177 = vld [vmem:[%s11 + $0x98] sm:$0xff]
        %v7178 = vld [vmem:[%s11 + $0xa0] sm:$0xff]
        %v7179 = vld [vmem:[%s11 + $0xa8] sm:$0xff]
        %v7180 = vld [vmem:[%s11 + $0xb0] sm:$0xff]
        %v7181 = vld [vmem:[%s11 + $0xb8] sm:$0xff]
        %v7182 = vld [vmem:[%s11 + $0xc0] sm:$0xff]
        %v7183 = vld [vmem:[%s11 + $0xc8] sm:$0xff]
        %v7184 = vld [vmem:[%s11 + $0xd0] sm:$0xff]
        %v7185 = vld [vmem:[%s11 + $0xd8] sm:$0xff]
        %v7186 = vld [vmem:[%s11 + $0xe0] sm:$0xff]
        %v7187 = vld [vmem:[%s11 + $0xe8] sm:$0xff]
        %v7188 = vld [vmem:[%s11 + $0xf0] sm:$0xff]
        %v7189 = vld [vmem:[%s11 + $0xf8] sm:$0xff]
        %v7190 = vld [vmem:[%s11 + $0x100] sm:$0xff]
        %v7191 = vld [vmem:[%s11 + $0x108] sm:$0xff]
        %v7192 = vld [vmem:[%s11 + $0x110] sm:$0xff]
        %v7193 = vld [vmem:[%s11 + $0x118] sm:$0xff]
        %v7194 = vld [vmem:[%s11 + $0x120] sm:$0xff]
        %v7195 = vld [vmem:[%s11 + $0x128] sm:$0xff]
        %v7196 = vld [vmem:[%s11 + $0x130] sm:$0xff]
        %v7197 = vld [vmem:[%s11 + $0x138] sm:$0xff]
        %v7198 = vld [vmem:[%s11 + $0x140] sm:$0xff]
        %v7199 = vld [vmem:[%s11 + $0x148] sm:$0xff]
        %v7200 = vld [vmem:[%s11 + $0x150] sm:$0xff]
        %v7201 = vld [vmem:[%s11 + $0x158] sm:$0xff]
        %v7202 = vld [vmem:[%s11 + $0x160] sm:$0xff]
        %v7203 = vld [vmem:[%s11 + $0x168] sm:$0xff]
        %v7204 = vld [vmem:[%s11 + $0x170] sm:$0xff]
        %v7205 = vld [vmem:[%s11 + $0x178] sm:$0xff]
        %v7206 = vld [vmem:[%s11 + $0x180] sm:$0xff]
        %v7207 = vld [vmem:[%s11 + $0x188] sm:$0xff]
        %v7208 = vld [vmem:[%s11 + $0x190] sm:$0xff]
        %v7209 = vld [vmem:[%s11 + $0x198] sm:$0xff]
        %v7210 = vld [vmem:[%s11 + $0x1a0] sm:$0xff]
        %v7211 = vld [vmem:[%s11 + $0x1a8] sm:$0xff]
        %v7212 = vld [vmem:[%s11 + $0x1b0] sm:$0xff]
        %v7213 = vld [vmem:[%s11 + $0x1b8] sm:$0xff]
        %v7214 = vld [vmem:[%s11 + $0x1c0] sm:$0xff]
        %v7215 = vld [vmem:[%s11 + $0x1c8] sm:$0xff]
        %v7216 = vld [vmem:[%s11 + $0x1d0] sm:$0xff]
        %v7217 = vld [vmem:[%s11 + $0x1d8] sm:$0xff]
        %v7218 = vld [vmem:[%s11 + $0x1e0] sm:$0xff]
        %v7219 = vld [vmem:[%s11 + $0x1e8] sm:$0xff]
        %v7220 = vld [vmem:[%s11 + $0x1f0] sm:$0xff]
        %v7221 = vld [vmem:[%s11 + $0x1f8] sm:$0xff]
        %v7222 = vld [vmem:[%s11 + $0x200] sm:$0xff]
        %v7223 = vld [vmem:[%s11 + $0x208] sm:$0xff]
        %v7224 = vld [vmem:[%s11 + $0x210] sm:$0xff]
        %v7225 = vld [vmem:[%s11 + $0x218] sm:$0xff]
        %v7226 = vld [vmem:[%s11 + $0x220] sm:$0xff]
        %v7227 = vld [vmem:[%s11 + $0x228] sm:$0xff]
        %v7228 = vld [vmem:[%s11 + $0x230] sm:$0xff]
        %v7229 = vld [vmem:[%s11 + $0x238] sm:$0xff]
        %v7230 = vld [vmem:[%s11 + $0x240] sm:$0xff]
        %v7231 = vld [vmem:[%s11 + $0x248] sm:$0xff]
        %v7232 = vld [vmem:[%s11 + $0x250] sm:$0xff]
        %v7233 = vld [vmem:[%s11 + $0x258] sm:$0xff]
        %v7234 = vld [vmem:[%s11 + $0x260] sm:$0xff]
        %v7235 = vld [vmem:[%s11 + $0x268] sm:$0xff]
        %v7236 = vld [vmem:[%s11 + $0x270] sm:$0xff]
        %v7237 = vld [vmem:[%s11 + $0x278] sm:$0xff]
        %v7238 = vld [vmem:[%s11 + $0x280] sm:$0xff]
        %v7239 = vld [vmem:[%s11 + $0x288] sm:$0xff]
        %v7240 = vld [vmem:[%s11 + $0x290] sm:$0xff]
        %v7241 = vld [vmem:[%s11 + $0x298] sm:$0xff]
        %v7242 = vld [vmem:[%s11 + $0x2a0] sm:$0xff]
        %v7243 = vld [vmem:[%s11 + $0x2a8] sm:$0xff]
        %v7244 = vld [vmem:[%s11 + $0x2b0] sm:$0xff]
        %v7245 = vld [vmem:[%s11 + $0x2b8] sm:$0xff]
        %v7246 = vld [vmem:[%s11 + $0x2c0] sm:$0xff]
        %v7247 = vld [vmem:[%s11 + $0x2c8] sm:$0xff]
        %v7248 = vld [vmem:[%s11 + $0x2d0] sm:$0xff]
        %v7249 = vld [vmem:[%s11 + $0x2d8] sm:$0xff]
        %v7250 = vld [vmem:[%s11 + $0x2e0] sm:$0xff]
        %v7251 = vld [vmem:[%s11 + $0x2e8] sm:$0xff]
        %v7252 = vld [vmem:[%s11 + $0x2f0] sm:$0xff]
        %v7253 = vld [vmem:[%s11 + $0x2f8] sm:$0xff]
        %v7254 = vld [vmem:[%s11 + $0x300] sm:$0xff]
        %v7255 = vld [vmem:[%s11 + $0x308] sm:$0xff]
        %v7256 = vld [vmem:[%s11 + $0x310] sm:$0xff]
        %v7257 = vld [vmem:[%s11 + $0x318] sm:$0xff]
        %v7258 = vld [vmem:[%s11 + $0x320] sm:$0xff]
        %v7259 = vld [vmem:[%s11 + $0x328] sm:$0xff]
        %v7260 = vld [vmem:[%s11 + $0x330] sm:$0xff]
        %v7261 = vld [vmem:[%s11 + $0x338] sm:$0xff]
        %v7262 = vld [vmem:[%s11 + $0x340] sm:$0xff]
        %v7263 = vld [vmem:[%s11 + $0x348] sm:$0xff]
        %v7264 = vld [vmem:[%s11 + $0x350] sm:$0xff]
        %v7265 = vld [vmem:[%s11 + $0x358] sm:$0xff]
        %v7266 = vld [vmem:[%s11 + $0x360] sm:$0xff]
        %v7267 = vld [vmem:[%s11 + $0x368] sm:$0xff]
        %v7268 = vld [vmem:[%s11 + $0x370] sm:$0xff]
        %v7269 = vld [vmem:[%s11 + $0x378] sm:$0xff]
        %v7270 = vld [vmem:[%s11 + $0x380] sm:$0xff]
        %v7271 = vld [vmem:[%s11 + $0x388] sm:$0xff]
        %v7272 = vld [vmem:[%s11 + $0x390] sm:$0xff]
        %v7273 = vld [vmem:[%s11 + $0x398] sm:$0xff]
        %v7274 = vld [vmem:[%s11 + $0x3a0] sm:$0xff]
        %v7275 = vld [vmem:[%s11 + $0x3a8] sm:$0xff]
        %v7276 = vld [vmem:[%s11 + $0x3b0] sm:$0xff]
        %v7277 = vld [vmem:[%s11 + $0x3b8] sm:$0xff]
        %v7278 = vld [vmem:[%s11 + $0x3c0] sm:$0xff]
        %v7279 = vld [vmem:[%s11 + $0x3c8] sm:$0xff]
        %v7280 = vld [vmem:[%s11 + $0x3d0] sm:$0xff]
        %v7281 = vld [vmem:[%s11 + $0x3d8] sm:$0xff]
        %v7282 = vld [vmem:[%s11 + $0x3e0] sm:$0xff]
        %v7283 = vld [vmem:[%s11 + $0x3e8] sm:$0xff]
        %v7284 = vld [vmem:[%s11 + $0x3f0] sm:$0xff]
        %v7285 = vld [vmem:[%s11 + $0x3f8] sm:$0xff]
        %v7286 = vld [vmem:[%s12] sm:$0x1]
        %v7288 = vlaneseq
        %v7289 = vshrl.u32 %v7288, 7
        %v7290 = vsub.s32 0, %v7289
        %v7291 = vrot.slane %v7286, %v7290
        %7293 = vmatprep.subr.mxu0 0.0
        %7294 = vmatpush1.msra.mxu0 %v7158
        %7295 = vmatprep.subr.mxu0 0.0
        %7296 = vmatpush1.msra.mxu0 %v7159
        %7297 = vmatprep.subr.mxu0 0.0
        %7298 = vmatpush1.msra.mxu0 %v7160
        %7299 = vmatprep.subr.mxu0 0.0
        %7300 = vmatpush1.msra.mxu0 %v7161
        %7301 = vmatprep.subr.mxu0 0.0
        %7302 = vmatpush1.msra.mxu0 %v7162
        %7303 = vmatprep.subr.mxu0 0.0
        %7304 = vmatpush1.msra.mxu0 %v7163
        %7305 = vmatprep.subr.mxu0 0.0
        %7306 = vmatpush1.msra.mxu0 %v7164
        %7307 = vmatprep.subr.mxu0 0.0
        %7308 = vmatpush1.msra.mxu0 %v7165
        %7309 = vmatprep.subr.mxu0 0.0
        %7310 = vmatpush1.msra.mxu0 %v7166
        %7311 = vmatprep.subr.mxu0 0.0
        %7312 = vmatpush1.msra.mxu0 %v7167
        %7313 = vmatprep.subr.mxu0 0.0
        %7314 = vmatpush1.msra.mxu0 %v7168
        %7315 = vmatprep.subr.mxu0 0.0
        %7316 = vmatpush1.msra.mxu0 %v7169
        %7317 = vmatprep.subr.mxu0 0.0
        %7318 = vmatpush1.msra.mxu0 %v7170
        %7319 = vmatprep.subr.mxu0 0.0
        %7320 = vmatpush1.msra.mxu0 %v7171
        %7321 = vmatprep.subr.mxu0 0.0
        %7322 = vmatpush1.msra.mxu0 %v7172
        %7323 = vmatprep.subr.mxu0 0.0
        %7324 = vmatpush1.msra.mxu0 %v7173
        %7325 = vmatprep.subr.mxu0 0.0
        %7326 = vmatpush1.msra.mxu0 %v7174
        %7327 = vmatprep.subr.mxu0 0.0
        %7328 = vmatpush1.msra.mxu0 %v7175
        %7329 = vmatprep.subr.mxu0 0.0
        %7330 = vmatpush1.msra.mxu0 %v7176
        %7331 = vmatprep.subr.mxu0 0.0
        %7332 = vmatpush1.msra.mxu0 %v7177
        %7333 = vmatprep.subr.mxu0 0.0
        %7334 = vmatpush1.msra.mxu0 %v7178
        %7335 = vmatprep.subr.mxu0 0.0
        %7336 = vmatpush1.msra.mxu0 %v7179
        %7337 = vmatprep.subr.mxu0 0.0
        %7338 = vmatpush1.msra.mxu0 %v7180
        %7339 = vmatprep.subr.mxu0 0.0
        %7340 = vmatpush1.msra.mxu0 %v7181
        %7341 = vmatprep.subr.mxu0 0.0
        %7342 = vmatpush1.msra.mxu0 %v7182
        %7343 = vmatprep.subr.mxu0 0.0
        %7344 = vmatpush1.msra.mxu0 %v7183
        %7345 = vmatprep.subr.mxu0 0.0
        %7346 = vmatpush1.msra.mxu0 %v7184
        %7347 = vmatprep.subr.mxu0 0.0
        %7348 = vmatpush1.msra.mxu0 %v7185
        %7349 = vmatprep.subr.mxu0 0.0
        %7350 = vmatpush1.msra.mxu0 %v7186
        %7351 = vmatprep.subr.mxu0 0.0
        %7352 = vmatpush1.msra.mxu0 %v7187
        %7353 = vmatprep.subr.mxu0 0.0
        %7354 = vmatpush1.msra.mxu0 %v7188
        %7355 = vmatprep.subr.mxu0 0.0
        %7356 = vmatpush1.msra.mxu0 %v7189
        %7357 = vmatprep.mubr.f32.mxu0 %v7130
        %7358 = vmatmul.mubr.f32.gmra.mrb[0].mxu0 %v7126
        %v7359 = vpop.f32.mrb[0].mxu0
        %v7360 = vadd.f32 %v7291, %v7359
        %v7361 = vpop.f32.mrb[0].mxu0
        %7362 = vmatprep.mubr.f32.mxu0 %v7131
        %7363 = vmatmul.mubr.f32.gmra.mrb[0].mxu0 %v7127
        %v7364 = vpop.f32.mrb[0].mxu0
        %v7365 = vadd.f32 %v7291, %v7364
        %v7366 = vpop.f32.mrb[0].mxu0
        %7367 = vmatprep.mubr.f32.mxu0 %v7132
        %7368 = vmatmul.mubr.f32.gmra.mrb[0].mxu0 %v7128
        %v7369 = vpop.f32.mrb[0].mxu0
        %v7370 = vadd.f32 %v7291, %v7369
        %v7371 = vpop.f32.mrb[0].mxu0
        %7372 = vmatprep.mubr.f32.mxu0 %v7133
        %7373 = vmatmul.mubr.f32.gmra.mrb[0].mxu0 %v7129
        %v7374 = vpop.f32.mrb[0].mxu0
        %v7375 = vadd.f32 %v7291, %v7374
        %v7376 = vpop.f32.mrb[0].mxu0
        %7377 = vdwg.mxu0
        %7378 = vmatprep.subr.mxu0 0.0
        %7379 = vmatpush1.msra.mxu0 %v7190
        %7380 = vmatprep.subr.mxu0 0.0
        %7381 = vmatpush1.msra.mxu0 %v7191
        %7382 = vmatprep.subr.mxu0 0.0
        %7383 = vmatpush1.msra.mxu0 %v7192
        %7384 = vmatprep.subr.mxu0 0.0
        %7385 = vmatpush1.msra.mxu0 %v7193
        %7386 = vmatprep.subr.mxu0 0.0
        %7387 = vmatpush1.msra.mxu0 %v7194
        %7388 = vmatprep.subr.mxu0 0.0
        %7389 = vmatpush1.msra.mxu0 %v7195
        %7390 = vmatprep.subr.mxu0 0.0
        %7391 = vmatpush1.msra.mxu0 %v7196
        %7392 = vmatprep.subr.mxu0 0.0
        %7393 = vmatpush1.msra.mxu0 %v7197
        %7394 = vmatprep.subr.mxu0 0.0
        %7395 = vmatpush1.msra.mxu0 %v7198
        %7396 = vmatprep.subr.mxu0 0.0
        %7397 = vmatpush1.msra.mxu0 %v7199
        %7398 = vmatprep.subr.mxu0 0.0
        %7399 = vmatpush1.msra.mxu0 %v7200
        %7400 = vmatprep.subr.mxu0 0.0
        %7401 = vmatpush1.msra.mxu0 %v7201
        %7402 = vmatprep.subr.mxu0 0.0
        %7403 = vmatpush1.msra.mxu0 %v7202
        %7404 = vmatprep.subr.mxu0 0.0
        %7405 = vmatpush1.msra.mxu0 %v7203
        %7406 = vmatprep.subr.mxu0 0.0
        %7407 = vmatpush1.msra.mxu0 %v7204
        %7408 = vmatprep.subr.mxu0 0.0
        %7409 = vmatpush1.msra.mxu0 %v7205
        %7410 = vmatprep.subr.mxu0 0.0
        %7411 = vmatpush1.msra.mxu0 %v7206
        %7412 = vmatprep.subr.mxu0 0.0
        %7413 = vmatpush1.msra.mxu0 %v7207
        %7414 = vmatprep.subr.mxu0 0.0
        %7415 = vmatpush1.msra.mxu0 %v7208
        %7416 = vmatprep.subr.mxu0 0.0
        %7417 = vmatpush1.msra.mxu0 %v7209
        %7418 = vmatprep.subr.mxu0 0.0
        %7419 = vmatpush1.msra.mxu0 %v7210
        %7420 = vmatprep.subr.mxu0 0.0
        %7421 = vmatpush1.msra.mxu0 %v7211
        %7422 = vmatprep.subr.mxu0 0.0
        %7423 = vmatpush1.msra.mxu0 %v7212
        %7424 = vmatprep.subr.mxu0 0.0
        %7425 = vmatpush1.msra.mxu0 %v7213
        %7426 = vmatprep.subr.mxu0 0.0
        %7427 = vmatpush1.msra.mxu0 %v7214
        %7428 = vmatprep.subr.mxu0 0.0
        %7429 = vmatpush1.msra.mxu0 %v7215
        %7430 = vmatprep.subr.mxu0 0.0
        %7431 = vmatpush1.msra.mxu0 %v7216
        %7432 = vmatprep.subr.mxu0 0.0
        %7433 = vmatpush1.msra.mxu0 %v7217
        %7434 = vmatprep.subr.mxu0 0.0
        %7435 = vmatpush1.msra.mxu0 %v7218
        %7436 = vmatprep.subr.mxu0 0.0
        %7437 = vmatpush1.msra.mxu0 %v7219
        %7438 = vmatprep.subr.mxu0 0.0
        %7439 = vmatpush1.msra.mxu0 %v7220
        %7440 = vmatprep.subr.mxu0 0.0
        %7441 = vmatpush1.msra.mxu0 %v7221
        %7442 = vmatprep.mubr.f32.mxu0 %v7138
        %7443 = vmatmul.mubr.f32.gmra.mrb[0].mxu0 %v7134
        %v7444 = vpop.f32.mrb[0].mxu0
        %v7445 = vadd.f32 %v7360, %v7444
        %v7446 = vpop.f32.mrb[0].mxu0
        %7447 = vmatprep.mubr.f32.mxu0 %v7139
        %7448 = vmatmul.mubr.f32.gmra.mrb[0].mxu0 %v7135
        %v7449 = vpop.f32.mrb[0].mxu0
        %v7450 = vadd.f32 %v7365, %v7449
        %v7451 = vpop.f32.mrb[0].mxu0
        %7452 = vmatprep.mubr.f32.mxu0 %v7140
        %7453 = vmatmul.mubr.f32.gmra.mrb[0].mxu0 %v7136
        %v7454 = vpop.f32.mrb[0].mxu0
        %v7455 = vadd.f32 %v7370, %v7454
        %v7456 = vpop.f32.mrb[0].mxu0
        %7457 = vmatprep.mubr.f32.mxu0 %v7141
        %7458 = vmatmul.mubr.f32.gmra.mrb[0].mxu0 %v7137
        %v7459 = vpop.f32.mrb[0].mxu0
        %v7460 = vadd.f32 %v7375, %v7459
        %v7461 = vpop.f32.mrb[0].mxu0
        %7462 = vdwg.mxu0
        %7463 = vmatprep.subr.mxu0 0.0
        %7464 = vmatpush1.msra.mxu0 %v7222
        %7465 = vmatprep.subr.mxu0 0.0
        %7466 = vmatpush1.msra.mxu0 %v7223
        %7467 = vmatprep.subr.mxu0 0.0
        %7468 = vmatpush1.msra.mxu0 %v7224
        %7469 = vmatprep.subr.mxu0 0.0
        %7470 = vmatpush1.msra.mxu0 %v7225
        %7471 = vmatprep.subr.mxu0 0.0
        %7472 = vmatpush1.msra.mxu0 %v7226
        %7473 = vmatprep.subr.mxu0 0.0
        %7474 = vmatpush1.msra.mxu0 %v7227
        %7475 = vmatprep.subr.mxu0 0.0
        %7476 = vmatpush1.msra.mxu0 %v7228
        %7477 = vmatprep.subr.mxu0 0.0
        %7478 = vmatpush1.msra.mxu0 %v7229
        %7479 = vmatprep.subr.mxu0 0.0
        %7480 = vmatpush1.msra.mxu0 %v7230
        %7481 = vmatprep.subr.mxu0 0.0
        %7482 = vmatpush1.msra.mxu0 %v7231
        %7483 = vmatprep.subr.mxu0 0.0
        %7484 = vmatpush1.msra.mxu0 %v7232
        %7485 = vmatprep.subr.mxu0 0.0
        %7486 = vmatpush1.msra.mxu0 %v7233
        %7487 = vmatprep.subr.mxu0 0.0
        %7488 = vmatpush1.msra.mxu0 %v7234
        %7489 = vmatprep.subr.mxu0 0.0
        %7490 = vmatpush1.msra.mxu0 %v7235
        %7491 = vmatprep.subr.mxu0 0.0
        %7492 = vmatpush1.msra.mxu0 %v7236
        %7493 = vmatprep.subr.mxu0 0.0
        %7494 = vmatpush1.msra.mxu0 %v7237
        %7495 = vmatprep.subr.mxu0 0.0
        %7496 = vmatpush1.msra.mxu0 %v7238
        %7497 = vmatprep.subr.mxu0 0.0
        %7498 = vmatpush1.msra.mxu0 %v7239
        %7499 = vmatprep.subr.mxu0 0.0
        %7500 = vmatpush1.msra.mxu0 %v7240
        %7501 = vmatprep.subr.mxu0 0.0
        %7502 = vmatpush1.msra.mxu0 %v7241
        %7503 = vmatprep.subr.mxu0 0.0
        %7504 = vmatpush1.msra.mxu0 %v7242
        %7505 = vmatprep.subr.mxu0 0.0
        %7506 = vmatpush1.msra.mxu0 %v7243
        %7507 = vmatprep.subr.mxu0 0.0
        %7508 = vmatpush1.msra.mxu0 %v7244
        %7509 = vmatprep.subr.mxu0 0.0
        %7510 = vmatpush1.msra.mxu0 %v7245
        %7511 = vmatprep.subr.mxu0 0.0
        %7512 = vmatpush1.msra.mxu0 %v7246
        %7513 = vmatprep.subr.mxu0 0.0
        %7514 = vmatpush1.msra.mxu0 %v7247
        %7515 = vmatprep.subr.mxu0 0.0
        %7516 = vmatpush1.msra.mxu0 %v7248
        %7517 = vmatprep.subr.mxu0 0.0
        %7518 = vmatpush1.msra.mxu0 %v7249
        %7519 = vmatprep.subr.mxu0 0.0
        %7520 = vmatpush1.msra.mxu0 %v7250
        %7521 = vmatprep.subr.mxu0 0.0
        %7522 = vmatpush1.msra.mxu0 %v7251
        %7523 = vmatprep.subr.mxu0 0.0
        %7524 = vmatpush1.msra.mxu0 %v7252
        %7525 = vmatprep.subr.mxu0 0.0
        %7526 = vmatpush1.msra.mxu0 %v7253
        %7527 = vmatprep.mubr.f32.mxu0 %v7146
        %7528 = vmatmul.mubr.f32.gmra.mrb[0].mxu0 %v7142
        %v7529 = vpop.f32.mrb[0].mxu0
        %v7530 = vadd.f32 %v7445, %v7529
        %v7531 = vpop.f32.mrb[0].mxu0
        %7532 = vmatprep.mubr.f32.mxu0 %v7147
        %7533 = vmatmul.mubr.f32.gmra.mrb[0].mxu0 %v7143
        %v7534 = vpop.f32.mrb[0].mxu0
        %v7535 = vadd.f32 %v7450, %v7534
        %v7536 = vpop.f32.mrb[0].mxu0
        %7537 = vmatprep.mubr.f32.mxu0 %v7148
        %7538 = vmatmul.mubr.f32.gmra.mrb[0].mxu0 %v7144
        %v7539 = vpop.f32.mrb[0].mxu0
        %v7540 = vadd.f32 %v7455, %v7539
        %v7541 = vpop.f32.mrb[0].mxu0
        %7542 = vmatprep.mubr.f32.mxu0 %v7149
        %7543 = vmatmul.mubr.f32.gmra.mrb[0].mxu0 %v7145
        %v7544 = vpop.f32.mrb[0].mxu0
        %v7545 = vadd.f32 %v7460, %v7544
        %v7546 = vpop.f32.mrb[0].mxu0
        %7547 = vdwg.mxu0
        %7548 = vmatprep.subr.mxu0 0.0
        %7549 = vmatpush1.msra.mxu0 %v7254
        %7550 = vmatprep.subr.mxu0 0.0
        %7551 = vmatpush1.msra.mxu0 %v7255
        %7552 = vmatprep.subr.mxu0 0.0
        %7553 = vmatpush1.msra.mxu0 %v7256
        %7554 = vmatprep.subr.mxu0 0.0
        %7555 = vmatpush1.msra.mxu0 %v7257
        %7556 = vmatprep.subr.mxu0 0.0
        %7557 = vmatpush1.msra.mxu0 %v7258
        %7558 = vmatprep.subr.mxu0 0.0
        %7559 = vmatpush1.msra.mxu0 %v7259
        %7560 = vmatprep.subr.mxu0 0.0
        %7561 = vmatpush1.msra.mxu0 %v7260
        %7562 = vmatprep.subr.mxu0 0.0
        %7563 = vmatpush1.msra.mxu0 %v7261
        %7564 = vmatprep.subr.mxu0 0.0
        %7565 = vmatpush1.msra.mxu0 %v7262
        %7566 = vmatprep.subr.mxu0 0.0
        %7567 = vmatpush1.msra.mxu0 %v7263
        %7568 = vmatprep.subr.mxu0 0.0
        %7569 = vmatpush1.msra.mxu0 %v7264
        %7570 = vmatprep.subr.mxu0 0.0
        %7571 = vmatpush1.msra.mxu0 %v7265
        %7572 = vmatprep.subr.mxu0 0.0
        %7573 = vmatpush1.msra.mxu0 %v7266
        %7574 = vmatprep.subr.mxu0 0.0
        %7575 = vmatpush1.msra.mxu0 %v7267
        %7576 = vmatprep.subr.mxu0 0.0
        %7577 = vmatpush1.msra.mxu0 %v7268
        %7578 = vmatprep.subr.mxu0 0.0
        %7579 = vmatpush1.msra.mxu0 %v7269
        %7580 = vmatprep.subr.mxu0 0.0
        %7581 = vmatpush1.msra.mxu0 %v7270
        %7582 = vmatprep.subr.mxu0 0.0
        %7583 = vmatpush1.msra.mxu0 %v7271
        %7584 = vmatprep.subr.mxu0 0.0
        %7585 = vmatpush1.msra.mxu0 %v7272
        %7586 = vmatprep.subr.mxu0 0.0
        %7587 = vmatpush1.msra.mxu0 %v7273
        %7588 = vmatprep.subr.mxu0 0.0
        %7589 = vmatpush1.msra.mxu0 %v7274
        %7590 = vmatprep.subr.mxu0 0.0
        %7591 = vmatpush1.msra.mxu0 %v7275
        %7592 = vmatprep.subr.mxu0 0.0
        %7593 = vmatpush1.msra.mxu0 %v7276
        %7594 = vmatprep.subr.mxu0 0.0
        %7595 = vmatpush1.msra.mxu0 %v7277
        %7596 = vmatprep.subr.mxu0 0.0
        %7597 = vmatpush1.msra.mxu0 %v7278
        %7598 = vmatprep.subr.mxu0 0.0
        %7599 = vmatpush1.msra.mxu0 %v7279
        %7600 = vmatprep.subr.mxu0 0.0
        %7601 = vmatpush1.msra.mxu0 %v7280
        %7602 = vmatprep.subr.mxu0 0.0
        %7603 = vmatpush1.msra.mxu0 %v7281
        %7604 = vmatprep.subr.mxu0 0.0
        %7605 = vmatpush1.msra.mxu0 %v7282
        %7606 = vmatprep.subr.mxu0 0.0
        %7607 = vmatpush1.msra.mxu0 %v7283
        %7608 = vmatprep.subr.mxu0 0.0
        %7609 = vmatpush1.msra.mxu0 %v7284
        %7610 = vmatprep.subr.mxu0 0.0
        %7611 = vmatpush1.msra.mxu0 %v7285
        %7612 = vmatprep.mubr.f32.mxu0 %v7154
        %7613 = vmatmul.mubr.f32.gmra.mrb[0].mxu0 %v7150
        %v7614 = vpop.f32.mrb[0].mxu0
        %v7615 = vadd.f32 %v7530, %v7614
        %v7616 = vpop.f32.mrb[0].mxu0
        %7617 = vmatprep.mubr.f32.mxu0 %v7155
        %7618 = vmatmul.mubr.f32.gmra.mrb[0].mxu0 %v7151
        %v7619 = vpop.f32.mrb[0].mxu0
        %v7620 = vadd.f32 %v7535, %v7619
        %v7621 = vpop.f32.mrb[0].mxu0
        %7622 = vmatprep.mubr.f32.mxu0 %v7156
        %7623 = vmatmul.mubr.f32.gmra.mrb[0].mxu0 %v7152
        %v7624 = vpop.f32.mrb[0].mxu0
        %v7625 = vadd.f32 %v7540, %v7624
        %v7626 = vpop.f32.mrb[0].mxu0
        %7627 = vmatprep.mubr.f32.mxu0 %v7157
        %7628 = vmatmul.mubr.f32.gmra.mrb[0].mxu0 %v7153
        %v7629 = vpop.f32.mrb[0].mxu0
        %v7630 = vadd.f32 %v7545, %v7629
        %v7631 = vpop.f32.mrb[0].mxu0
        %7632 = vdwg.mxu0
        %v7633 = vsel %vm500, %v7615, 0.0
        %v7634 = vrot.slane %v7633, 4
        %v7635 = vadd.f32 %v7633, %v7634
        %v7636 = vrot.slane %v7635, 2
        %v7637 = vadd.f32 %v7635, %v7636
        %v7638 = vrot.slane %v7637, 1
        %v7639 = vadd.f32 %v7637, %v7638
        %v7640 = vsel %vm500, %v7620, 0.0
        %v7641 = vrot.slane %v7640, 4
        %v7642 = vadd.f32 %v7640, %v7641
        %v7643 = vrot.slane %v7642, 2
        %v7644 = vadd.f32 %v7642, %v7643
        %v7645 = vrot.slane %v7644, 1
        %v7646 = vadd.f32 %v7644, %v7645
        %v7647 = vsel %vm500, %v7625, 0.0
        %v7648 = vrot.slane %v7647, 4
        %v7649 = vadd.f32 %v7647, %v7648
        %v7650 = vrot.slane %v7649, 2
        %v7651 = vadd.f32 %v7649, %v7650
        %v7652 = vrot.slane %v7651, 1
        %v7653 = vadd.f32 %v7651, %v7652
        %v7654 = vsel %vm500, %v7630, 0.0
        %v7655 = vrot.slane %v7654, 4
        %v7656 = vadd.f32 %v7654, %v7655
        %v7657 = vrot.slane %v7656, 2
        %v7658 = vadd.f32 %v7656, %v7657
        %v7659 = vrot.slane %v7658, 1
        %v7660 = vadd.f32 %v7658, %v7659
        %v7661 = vrcp.pop 8.0
        %v7662 = vmul.f32 %v7639, %v7661
        %v7663 = vmul.f32 %v7646, %v7661
        %v7664 = vmul.f32 %v7653, %v7661
        %v7665 = vmul.f32 %v7660, %v7661
        %v7666 = vsub.f32 %v7615, %v7662
        %v7667 = vsub.f32 %v7620, %v7663
        %v7668 = vsub.f32 %v7625, %v7664
        %v7669 = vsub.f32 %v7630, %v7665
        %v7670 = vmul.f32 %v7666, %v7666
        %v7671 = vmul.f32 %v7667, %v7667
        %v7672 = vmul.f32 %v7668, %v7668
        %v7673 = vmul.f32 %v7669, %v7669
        %v7674 = vsel %vm500, %v7670, 0.0
        %v7675 = vrot.slane %v7674, 4
        %v7676 = vadd.f32 %v7674, %v7675
        %v7677 = vrot.slane %v7676, 2
        %v7678 = vadd.f32 %v7676, %v7677
        %v7679 = vrot.slane %v7678, 1
        %v7680 = vadd.f32 %v7678, %v7679
        %v7681 = vsel %vm500, %v7671, 0.0
        %v7682 = vrot.slane %v7681, 4
        %v7683 = vadd.f32 %v7681, %v7682
        %v7684 = vrot.slane %v7683, 2
        %v7685 = vadd.f32 %v7683, %v7684
        %v7686 = vrot.slane %v7685, 1
        %v7687 = vadd.f32 %v7685, %v7686
        %v7688 = vsel %vm500, %v7672, 0.0
        %v7689 = vrot.slane %v7688, 4
        %v7690 = vadd.f32 %v7688, %v7689
        %v7691 = vrot.slane %v7690, 2
        %v7692 = vadd.f32 %v7690, %v7691
        %v7693 = vrot.slane %v7692, 1
        %v7694 = vadd.f32 %v7692, %v7693
        %v7695 = vsel %vm500, %v7673, 0.0
        %v7696 = vrot.slane %v7695, 4
        %v7697 = vadd.f32 %v7695, %v7696
        %v7698 = vrot.slane %v7697, 2
        %v7699 = vadd.f32 %v7697, %v7698
        %v7700 = vrot.slane %v7699, 1
        %v7701 = vadd.f32 %v7699, %v7700
        %v7702 = vrcp.pop 7.0
        %v7703 = vmul.f32 %v7680, %v7702
        %v7704 = vmul.f32 %v7687, %v7702
        %v7705 = vmul.f32 %v7694, %v7702
        %v7706 = vmul.f32 %v7701, %v7702
        %v7707 = vrsqrt.pop %v7703
        %v7708 = vmul.f32 %v7703, %v7707
        %vm7709 = vcmp.eq.f32.partialorder %v7703, inf
        %v7710 = vsel %vm7709, %v7703, %v7708
        %vm7711 = vcmp.eq.f32.partialorder %v7703, 0.0
        %v7712 = vand.u32 %v7703, 2147483648
        %v7713 = vsel %vm7711, %v7712, %v7710
        %v7714 = vrsqrt.pop %v7704
        %v7715 = vmul.f32 %v7704, %v7714
        %vm7716 = vcmp.eq.f32.partialorder %v7704, inf
        %v7717 = vsel %vm7716, %v7704, %v7715
        %vm7718 = vcmp.eq.f32.partialorder %v7704, 0.0
        %v7719 = vand.u32 %v7704, 2147483648
        %v7720 = vsel %vm7718, %v7719, %v7717
        %v7721 = vrsqrt.pop %v7705
        %v7722 = vmul.f32 %v7705, %v7721
        %vm7723 = vcmp.eq.f32.partialorder %v7705, inf
        %v7724 = vsel %vm7723, %v7705, %v7722
        %vm7725 = vcmp.eq.f32.partialorder %v7705, 0.0
        %v7726 = vand.u32 %v7705, 2147483648
        %v7727 = vsel %vm7725, %v7726, %v7724
        %v7728 = vrsqrt.pop %v7706
        %v7729 = vmul.f32 %v7706, %v7728
        %vm7730 = vcmp.eq.f32.partialorder %v7706, inf
        %v7731 = vsel %vm7730, %v7706, %v7729
        %vm7732 = vcmp.eq.f32.partialorder %v7706, 0.0
        %v7733 = vand.u32 %v7706, 2147483648
        %v7734 = vsel %vm7732, %v7733, %v7731
        %v7735 = vadd.f32 %v7713, 1e-08
        %v7736 = vadd.f32 %v7720, 1e-08
        %v7737 = vadd.f32 %v7727, 1e-08
        %v7738 = vadd.f32 %v7734, 1e-08
        %v7739 = vrcp.pop %v7735
        %v7740 = vrcp.pop %v7736
        %v7741 = vrcp.pop %v7737
        %v7742 = vrcp.pop %v7738
        %v7743 = vmul.f32 %v7735, %v7739
        %v7744 = vmul.f32 %v7736, %v7740
        %v7745 = vmul.f32 %v7737, %v7741
        %v7746 = vmul.f32 %v7738, %v7742
        %v7747 = vsub.f32 2.0, %v7743
        %v7748 = vsub.f32 2.0, %v7744
        %v7749 = vsub.f32 2.0, %v7745
        %v7750 = vsub.f32 2.0, %v7746
        %v7751 = vmul.f32 %v7739, %v7747
        %v7752 = vmul.f32 %v7740, %v7748
        %v7753 = vmul.f32 %v7741, %v7749
        %v7754 = vmul.f32 %v7742, %v7750
        %v7755 = vld [vmem:[%s13] sm:$0x1]
        %v7756 = vld [vmem:[%s14] sm:$0x1]
        %v7758 = vlaneseq
        %v7759 = vshrl.u32 %v7758, 7
        %v7760 = vsub.s32 0, %v7759
        %v7761 = vrot.slane %v7755, %v7760
        %v7763 = vmul.f32 %v7761, %v7666
        %v7764 = vmul.f32 %v7761, %v7667
        %v7765 = vmul.f32 %v7761, %v7668
        %v7766 = vmul.f32 %v7761, %v7669
        %v7767 = vmul.f32 %v7763, %v7751
        %v7768 = vmul.f32 %v7764, %v7752
        %v7769 = vmul.f32 %v7765, %v7753
        %v7770 = vmul.f32 %v7766, %v7754
        %v7772 = vlaneseq
        %v7773 = vshrl.u32 %v7772, 7
        %v7774 = vsub.s32 0, %v7773
        %v7775 = vrot.slane %v7756, %v7774
        %v7777 = vadd.f32 %v7767, %v7775
        %v7778 = vadd.f32 %v7768, %v7775
        %v7779 = vadd.f32 %v7769, %v7775
        %v7780 = vadd.f32 %v7770, %v7775
        %vm7781 = vcmp.gt.f32.partialorder %v7777, 0.0
        %vm7782 = vcmp.gt.f32.partialorder %v7778, 0.0
        %vm7783 = vcmp.gt.f32.partialorder %v7779, 0.0
        %vm7784 = vcmp.gt.f32.partialorder %v7780, 0.0
        %v7785 = vmul.f32 %v7777, 0.2
        %v7786 = vmul.f32 %v7778, 0.2
        %v7787 = vmul.f32 %v7779, 0.2
        %v7788 = vmul.f32 %v7780, 0.2
        %v7789 = vsel %vm7781, %v7777, %v7785
        %v7790 = vsel %vm7782, %v7778, %v7786
        %v7791 = vsel %vm7783, %v7779, %v7787
        %v7792 = vsel %vm7784, %v7780, %v7788
        %7793 = vst.msk [vmem:[%s490] sm:$0xff] %vm500, %v7789
        %7794 = vst.msk [vmem:[%s490 + $0x8] sm:$0xff] %vm500, %v7790
        %7795 = vst.msk [vmem:[%s490 + $0x10] sm:$0xff] %vm500, %v7791
        %7796 = vst.msk [vmem:[%s490 + $0x18] sm:$0xff] %vm500, %v7792
        %s7797 = sand.u32 %s357, 1
        %s7798 = scalar_lea.sflag [#allocation5], %s7797
        %s7799 = sand.u32 %s357, 1
        %s7800 = smul.addr %s7799, 32
        %s7801 = scalar_lea.vmem [#allocation4], %s7800
        // Predicated region
        $region81: #{tpu_custom_call.1} parent=79 // pred_check
          %p7802 = pneg %p367
        $region82: #{tpu_custom_call.1} parent=79 // pred_check_branch
          %7804 = sbr.rel (%p7802) target = $region84
        $region83: #{tpu_custom_call.1} parent=79 // pred_region
          %s7805 = smul.u32 4, %s29
          %s7807 = ssub.s32 512, 512
          %7808 = vsyncadd %s7798, %s7807
          %s7809 = smul.addr %s7805, 128
          %s7810 = scalar_lea.hbm %s15, %s7809
          %s7811 = sshll.u32 %s7801, 4
          %s7812 = int_to_ptr.vmem [resolvable:$true] %s7811
          %7817 = dma.vmem_to_hbm [thread:$0]  %s7812, 512, %s7810, %s7798, 128, 128, 8
        $region84: #{tpu_custom_call.1} parent=79 // pred_fallthru
          _
      $region80: #{tpu_custom_call.1} parent=5 // pred_fallthru
        _
      %p7818 = scmp.le.s32.totalorder 2, %s24
      // Predicated region
      $region85: #{tpu_custom_call.1} parent=5 // pred_check
        %p7819 = pneg %p7818
      $region86: #{tpu_custom_call.1} parent=5 // pred_check_branch
        %7821 = sbr.rel (%p7819) target = $region88
      $region87: #{tpu_custom_call.1} parent=5 // pred_region
        %s7822 = ssub.s32 %s24, 2
        // Predicated region
        $region89: #{tpu_custom_call.1} parent=87 // pred_check
          %p7823 = pneg %p373
        $region90: #{tpu_custom_call.1} parent=87 // pred_check_branch
          %7825 = sbr.rel (%p7823) target = $region92
        $region91: #{tpu_custom_call.1} parent=87 // pred_region
          %s7826 = sand.u32 %s358, 1
          %s7827 = scalar_lea.sflag [#allocation5], %s7826
          %s7828 = sand.u32 %s358, 1
          %s7829 = smul.addr %s7828, 32
          %s7830 = scalar_lea.vmem [#allocation4], %s7829
          %7831 = dma.done %s7827, 512
        $region92: #{tpu_custom_call.1} parent=87 // pred_fallthru
          _
      $region88: #{tpu_custom_call.1} parent=5 // pred_fallthru
        _
    $region6: #{tpu_custom_call.1} parent=1 // loop_footer
      %s28 = sadd.s32 1, %s24
    $region7: #{tpu_custom_call.1} parent=1 // loop_footer_branch
      %23 = sbr.rel target = $region3
    $region8: #{tpu_custom_call.1} parent=1 // loop_exit
      _
    %7832 = vsyncpa [#allocation5], 1
    %s7833 = scalar_lea.sflag [#allocation5], 1
    %7834 = vsyncpa %s7833, 1

</llo_original>
